<compile_context>
chip_gen: v6e
topology: v6e:2x2x1
jax: 0.10.0
libtpu: 0.0.40
codegen_flags: <defaults>
</compile_context>

<pallas_src>
import functools

import jax
import jax.numpy as jnp
from jax.experimental import pallas as pl
from jax.experimental.pallas import tpu as pltpu

F32 = jnp.float32
BF16 = jnp.bfloat16


# ------------------------------ kernel helpers ------------------------------


def _relu(x):
    return jnp.maximum(x, 0.0)


def _zero_border(pad_ref, H, W):
    """Zero the 1-wide border ring of a (H+2, W+2, C) padded VMEM plane."""
    C = pad_ref.shape[-1]
    zrow = jnp.zeros((W + 2, C), pad_ref.dtype)
    pad_ref[0] = zrow
    pad_ref[H + 1] = zrow
    zcol = jnp.zeros((H + 2, 1, C), pad_ref.dtype)
    pad_ref[:, 0:1, :] = zcol
    pad_ref[:, W + 1:W + 2, :] = zcol


def _maxpool_3x3_s2_to(pad_ref, y, dst_ref, H, W):
    """3x3 / stride-2 / pad-1 max-pool of `y` (H, W, C), fully in VMEM.

    `y` is post-ReLU (>= 0), so the zero border is equivalent to torch's -inf
    padding.  Writes the pooled map into `dst_ref` as a (H//2 * W//2, C) matrix
    whose rows are the flattened output positions (row-major).
    """
    Ho, Wo = H // 2, W // 2
    _zero_border(pad_ref, H, W)
    pad_ref[1:H + 1, 1:W + 1, :] = y                       # one bulk store
    for i in range(Ho):
        r = jnp.maximum(jnp.maximum(pad_ref[2 * i], pad_ref[2 * i + 1]),
                        pad_ref[2 * i + 2])                # (W+2, C) row-window max
        for j in range(Wo):
            c = jnp.maximum(jnp.maximum(r[2 * j:2 * j + 1, :],
                                        r[2 * j + 1:2 * j + 2, :]),
                            r[2 * j + 2:2 * j + 3, :])     # (1, C)
            dst_ref[i * Wo + j:i * Wo + j + 1, :] = c


def _conv3x3_relu_batched(pad_ref, w_ref, b_ref, H, W):
    """3x3 / pad-1 conv + ReLU over a zero-padded (H+2, W+2, Cin) VMEM plane.

    Nine per-tap (H*W, Cin) @ (Cin, Cout) bf16 MXU dots into one f32 accumulator.
    Used where W == 8 so the (H, W, C) -> (H*W, C) reshape is a layout no-op.
    """
    HW = H * W
    cin = pad_ref.shape[-1]
    cout = w_ref.shape[-1]
    acc = jnp.zeros((HW, cout), F32)
    for ky in range(3):
        for kx in range(3):
            tap = pad_ref[ky:ky + H, kx:kx + W, :].reshape(HW, cin).astype(BF16)
            acc = acc + jnp.dot(tap, w_ref[ky, kx], preferred_element_type=F32)
    return _relu(acc + b_ref[...])                          # (H*W, Cout) f32


# ----------------------------- stem conv kernel ------------------------------


def _stem_kernel(p_ref, w_ref, b_ref, o_ref, pool_pad, pooled, *, Hc, Wc):
    """7x7/s2/p3 stem conv (im2col matmul) + bias + ReLU + fused 3x3/s2/p1 max-pool."""
    y = jnp.dot(p_ref[0], w_ref[...], preferred_element_type=F32)   # (Hc*Wc, 64)
    y = _relu(y + b_ref[...]).reshape(Hc, Wc, -1)                   # f32
    _maxpool_3x3_s2_to(pool_pad, y, pooled, Hc, Wc)                 # (Ho*Wo, 64)
    o_ref[0] = pooled[...].astype(BF16)                             # one bulk store


def stem_conv_pool(patches, w, b, Hc, Wc):
    B, M, K = patches.shape
    N = w.shape[1]
    Ho, Wo = Hc // 2, Wc // 2
    flops = 2 * B * M * K * N
    bytes_accessed = int(patches.size * 2 + w.size * 2 + B * Ho * Wo * N * 2)
    return pl.pallas_call(
        functools.partial(_stem_kernel, Hc=Hc, Wc=Wc),
        grid=(B,),
        in_specs=[
            pl.BlockSpec((1, M, K), lambda bi: (bi, 0, 0)),
            pl.BlockSpec((K, N), lambda bi: (0, 0)),
            pl.BlockSpec((1, N), lambda bi: (0, 0)),
        ],
        out_specs=pl.BlockSpec((1, Ho * Wo, N), lambda bi: (bi, 0, 0)),
        out_shape=jax.ShapeDtypeStruct((B, Ho * Wo, N), BF16),
        scratch_shapes=[pltpu.VMEM((Hc + 2, Wc + 2, N), F32),   # pool pad plane
                        pltpu.VMEM((Ho * Wo, N), F32)],         # pooled matrix
        compiler_params=pltpu.CompilerParams(dimension_semantics=("parallel",)),
        cost_estimate=pl.CostEstimate(flops=flops, transcendentals=0,
                                      bytes_accessed=bytes_accessed),
    )(patches, w, b)


# --------------------- fused block1+pool+block2+GAP+fc -----------------------


def _blocks_head_kernel(x_ref, w2, b2, w3, b3, w4, b4, w5, b5, w6, b6, w7, b7,
                        fcw, fcb, o_ref, pad1, poolpad, pooled, pad2,
                        *, H1, W1, H2, W2):
    """block1 (1x1->3x3->1x1) -> maxpool -> block2 (1x1->3x3->1x1) -> GAP -> fc,
    all VMEM-resident, one image per grid step."""
    # ---- block 1 : 64 -> 64 -> 64 -> 256 on the 8x8 map (M = 64) ------------
    z = _relu(jnp.dot(x_ref[0], w2[...], preferred_element_type=F32) + b2[...])
    _zero_border(pad1, H1, W1)
    pad1[1:H1 + 1, 1:W1 + 1, :] = z.reshape(H1, W1, -1)     # one bulk store
    z = _conv3x3_relu_batched(pad1, w3, b3, H1, W1)
    z = _relu(jnp.dot(z.astype(BF16), w4[...], preferred_element_type=F32) + b4[...])

    # ---- fused 3x3/s2/p1 max-pool : (8,8,256) -> (16,256) matrix ------------
    _maxpool_3x3_s2_to(poolpad, z.reshape(H1, W1, -1), pooled, H1, W1)

    # ---- block 2 : 256 -> 128 -> 128 -> 512 on the 4x4 map (M = 16) ---------
    z5 = _relu(jnp.dot(pooled[...].astype(BF16), w5[...],
                       preferred_element_type=F32) + b5[...])       # (16, 128)
    _zero_border(pad2, H2, W2)
    for h in range(H2):                                     # no sublane-repack reshape
        pad2[h + 1, 1:W2 + 1, :] = z5[h * W2:(h + 1) * W2, :]
    cmid = w6.shape[3]
    feat = jnp.zeros((1, w7.shape[1]), F32)
    for h in range(H2):                                     # row-wise 3x3 + 1x1 + GAP
        acc = jnp.zeros((W2, cmid), F32)
        for ky in range(3):
            for kx in range(3):
                acc = acc + jnp.dot(pad2[h + ky, kx:kx + W2, :].astype(BF16),
                                    w6[ky, kx], preferred_element_type=F32)
        z6 = _relu(acc + b6[...]).astype(BF16)                       # (4, 128)
        z7 = _relu(jnp.dot(z6, w7[...], preferred_element_type=F32) + b7[...])
        feat = feat + jnp.sum(z7, axis=0, keepdims=True)             # (1, 512)

    # ---- global average pool + fc (kept f32 for accuracy headroom) ----------
    feat = feat * (1.0 / (H2 * W2))
    o_ref[0] = jnp.dot(feat, fcw[...], preferred_element_type=F32) + fcb[...]


def _const_index_map(nd):
    def imap(bi):
        return (0,) * nd
    return imap


def fused_blocks_head(x, q):
    B = x.shape[0]
    H1 = W1 = 8
    H2 = W2 = 4
    NC = q["fc_w"].shape[1]
    weights = [q["conv2_w"], q["conv2_b"], q["conv3_w"], q["conv3_b"],
               q["conv4_w"], q["conv4_b"], q["conv5_w"], q["conv5_b"],
               q["conv6_w"], q["conv6_b"], q["conv7_w"], q["conv7_b"],
               q["fc_w"], q["fc_b"]]
    flops = 2 * B * (H1 * W1 * (64 * 64 + 9 * 64 * 64 + 64 * 256)
                     + H2 * W2 * (256 * 128 + 9 * 128 * 128 + 128 * 512)
                     + 512 * NC)
    bytes_accessed = int(x.size * 2 + B * NC * 4
                         + sum(int(w.size) * w.dtype.itemsize for w in weights))
    out = pl.pallas_call(
        functools.partial(_blocks_head_kernel, H1=H1, W1=W1, H2=H2, W2=W2),
        grid=(B,),
        in_specs=([pl.BlockSpec((1, H1 * W1, x.shape[-1]), lambda bi: (bi, 0, 0))]
                  + [pl.BlockSpec(w.shape, _const_index_map(w.ndim)) for w in weights]),
        out_specs=pl.BlockSpec((1, 1, NC), lambda bi: (bi, 0, 0)),
        out_shape=jax.ShapeDtypeStruct((B, 1, NC), F32),
        scratch_shapes=[
            pltpu.VMEM((H1 + 2, W1 + 2, 64), F32),          # pad plane for 3x3 #1
            pltpu.VMEM((H1 + 2, W1 + 2, 256), F32),         # pad plane for max-pool
            pltpu.VMEM((H1 // 2 * W1 // 2, 256), F32),      # pooled (16, 256) matrix
            pltpu.VMEM((H2 + 2, W2 + 2, 128), F32),         # pad plane for 3x3 #2
        ],
        compiler_params=pltpu.CompilerParams(dimension_semantics=("parallel",)),
        cost_estimate=pl.CostEstimate(flops=flops, transcendentals=0,
                                      bytes_accessed=bytes_accessed),
    )(x, *weights)
    return out.reshape(B, NC)


# ------------------------------- forward pass --------------------------------


def _stem_patches(x_nhwc):
    """im2col for the 7x7 / stride-2 / pad-3 stem conv (XLA-side)."""
    # TODO(synk): fold this stride-2 gather into the stem kernel via a padded
    #             (38, 38, 3) VMEM plane; left in XLA for now.
    B, H, W, C = x_nhwc.shape
    Ho = (H + 2 * 3 - 7) // 2 + 1
    Wo = (W + 2 * 3 - 7) // 2 + 1
    xp = jnp.pad(x_nhwc, ((0, 0), (3, 3), (3, 3), (0, 0)))
    cols = []
    for ky in range(7):
        for kx in range(7):
            cols.append(xp[:, ky:ky + 2 * Ho - 1:2, kx:kx + 2 * Wo - 1:2, :])
    patches = jnp.concatenate(cols, axis=-1)                # (B, Ho, Wo, 49*C)
    return patches.reshape(B, Ho * Wo, 7 * 7 * C), (Ho, Wo)


@jax.jit
def simplenet_forward(x_nchw, q):
    """SimpleNet inference forward: features -> avgpool -> flatten -> fc."""
    x = jnp.transpose(x_nchw, (0, 2, 3, 1)).astype(F32)     # NHWC
    patches, (Hc, Wc) = _stem_patches(x)
    patches = patches.astype(BF16)
    y = stem_conv_pool(patches, q["stem_w"], q["stem_b"], Hc, Wc)   # (B, 64, 64) bf16
    return fused_blocks_head(y, q)                                   # (B, NC) f32


# ------------------------ params & pure-JAX reference ------------------------


def init_params(key, num_classes=100):
    """Deterministic parameters in the PyTorch layouts (OIHW conv, (out,in) fc)."""
    specs = [("conv1", 64, 3, 7), ("conv2", 64, 64, 1), ("conv3", 64, 64, 3),
             ("conv4", 256, 64, 1), ("conv5", 128, 256, 1),
             ("conv6", 128, 128, 3), ("conv7", 512, 128, 1)]
    keys = jax.random.split(key, 2 * len(specs) + 2)
    p = {}
    for i, (name, cout, cin, k) in enumerate(specs):
        std = (2.0 / (cin * k * k)) ** 0.5
        p[name + "_w"] = std * jax.random.normal(keys[2 * i], (cout, cin, k, k), F32)
        p[name + "_b"] = 0.01 * jax.random.normal(keys[2 * i + 1], (cout,), F32)
    p["fc_w"] = (1.0 / 512 ** 0.5) * jax.random.normal(keys[-2], (num_classes, 512), F32)
    p["fc_b"] = 0.01 * jax.random.normal(keys[-1], (num_classes,), F32)
    return p


def prepare_params(p):
    """One-time layout prep: pre-transposed, bf16 Pallas-friendly weights."""
    q = {
        "stem_w": jnp.transpose(p["conv1_w"], (2, 3, 1, 0)).reshape(-1, 64).astype(BF16),
        "stem_b": p["conv1_b"].reshape(1, -1).astype(F32),
        "fc_w": jnp.transpose(p["fc_w"]).astype(F32),                # (512, NC), f32 head
        "fc_b": p["fc_b"].reshape(1, -1).astype(F32),
    }
    for name in ("conv2", "conv4", "conv5", "conv7"):                # 1x1 convs
        q[name + "_w"] = jnp.transpose(p[name + "_w"][:, :, 0, 0]).astype(BF16)
        q[name + "_b"] = p[name + "_b"].reshape(1, -1).astype(F32)
    for name in ("conv3", "conv6"):                                  # 3x3 convs
        q[name + "_w"] = jnp.transpose(p[name + "_w"], (2, 3, 1, 0)).astype(BF16)
        q[name + "_b"] = p[name + "_b"].reshape(1, -1).astype(F32)
    return q


def simplenet_reference(x_nchw, p):
    """Pure-JAX/XLA mirror of SimpleNet.forward (inference path), NCHW, f32."""
    hp = jax.lax.Precision.HIGHEST

    def conv(x, w, b, stride=1, pad=0):
        y = jax.lax.conv_general_dilated(
            x, w, window_strides=(stride, stride),
            padding=((pad, pad), (pad, pad)),
            dimension_numbers=("NCHW", "OIHW", "NCHW"), precision=hp)
        return y + b.reshape(1, -1, 1, 1)

    def maxpool(x):
        init = jnp.array(-jnp.inf, x.dtype)
        return jax.lax.reduce_window(
            x, init, jax.lax.max, (1, 1, 3, 3), (1, 1, 2, 2),
            ((0, 0), (0, 0), (1, 1), (1, 1)))

    relu = lambda t: jnp.maximum(t, 0.0)
    x = relu(conv(x_nchw, p["conv1_w"], p["conv1_b"], stride=2, pad=3))
    x = maxpool(x)
    x = relu(conv(x, p["conv2_w"], p["conv2_b"]))
    x = relu(conv(x, p["conv3_w"], p["conv3_b"], pad=1))
    x = relu(conv(x, p["conv4_w"], p["conv4_b"]))
    x = maxpool(x)
    x = relu(conv(x, p["conv5_w"], p["conv5_b"]))
    x = relu(conv(x, p["conv6_w"], p["conv6_b"], pad=1))
    x = relu(conv(x, p["conv7_w"], p["conv7_b"]))
    x = jnp.mean(x, axis=(2, 3))
    return jnp.dot(x, p["fc_w"].T, precision=hp) + p["fc_b"]


if __name__ == "__main__":
    B, num_classes = 2, 100
    key = jax.random.PRNGKey(0)
    kx, kp = jax.random.split(key)

    x = jax.random.normal(kx, (B, 3, 32, 32), dtype=jnp.float32)     # NCHW input
    params = init_params(kp, num_classes)
    pallas_params = prepare_params(params)                           # one-time prep

    logits = jax.block_until_ready(simplenet_forward(x, pallas_params))
    assert logits.shape == (B, num_classes)

    ref = simplenet_reference(x, params)
    max_err = float(jnp.max(jnp.abs(logits - ref)))
    rel_err = float(jnp.linalg.norm(logits - ref) / jnp.linalg.norm(ref))
    # bf16 weights/activations with f32 accumulation (per perf review) -> loosened
    # elementwise tolerance, backed by a tight relative-norm check.
    assert max_err < 2e-1 and rel_err < 3e-2, (max_err, rel_err)

    print("KERNEL_OK")
</pallas_src>

<mosaic_0001>
module attributes {stable_mosaic.version = 11 : i64} {
  func.func @_stem_kernel(%arg0: i32, %arg1: memref<1x256x147xbf16, #tpu.memory_space<vmem>>, %arg2: memref<147x64xbf16, #tpu.memory_space<vmem>>, %arg3: memref<1x64xf32, #tpu.memory_space<vmem>>, %arg4: memref<1x64x64xbf16, #tpu.memory_space<vmem>>, %arg5: memref<18x18x64xf32, #tpu.memory_space<vmem>>, %arg6: memref<64x64xf32, #tpu.memory_space<vmem>>) attributes {dimension_semantics = [#tpu.dimension_semantics<parallel>], iteration_bounds = array<i64: 2>, scalar_prefetch = 0 : i64, scratch_operands = 2 : i64, tpu.core_type = #tpu.core_type<tc>, window_params = [{transform_indices = @transform_0, window_bounds = array<i64: 1, 256, 147>}, {pipeline_mode = #tpu.pipeline_mode<synchronous>, transform_indices = @transform_1, window_bounds = array<i64: 147, 64>}, {pipeline_mode = #tpu.pipeline_mode<synchronous>, transform_indices = @transform_2, window_bounds = array<i64: 1, 64>}, {transform_indices = @transform_3, window_bounds = array<i64: 1, 64, 64>}]} {
    %c0 = arith.constant 0 : index
    %c0_0 = arith.constant 0 : index
    %c0_1 = arith.constant 0 : index
    %0 = vector.load %arg1[%c0, %c0_0, %c0_1] : memref<1x256x147xbf16, #tpu.memory_space<vmem>>, vector<1x256x147xbf16>
    %1 = vector.shape_cast %0 : vector<1x256x147xbf16> to vector<256x147xbf16>
    %c0_2 = arith.constant 0 : index
    %c0_3 = arith.constant 0 : index
    %2 = vector.load %arg2[%c0_2, %c0_3] : memref<147x64xbf16, #tpu.memory_space<vmem>>, vector<147x64xbf16>
    %cst = arith.constant dense<0.000000e+00> : vector<256x64xf32>
    %3 = tpu.matmul %1, %2, %cst {dimension_numbers = #tpu.dot_dimension_numbers<[1], [0], [0], [1], [0, 0, 1, 1], [], []>} : vector<256x147xbf16>, vector<147x64xbf16>, vector<256x64xf32> -> vector<256x64xf32>
    %c0_4 = arith.constant 0 : index
    %c0_5 = arith.constant 0 : index
    %4 = vector.load %arg3[%c0_4, %c0_5] : memref<1x64xf32, #tpu.memory_space<vmem>>, vector<1x64xf32>
    %5 = vector.broadcast %4 : vector<1x64xf32> to vector<256x64xf32>
    %6 = arith.addf %3, %5 : vector<256x64xf32>
    %cst_6 = arith.constant 0.000000e+00 : f32
    %7 = vector.broadcast %cst_6 : f32 to vector<256x64xf32>
    %8 = arith.maximumf %6, %7 : vector<256x64xf32>
    %9 = vector.shape_cast %8 : vector<256x64xf32> to vector<16x16x64xf32>
    %cst_7 = arith.constant 0.000000e+00 : f32
    %10 = vector.broadcast %cst_7 : f32 to vector<18x64xf32>
    %c0_8 = arith.constant 0 : index
    %c0_9 = arith.constant 0 : index
    %c0_10 = arith.constant 0 : index
    %11 = vector.load %arg5[%c0_8, %c0_9, %c0_10] : memref<18x18x64xf32, #tpu.memory_space<vmem>>, vector<1x18x64xf32>
    %12 = vector.shape_cast %11 : vector<1x18x64xf32> to vector<18x64xf32>
    %13 = vector.shape_cast %10 : vector<18x64xf32> to vector<1x18x64xf32>
    tpu.vector_store %arg5[%c0_8, %c0_9, %c0_10], %13 {strides = array<i32>} : memref<18x18x64xf32, #tpu.memory_space<vmem>>, vector<1x18x64xf32>,
    %c17 = arith.constant 17 : index
    %c0_11 = arith.constant 0 : index
    %c0_12 = arith.constant 0 : index
    %14 = vector.load %arg5[%c17, %c0_11, %c0_12] : memref<18x18x64xf32, #tpu.memory_space<vmem>>, vector<1x18x64xf32>
    %15 = vector.shape_cast %14 : vector<1x18x64xf32> to vector<18x64xf32>
    %16 = vector.shape_cast %10 : vector<18x64xf32> to vector<1x18x64xf32>
    tpu.vector_store %arg5[%c17, %c0_11, %c0_12], %16 {strides = array<i32>} : memref<18x18x64xf32, #tpu.memory_space<vmem>>, vector<1x18x64xf32>,
    %cst_13 = arith.constant 0.000000e+00 : f32
    %17 = vector.broadcast %cst_13 : f32 to vector<18x1x64xf32>
    %c0_14 = arith.constant 0 : index
    %c0_15 = arith.constant 0 : index
    %c0_16 = arith.constant 0 : index
    %18 = vector.load %arg5[%c0_14, %c0_15, %c0_16] : memref<18x18x64xf32, #tpu.memory_space<vmem>>, vector<18x1x64xf32>
    tpu.vector_store %arg5[%c0_14, %c0_15, %c0_16], %17 {strides = array<i32>} : memref<18x18x64xf32, #tpu.memory_space<vmem>>, vector<18x1x64xf32>,
    %c0_17 = arith.constant 0 : index
    %c17_18 = arith.constant 17 : index
    %c0_19 = arith.constant 0 : index
    %19 = vector.load %arg5[%c0_17, %c17_18, %c0_19] : memref<18x18x64xf32, #tpu.memory_space<vmem>>, vector<18x1x64xf32>
    tpu.vector_store %arg5[%c0_17, %c17_18, %c0_19], %17 {strides = array<i32>} : memref<18x18x64xf32, #tpu.memory_space<vmem>>, vector<18x1x64xf32>,
    %c1 = arith.constant 1 : index
    %c1_20 = arith.constant 1 : index
    %c0_21 = arith.constant 0 : index
    %20 = vector.load %arg5[%c1, %c1_20, %c0_21] : memref<18x18x64xf32, #tpu.memory_space<vmem>>, vector<16x16x64xf32>
    tpu.vector_store %arg5[%c1, %c1_20, %c0_21], %9 {strides = array<i32>} : memref<18x18x64xf32, #tpu.memory_space<vmem>>, vector<16x16x64xf32>,
    %c0_22 = arith.constant 0 : index
    %c0_23 = arith.constant 0 : index
    %c0_24 = arith.constant 0 : index
    %21 = vector.load %arg5[%c0_22, %c0_23, %c0_24] : memref<18x18x64xf32, #tpu.memory_space<vmem>>, vector<1x18x64xf32>
    %22 = vector.shape_cast %21 : vector<1x18x64xf32> to vector<18x64xf32>
    %c1_25 = arith.constant 1 : index
    %c0_26 = arith.constant 0 : index
    %c0_27 = arith.constant 0 : index
    %23 = vector.load %arg5[%c1_25, %c0_26, %c0_27] : memref<18x18x64xf32, #tpu.memory_space<vmem>>, vector<1x18x64xf32>
    %24 = vector.shape_cast %23 : vector<1x18x64xf32> to vector<18x64xf32>
    %25 = arith.maximumf %22, %24 : vector<18x64xf32>
    %c2 = arith.constant 2 : index
    %c0_28 = arith.constant 0 : index
    %c0_29 = arith.constant 0 : index
    %26 = vector.load %arg5[%c2, %c0_28, %c0_29] : memref<18x18x64xf32, #tpu.memory_space<vmem>>, vector<1x18x64xf32>
    %27 = vector.shape_cast %26 : vector<1x18x64xf32> to vector<18x64xf32>
    %28 = arith.maximumf %25, %27 : vector<18x64xf32>
    %29 = vector.extract_strided_slice %28 {offsets = [0, 0], sizes = [1, 64], strides = [1, 1]} : vector<18x64xf32> to vector<1x64xf32>
    %30 = vector.extract_strided_slice %28 {offsets = [1, 0], sizes = [1, 64], strides = [1, 1]} : vector<18x64xf32> to vector<1x64xf32>
    %31 = arith.maximumf %29, %30 : vector<1x64xf32>
    %32 = vector.extract_strided_slice %28 {offsets = [2, 0], sizes = [1, 64], strides = [1, 1]} : vector<18x64xf32> to vector<1x64xf32>
    %33 = arith.maximumf %31, %32 : vector<1x64xf32>
    %c0_30 = arith.constant 0 : index
    %c0_31 = arith.constant 0 : index
    %34 = vector.load %arg6[%c0_30, %c0_31] : memref<64x64xf32, #tpu.memory_space<vmem>>, vector<1x64xf32>
    tpu.vector_store %arg6[%c0_30, %c0_31], %33 {strides = array<i32>} : memref<64x64xf32, #tpu.memory_space<vmem>>, vector<1x64xf32>,
    %35 = vector.extract_strided_slice %28 {offsets = [2, 0], sizes = [1, 64], strides = [1, 1]} : vector<18x64xf32> to vector<1x64xf32>
    %36 = vector.extract_strided_slice %28 {offsets = [3, 0], sizes = [1, 64], strides = [1, 1]} : vector<18x64xf32> to vector<1x64xf32>
    %37 = arith.maximumf %35, %36 : vector<1x64xf32>
    %38 = vector.extract_strided_slice %28 {offsets = [4, 0], sizes = [1, 64], strides = [1, 1]} : vector<18x64xf32> to vector<1x64xf32>
    %39 = arith.maximumf %37, %38 : vector<1x64xf32>
    %c1_32 = arith.constant 1 : index
    %c0_33 = arith.constant 0 : index
    %40 = vector.load %arg6[%c1_32, %c0_33] : memref<64x64xf32, #tpu.memory_space<vmem>>, vector<1x64xf32>
    tpu.vector_store %arg6[%c1_32, %c0_33], %39 {strides = array<i32>} : memref<64x64xf32, #tpu.memory_space<vmem>>, vector<1x64xf32>,
    %41 = vector.extract_strided_slice %28 {offsets = [4, 0], sizes = [1, 64], strides = [1, 1]} : vector<18x64xf32> to vector<1x64xf32>
    %42 = vector.extract_strided_slice %28 {offsets = [5, 0], sizes = [1, 64], strides = [1, 1]} : vector<18x64xf32> to vector<1x64xf32>
    %43 = arith.maximumf %41, %42 : vector<1x64xf32>
    %44 = vector.extract_strided_slice %28 {offsets = [6, 0], sizes = [1, 64], strides = [1, 1]} : vector<18x64xf32> to vector<1x64xf32>
    %45 = arith.maximumf %43, %44 : vector<1x64xf32>
    %c2_34 = arith.constant 2 : index
    %c0_35 = arith.constant 0 : index
    %46 = vector.load %arg6[%c2_34, %c0_35] : memref<64x64xf32, #tpu.memory_space<vmem>>, vector<1x64xf32>
    tpu.vector_store %arg6[%c2_34, %c0_35], %45 {strides = array<i32>} : memref<64x64xf32, #tpu.memory_space<vmem>>, vector<1x64xf32>,
    %47 = vector.extract_strided_slice %28 {offsets = [6, 0], sizes = [1, 64], strides = [1, 1]} : vector<18x64xf32> to vector<1x64xf32>
    %48 = vector.extract_strided_slice %28 {offsets = [7, 0], sizes = [1, 64], strides = [1, 1]} : vector<18x64xf32> to vector<1x64xf32>
    %49 = arith.maximumf %47, %48 : vector<1x64xf32>
    %50 = vector.extract_strided_slice %28 {offsets = [8, 0], sizes = [1, 64], strides = [1, 1]} : vector<18x64xf32> to vector<1x64xf32>
    %51 = arith.maximumf %49, %50 : vector<1x64xf32>
    %c3 = arith.constant 3 : index
    %c0_36 = arith.constant 0 : index
    %52 = vector.load %arg6[%c3, %c0_36] : memref<64x64xf32, #tpu.memory_space<vmem>>, vector<1x64xf32>
    tpu.vector_store %arg6[%c3, %c0_36], %51 {strides = array<i32>} : memref<64x64xf32, #tpu.memory_space<vmem>>, vector<1x64xf32>,
    %53 = vector.extract_strided_slice %28 {offsets = [8, 0], sizes = [1, 64], strides = [1, 1]} : vector<18x64xf32> to vector<1x64xf32>
    %54 = vector.extract_strided_slice %28 {offsets = [9, 0], sizes = [1, 64], strides = [1, 1]} : vector<18x64xf32> to vector<1x64xf32>
    %55 = arith.maximumf %53, %54 : vector<1x64xf32>
    %56 = vector.extract_strided_slice %28 {offsets = [10, 0], sizes = [1, 64], strides = [1, 1]} : vector<18x64xf32> to vector<1x64xf32>
    %57 = arith.maximumf %55, %56 : vector<1x64xf32>
    %c4 = arith.constant 4 : index
    %c0_37 = arith.constant 0 : index
    %58 = vector.load %arg6[%c4, %c0_37] : memref<64x64xf32, #tpu.memory_space<vmem>>, vector<1x64xf32>
    tpu.vector_store %arg6[%c4, %c0_37], %57 {strides = array<i32>} : memref<64x64xf32, #tpu.memory_space<vmem>>, vector<1x64xf32>,
    %59 = vector.extract_strided_slice %28 {offsets = [10, 0], sizes = [1, 64], strides = [1, 1]} : vector<18x64xf32> to vector<1x64xf32>
    %60 = vector.extract_strided_slice %28 {offsets = [11, 0], sizes = [1, 64], strides = [1, 1]} : vector<18x64xf32> to vector<1x64xf32>
    %61 = arith.maximumf %59, %60 : vector<1x64xf32>
    %62 = vector.extract_strided_slice %28 {offsets = [12, 0], sizes = [1, 64], strides = [1, 1]} : vector<18x64xf32> to vector<1x64xf32>
    %63 = arith.maximumf %61, %62 : vector<1x64xf32>
    %c5 = arith.constant 5 : index
    %c0_38 = arith.constant 0 : index
    %64 = vector.load %arg6[%c5, %c0_38] : memref<64x64xf32, #tpu.memory_space<vmem>>, vector<1x64xf32>
    tpu.vector_store %arg6[%c5, %c0_38], %63 {strides = array<i32>} : memref<64x64xf32, #tpu.memory_space<vmem>>, vector<1x64xf32>,
    %65 = vector.extract_strided_slice %28 {offsets = [12, 0], sizes = [1, 64], strides = [1, 1]} : vector<18x64xf32> to vector<1x64xf32>
    %66 = vector.extract_strided_slice %28 {offsets = [13, 0], sizes = [1, 64], strides = [1, 1]} : vector<18x64xf32> to vector<1x64xf32>
    %67 = arith.maximumf %65, %66 : vector<1x64xf32>
    %68 = vector.extract_strided_slice %28 {offsets = [14, 0], sizes = [1, 64], strides = [1, 1]} : vector<18x64xf32> to vector<1x64xf32>
    %69 = arith.maximumf %67, %68 : vector<1x64xf32>
    %c6 = arith.constant 6 : index
    %c0_39 = arith.constant 0 : index
    %70 = vector.load %arg6[%c6, %c0_39] : memref<64x64xf32, #tpu.memory_space<vmem>>, vector<1x64xf32>
    tpu.vector_store %arg6[%c6, %c0_39], %69 {strides = array<i32>} : memref<64x64xf32, #tpu.memory_space<vmem>>, vector<1x64xf32>,
    %71 = vector.extract_strided_slice %28 {offsets = [14, 0], sizes = [1, 64], strides = [1, 1]} : vector<18x64xf32> to vector<1x64xf32>
    %72 = vector.extract_strided_slice %28 {offsets = [15, 0], sizes = [1, 64], strides = [1, 1]} : vector<18x64xf32> to vector<1x64xf32>
    %73 = arith.maximumf %71, %72 : vector<1x64xf32>
    %74 = vector.extract_strided_slice %28 {offsets = [16, 0], sizes = [1, 64], strides = [1, 1]} : vector<18x64xf32> to vector<1x64xf32>
    %75 = arith.maximumf %73, %74 : vector<1x64xf32>
    %c7 = arith.constant 7 : index
    %c0_40 = arith.constant 0 : index
    %76 = vector.load %arg6[%c7, %c0_40] : memref<64x64xf32, #tpu.memory_space<vmem>>, vector<1x64xf32>
    tpu.vector_store %arg6[%c7, %c0_40], %75 {strides = array<i32>} : memref<64x64xf32, #tpu.memory_space<vmem>>, vector<1x64xf32>,
    %c2_41 = arith.constant 2 : index
    %c0_42 = arith.constant 0 : index
    %c0_43 = arith.constant 0 : index
    %77 = vector.load %arg5[%c2_41, %c0_42, %c0_43] : memref<18x18x64xf32, #tpu.memory_space<vmem>>, vector<1x18x64xf32>
    %78 = vector.shape_cast %77 : vector<1x18x64xf32> to vector<18x64xf32>
    %c3_44 = arith.constant 3 : index
    %c0_45 = arith.constant 0 : index
    %c0_46 = arith.constant 0 : index
    %79 = vector.load %arg5[%c3_44, %c0_45, %c0_46] : memref<18x18x64xf32, #tpu.memory_space<vmem>>, vector<1x18x64xf32>
    %80 = vector.shape_cast %79 : vector<1x18x64xf32> to vector<18x64xf32>
    %81 = arith.maximumf %78, %80 : vector<18x64xf32>
    %c4_47 = arith.constant 4 : index
    %c0_48 = arith.constant 0 : index
    %c0_49 = arith.constant 0 : index
    %82 = vector.load %arg5[%c4_47, %c0_48, %c0_49] : memref<18x18x64xf32, #tpu.memory_space<vmem>>, vector<1x18x64xf32>
    %83 = vector.shape_cast %82 : vector<1x18x64xf32> to vector<18x64xf32>
    %84 = arith.maximumf %81, %83 : vector<18x64xf32>
    %85 = vector.extract_strided_slice %84 {offsets = [0, 0], sizes = [1, 64], strides = [1, 1]} : vector<18x64xf32> to vector<1x64xf32>
    %86 = vector.extract_strided_slice %84 {offsets = [1, 0], sizes = [1, 64], strides = [1, 1]} : vector<18x64xf32> to vector<1x64xf32>
    %87 = arith.maximumf %85, %86 : vector<1x64xf32>
    %88 = vector.extract_strided_slice %84 {offsets = [2, 0], sizes = [1, 64], strides = [1, 1]} : vector<18x64xf32> to vector<1x64xf32>
    %89 = arith.maximumf %87, %88 : vector<1x64xf32>
    %c8 = arith.constant 8 : index
    %c0_50 = arith.constant 0 : index
    %90 = vector.load %arg6[%c8, %c0_50] : memref<64x64xf32, #tpu.memory_space<vmem>>, vector<1x64xf32>
    tpu.vector_store %arg6[%c8, %c0_50], %89 {strides = array<i32>} : memref<64x64xf32, #tpu.memory_space<vmem>>, vector<1x64xf32>,
    %91 = vector.extract_strided_slice %84 {offsets = [2, 0], sizes = [1, 64], strides = [1, 1]} : vector<18x64xf32> to vector<1x64xf32>
    %92 = vector.extract_strided_slice %84 {offsets = [3, 0], sizes = [1, 64], strides = [1, 1]} : vector<18x64xf32> to vector<1x64xf32>
    %93 = arith.maximumf %91, %92 : vector<1x64xf32>
    %94 = vector.extract_strided_slice %84 {offsets = [4, 0], sizes = [1, 64], strides = [1, 1]} : vector<18x64xf32> to vector<1x64xf32>
    %95 = arith.maximumf %93, %94 : vector<1x64xf32>
    %c9 = arith.constant 9 : index
    %c0_51 = arith.constant 0 : index
    %96 = vector.load %arg6[%c9, %c0_51] : memref<64x64xf32, #tpu.memory_space<vmem>>, vector<1x64xf32>
    tpu.vector_store %arg6[%c9, %c0_51], %95 {strides = array<i32>} : memref<64x64xf32, #tpu.memory_space<vmem>>, vector<1x64xf32>,
    %97 = vector.extract_strided_slice %84 {offsets = [4, 0], sizes = [1, 64], strides = [1, 1]} : vector<18x64xf32> to vector<1x64xf32>
    %98 = vector.extract_strided_slice %84 {offsets = [5, 0], sizes = [1, 64], strides = [1, 1]} : vector<18x64xf32> to vector<1x64xf32>
    %99 = arith.maximumf %97, %98 : vector<1x64xf32>
    %100 = vector.extract_strided_slice %84 {offsets = [6, 0], sizes = [1, 64], strides = [1, 1]} : vector<18x64xf32> to vector<1x64xf32>
    %101 = arith.maximumf %99, %100 : vector<1x64xf32>
    %c10 = arith.constant 10 : index
    %c0_52 = arith.constant 0 : index
    %102 = vector.load %arg6[%c10, %c0_52] : memref<64x64xf32, #tpu.memory_space<vmem>>, vector<1x64xf32>
    tpu.vector_store %arg6[%c10, %c0_52], %101 {strides = array<i32>} : memref<64x64xf32, #tpu.memory_space<vmem>>, vector<1x64xf32>,
    %103 = vector.extract_strided_slice %84 {offsets = [6, 0], sizes = [1, 64], strides = [1, 1]} : vector<18x64xf32> to vector<1x64xf32>
    %104 = vector.extract_strided_slice %84 {offsets = [7, 0], sizes = [1, 64], strides = [1, 1]} : vector<18x64xf32> to vector<1x64xf32>
    %105 = arith.maximumf %103, %104 : vector<1x64xf32>
    %106 = vector.extract_strided_slice %84 {offsets = [8, 0], sizes = [1, 64], strides = [1, 1]} : vector<18x64xf32> to vector<1x64xf32>
    %107 = arith.maximumf %105, %106 : vector<1x64xf32>
    %c11 = arith.constant 11 : index
    %c0_53 = arith.constant 0 : index
    %108 = vector.load %arg6[%c11, %c0_53] : memref<64x64xf32, #tpu.memory_space<vmem>>, vector<1x64xf32>
    tpu.vector_store %arg6[%c11, %c0_53], %107 {strides = array<i32>} : memref<64x64xf32, #tpu.memory_space<vmem>>, vector<1x64xf32>,
    %109 = vector.extract_strided_slice %84 {offsets = [8, 0], sizes = [1, 64], strides = [1, 1]} : vector<18x64xf32> to vector<1x64xf32>
    %110 = vector.extract_strided_slice %84 {offsets = [9, 0], sizes = [1, 64], strides = [1, 1]} : vector<18x64xf32> to vector<1x64xf32>
    %111 = arith.maximumf %109, %110 : vector<1x64xf32>
    %112 = vector.extract_strided_slice %84 {offsets = [10, 0], sizes = [1, 64], strides = [1, 1]} : vector<18x64xf32> to vector<1x64xf32>
    %113 = arith.maximumf %111, %112 : vector<1x64xf32>
    %c12 = arith.constant 12 : index
    %c0_54 = arith.constant 0 : index
    %114 = vector.load %arg6[%c12, %c0_54] : memref<64x64xf32, #tpu.memory_space<vmem>>, vector<1x64xf32>
    tpu.vector_store %arg6[%c12, %c0_54], %113 {strides = array<i32>} : memref<64x64xf32, #tpu.memory_space<vmem>>, vector<1x64xf32>,
    %115 = vector.extract_strided_slice %84 {offsets = [10, 0], sizes = [1, 64], strides = [1, 1]} : vector<18x64xf32> to vector<1x64xf32>
    %116 = vector.extract_strided_slice %84 {offsets = [11, 0], sizes = [1, 64], strides = [1, 1]} : vector<18x64xf32> to vector<1x64xf32>
    %117 = arith.maximumf %115, %116 : vector<1x64xf32>
    %118 = vector.extract_strided_slice %84 {offsets = [12, 0], sizes = [1, 64], strides = [1, 1]} : vector<18x64xf32> to vector<1x64xf32>
    %119 = arith.maximumf %117, %118 : vector<1x64xf32>
    %c13 = arith.constant 13 : index
    %c0_55 = arith.constant 0 : index
    %120 = vector.load %arg6[%c13, %c0_55] : memref<64x64xf32, #tpu.memory_space<vmem>>, vector<1x64xf32>
    tpu.vector_store %arg6[%c13, %c0_55], %119 {strides = array<i32>} : memref<64x64xf32, #tpu.memory_space<vmem>>, vector<1x64xf32>,
    %121 = vector.extract_strided_slice %84 {offsets = [12, 0], sizes = [1, 64], strides = [1, 1]} : vector<18x64xf32> to vector<1x64xf32>
    %122 = vector.extract_strided_slice %84 {offsets = [13, 0], sizes = [1, 64], strides = [1, 1]} : vector<18x64xf32> to vector<1x64xf32>
    %123 = arith.maximumf %121, %122 : vector<1x64xf32>
    %124 = vector.extract_strided_slice %84 {offsets = [14, 0], sizes = [1, 64], strides = [1, 1]} : vector<18x64xf32> to vector<1x64xf32>
    %125 = arith.maximumf %123, %124 : vector<1x64xf32>
    %c14 = arith.constant 14 : index
    %c0_56 = arith.constant 0 : index
    %126 = vector.load %arg6[%c14, %c0_56] : memref<64x64xf32, #tpu.memory_space<vmem>>, vector<1x64xf32>
    tpu.vector_store %arg6[%c14, %c0_56], %125 {strides = array<i32>} : memref<64x64xf32, #tpu.memory_space<vmem>>, vector<1x64xf32>,
    %127 = vector.extract_strided_slice %84 {offsets = [14, 0], sizes = [1, 64], strides = [1, 1]} : vector<18x64xf32> to vector<1x64xf32>
    %128 = vector.extract_strided_slice %84 {offsets = [15, 0], sizes = [1, 64], strides = [1, 1]} : vector<18x64xf32> to vector<1x64xf32>
    %129 = arith.maximumf %127, %128 : vector<1x64xf32>
    %130 = vector.extract_strided_slice %84 {offsets = [16, 0], sizes = [1, 64], strides = [1, 1]} : vector<18x64xf32> to vector<1x64xf32>
    %131 = arith.maximumf %129, %130 : vector<1x64xf32>
    %c15 = arith.constant 15 : index
    %c0_57 = arith.constant 0 : index
    %132 = vector.load %arg6[%c15, %c0_57] : memref<64x64xf32, #tpu.memory_space<vmem>>, vector<1x64xf32>
    tpu.vector_store %arg6[%c15, %c0_57], %131 {strides = array<i32>} : memref<64x64xf32, #tpu.memory_space<vmem>>, vector<1x64xf32>,
    %c4_58 = arith.constant 4 : index
    %c0_59 = arith.constant 0 : index
    %c0_60 = arith.constant 0 : index
    %133 = vector.load %arg5[%c4_58, %c0_59, %c0_60] : memref<18x18x64xf32, #tpu.memory_space<vmem>>, vector<1x18x64xf32>
    %134 = vector.shape_cast %133 : vector<1x18x64xf32> to vector<18x64xf32>
    %c5_61 = arith.constant 5 : index
    %c0_62 = arith.constant 0 : index
    %c0_63 = arith.constant 0 : index
    %135 = vector.load %arg5[%c5_61, %c0_62, %c0_63] : memref<18x18x64xf32, #tpu.memory_space<vmem>>, vector<1x18x64xf32>
    %136 = vector.shape_cast %135 : vector<1x18x64xf32> to vector<18x64xf32>
    %137 = arith.maximumf %134, %136 : vector<18x64xf32>
    %c6_64 = arith.constant 6 : index
    %c0_65 = arith.constant 0 : index
    %c0_66 = arith.constant 0 : index
    %138 = vector.load %arg5[%c6_64, %c0_65, %c0_66] : memref<18x18x64xf32, #tpu.memory_space<vmem>>, vector<1x18x64xf32>
    %139 = vector.shape_cast %138 : vector<1x18x64xf32> to vector<18x64xf32>
    %140 = arith.maximumf %137, %139 : vector<18x64xf32>
    %141 = vector.extract_strided_slice %140 {offsets = [0, 0], sizes = [1, 64], strides = [1, 1]} : vector<18x64xf32> to vector<1x64xf32>
    %142 = vector.extract_strided_slice %140 {offsets = [1, 0], sizes = [1, 64], strides = [1, 1]} : vector<18x64xf32> to vector<1x64xf32>
    %143 = arith.maximumf %141, %142 : vector<1x64xf32>
    %144 = vector.extract_strided_slice %140 {offsets = [2, 0], sizes = [1, 64], strides = [1, 1]} : vector<18x64xf32> to vector<1x64xf32>
    %145 = arith.maximumf %143, %144 : vector<1x64xf32>
    %c16 = arith.constant 16 : index
    %c0_67 = arith.constant 0 : index
    %146 = vector.load %arg6[%c16, %c0_67] : memref<64x64xf32, #tpu.memory_space<vmem>>, vector<1x64xf32>
    tpu.vector_store %arg6[%c16, %c0_67], %145 {strides = array<i32>} : memref<64x64xf32, #tpu.memory_space<vmem>>, vector<1x64xf32>,
    %147 = vector.extract_strided_slice %140 {offsets = [2, 0], sizes = [1, 64], strides = [1, 1]} : vector<18x64xf32> to vector<1x64xf32>
    %148 = vector.extract_strided_slice %140 {offsets = [3, 0], sizes = [1, 64], strides = [1, 1]} : vector<18x64xf32> to vector<1x64xf32>
    %149 = arith.maximumf %147, %148 : vector<1x64xf32>
    %150 = vector.extract_strided_slice %140 {offsets = [4, 0], sizes = [1, 64], strides = [1, 1]} : vector<18x64xf32> to vector<1x64xf32>
    %151 = arith.maximumf %149, %150 : vector<1x64xf32>
    %c17_68 = arith.constant 17 : index
    %c0_69 = arith.constant 0 : index
    %152 = vector.load %arg6[%c17_68, %c0_69] : memref<64x64xf32, #tpu.memory_space<vmem>>, vector<1x64xf32>
    tpu.vector_store %arg6[%c17_68, %c0_69], %151 {strides = array<i32>} : memref<64x64xf32, #tpu.memory_space<vmem>>, vector<1x64xf32>,
    %153 = vector.extract_strided_slice %140 {offsets = [4, 0], sizes = [1, 64], strides = [1, 1]} : vector<18x64xf32> to vector<1x64xf32>
    %154 = vector.extract_strided_slice %140 {offsets = [5, 0], sizes = [1, 64], strides = [1, 1]} : vector<18x64xf32> to vector<1x64xf32>
    %155 = arith.maximumf %153, %154 : vector<1x64xf32>
    %156 = vector.extract_strided_slice %140 {offsets = [6, 0], sizes = [1, 64], strides = [1, 1]} : vector<18x64xf32> to vector<1x64xf32>
    %157 = arith.maximumf %155, %156 : vector<1x64xf32>
    %c18 = arith.constant 18 : index
    %c0_70 = arith.constant 0 : index
    %158 = vector.load %arg6[%c18, %c0_70] : memref<64x64xf32, #tpu.memory_space<vmem>>, vector<1x64xf32>
    tpu.vector_store %arg6[%c18, %c0_70], %157 {strides = array<i32>} : memref<64x64xf32, #tpu.memory_space<vmem>>, vector<1x64xf32>,
    %159 = vector.extract_strided_slice %140 {offsets = [6, 0], sizes = [1, 64], strides = [1, 1]} : vector<18x64xf32> to vector<1x64xf32>
    %160 = vector.extract_strided_slice %140 {offsets = [7, 0], sizes = [1, 64], strides = [1, 1]} : vector<18x64xf32> to vector<1x64xf32>
    %161 = arith.maximumf %159, %160 : vector<1x64xf32>
    %162 = vector.extract_strided_slice %140 {offsets = [8, 0], sizes = [1, 64], strides = [1, 1]} : vector<18x64xf32> to vector<1x64xf32>
    %163 = arith.maximumf %161, %162 : vector<1x64xf32>
    %c19 = arith.constant 19 : index
    %c0_71 = arith.constant 0 : index
    %164 = vector.load %arg6[%c19, %c0_71] : memref<64x64xf32, #tpu.memory_space<vmem>>, vector<1x64xf32>
    tpu.vector_store %arg6[%c19, %c0_71], %163 {strides = array<i32>} : memref<64x64xf32, #tpu.memory_space<vmem>>, vector<1x64xf32>,
    %165 = vector.extract_strided_slice %140 {offsets = [8, 0], sizes = [1, 64], strides = [1, 1]} : vector<18x64xf32> to vector<1x64xf32>
    %166 = vector.extract_strided_slice %140 {offsets = [9, 0], sizes = [1, 64], strides = [1, 1]} : vector<18x64xf32> to vector<1x64xf32>
    %167 = arith.maximumf %165, %166 : vector<1x64xf32>
    %168 = vector.extract_strided_slice %140 {offsets = [10, 0], sizes = [1, 64], strides = [1, 1]} : vector<18x64xf32> to vector<1x64xf32>
    %169 = arith.maximumf %167, %168 : vector<1x64xf32>
    %c20 = arith.constant 20 : index
    %c0_72 = arith.constant 0 : index
    %170 = vector.load %arg6[%c20, %c0_72] : memref<64x64xf32, #tpu.memory_space<vmem>>, vector<1x64xf32>
    tpu.vector_store %arg6[%c20, %c0_72], %169 {strides = array<i32>} : memref<64x64xf32, #tpu.memory_space<vmem>>, vector<1x64xf32>,
    %171 = vector.extract_strided_slice %140 {offsets = [10, 0], sizes = [1, 64], strides = [1, 1]} : vector<18x64xf32> to vector<1x64xf32>
    %172 = vector.extract_strided_slice %140 {offsets = [11, 0], sizes = [1, 64], strides = [1, 1]} : vector<18x64xf32> to vector<1x64xf32>
    %173 = arith.maximumf %171, %172 : vector<1x64xf32>
    %174 = vector.extract_strided_slice %140 {offsets = [12, 0], sizes = [1, 64], strides = [1, 1]} : vector<18x64xf32> to vector<1x64xf32>
    %175 = arith.maximumf %173, %174 : vector<1x64xf32>
    %c21 = arith.constant 21 : index
    %c0_73 = arith.constant 0 : index
    %176 = vector.load %arg6[%c21, %c0_73] : memref<64x64xf32, #tpu.memory_space<vmem>>, vector<1x64xf32>
    tpu.vector_store %arg6[%c21, %c0_73], %175 {strides = array<i32>} : memref<64x64xf32, #tpu.memory_space<vmem>>, vector<1x64xf32>,
    %177 = vector.extract_strided_slice %140 {offsets = [12, 0], sizes = [1, 64], strides = [1, 1]} : vector<18x64xf32> to vector<1x64xf32>
    %178 = vector.extract_strided_slice %140 {offsets = [13, 0], sizes = [1, 64], strides = [1, 1]} : vector<18x64xf32> to vector<1x64xf32>
    %179 = arith.maximumf %177, %178 : vector<1x64xf32>
    %180 = vector.extract_strided_slice %140 {offsets = [14, 0], sizes = [1, 64], strides = [1, 1]} : vector<18x64xf32> to vector<1x64xf32>
    %181 = arith.maximumf %179, %180 : vector<1x64xf32>
    %c22 = arith.constant 22 : index
    %c0_74 = arith.constant 0 : index
    %182 = vector.load %arg6[%c22, %c0_74] : memref<64x64xf32, #tpu.memory_space<vmem>>, vector<1x64xf32>
    tpu.vector_store %arg6[%c22, %c0_74], %181 {strides = array<i32>} : memref<64x64xf32, #tpu.memory_space<vmem>>, vector<1x64xf32>,
    %183 = vector.extract_strided_slice %140 {offsets = [14, 0], sizes = [1, 64], strides = [1, 1]} : vector<18x64xf32> to vector<1x64xf32>
    %184 = vector.extract_strided_slice %140 {offsets = [15, 0], sizes = [1, 64], strides = [1, 1]} : vector<18x64xf32> to vector<1x64xf32>
    %185 = arith.maximumf %183, %184 : vector<1x64xf32>
    %186 = vector.extract_strided_slice %140 {offsets = [16, 0], sizes = [1, 64], strides = [1, 1]} : vector<18x64xf32> to vector<1x64xf32>
    %187 = arith.maximumf %185, %186 : vector<1x64xf32>
    %c23 = arith.constant 23 : index
    %c0_75 = arith.constant 0 : index
    %188 = vector.load %arg6[%c23, %c0_75] : memref<64x64xf32, #tpu.memory_space<vmem>>, vector<1x64xf32>
    tpu.vector_store %arg6[%c23, %c0_75], %187 {strides = array<i32>} : memref<64x64xf32, #tpu.memory_space<vmem>>, vector<1x64xf32>,
    %c6_76 = arith.constant 6 : index
    %c0_77 = arith.constant 0 : index
    %c0_78 = arith.constant 0 : index
    %189 = vector.load %arg5[%c6_76, %c0_77, %c0_78] : memref<18x18x64xf32, #tpu.memory_space<vmem>>, vector<1x18x64xf32>
    %190 = vector.shape_cast %189 : vector<1x18x64xf32> to vector<18x64xf32>
    %c7_79 = arith.constant 7 : index
    %c0_80 = arith.constant 0 : index
    %c0_81 = arith.constant 0 : index
    %191 = vector.load %arg5[%c7_79, %c0_80, %c0_81] : memref<18x18x64xf32, #tpu.memory_space<vmem>>, vector<1x18x64xf32>
    %192 = vector.shape_cast %191 : vector<1x18x64xf32> to vector<18x64xf32>
    %193 = arith.maximumf %190, %192 : vector<18x64xf32>
    %c8_82 = arith.constant 8 : index
    %c0_83 = arith.constant 0 : index
    %c0_84 = arith.constant 0 : index
    %194 = vector.load %arg5[%c8_82, %c0_83, %c0_84] : memref<18x18x64xf32, #tpu.memory_space<vmem>>, vector<1x18x64xf32>
    %195 = vector.shape_cast %194 : vector<1x18x64xf32> to vector<18x64xf32>
    %196 = arith.maximumf %193, %195 : vector<18x64xf32>
    %197 = vector.extract_strided_slice %196 {offsets = [0, 0], sizes = [1, 64], strides = [1, 1]} : vector<18x64xf32> to vector<1x64xf32>
    %198 = vector.extract_strided_slice %196 {offsets = [1, 0], sizes = [1, 64], strides = [1, 1]} : vector<18x64xf32> to vector<1x64xf32>
    %199 = arith.maximumf %197, %198 : vector<1x64xf32>
    %200 = vector.extract_strided_slice %196 {offsets = [2, 0], sizes = [1, 64], strides = [1, 1]} : vector<18x64xf32> to vector<1x64xf32>
    %201 = arith.maximumf %199, %200 : vector<1x64xf32>
    %c24 = arith.constant 24 : index
    %c0_85 = arith.constant 0 : index
    %202 = vector.load %arg6[%c24, %c0_85] : memref<64x64xf32, #tpu.memory_space<vmem>>, vector<1x64xf32>
    tpu.vector_store %arg6[%c24, %c0_85], %201 {strides = array<i32>} : memref<64x64xf32, #tpu.memory_space<vmem>>, vector<1x64xf32>,
    %203 = vector.extract_strided_slice %196 {offsets = [2, 0], sizes = [1, 64], strides = [1, 1]} : vector<18x64xf32> to vector<1x64xf32>
    %204 = vector.extract_strided_slice %196 {offsets = [3, 0], sizes = [1, 64], strides = [1, 1]} : vector<18x64xf32> to vector<1x64xf32>
    %205 = arith.maximumf %203, %204 : vector<1x64xf32>
    %206 = vector.extract_strided_slice %196 {offsets = [4, 0], sizes = [1, 64], strides = [1, 1]} : vector<18x64xf32> to vector<1x64xf32>
    %207 = arith.maximumf %205, %206 : vector<1x64xf32>
    %c25 = arith.constant 25 : index
    %c0_86 = arith.constant 0 : index
    %208 = vector.load %arg6[%c25, %c0_86] : memref<64x64xf32, #tpu.memory_space<vmem>>, vector<1x64xf32>
    tpu.vector_store %arg6[%c25, %c0_86], %207 {strides = array<i32>} : memref<64x64xf32, #tpu.memory_space<vmem>>, vector<1x64xf32>,
    %209 = vector.extract_strided_slice %196 {offsets = [4, 0], sizes = [1, 64], strides = [1, 1]} : vector<18x64xf32> to vector<1x64xf32>
    %210 = vector.extract_strided_slice %196 {offsets = [5, 0], sizes = [1, 64], strides = [1, 1]} : vector<18x64xf32> to vector<1x64xf32>
    %211 = arith.maximumf %209, %210 : vector<1x64xf32>
    %212 = vector.extract_strided_slice %196 {offsets = [6, 0], sizes = [1, 64], strides = [1, 1]} : vector<18x64xf32> to vector<1x64xf32>
    %213 = arith.maximumf %211, %212 : vector<1x64xf32>
    %c26 = arith.constant 26 : index
    %c0_87 = arith.constant 0 : index
    %214 = vector.load %arg6[%c26, %c0_87] : memref<64x64xf32, #tpu.memory_space<vmem>>, vector<1x64xf32>
    tpu.vector_store %arg6[%c26, %c0_87], %213 {strides = array<i32>} : memref<64x64xf32, #tpu.memory_space<vmem>>, vector<1x64xf32>,
    %215 = vector.extract_strided_slice %196 {offsets = [6, 0], sizes = [1, 64], strides = [1, 1]} : vector<18x64xf32> to vector<1x64xf32>
    %216 = vector.extract_strided_slice %196 {offsets = [7, 0], sizes = [1, 64], strides = [1, 1]} : vector<18x64xf32> to vector<1x64xf32>
    %217 = arith.maximumf %215, %216 : vector<1x64xf32>
    %218 = vector.extract_strided_slice %196 {offsets = [8, 0], sizes = [1, 64], strides = [1, 1]} : vector<18x64xf32> to vector<1x64xf32>
    %219 = arith.maximumf %217, %218 : vector<1x64xf32>
    %c27 = arith.constant 27 : index
    %c0_88 = arith.constant 0 : index
    %220 = vector.load %arg6[%c27, %c0_88] : memref<64x64xf32, #tpu.memory_space<vmem>>, vector<1x64xf32>
    tpu.vector_store %arg6[%c27, %c0_88], %219 {strides = array<i32>} : memref<64x64xf32, #tpu.memory_space<vmem>>, vector<1x64xf32>,
    %221 = vector.extract_strided_slice %196 {offsets = [8, 0], sizes = [1, 64], strides = [1, 1]} : vector<18x64xf32> to vector<1x64xf32>
    %222 = vector.extract_strided_slice %196 {offsets = [9, 0], sizes = [1, 64], strides = [1, 1]} : vector<18x64xf32> to vector<1x64xf32>
    %223 = arith.maximumf %221, %222 : vector<1x64xf32>
    %224 = vector.extract_strided_slice %196 {offsets = [10, 0], sizes = [1, 64], strides = [1, 1]} : vector<18x64xf32> to vector<1x64xf32>
    %225 = arith.maximumf %223, %224 : vector<1x64xf32>
    %c28 = arith.constant 28 : index
    %c0_89 = arith.constant 0 : index
    %226 = vector.load %arg6[%c28, %c0_89] : memref<64x64xf32, #tpu.memory_space<vmem>>, vector<1x64xf32>
    tpu.vector_store %arg6[%c28, %c0_89], %225 {strides = array<i32>} : memref<64x64xf32, #tpu.memory_space<vmem>>, vector<1x64xf32>,
    %227 = vector.extract_strided_slice %196 {offsets = [10, 0], sizes = [1, 64], strides = [1, 1]} : vector<18x64xf32> to vector<1x64xf32>
    %228 = vector.extract_strided_slice %196 {offsets = [11, 0], sizes = [1, 64], strides = [1, 1]} : vector<18x64xf32> to vector<1x64xf32>
    %229 = arith.maximumf %227, %228 : vector<1x64xf32>
    %230 = vector.extract_strided_slice %196 {offsets = [12, 0], sizes = [1, 64], strides = [1, 1]} : vector<18x64xf32> to vector<1x64xf32>
    %231 = arith.maximumf %229, %230 : vector<1x64xf32>
    %c29 = arith.constant 29 : index
    %c0_90 = arith.constant 0 : index
    %232 = vector.load %arg6[%c29, %c0_90] : memref<64x64xf32, #tpu.memory_space<vmem>>, vector<1x64xf32>
    tpu.vector_store %arg6[%c29, %c0_90], %231 {strides = array<i32>} : memref<64x64xf32, #tpu.memory_space<vmem>>, vector<1x64xf32>,
    %233 = vector.extract_strided_slice %196 {offsets = [12, 0], sizes = [1, 64], strides = [1, 1]} : vector<18x64xf32> to vector<1x64xf32>
    %234 = vector.extract_strided_slice %196 {offsets = [13, 0], sizes = [1, 64], strides = [1, 1]} : vector<18x64xf32> to vector<1x64xf32>
    %235 = arith.maximumf %233, %234 : vector<1x64xf32>
    %236 = vector.extract_strided_slice %196 {offsets = [14, 0], sizes = [1, 64], strides = [1, 1]} : vector<18x64xf32> to vector<1x64xf32>
    %237 = arith.maximumf %235, %236 : vector<1x64xf32>
    %c30 = arith.constant 30 : index
    %c0_91 = arith.constant 0 : index
    %238 = vector.load %arg6[%c30, %c0_91] : memref<64x64xf32, #tpu.memory_space<vmem>>, vector<1x64xf32>
    tpu.vector_store %arg6[%c30, %c0_91], %237 {strides = array<i32>} : memref<64x64xf32, #tpu.memory_space<vmem>>, vector<1x64xf32>,
    %239 = vector.extract_strided_slice %196 {offsets = [14, 0], sizes = [1, 64], strides = [1, 1]} : vector<18x64xf32> to vector<1x64xf32>
    %240 = vector.extract_strided_slice %196 {offsets = [15, 0], sizes = [1, 64], strides = [1, 1]} : vector<18x64xf32> to vector<1x64xf32>
    %241 = arith.maximumf %239, %240 : vector<1x64xf32>
    %242 = vector.extract_strided_slice %196 {offsets = [16, 0], sizes = [1, 64], strides = [1, 1]} : vector<18x64xf32> to vector<1x64xf32>
    %243 = arith.maximumf %241, %242 : vector<1x64xf32>
    %c31 = arith.constant 31 : index
    %c0_92 = arith.constant 0 : index
    %244 = vector.load %arg6[%c31, %c0_92] : memref<64x64xf32, #tpu.memory_space<vmem>>, vector<1x64xf32>
    tpu.vector_store %arg6[%c31, %c0_92], %243 {strides = array<i32>} : memref<64x64xf32, #tpu.memory_space<vmem>>, vector<1x64xf32>,
    %c8_93 = arith.constant 8 : index
    %c0_94 = arith.constant 0 : index
    %c0_95 = arith.constant 0 : index
    %245 = vector.load %arg5[%c8_93, %c0_94, %c0_95] : memref<18x18x64xf32, #tpu.memory_space<vmem>>, vector<1x18x64xf32>
    %246 = vector.shape_cast %245 : vector<1x18x64xf32> to vector<18x64xf32>
    %c9_96 = arith.constant 9 : index
    %c0_97 = arith.constant 0 : index
    %c0_98 = arith.constant 0 : index
    %247 = vector.load %arg5[%c9_96, %c0_97, %c0_98] : memref<18x18x64xf32, #tpu.memory_space<vmem>>, vector<1x18x64xf32>
    %248 = vector.shape_cast %247 : vector<1x18x64xf32> to vector<18x64xf32>
    %249 = arith.maximumf %246, %248 : vector<18x64xf32>
    %c10_99 = arith.constant 10 : index
    %c0_100 = arith.constant 0 : index
    %c0_101 = arith.constant 0 : index
    %250 = vector.load %arg5[%c10_99, %c0_100, %c0_101] : memref<18x18x64xf32, #tpu.memory_space<vmem>>, vector<1x18x64xf32>
    %251 = vector.shape_cast %250 : vector<1x18x64xf32> to vector<18x64xf32>
    %252 = arith.maximumf %249, %251 : vector<18x64xf32>
    %253 = vector.extract_strided_slice %252 {offsets = [0, 0], sizes = [1, 64], strides = [1, 1]} : vector<18x64xf32> to vector<1x64xf32>
    %254 = vector.extract_strided_slice %252 {offsets = [1, 0], sizes = [1, 64], strides = [1, 1]} : vector<18x64xf32> to vector<1x64xf32>
    %255 = arith.maximumf %253, %254 : vector<1x64xf32>
    %256 = vector.extract_strided_slice %252 {offsets = [2, 0], sizes = [1, 64], strides = [1, 1]} : vector<18x64xf32> to vector<1x64xf32>
    %257 = arith.maximumf %255, %256 : vector<1x64xf32>
    %c32 = arith.constant 32 : index
    %c0_102 = arith.constant 0 : index
    %258 = vector.load %arg6[%c32, %c0_102] : memref<64x64xf32, #tpu.memory_space<vmem>>, vector<1x64xf32>
    tpu.vector_store %arg6[%c32, %c0_102], %257 {strides = array<i32>} : memref<64x64xf32, #tpu.memory_space<vmem>>, vector<1x64xf32>,
    %259 = vector.extract_strided_slice %252 {offsets = [2, 0], sizes = [1, 64], strides = [1, 1]} : vector<18x64xf32> to vector<1x64xf32>
    %260 = vector.extract_strided_slice %252 {offsets = [3, 0], sizes = [1, 64], strides = [1, 1]} : vector<18x64xf32> to vector<1x64xf32>
    %261 = arith.maximumf %259, %260 : vector<1x64xf32>
    %262 = vector.extract_strided_slice %252 {offsets = [4, 0], sizes = [1, 64], strides = [1, 1]} : vector<18x64xf32> to vector<1x64xf32>
    %263 = arith.maximumf %261, %262 : vector<1x64xf32>
    %c33 = arith.constant 33 : index
    %c0_103 = arith.constant 0 : index
    %264 = vector.load %arg6[%c33, %c0_103] : memref<64x64xf32, #tpu.memory_space<vmem>>, vector<1x64xf32>
    tpu.vector_store %arg6[%c33, %c0_103], %263 {strides = array<i32>} : memref<64x64xf32, #tpu.memory_space<vmem>>, vector<1x64xf32>,
    %265 = vector.extract_strided_slice %252 {offsets = [4, 0], sizes = [1, 64], strides = [1, 1]} : vector<18x64xf32> to vector<1x64xf32>
    %266 = vector.extract_strided_slice %252 {offsets = [5, 0], sizes = [1, 64], strides = [1, 1]} : vector<18x64xf32> to vector<1x64xf32>
    %267 = arith.maximumf %265, %266 : vector<1x64xf32>
    %268 = vector.extract_strided_slice %252 {offsets = [6, 0], sizes = [1, 64], strides = [1, 1]} : vector<18x64xf32> to vector<1x64xf32>
    %269 = arith.maximumf %267, %268 : vector<1x64xf32>
    %c34 = arith.constant 34 : index
    %c0_104 = arith.constant 0 : index
    %270 = vector.load %arg6[%c34, %c0_104] : memref<64x64xf32, #tpu.memory_space<vmem>>, vector<1x64xf32>
    tpu.vector_store %arg6[%c34, %c0_104], %269 {strides = array<i32>} : memref<64x64xf32, #tpu.memory_space<vmem>>, vector<1x64xf32>,
    %271 = vector.extract_strided_slice %252 {offsets = [6, 0], sizes = [1, 64], strides = [1, 1]} : vector<18x64xf32> to vector<1x64xf32>
    %272 = vector.extract_strided_slice %252 {offsets = [7, 0], sizes = [1, 64], strides = [1, 1]} : vector<18x64xf32> to vector<1x64xf32>
    %273 = arith.maximumf %271, %272 : vector<1x64xf32>
    %274 = vector.extract_strided_slice %252 {offsets = [8, 0], sizes = [1, 64], strides = [1, 1]} : vector<18x64xf32> to vector<1x64xf32>
    %275 = arith.maximumf %273, %274 : vector<1x64xf32>
    %c35 = arith.constant 35 : index
    %c0_105 = arith.constant 0 : index
    %276 = vector.load %arg6[%c35, %c0_105] : memref<64x64xf32, #tpu.memory_space<vmem>>, vector<1x64xf32>
    tpu.vector_store %arg6[%c35, %c0_105], %275 {strides = array<i32>} : memref<64x64xf32, #tpu.memory_space<vmem>>, vector<1x64xf32>,
    %277 = vector.extract_strided_slice %252 {offsets = [8, 0], sizes = [1, 64], strides = [1, 1]} : vector<18x64xf32> to vector<1x64xf32>
    %278 = vector.extract_strided_slice %252 {offsets = [9, 0], sizes = [1, 64], strides = [1, 1]} : vector<18x64xf32> to vector<1x64xf32>
    %279 = arith.maximumf %277, %278 : vector<1x64xf32>
    %280 = vector.extract_strided_slice %252 {offsets = [10, 0], sizes = [1, 64], strides = [1, 1]} : vector<18x64xf32> to vector<1x64xf32>
    %281 = arith.maximumf %279, %280 : vector<1x64xf32>
    %c36 = arith.constant 36 : index
    %c0_106 = arith.constant 0 : index
    %282 = vector.load %arg6[%c36, %c0_106] : memref<64x64xf32, #tpu.memory_space<vmem>>, vector<1x64xf32>
    tpu.vector_store %arg6[%c36, %c0_106], %281 {strides = array<i32>} : memref<64x64xf32, #tpu.memory_space<vmem>>, vector<1x64xf32>,
    %283 = vector.extract_strided_slice %252 {offsets = [10, 0], sizes = [1, 64], strides = [1, 1]} : vector<18x64xf32> to vector<1x64xf32>
    %284 = vector.extract_strided_slice %252 {offsets = [11, 0], sizes = [1, 64], strides = [1, 1]} : vector<18x64xf32> to vector<1x64xf32>
    %285 = arith.maximumf %283, %284 : vector<1x64xf32>
    %286 = vector.extract_strided_slice %252 {offsets = [12, 0], sizes = [1, 64], strides = [1, 1]} : vector<18x64xf32> to vector<1x64xf32>
    %287 = arith.maximumf %285, %286 : vector<1x64xf32>
    %c37 = arith.constant 37 : index
    %c0_107 = arith.constant 0 : index
    %288 = vector.load %arg6[%c37, %c0_107] : memref<64x64xf32, #tpu.memory_space<vmem>>, vector<1x64xf32>
    tpu.vector_store %arg6[%c37, %c0_107], %287 {strides = array<i32>} : memref<64x64xf32, #tpu.memory_space<vmem>>, vector<1x64xf32>,
    %289 = vector.extract_strided_slice %252 {offsets = [12, 0], sizes = [1, 64], strides = [1, 1]} : vector<18x64xf32> to vector<1x64xf32>
    %290 = vector.extract_strided_slice %252 {offsets = [13, 0], sizes = [1, 64], strides = [1, 1]} : vector<18x64xf32> to vector<1x64xf32>
    %291 = arith.maximumf %289, %290 : vector<1x64xf32>
    %292 = vector.extract_strided_slice %252 {offsets = [14, 0], sizes = [1, 64], strides = [1, 1]} : vector<18x64xf32> to vector<1x64xf32>
    %293 = arith.maximumf %291, %292 : vector<1x64xf32>
    %c38 = arith.constant 38 : index
    %c0_108 = arith.constant 0 : index
    %294 = vector.load %arg6[%c38, %c0_108] : memref<64x64xf32, #tpu.memory_space<vmem>>, vector<1x64xf32>
    tpu.vector_store %arg6[%c38, %c0_108], %293 {strides = array<i32>} : memref<64x64xf32, #tpu.memory_space<vmem>>, vector<1x64xf32>,
    %295 = vector.extract_strided_slice %252 {offsets = [14, 0], sizes = [1, 64], strides = [1, 1]} : vector<18x64xf32> to vector<1x64xf32>
    %296 = vector.extract_strided_slice %252 {offsets = [15, 0], sizes = [1, 64], strides = [1, 1]} : vector<18x64xf32> to vector<1x64xf32>
    %297 = arith.maximumf %295, %296 : vector<1x64xf32>
    %298 = vector.extract_strided_slice %252 {offsets = [16, 0], sizes = [1, 64], strides = [1, 1]} : vector<18x64xf32> to vector<1x64xf32>
    %299 = arith.maximumf %297, %298 : vector<1x64xf32>
    %c39 = arith.constant 39 : index
    %c0_109 = arith.constant 0 : index
    %300 = vector.load %arg6[%c39, %c0_109] : memref<64x64xf32, #tpu.memory_space<vmem>>, vector<1x64xf32>
    tpu.vector_store %arg6[%c39, %c0_109], %299 {strides = array<i32>} : memref<64x64xf32, #tpu.memory_space<vmem>>, vector<1x64xf32>,
    %c10_110 = arith.constant 10 : index
    %c0_111 = arith.constant 0 : index
    %c0_112 = arith.constant 0 : index
    %301 = vector.load %arg5[%c10_110, %c0_111, %c0_112] : memref<18x18x64xf32, #tpu.memory_space<vmem>>, vector<1x18x64xf32>
    %302 = vector.shape_cast %301 : vector<1x18x64xf32> to vector<18x64xf32>
    %c11_113 = arith.constant 11 : index
    %c0_114 = arith.constant 0 : index
    %c0_115 = arith.constant 0 : index
    %303 = vector.load %arg5[%c11_113, %c0_114, %c0_115] : memref<18x18x64xf32, #tpu.memory_space<vmem>>, vector<1x18x64xf32>
    %304 = vector.shape_cast %303 : vector<1x18x64xf32> to vector<18x64xf32>
    %305 = arith.maximumf %302, %304 : vector<18x64xf32>
    %c12_116 = arith.constant 12 : index
    %c0_117 = arith.constant 0 : index
    %c0_118 = arith.constant 0 : index
    %306 = vector.load %arg5[%c12_116, %c0_117, %c0_118] : memref<18x18x64xf32, #tpu.memory_space<vmem>>, vector<1x18x64xf32>
    %307 = vector.shape_cast %306 : vector<1x18x64xf32> to vector<18x64xf32>
    %308 = arith.maximumf %305, %307 : vector<18x64xf32>
    %309 = vector.extract_strided_slice %308 {offsets = [0, 0], sizes = [1, 64], strides = [1, 1]} : vector<18x64xf32> to vector<1x64xf32>
    %310 = vector.extract_strided_slice %308 {offsets = [1, 0], sizes = [1, 64], strides = [1, 1]} : vector<18x64xf32> to vector<1x64xf32>
    %311 = arith.maximumf %309, %310 : vector<1x64xf32>
    %312 = vector.extract_strided_slice %308 {offsets = [2, 0], sizes = [1, 64], strides = [1, 1]} : vector<18x64xf32> to vector<1x64xf32>
    %313 = arith.maximumf %311, %312 : vector<1x64xf32>
    %c40 = arith.constant 40 : index
    %c0_119 = arith.constant 0 : index
    %314 = vector.load %arg6[%c40, %c0_119] : memref<64x64xf32, #tpu.memory_space<vmem>>, vector<1x64xf32>
    tpu.vector_store %arg6[%c40, %c0_119], %313 {strides = array<i32>} : memref<64x64xf32, #tpu.memory_space<vmem>>, vector<1x64xf32>,
    %315 = vector.extract_strided_slice %308 {offsets = [2, 0], sizes = [1, 64], strides = [1, 1]} : vector<18x64xf32> to vector<1x64xf32>
    %316 = vector.extract_strided_slice %308 {offsets = [3, 0], sizes = [1, 64], strides = [1, 1]} : vector<18x64xf32> to vector<1x64xf32>
    %317 = arith.maximumf %315, %316 : vector<1x64xf32>
    %318 = vector.extract_strided_slice %308 {offsets = [4, 0], sizes = [1, 64], strides = [1, 1]} : vector<18x64xf32> to vector<1x64xf32>
    %319 = arith.maximumf %317, %318 : vector<1x64xf32>
    %c41 = arith.constant 41 : index
    %c0_120 = arith.constant 0 : index
    %320 = vector.load %arg6[%c41, %c0_120] : memref<64x64xf32, #tpu.memory_space<vmem>>, vector<1x64xf32>
    tpu.vector_store %arg6[%c41, %c0_120], %319 {strides = array<i32>} : memref<64x64xf32, #tpu.memory_space<vmem>>, vector<1x64xf32>,
    %321 = vector.extract_strided_slice %308 {offsets = [4, 0], sizes = [1, 64], strides = [1, 1]} : vector<18x64xf32> to vector<1x64xf32>
    %322 = vector.extract_strided_slice %308 {offsets = [5, 0], sizes = [1, 64], strides = [1, 1]} : vector<18x64xf32> to vector<1x64xf32>
    %323 = arith.maximumf %321, %322 : vector<1x64xf32>
    %324 = vector.extract_strided_slice %308 {offsets = [6, 0], sizes = [1, 64], strides = [1, 1]} : vector<18x64xf32> to vector<1x64xf32>
    %325 = arith.maximumf %323, %324 : vector<1x64xf32>
    %c42 = arith.constant 42 : index
    %c0_121 = arith.constant 0 : index
    %326 = vector.load %arg6[%c42, %c0_121] : memref<64x64xf32, #tpu.memory_space<vmem>>, vector<1x64xf32>
    tpu.vector_store %arg6[%c42, %c0_121], %325 {strides = array<i32>} : memref<64x64xf32, #tpu.memory_space<vmem>>, vector<1x64xf32>,
    %327 = vector.extract_strided_slice %308 {offsets = [6, 0], sizes = [1, 64], strides = [1, 1]} : vector<18x64xf32> to vector<1x64xf32>
    %328 = vector.extract_strided_slice %308 {offsets = [7, 0], sizes = [1, 64], strides = [1, 1]} : vector<18x64xf32> to vector<1x64xf32>
    %329 = arith.maximumf %327, %328 : vector<1x64xf32>
    %330 = vector.extract_strided_slice %308 {offsets = [8, 0], sizes = [1, 64], strides = [1, 1]} : vector<18x64xf32> to vector<1x64xf32>
    %331 = arith.maximumf %329, %330 : vector<1x64xf32>
    %c43 = arith.constant 43 : index
    %c0_122 = arith.constant 0 : index
    %332 = vector.load %arg6[%c43, %c0_122] : memref<64x64xf32, #tpu.memory_space<vmem>>, vector<1x64xf32>
    tpu.vector_store %arg6[%c43, %c0_122], %331 {strides = array<i32>} : memref<64x64xf32, #tpu.memory_space<vmem>>, vector<1x64xf32>,
    %333 = vector.extract_strided_slice %308 {offsets = [8, 0], sizes = [1, 64], strides = [1, 1]} : vector<18x64xf32> to vector<1x64xf32>
    %334 = vector.extract_strided_slice %308 {offsets = [9, 0], sizes = [1, 64], strides = [1, 1]} : vector<18x64xf32> to vector<1x64xf32>
    %335 = arith.maximumf %333, %334 : vector<1x64xf32>
    %336 = vector.extract_strided_slice %308 {offsets = [10, 0], sizes = [1, 64], strides = [1, 1]} : vector<18x64xf32> to vector<1x64xf32>
    %337 = arith.maximumf %335, %336 : vector<1x64xf32>
    %c44 = arith.constant 44 : index
    %c0_123 = arith.constant 0 : index
    %338 = vector.load %arg6[%c44, %c0_123] : memref<64x64xf32, #tpu.memory_space<vmem>>, vector<1x64xf32>
    tpu.vector_store %arg6[%c44, %c0_123], %337 {strides = array<i32>} : memref<64x64xf32, #tpu.memory_space<vmem>>, vector<1x64xf32>,
    %339 = vector.extract_strided_slice %308 {offsets = [10, 0], sizes = [1, 64], strides = [1, 1]} : vector<18x64xf32> to vector<1x64xf32>
    %340 = vector.extract_strided_slice %308 {offsets = [11, 0], sizes = [1, 64], strides = [1, 1]} : vector<18x64xf32> to vector<1x64xf32>
    %341 = arith.maximumf %339, %340 : vector<1x64xf32>
    %342 = vector.extract_strided_slice %308 {offsets = [12, 0], sizes = [1, 64], strides = [1, 1]} : vector<18x64xf32> to vector<1x64xf32>
    %343 = arith.maximumf %341, %342 : vector<1x64xf32>
    %c45 = arith.constant 45 : index
    %c0_124 = arith.constant 0 : index
    %344 = vector.load %arg6[%c45, %c0_124] : memref<64x64xf32, #tpu.memory_space<vmem>>, vector<1x64xf32>
    tpu.vector_store %arg6[%c45, %c0_124], %343 {strides = array<i32>} : memref<64x64xf32, #tpu.memory_space<vmem>>, vector<1x64xf32>,
    %345 = vector.extract_strided_slice %308 {offsets = [12, 0], sizes = [1, 64], strides = [1, 1]} : vector<18x64xf32> to vector<1x64xf32>
    %346 = vector.extract_strided_slice %308 {offsets = [13, 0], sizes = [1, 64], strides = [1, 1]} : vector<18x64xf32> to vector<1x64xf32>
    %347 = arith.maximumf %345, %346 : vector<1x64xf32>
    %348 = vector.extract_strided_slice %308 {offsets = [14, 0], sizes = [1, 64], strides = [1, 1]} : vector<18x64xf32> to vector<1x64xf32>
    %349 = arith.maximumf %347, %348 : vector<1x64xf32>
    %c46 = arith.constant 46 : index
    %c0_125 = arith.constant 0 : index
    %350 = vector.load %arg6[%c46, %c0_125] : memref<64x64xf32, #tpu.memory_space<vmem>>, vector<1x64xf32>
    tpu.vector_store %arg6[%c46, %c0_125], %349 {strides = array<i32>} : memref<64x64xf32, #tpu.memory_space<vmem>>, vector<1x64xf32>,
    %351 = vector.extract_strided_slice %308 {offsets = [14, 0], sizes = [1, 64], strides = [1, 1]} : vector<18x64xf32> to vector<1x64xf32>
    %352 = vector.extract_strided_slice %308 {offsets = [15, 0], sizes = [1, 64], strides = [1, 1]} : vector<18x64xf32> to vector<1x64xf32>
    %353 = arith.maximumf %351, %352 : vector<1x64xf32>
    %354 = vector.extract_strided_slice %308 {offsets = [16, 0], sizes = [1, 64], strides = [1, 1]} : vector<18x64xf32> to vector<1x64xf32>
    %355 = arith.maximumf %353, %354 : vector<1x64xf32>
    %c47 = arith.constant 47 : index
    %c0_126 = arith.constant 0 : index
    %356 = vector.load %arg6[%c47, %c0_126] : memref<64x64xf32, #tpu.memory_space<vmem>>, vector<1x64xf32>
    tpu.vector_store %arg6[%c47, %c0_126], %355 {strides = array<i32>} : memref<64x64xf32, #tpu.memory_space<vmem>>, vector<1x64xf32>,
    %c12_127 = arith.constant 12 : index
    %c0_128 = arith.constant 0 : index
    %c0_129 = arith.constant 0 : index
    %357 = vector.load %arg5[%c12_127, %c0_128, %c0_129] : memref<18x18x64xf32, #tpu.memory_space<vmem>>, vector<1x18x64xf32>
    %358 = vector.shape_cast %357 : vector<1x18x64xf32> to vector<18x64xf32>
    %c13_130 = arith.constant 13 : index
    %c0_131 = arith.constant 0 : index
    %c0_132 = arith.constant 0 : index
    %359 = vector.load %arg5[%c13_130, %c0_131, %c0_132] : memref<18x18x64xf32, #tpu.memory_space<vmem>>, vector<1x18x64xf32>
    %360 = vector.shape_cast %359 : vector<1x18x64xf32> to vector<18x64xf32>
    %361 = arith.maximumf %358, %360 : vector<18x64xf32>
    %c14_133 = arith.constant 14 : index
    %c0_134 = arith.constant 0 : index
    %c0_135 = arith.constant 0 : index
    %362 = vector.load %arg5[%c14_133, %c0_134, %c0_135] : memref<18x18x64xf32, #tpu.memory_space<vmem>>, vector<1x18x64xf32>
    %363 = vector.shape_cast %362 : vector<1x18x64xf32> to vector<18x64xf32>
    %364 = arith.maximumf %361, %363 : vector<18x64xf32>
    %365 = vector.extract_strided_slice %364 {offsets = [0, 0], sizes = [1, 64], strides = [1, 1]} : vector<18x64xf32> to vector<1x64xf32>
    %366 = vector.extract_strided_slice %364 {offsets = [1, 0], sizes = [1, 64], strides = [1, 1]} : vector<18x64xf32> to vector<1x64xf32>
    %367 = arith.maximumf %365, %366 : vector<1x64xf32>
    %368 = vector.extract_strided_slice %364 {offsets = [2, 0], sizes = [1, 64], strides = [1, 1]} : vector<18x64xf32> to vector<1x64xf32>
    %369 = arith.maximumf %367, %368 : vector<1x64xf32>
    %c48 = arith.constant 48 : index
    %c0_136 = arith.constant 0 : index
    %370 = vector.load %arg6[%c48, %c0_136] : memref<64x64xf32, #tpu.memory_space<vmem>>, vector<1x64xf32>
    tpu.vector_store %arg6[%c48, %c0_136], %369 {strides = array<i32>} : memref<64x64xf32, #tpu.memory_space<vmem>>, vector<1x64xf32>,
    %371 = vector.extract_strided_slice %364 {offsets = [2, 0], sizes = [1, 64], strides = [1, 1]} : vector<18x64xf32> to vector<1x64xf32>
    %372 = vector.extract_strided_slice %364 {offsets = [3, 0], sizes = [1, 64], strides = [1, 1]} : vector<18x64xf32> to vector<1x64xf32>
    %373 = arith.maximumf %371, %372 : vector<1x64xf32>
    %374 = vector.extract_strided_slice %364 {offsets = [4, 0], sizes = [1, 64], strides = [1, 1]} : vector<18x64xf32> to vector<1x64xf32>
    %375 = arith.maximumf %373, %374 : vector<1x64xf32>
    %c49 = arith.constant 49 : index
    %c0_137 = arith.constant 0 : index
    %376 = vector.load %arg6[%c49, %c0_137] : memref<64x64xf32, #tpu.memory_space<vmem>>, vector<1x64xf32>
    tpu.vector_store %arg6[%c49, %c0_137], %375 {strides = array<i32>} : memref<64x64xf32, #tpu.memory_space<vmem>>, vector<1x64xf32>,
    %377 = vector.extract_strided_slice %364 {offsets = [4, 0], sizes = [1, 64], strides = [1, 1]} : vector<18x64xf32> to vector<1x64xf32>
    %378 = vector.extract_strided_slice %364 {offsets = [5, 0], sizes = [1, 64], strides = [1, 1]} : vector<18x64xf32> to vector<1x64xf32>
    %379 = arith.maximumf %377, %378 : vector<1x64xf32>
    %380 = vector.extract_strided_slice %364 {offsets = [6, 0], sizes = [1, 64], strides = [1, 1]} : vector<18x64xf32> to vector<1x64xf32>
    %381 = arith.maximumf %379, %380 : vector<1x64xf32>
    %c50 = arith.constant 50 : index
    %c0_138 = arith.constant 0 : index
    %382 = vector.load %arg6[%c50, %c0_138] : memref<64x64xf32, #tpu.memory_space<vmem>>, vector<1x64xf32>
    tpu.vector_store %arg6[%c50, %c0_138], %381 {strides = array<i32>} : memref<64x64xf32, #tpu.memory_space<vmem>>, vector<1x64xf32>,
    %383 = vector.extract_strided_slice %364 {offsets = [6, 0], sizes = [1, 64], strides = [1, 1]} : vector<18x64xf32> to vector<1x64xf32>
    %384 = vector.extract_strided_slice %364 {offsets = [7, 0], sizes = [1, 64], strides = [1, 1]} : vector<18x64xf32> to vector<1x64xf32>
    %385 = arith.maximumf %383, %384 : vector<1x64xf32>
    %386 = vector.extract_strided_slice %364 {offsets = [8, 0], sizes = [1, 64], strides = [1, 1]} : vector<18x64xf32> to vector<1x64xf32>
    %387 = arith.maximumf %385, %386 : vector<1x64xf32>
    %c51 = arith.constant 51 : index
    %c0_139 = arith.constant 0 : index
    %388 = vector.load %arg6[%c51, %c0_139] : memref<64x64xf32, #tpu.memory_space<vmem>>, vector<1x64xf32>
    tpu.vector_store %arg6[%c51, %c0_139], %387 {strides = array<i32>} : memref<64x64xf32, #tpu.memory_space<vmem>>, vector<1x64xf32>,
    %389 = vector.extract_strided_slice %364 {offsets = [8, 0], sizes = [1, 64], strides = [1, 1]} : vector<18x64xf32> to vector<1x64xf32>
    %390 = vector.extract_strided_slice %364 {offsets = [9, 0], sizes = [1, 64], strides = [1, 1]} : vector<18x64xf32> to vector<1x64xf32>
    %391 = arith.maximumf %389, %390 : vector<1x64xf32>
    %392 = vector.extract_strided_slice %364 {offsets = [10, 0], sizes = [1, 64], strides = [1, 1]} : vector<18x64xf32> to vector<1x64xf32>
    %393 = arith.maximumf %391, %392 : vector<1x64xf32>
    %c52 = arith.constant 52 : index
    %c0_140 = arith.constant 0 : index
    %394 = vector.load %arg6[%c52, %c0_140] : memref<64x64xf32, #tpu.memory_space<vmem>>, vector<1x64xf32>
    tpu.vector_store %arg6[%c52, %c0_140], %393 {strides = array<i32>} : memref<64x64xf32, #tpu.memory_space<vmem>>, vector<1x64xf32>,
    %395 = vector.extract_strided_slice %364 {offsets = [10, 0], sizes = [1, 64], strides = [1, 1]} : vector<18x64xf32> to vector<1x64xf32>
    %396 = vector.extract_strided_slice %364 {offsets = [11, 0], sizes = [1, 64], strides = [1, 1]} : vector<18x64xf32> to vector<1x64xf32>
    %397 = arith.maximumf %395, %396 : vector<1x64xf32>
    %398 = vector.extract_strided_slice %364 {offsets = [12, 0], sizes = [1, 64], strides = [1, 1]} : vector<18x64xf32> to vector<1x64xf32>
    %399 = arith.maximumf %397, %398 : vector<1x64xf32>
    %c53 = arith.constant 53 : index
    %c0_141 = arith.constant 0 : index
    %400 = vector.load %arg6[%c53, %c0_141] : memref<64x64xf32, #tpu.memory_space<vmem>>, vector<1x64xf32>
    tpu.vector_store %arg6[%c53, %c0_141], %399 {strides = array<i32>} : memref<64x64xf32, #tpu.memory_space<vmem>>, vector<1x64xf32>,
    %401 = vector.extract_strided_slice %364 {offsets = [12, 0], sizes = [1, 64], strides = [1, 1]} : vector<18x64xf32> to vector<1x64xf32>
    %402 = vector.extract_strided_slice %364 {offsets = [13, 0], sizes = [1, 64], strides = [1, 1]} : vector<18x64xf32> to vector<1x64xf32>
    %403 = arith.maximumf %401, %402 : vector<1x64xf32>
    %404 = vector.extract_strided_slice %364 {offsets = [14, 0], sizes = [1, 64], strides = [1, 1]} : vector<18x64xf32> to vector<1x64xf32>
    %405 = arith.maximumf %403, %404 : vector<1x64xf32>
    %c54 = arith.constant 54 : index
    %c0_142 = arith.constant 0 : index
    %406 = vector.load %arg6[%c54, %c0_142] : memref<64x64xf32, #tpu.memory_space<vmem>>, vector<1x64xf32>
    tpu.vector_store %arg6[%c54, %c0_142], %405 {strides = array<i32>} : memref<64x64xf32, #tpu.memory_space<vmem>>, vector<1x64xf32>,
    %407 = vector.extract_strided_slice %364 {offsets = [14, 0], sizes = [1, 64], strides = [1, 1]} : vector<18x64xf32> to vector<1x64xf32>
    %408 = vector.extract_strided_slice %364 {offsets = [15, 0], sizes = [1, 64], strides = [1, 1]} : vector<18x64xf32> to vector<1x64xf32>
    %409 = arith.maximumf %407, %408 : vector<1x64xf32>
    %410 = vector.extract_strided_slice %364 {offsets = [16, 0], sizes = [1, 64], strides = [1, 1]} : vector<18x64xf32> to vector<1x64xf32>
    %411 = arith.maximumf %409, %410 : vector<1x64xf32>
    %c55 = arith.constant 55 : index
    %c0_143 = arith.constant 0 : index
    %412 = vector.load %arg6[%c55, %c0_143] : memref<64x64xf32, #tpu.memory_space<vmem>>, vector<1x64xf32>
    tpu.vector_store %arg6[%c55, %c0_143], %411 {strides = array<i32>} : memref<64x64xf32, #tpu.memory_space<vmem>>, vector<1x64xf32>,
    %c14_144 = arith.constant 14 : index
    %c0_145 = arith.constant 0 : index
    %c0_146 = arith.constant 0 : index
    %413 = vector.load %arg5[%c14_144, %c0_145, %c0_146] : memref<18x18x64xf32, #tpu.memory_space<vmem>>, vector<1x18x64xf32>
    %414 = vector.shape_cast %413 : vector<1x18x64xf32> to vector<18x64xf32>
    %c15_147 = arith.constant 15 : index
    %c0_148 = arith.constant 0 : index
    %c0_149 = arith.constant 0 : index
    %415 = vector.load %arg5[%c15_147, %c0_148, %c0_149] : memref<18x18x64xf32, #tpu.memory_space<vmem>>, vector<1x18x64xf32>
    %416 = vector.shape_cast %415 : vector<1x18x64xf32> to vector<18x64xf32>
    %417 = arith.maximumf %414, %416 : vector<18x64xf32>
    %c16_150 = arith.constant 16 : index
    %c0_151 = arith.constant 0 : index
    %c0_152 = arith.constant 0 : index
    %418 = vector.load %arg5[%c16_150, %c0_151, %c0_152] : memref<18x18x64xf32, #tpu.memory_space<vmem>>, vector<1x18x64xf32>
    %419 = vector.shape_cast %418 : vector<1x18x64xf32> to vector<18x64xf32>
    %420 = arith.maximumf %417, %419 : vector<18x64xf32>
    %421 = vector.extract_strided_slice %420 {offsets = [0, 0], sizes = [1, 64], strides = [1, 1]} : vector<18x64xf32> to vector<1x64xf32>
    %422 = vector.extract_strided_slice %420 {offsets = [1, 0], sizes = [1, 64], strides = [1, 1]} : vector<18x64xf32> to vector<1x64xf32>
    %423 = arith.maximumf %421, %422 : vector<1x64xf32>
    %424 = vector.extract_strided_slice %420 {offsets = [2, 0], sizes = [1, 64], strides = [1, 1]} : vector<18x64xf32> to vector<1x64xf32>
    %425 = arith.maximumf %423, %424 : vector<1x64xf32>
    %c56 = arith.constant 56 : index
    %c0_153 = arith.constant 0 : index
    %426 = vector.load %arg6[%c56, %c0_153] : memref<64x64xf32, #tpu.memory_space<vmem>>, vector<1x64xf32>
    tpu.vector_store %arg6[%c56, %c0_153], %425 {strides = array<i32>} : memref<64x64xf32, #tpu.memory_space<vmem>>, vector<1x64xf32>,
    %427 = vector.extract_strided_slice %420 {offsets = [2, 0], sizes = [1, 64], strides = [1, 1]} : vector<18x64xf32> to vector<1x64xf32>
    %428 = vector.extract_strided_slice %420 {offsets = [3, 0], sizes = [1, 64], strides = [1, 1]} : vector<18x64xf32> to vector<1x64xf32>
    %429 = arith.maximumf %427, %428 : vector<1x64xf32>
    %430 = vector.extract_strided_slice %420 {offsets = [4, 0], sizes = [1, 64], strides = [1, 1]} : vector<18x64xf32> to vector<1x64xf32>
    %431 = arith.maximumf %429, %430 : vector<1x64xf32>
    %c57 = arith.constant 57 : index
    %c0_154 = arith.constant 0 : index
    %432 = vector.load %arg6[%c57, %c0_154] : memref<64x64xf32, #tpu.memory_space<vmem>>, vector<1x64xf32>
    tpu.vector_store %arg6[%c57, %c0_154], %431 {strides = array<i32>} : memref<64x64xf32, #tpu.memory_space<vmem>>, vector<1x64xf32>,
    %433 = vector.extract_strided_slice %420 {offsets = [4, 0], sizes = [1, 64], strides = [1, 1]} : vector<18x64xf32> to vector<1x64xf32>
    %434 = vector.extract_strided_slice %420 {offsets = [5, 0], sizes = [1, 64], strides = [1, 1]} : vector<18x64xf32> to vector<1x64xf32>
    %435 = arith.maximumf %433, %434 : vector<1x64xf32>
    %436 = vector.extract_strided_slice %420 {offsets = [6, 0], sizes = [1, 64], strides = [1, 1]} : vector<18x64xf32> to vector<1x64xf32>
    %437 = arith.maximumf %435, %436 : vector<1x64xf32>
    %c58 = arith.constant 58 : index
    %c0_155 = arith.constant 0 : index
    %438 = vector.load %arg6[%c58, %c0_155] : memref<64x64xf32, #tpu.memory_space<vmem>>, vector<1x64xf32>
    tpu.vector_store %arg6[%c58, %c0_155], %437 {strides = array<i32>} : memref<64x64xf32, #tpu.memory_space<vmem>>, vector<1x64xf32>,
    %439 = vector.extract_strided_slice %420 {offsets = [6, 0], sizes = [1, 64], strides = [1, 1]} : vector<18x64xf32> to vector<1x64xf32>
    %440 = vector.extract_strided_slice %420 {offsets = [7, 0], sizes = [1, 64], strides = [1, 1]} : vector<18x64xf32> to vector<1x64xf32>
    %441 = arith.maximumf %439, %440 : vector<1x64xf32>
    %442 = vector.extract_strided_slice %420 {offsets = [8, 0], sizes = [1, 64], strides = [1, 1]} : vector<18x64xf32> to vector<1x64xf32>
    %443 = arith.maximumf %441, %442 : vector<1x64xf32>
    %c59 = arith.constant 59 : index
    %c0_156 = arith.constant 0 : index
    %444 = vector.load %arg6[%c59, %c0_156] : memref<64x64xf32, #tpu.memory_space<vmem>>, vector<1x64xf32>
    tpu.vector_store %arg6[%c59, %c0_156], %443 {strides = array<i32>} : memref<64x64xf32, #tpu.memory_space<vmem>>, vector<1x64xf32>,
    %445 = vector.extract_strided_slice %420 {offsets = [8, 0], sizes = [1, 64], strides = [1, 1]} : vector<18x64xf32> to vector<1x64xf32>
    %446 = vector.extract_strided_slice %420 {offsets = [9, 0], sizes = [1, 64], strides = [1, 1]} : vector<18x64xf32> to vector<1x64xf32>
    %447 = arith.maximumf %445, %446 : vector<1x64xf32>
    %448 = vector.extract_strided_slice %420 {offsets = [10, 0], sizes = [1, 64], strides = [1, 1]} : vector<18x64xf32> to vector<1x64xf32>
    %449 = arith.maximumf %447, %448 : vector<1x64xf32>
    %c60 = arith.constant 60 : index
    %c0_157 = arith.constant 0 : index
    %450 = vector.load %arg6[%c60, %c0_157] : memref<64x64xf32, #tpu.memory_space<vmem>>, vector<1x64xf32>
    tpu.vector_store %arg6[%c60, %c0_157], %449 {strides = array<i32>} : memref<64x64xf32, #tpu.memory_space<vmem>>, vector<1x64xf32>,
    %451 = vector.extract_strided_slice %420 {offsets = [10, 0], sizes = [1, 64], strides = [1, 1]} : vector<18x64xf32> to vector<1x64xf32>
    %452 = vector.extract_strided_slice %420 {offsets = [11, 0], sizes = [1, 64], strides = [1, 1]} : vector<18x64xf32> to vector<1x64xf32>
    %453 = arith.maximumf %451, %452 : vector<1x64xf32>
    %454 = vector.extract_strided_slice %420 {offsets = [12, 0], sizes = [1, 64], strides = [1, 1]} : vector<18x64xf32> to vector<1x64xf32>
    %455 = arith.maximumf %453, %454 : vector<1x64xf32>
    %c61 = arith.constant 61 : index
    %c0_158 = arith.constant 0 : index
    %456 = vector.load %arg6[%c61, %c0_158] : memref<64x64xf32, #tpu.memory_space<vmem>>, vector<1x64xf32>
    tpu.vector_store %arg6[%c61, %c0_158], %455 {strides = array<i32>} : memref<64x64xf32, #tpu.memory_space<vmem>>, vector<1x64xf32>,
    %457 = vector.extract_strided_slice %420 {offsets = [12, 0], sizes = [1, 64], strides = [1, 1]} : vector<18x64xf32> to vector<1x64xf32>
    %458 = vector.extract_strided_slice %420 {offsets = [13, 0], sizes = [1, 64], strides = [1, 1]} : vector<18x64xf32> to vector<1x64xf32>
    %459 = arith.maximumf %457, %458 : vector<1x64xf32>
    %460 = vector.extract_strided_slice %420 {offsets = [14, 0], sizes = [1, 64], strides = [1, 1]} : vector<18x64xf32> to vector<1x64xf32>
    %461 = arith.maximumf %459, %460 : vector<1x64xf32>
    %c62 = arith.constant 62 : index
    %c0_159 = arith.constant 0 : index
    %462 = vector.load %arg6[%c62, %c0_159] : memref<64x64xf32, #tpu.memory_space<vmem>>, vector<1x64xf32>
    tpu.vector_store %arg6[%c62, %c0_159], %461 {strides = array<i32>} : memref<64x64xf32, #tpu.memory_space<vmem>>, vector<1x64xf32>,
    %463 = vector.extract_strided_slice %420 {offsets = [14, 0], sizes = [1, 64], strides = [1, 1]} : vector<18x64xf32> to vector<1x64xf32>
    %464 = vector.extract_strided_slice %420 {offsets = [15, 0], sizes = [1, 64], strides = [1, 1]} : vector<18x64xf32> to vector<1x64xf32>
    %465 = arith.maximumf %463, %464 : vector<1x64xf32>
    %466 = vector.extract_strided_slice %420 {offsets = [16, 0], sizes = [1, 64], strides = [1, 1]} : vector<18x64xf32> to vector<1x64xf32>
    %467 = arith.maximumf %465, %466 : vector<1x64xf32>
    %c63 = arith.constant 63 : index
    %c0_160 = arith.constant 0 : index
    %468 = vector.load %arg6[%c63, %c0_160] : memref<64x64xf32, #tpu.memory_space<vmem>>, vector<1x64xf32>
    tpu.vector_store %arg6[%c63, %c0_160], %467 {strides = array<i32>} : memref<64x64xf32, #tpu.memory_space<vmem>>, vector<1x64xf32>,
    %c0_161 = arith.constant 0 : index
    %c0_162 = arith.constant 0 : index
    %469 = vector.load %arg6[%c0_161, %c0_162] : memref<64x64xf32, #tpu.memory_space<vmem>>, vector<64x64xf32>
    %470 = arith.truncf %469 : vector<64x64xf32> to vector<64x64xbf16>
    %c0_163 = arith.constant 0 : index
    %c0_164 = arith.constant 0 : index
    %c0_165 = arith.constant 0 : index
    %471 = vector.load %arg4[%c0_163, %c0_164, %c0_165] : memref<1x64x64xbf16, #tpu.memory_space<vmem>>, vector<1x64x64xbf16>
    %472 = vector.shape_cast %471 : vector<1x64x64xbf16> to vector<64x64xbf16>
    %473 = vector.shape_cast %470 : vector<64x64xbf16> to vector<1x64x64xbf16>
    tpu.vector_store %arg4[%c0_163, %c0_164, %c0_165], %473 {strides = array<i32>} : memref<1x64x64xbf16, #tpu.memory_space<vmem>>, vector<1x64x64xbf16>,
    return
  }
  func.func @transform_0(%arg0: i32) -> (i32, i32, i32) {
    %c0_i32 = arith.constant 0 : i32
    %c0_i32_0 = arith.constant 0 : i32
    %c0_i32_1 = arith.constant 0 : i32
    return %arg0, %c0_i32, %c0_i32_0 : i32, i32, i32
  }
  func.func @transform_1(%arg0: i32) -> (i32, i32) {
    %c0_i32 = arith.constant 0 : i32
    %c0_i32_0 = arith.constant 0 : i32
    %c0_i32_1 = arith.constant 0 : i32
    return %c0_i32, %c0_i32_0 : i32, i32
  }
  func.func @transform_2(%arg0: i32) -> (i32, i32) {
    %c0_i32 = arith.constant 0 : i32
    %c0_i32_0 = arith.constant 0 : i32
    %c0_i32_1 = arith.constant 0 : i32
    return %c0_i32, %c0_i32_0 : i32, i32
  }
  func.func @transform_3(%arg0: i32) -> (i32, i32, i32) {
    %c0_i32 = arith.constant 0 : i32
    %c0_i32_0 = arith.constant 0 : i32
    %c0_i32_1 = arith.constant 0 : i32
    return %arg0, %c0_i32, %c0_i32_0 : i32, i32, i32
  }
}

module attributes {stable_mosaic.version = 11 : i64} {
  func.func @_blocks_head_kernel(%arg0: i32, %arg1: memref<1x64x64xbf16, #tpu.memory_space<vmem>>, %arg2: memref<64x64xbf16, #tpu.memory_space<vmem>>, %arg3: memref<1x64xf32, #tpu.memory_space<vmem>>, %arg4: memref<3x3x64x64xbf16, #tpu.memory_space<vmem>>, %arg5: memref<1x64xf32, #tpu.memory_space<vmem>>, %arg6: memref<64x256xbf16, #tpu.memory_space<vmem>>, %arg7: memref<1x256xf32, #tpu.memory_space<vmem>>, %arg8: memref<256x128xbf16, #tpu.memory_space<vmem>>, %arg9: memref<1x128xf32, #tpu.memory_space<vmem>>, %arg10: memref<3x3x128x128xbf16, #tpu.memory_space<vmem>>, %arg11: memref<1x128xf32, #tpu.memory_space<vmem>>, %arg12: memref<128x512xbf16, #tpu.memory_space<vmem>>, %arg13: memref<1x512xf32, #tpu.memory_space<vmem>>, %arg14: memref<512x100xf32, #tpu.memory_space<vmem>>, %arg15: memref<1x100xf32, #tpu.memory_space<vmem>>, %arg16: memref<1x1x100xf32, #tpu.memory_space<vmem>>, %arg17: memref<10x10x64xf32, #tpu.memory_space<vmem>>, %arg18: memref<10x10x256xf32, #tpu.memory_space<vmem>>, %arg19: memref<16x256xf32, #tpu.memory_space<vmem>>, %arg20: memref<6x6x128xf32, #tpu.memory_space<vmem>>) attributes {dimension_semantics = [#tpu.dimension_semantics<parallel>], iteration_bounds = array<i64: 2>, scalar_prefetch = 0 : i64, scratch_operands = 4 : i64, tpu.core_type = #tpu.core_type<tc>, window_params = [{transform_indices = @transform_0, window_bounds = array<i64: 1, 64, 64>}, {pipeline_mode = #tpu.pipeline_mode<synchronous>, transform_indices = @transform_1, window_bounds = array<i64: 64, 64>}, {pipeline_mode = #tpu.pipeline_mode<synchronous>, transform_indices = @transform_2, window_bounds = array<i64: 1, 64>}, {pipeline_mode = #tpu.pipeline_mode<synchronous>, transform_indices = @transform_3, window_bounds = array<i64: 3, 3, 64, 64>}, {pipeline_mode = #tpu.pipeline_mode<synchronous>, transform_indices = @transform_4, window_bounds = array<i64: 1, 64>}, {pipeline_mode = #tpu.pipeline_mode<synchronous>, transform_indices = @transform_5, window_bounds = array<i64: 64, 256>}, {pipeline_mode = #tpu.pipeline_mode<synchronous>, transform_indices = @transform_6, window_bounds = array<i64: 1, 256>}, {pipeline_mode = #tpu.pipeline_mode<synchronous>, transform_indices = @transform_7, window_bounds = array<i64: 256, 128>}, {pipeline_mode = #tpu.pipeline_mode<synchronous>, transform_indices = @transform_8, window_bounds = array<i64: 1, 128>}, {pipeline_mode = #tpu.pipeline_mode<synchronous>, transform_indices = @transform_9, window_bounds = array<i64: 3, 3, 128, 128>}, {pipeline_mode = #tpu.pipeline_mode<synchronous>, transform_indices = @transform_10, window_bounds = array<i64: 1, 128>}, {pipeline_mode = #tpu.pipeline_mode<synchronous>, transform_indices = @transform_11, window_bounds = array<i64: 128, 512>}, {pipeline_mode = #tpu.pipeline_mode<synchronous>, transform_indices = @transform_12, window_bounds = array<i64: 1, 512>}, {pipeline_mode = #tpu.pipeline_mode<synchronous>, transform_indices = @transform_13, window_bounds = array<i64: 512, 100>}, {pipeline_mode = #tpu.pipeline_mode<synchronous>, transform_indices = @transform_14, window_bounds = array<i64: 1, 100>}, {transform_indices = @transform_15, window_bounds = array<i64: 1, 1, 100>}]} {
    %c0 = arith.constant 0 : index
    %c0_0 = arith.constant 0 : index
    %c0_1 = arith.constant 0 : index
    %0 = vector.load %arg1[%c0, %c0_0, %c0_1] : memref<1x64x64xbf16, #tpu.memory_space<vmem>>, vector<1x64x64xbf16>
    %1 = vector.shape_cast %0 : vector<1x64x64xbf16> to vector<64x64xbf16>
    %c0_2 = arith.constant 0 : index
    %c0_3 = arith.constant 0 : index
    %2 = vector.load %arg2[%c0_2, %c0_3] : memref<64x64xbf16, #tpu.memory_space<vmem>>, vector<64x64xbf16>
    %cst = arith.constant dense<0.000000e+00> : vector<64x64xf32>
    %3 = tpu.matmul %1, %2, %cst {dimension_numbers = #tpu.dot_dimension_numbers<[1], [0], [0], [1], [0, 0, 1, 1], [], []>} : vector<64x64xbf16>, vector<64x64xbf16>, vector<64x64xf32> -> vector<64x64xf32>
    %c0_4 = arith.constant 0 : index
    %c0_5 = arith.constant 0 : index
    %4 = vector.load %arg3[%c0_4, %c0_5] : memref<1x64xf32, #tpu.memory_space<vmem>>, vector<1x64xf32>
    %5 = vector.broadcast %4 : vector<1x64xf32> to vector<64x64xf32>
    %6 = arith.addf %3, %5 : vector<64x64xf32>
    %cst_6 = arith.constant 0.000000e+00 : f32
    %7 = vector.broadcast %cst_6 : f32 to vector<64x64xf32>
    %8 = arith.maximumf %6, %7 : vector<64x64xf32>
    %cst_7 = arith.constant 0.000000e+00 : f32
    %9 = vector.broadcast %cst_7 : f32 to vector<10x64xf32>
    %c0_8 = arith.constant 0 : index
    %c0_9 = arith.constant 0 : index
    %c0_10 = arith.constant 0 : index
    %10 = vector.load %arg17[%c0_8, %c0_9, %c0_10] : memref<10x10x64xf32, #tpu.memory_space<vmem>>, vector<1x10x64xf32>
    %11 = vector.shape_cast %10 : vector<1x10x64xf32> to vector<10x64xf32>
    %12 = vector.shape_cast %9 : vector<10x64xf32> to vector<1x10x64xf32>
    tpu.vector_store %arg17[%c0_8, %c0_9, %c0_10], %12 {strides = array<i32>} : memref<10x10x64xf32, #tpu.memory_space<vmem>>, vector<1x10x64xf32>,
    %c9 = arith.constant 9 : index
    %c0_11 = arith.constant 0 : index
    %c0_12 = arith.constant 0 : index
    %13 = vector.load %arg17[%c9, %c0_11, %c0_12] : memref<10x10x64xf32, #tpu.memory_space<vmem>>, vector<1x10x64xf32>
    %14 = vector.shape_cast %13 : vector<1x10x64xf32> to vector<10x64xf32>
    %15 = vector.shape_cast %9 : vector<10x64xf32> to vector<1x10x64xf32>
    tpu.vector_store %arg17[%c9, %c0_11, %c0_12], %15 {strides = array<i32>} : memref<10x10x64xf32, #tpu.memory_space<vmem>>, vector<1x10x64xf32>,
    %cst_13 = arith.constant 0.000000e+00 : f32
    %16 = vector.broadcast %cst_13 : f32 to vector<10x1x64xf32>
    %c0_14 = arith.constant 0 : index
    %c0_15 = arith.constant 0 : index
    %c0_16 = arith.constant 0 : index
    %17 = vector.load %arg17[%c0_14, %c0_15, %c0_16] : memref<10x10x64xf32, #tpu.memory_space<vmem>>, vector<10x1x64xf32>
    tpu.vector_store %arg17[%c0_14, %c0_15, %c0_16], %16 {strides = array<i32>} : memref<10x10x64xf32, #tpu.memory_space<vmem>>, vector<10x1x64xf32>,
    %c0_17 = arith.constant 0 : index
    %c9_18 = arith.constant 9 : index
    %c0_19 = arith.constant 0 : index
    %18 = vector.load %arg17[%c0_17, %c9_18, %c0_19] : memref<10x10x64xf32, #tpu.memory_space<vmem>>, vector<10x1x64xf32>
    tpu.vector_store %arg17[%c0_17, %c9_18, %c0_19], %16 {strides = array<i32>} : memref<10x10x64xf32, #tpu.memory_space<vmem>>, vector<10x1x64xf32>,
    %19 = vector.shape_cast %8 : vector<64x64xf32> to vector<8x8x64xf32>
    %c1 = arith.constant 1 : index
    %c1_20 = arith.constant 1 : index
    %c0_21 = arith.constant 0 : index
    %20 = vector.load %arg17[%c1, %c1_20, %c0_21] : memref<10x10x64xf32, #tpu.memory_space<vmem>>, vector<8x8x64xf32>
    tpu.vector_store %arg17[%c1, %c1_20, %c0_21], %19 {strides = array<i32>} : memref<10x10x64xf32, #tpu.memory_space<vmem>>, vector<8x8x64xf32>,
    %cst_22 = arith.constant 0.000000e+00 : f32
    %21 = vector.broadcast %cst_22 : f32 to vector<64x64xf32>
    %c0_23 = arith.constant 0 : index
    %c0_24 = arith.constant 0 : index
    %c0_25 = arith.constant 0 : index
    %22 = vector.load %arg17[%c0_23, %c0_24, %c0_25] : memref<10x10x64xf32, #tpu.memory_space<vmem>>, vector<8x8x64xf32>
    %23 = vector.shape_cast %22 : vector<8x8x64xf32> to vector<64x64xf32>
    %24 = arith.truncf %23 : vector<64x64xf32> to vector<64x64xbf16>
    %c0_26 = arith.constant 0 : index
    %c0_27 = arith.constant 0 : index
    %c0_28 = arith.constant 0 : index
    %c0_29 = arith.constant 0 : index
    %25 = vector.load %arg4[%c0_26, %c0_27, %c0_28, %c0_29] : memref<3x3x64x64xbf16, #tpu.memory_space<vmem>>, vector<1x1x64x64xbf16>
    %26 = vector.shape_cast %25 : vector<1x1x64x64xbf16> to vector<64x64xbf16>
    %cst_30 = arith.constant dense<0.000000e+00> : vector<64x64xf32>
    %27 = tpu.matmul %24, %26, %cst_30 {dimension_numbers = #tpu.dot_dimension_numbers<[1], [0], [0], [1], [0, 0, 1, 1], [], []>} : vector<64x64xbf16>, vector<64x64xbf16>, vector<64x64xf32> -> vector<64x64xf32>
    %28 = arith.addf %21, %27 : vector<64x64xf32>
    %c0_31 = arith.constant 0 : index
    %c1_32 = arith.constant 1 : index
    %c0_33 = arith.constant 0 : index
    %29 = vector.load %arg17[%c0_31, %c1_32, %c0_33] : memref<10x10x64xf32, #tpu.memory_space<vmem>>, vector<8x8x64xf32>
    %30 = vector.shape_cast %29 : vector<8x8x64xf32> to vector<64x64xf32>
    %31 = arith.truncf %30 : vector<64x64xf32> to vector<64x64xbf16>
    %c0_34 = arith.constant 0 : index
    %c1_35 = arith.constant 1 : index
    %c0_36 = arith.constant 0 : index
    %c0_37 = arith.constant 0 : index
    %32 = vector.load %arg4[%c0_34, %c1_35, %c0_36, %c0_37] : memref<3x3x64x64xbf16, #tpu.memory_space<vmem>>, vector<1x1x64x64xbf16>
    %33 = vector.shape_cast %32 : vector<1x1x64x64xbf16> to vector<64x64xbf16>
    %cst_38 = arith.constant dense<0.000000e+00> : vector<64x64xf32>
    %34 = tpu.matmul %31, %33, %cst_38 {dimension_numbers = #tpu.dot_dimension_numbers<[1], [0], [0], [1], [0, 0, 1, 1], [], []>} : vector<64x64xbf16>, vector<64x64xbf16>, vector<64x64xf32> -> vector<64x64xf32>
    %35 = arith.addf %28, %34 : vector<64x64xf32>
    %c0_39 = arith.constant 0 : index
    %c2 = arith.constant 2 : index
    %c0_40 = arith.constant 0 : index
    %36 = vector.load %arg17[%c0_39, %c2, %c0_40] : memref<10x10x64xf32, #tpu.memory_space<vmem>>, vector<8x8x64xf32>
    %37 = vector.shape_cast %36 : vector<8x8x64xf32> to vector<64x64xf32>
    %38 = arith.truncf %37 : vector<64x64xf32> to vector<64x64xbf16>
    %c0_41 = arith.constant 0 : index
    %c2_42 = arith.constant 2 : index
    %c0_43 = arith.constant 0 : index
    %c0_44 = arith.constant 0 : index
    %39 = vector.load %arg4[%c0_41, %c2_42, %c0_43, %c0_44] : memref<3x3x64x64xbf16, #tpu.memory_space<vmem>>, vector<1x1x64x64xbf16>
    %40 = vector.shape_cast %39 : vector<1x1x64x64xbf16> to vector<64x64xbf16>
    %cst_45 = arith.constant dense<0.000000e+00> : vector<64x64xf32>
    %41 = tpu.matmul %38, %40, %cst_45 {dimension_numbers = #tpu.dot_dimension_numbers<[1], [0], [0], [1], [0, 0, 1, 1], [], []>} : vector<64x64xbf16>, vector<64x64xbf16>, vector<64x64xf32> -> vector<64x64xf32>
    %42 = arith.addf %35, %41 : vector<64x64xf32>
    %c1_46 = arith.constant 1 : index
    %c0_47 = arith.constant 0 : index
    %c0_48 = arith.constant 0 : index
    %43 = vector.load %arg17[%c1_46, %c0_47, %c0_48] : memref<10x10x64xf32, #tpu.memory_space<vmem>>, vector<8x8x64xf32>
    %44 = vector.shape_cast %43 : vector<8x8x64xf32> to vector<64x64xf32>
    %45 = arith.truncf %44 : vector<64x64xf32> to vector<64x64xbf16>
    %c1_49 = arith.constant 1 : index
    %c0_50 = arith.constant 0 : index
    %c0_51 = arith.constant 0 : index
    %c0_52 = arith.constant 0 : index
    %46 = vector.load %arg4[%c1_49, %c0_50, %c0_51, %c0_52] : memref<3x3x64x64xbf16, #tpu.memory_space<vmem>>, vector<1x1x64x64xbf16>
    %47 = vector.shape_cast %46 : vector<1x1x64x64xbf16> to vector<64x64xbf16>
    %cst_53 = arith.constant dense<0.000000e+00> : vector<64x64xf32>
    %48 = tpu.matmul %45, %47, %cst_53 {dimension_numbers = #tpu.dot_dimension_numbers<[1], [0], [0], [1], [0, 0, 1, 1], [], []>} : vector<64x64xbf16>, vector<64x64xbf16>, vector<64x64xf32> -> vector<64x64xf32>
    %49 = arith.addf %42, %48 : vector<64x64xf32>
    %c1_54 = arith.constant 1 : index
    %c1_55 = arith.constant 1 : index
    %c0_56 = arith.constant 0 : index
    %50 = vector.load %arg17[%c1_54, %c1_55, %c0_56] : memref<10x10x64xf32, #tpu.memory_space<vmem>>, vector<8x8x64xf32>
    %51 = vector.shape_cast %50 : vector<8x8x64xf32> to vector<64x64xf32>
    %52 = arith.truncf %51 : vector<64x64xf32> to vector<64x64xbf16>
    %c1_57 = arith.constant 1 : index
    %c1_58 = arith.constant 1 : index
    %c0_59 = arith.constant 0 : index
    %c0_60 = arith.constant 0 : index
    %53 = vector.load %arg4[%c1_57, %c1_58, %c0_59, %c0_60] : memref<3x3x64x64xbf16, #tpu.memory_space<vmem>>, vector<1x1x64x64xbf16>
    %54 = vector.shape_cast %53 : vector<1x1x64x64xbf16> to vector<64x64xbf16>
    %cst_61 = arith.constant dense<0.000000e+00> : vector<64x64xf32>
    %55 = tpu.matmul %52, %54, %cst_61 {dimension_numbers = #tpu.dot_dimension_numbers<[1], [0], [0], [1], [0, 0, 1, 1], [], []>} : vector<64x64xbf16>, vector<64x64xbf16>, vector<64x64xf32> -> vector<64x64xf32>
    %56 = arith.addf %49, %55 : vector<64x64xf32>
    %c1_62 = arith.constant 1 : index
    %c2_63 = arith.constant 2 : index
    %c0_64 = arith.constant 0 : index
    %57 = vector.load %arg17[%c1_62, %c2_63, %c0_64] : memref<10x10x64xf32, #tpu.memory_space<vmem>>, vector<8x8x64xf32>
    %58 = vector.shape_cast %57 : vector<8x8x64xf32> to vector<64x64xf32>
    %59 = arith.truncf %58 : vector<64x64xf32> to vector<64x64xbf16>
    %c1_65 = arith.constant 1 : index
    %c2_66 = arith.constant 2 : index
    %c0_67 = arith.constant 0 : index
    %c0_68 = arith.constant 0 : index
    %60 = vector.load %arg4[%c1_65, %c2_66, %c0_67, %c0_68] : memref<3x3x64x64xbf16, #tpu.memory_space<vmem>>, vector<1x1x64x64xbf16>
    %61 = vector.shape_cast %60 : vector<1x1x64x64xbf16> to vector<64x64xbf16>
    %cst_69 = arith.constant dense<0.000000e+00> : vector<64x64xf32>
    %62 = tpu.matmul %59, %61, %cst_69 {dimension_numbers = #tpu.dot_dimension_numbers<[1], [0], [0], [1], [0, 0, 1, 1], [], []>} : vector<64x64xbf16>, vector<64x64xbf16>, vector<64x64xf32> -> vector<64x64xf32>
    %63 = arith.addf %56, %62 : vector<64x64xf32>
    %c2_70 = arith.constant 2 : index
    %c0_71 = arith.constant 0 : index
    %c0_72 = arith.constant 0 : index
    %64 = vector.load %arg17[%c2_70, %c0_71, %c0_72] : memref<10x10x64xf32, #tpu.memory_space<vmem>>, vector<8x8x64xf32>
    %65 = vector.shape_cast %64 : vector<8x8x64xf32> to vector<64x64xf32>
    %66 = arith.truncf %65 : vector<64x64xf32> to vector<64x64xbf16>
    %c2_73 = arith.constant 2 : index
    %c0_74 = arith.constant 0 : index
    %c0_75 = arith.constant 0 : index
    %c0_76 = arith.constant 0 : index
    %67 = vector.load %arg4[%c2_73, %c0_74, %c0_75, %c0_76] : memref<3x3x64x64xbf16, #tpu.memory_space<vmem>>, vector<1x1x64x64xbf16>
    %68 = vector.shape_cast %67 : vector<1x1x64x64xbf16> to vector<64x64xbf16>
    %cst_77 = arith.constant dense<0.000000e+00> : vector<64x64xf32>
    %69 = tpu.matmul %66, %68, %cst_77 {dimension_numbers = #tpu.dot_dimension_numbers<[1], [0], [0], [1], [0, 0, 1, 1], [], []>} : vector<64x64xbf16>, vector<64x64xbf16>, vector<64x64xf32> -> vector<64x64xf32>
    %70 = arith.addf %63, %69 : vector<64x64xf32>
    %c2_78 = arith.constant 2 : index
    %c1_79 = arith.constant 1 : index
    %c0_80 = arith.constant 0 : index
    %71 = vector.load %arg17[%c2_78, %c1_79, %c0_80] : memref<10x10x64xf32, #tpu.memory_space<vmem>>, vector<8x8x64xf32>
    %72 = vector.shape_cast %71 : vector<8x8x64xf32> to vector<64x64xf32>
    %73 = arith.truncf %72 : vector<64x64xf32> to vector<64x64xbf16>
    %c2_81 = arith.constant 2 : index
    %c1_82 = arith.constant 1 : index
    %c0_83 = arith.constant 0 : index
    %c0_84 = arith.constant 0 : index
    %74 = vector.load %arg4[%c2_81, %c1_82, %c0_83, %c0_84] : memref<3x3x64x64xbf16, #tpu.memory_space<vmem>>, vector<1x1x64x64xbf16>
    %75 = vector.shape_cast %74 : vector<1x1x64x64xbf16> to vector<64x64xbf16>
    %cst_85 = arith.constant dense<0.000000e+00> : vector<64x64xf32>
    %76 = tpu.matmul %73, %75, %cst_85 {dimension_numbers = #tpu.dot_dimension_numbers<[1], [0], [0], [1], [0, 0, 1, 1], [], []>} : vector<64x64xbf16>, vector<64x64xbf16>, vector<64x64xf32> -> vector<64x64xf32>
    %77 = arith.addf %70, %76 : vector<64x64xf32>
    %c2_86 = arith.constant 2 : index
    %c2_87 = arith.constant 2 : index
    %c0_88 = arith.constant 0 : index
    %78 = vector.load %arg17[%c2_86, %c2_87, %c0_88] : memref<10x10x64xf32, #tpu.memory_space<vmem>>, vector<8x8x64xf32>
    %79 = vector.shape_cast %78 : vector<8x8x64xf32> to vector<64x64xf32>
    %80 = arith.truncf %79 : vector<64x64xf32> to vector<64x64xbf16>
    %c2_89 = arith.constant 2 : index
    %c2_90 = arith.constant 2 : index
    %c0_91 = arith.constant 0 : index
    %c0_92 = arith.constant 0 : index
    %81 = vector.load %arg4[%c2_89, %c2_90, %c0_91, %c0_92] : memref<3x3x64x64xbf16, #tpu.memory_space<vmem>>, vector<1x1x64x64xbf16>
    %82 = vector.shape_cast %81 : vector<1x1x64x64xbf16> to vector<64x64xbf16>
    %cst_93 = arith.constant dense<0.000000e+00> : vector<64x64xf32>
    %83 = tpu.matmul %80, %82, %cst_93 {dimension_numbers = #tpu.dot_dimension_numbers<[1], [0], [0], [1], [0, 0, 1, 1], [], []>} : vector<64x64xbf16>, vector<64x64xbf16>, vector<64x64xf32> -> vector<64x64xf32>
    %84 = arith.addf %77, %83 : vector<64x64xf32>
    %c0_94 = arith.constant 0 : index
    %c0_95 = arith.constant 0 : index
    %85 = vector.load %arg5[%c0_94, %c0_95] : memref<1x64xf32, #tpu.memory_space<vmem>>, vector<1x64xf32>
    %86 = vector.broadcast %85 : vector<1x64xf32> to vector<64x64xf32>
    %87 = arith.addf %84, %86 : vector<64x64xf32>
    %cst_96 = arith.constant 0.000000e+00 : f32
    %88 = vector.broadcast %cst_96 : f32 to vector<64x64xf32>
    %89 = arith.maximumf %87, %88 : vector<64x64xf32>
    %90 = arith.truncf %89 : vector<64x64xf32> to vector<64x64xbf16>
    %c0_97 = arith.constant 0 : index
    %c0_98 = arith.constant 0 : index
    %91 = vector.load %arg6[%c0_97, %c0_98] : memref<64x256xbf16, #tpu.memory_space<vmem>>, vector<64x256xbf16>
    %cst_99 = arith.constant dense<0.000000e+00> : vector<64x256xf32>
    %92 = tpu.matmul %90, %91, %cst_99 {dimension_numbers = #tpu.dot_dimension_numbers<[1], [0], [0], [1], [0, 0, 1, 1], [], []>} : vector<64x64xbf16>, vector<64x256xbf16>, vector<64x256xf32> -> vector<64x256xf32>
    %c0_100 = arith.constant 0 : index
    %c0_101 = arith.constant 0 : index
    %93 = vector.load %arg7[%c0_100, %c0_101] : memref<1x256xf32, #tpu.memory_space<vmem>>, vector<1x256xf32>
    %94 = vector.broadcast %93 : vector<1x256xf32> to vector<64x256xf32>
    %95 = arith.addf %92, %94 : vector<64x256xf32>
    %cst_102 = arith.constant 0.000000e+00 : f32
    %96 = vector.broadcast %cst_102 : f32 to vector<64x256xf32>
    %97 = arith.maximumf %95, %96 : vector<64x256xf32>
    %98 = vector.shape_cast %97 : vector<64x256xf32> to vector<8x8x256xf32>
    %cst_103 = arith.constant 0.000000e+00 : f32
    %99 = vector.broadcast %cst_103 : f32 to vector<10x256xf32>
    %c0_104 = arith.constant 0 : index
    %c0_105 = arith.constant 0 : index
    %c0_106 = arith.constant 0 : index
    %100 = vector.load %arg18[%c0_104, %c0_105, %c0_106] : memref<10x10x256xf32, #tpu.memory_space<vmem>>, vector<1x10x256xf32>
    %101 = vector.shape_cast %100 : vector<1x10x256xf32> to vector<10x256xf32>
    %102 = vector.shape_cast %99 : vector<10x256xf32> to vector<1x10x256xf32>
    tpu.vector_store %arg18[%c0_104, %c0_105, %c0_106], %102 {strides = array<i32>} : memref<10x10x256xf32, #tpu.memory_space<vmem>>, vector<1x10x256xf32>,
    %c9_107 = arith.constant 9 : index
    %c0_108 = arith.constant 0 : index
    %c0_109 = arith.constant 0 : index
    %103 = vector.load %arg18[%c9_107, %c0_108, %c0_109] : memref<10x10x256xf32, #tpu.memory_space<vmem>>, vector<1x10x256xf32>
    %104 = vector.shape_cast %103 : vector<1x10x256xf32> to vector<10x256xf32>
    %105 = vector.shape_cast %99 : vector<10x256xf32> to vector<1x10x256xf32>
    tpu.vector_store %arg18[%c9_107, %c0_108, %c0_109], %105 {strides = array<i32>} : memref<10x10x256xf32, #tpu.memory_space<vmem>>, vector<1x10x256xf32>,
    %cst_110 = arith.constant 0.000000e+00 : f32
    %106 = vector.broadcast %cst_110 : f32 to vector<10x1x256xf32>
    %c0_111 = arith.constant 0 : index
    %c0_112 = arith.constant 0 : index
    %c0_113 = arith.constant 0 : index
    %107 = vector.load %arg18[%c0_111, %c0_112, %c0_113] : memref<10x10x256xf32, #tpu.memory_space<vmem>>, vector<10x1x256xf32>
    tpu.vector_store %arg18[%c0_111, %c0_112, %c0_113], %106 {strides = array<i32>} : memref<10x10x256xf32, #tpu.memory_space<vmem>>, vector<10x1x256xf32>,
    %c0_114 = arith.constant 0 : index
    %c9_115 = arith.constant 9 : index
    %c0_116 = arith.constant 0 : index
    %108 = vector.load %arg18[%c0_114, %c9_115, %c0_116] : memref<10x10x256xf32, #tpu.memory_space<vmem>>, vector<10x1x256xf32>
    tpu.vector_store %arg18[%c0_114, %c9_115, %c0_116], %106 {strides = array<i32>} : memref<10x10x256xf32, #tpu.memory_space<vmem>>, vector<10x1x256xf32>,
    %c1_117 = arith.constant 1 : index
    %c1_118 = arith.constant 1 : index
    %c0_119 = arith.constant 0 : index
    %109 = vector.load %arg18[%c1_117, %c1_118, %c0_119] : memref<10x10x256xf32, #tpu.memory_space<vmem>>, vector<8x8x256xf32>
    tpu.vector_store %arg18[%c1_117, %c1_118, %c0_119], %98 {strides = array<i32>} : memref<10x10x256xf32, #tpu.memory_space<vmem>>, vector<8x8x256xf32>,
    %c0_120 = arith.constant 0 : index
    %c0_121 = arith.constant 0 : index
    %c0_122 = arith.constant 0 : index
    %110 = vector.load %arg18[%c0_120, %c0_121, %c0_122] : memref<10x10x256xf32, #tpu.memory_space<vmem>>, vector<1x10x256xf32>
    %111 = vector.shape_cast %110 : vector<1x10x256xf32> to vector<10x256xf32>
    %c1_123 = arith.constant 1 : index
    %c0_124 = arith.constant 0 : index
    %c0_125 = arith.constant 0 : index
    %112 = vector.load %arg18[%c1_123, %c0_124, %c0_125] : memref<10x10x256xf32, #tpu.memory_space<vmem>>, vector<1x10x256xf32>
    %113 = vector.shape_cast %112 : vector<1x10x256xf32> to vector<10x256xf32>
    %114 = arith.maximumf %111, %113 : vector<10x256xf32>
    %c2_126 = arith.constant 2 : index
    %c0_127 = arith.constant 0 : index
    %c0_128 = arith.constant 0 : index
    %115 = vector.load %arg18[%c2_126, %c0_127, %c0_128] : memref<10x10x256xf32, #tpu.memory_space<vmem>>, vector<1x10x256xf32>
    %116 = vector.shape_cast %115 : vector<1x10x256xf32> to vector<10x256xf32>
    %117 = arith.maximumf %114, %116 : vector<10x256xf32>
    %118 = vector.extract_strided_slice %117 {offsets = [0, 0], sizes = [1, 256], strides = [1, 1]} : vector<10x256xf32> to vector<1x256xf32>
    %119 = vector.extract_strided_slice %117 {offsets = [1, 0], sizes = [1, 256], strides = [1, 1]} : vector<10x256xf32> to vector<1x256xf32>
    %120 = arith.maximumf %118, %119 : vector<1x256xf32>
    %121 = vector.extract_strided_slice %117 {offsets = [2, 0], sizes = [1, 256], strides = [1, 1]} : vector<10x256xf32> to vector<1x256xf32>
    %122 = arith.maximumf %120, %121 : vector<1x256xf32>
    %c0_129 = arith.constant 0 : index
    %c0_130 = arith.constant 0 : index
    %123 = vector.load %arg19[%c0_129, %c0_130] : memref<16x256xf32, #tpu.memory_space<vmem>>, vector<1x256xf32>
    tpu.vector_store %arg19[%c0_129, %c0_130], %122 {strides = array<i32>} : memref<16x256xf32, #tpu.memory_space<vmem>>, vector<1x256xf32>,
    %124 = vector.extract_strided_slice %117 {offsets = [2, 0], sizes = [1, 256], strides = [1, 1]} : vector<10x256xf32> to vector<1x256xf32>
    %125 = vector.extract_strided_slice %117 {offsets = [3, 0], sizes = [1, 256], strides = [1, 1]} : vector<10x256xf32> to vector<1x256xf32>
    %126 = arith.maximumf %124, %125 : vector<1x256xf32>
    %127 = vector.extract_strided_slice %117 {offsets = [4, 0], sizes = [1, 256], strides = [1, 1]} : vector<10x256xf32> to vector<1x256xf32>
    %128 = arith.maximumf %126, %127 : vector<1x256xf32>
    %c1_131 = arith.constant 1 : index
    %c0_132 = arith.constant 0 : index
    %129 = vector.load %arg19[%c1_131, %c0_132] : memref<16x256xf32, #tpu.memory_space<vmem>>, vector<1x256xf32>
    tpu.vector_store %arg19[%c1_131, %c0_132], %128 {strides = array<i32>} : memref<16x256xf32, #tpu.memory_space<vmem>>, vector<1x256xf32>,
    %130 = vector.extract_strided_slice %117 {offsets = [4, 0], sizes = [1, 256], strides = [1, 1]} : vector<10x256xf32> to vector<1x256xf32>
    %131 = vector.extract_strided_slice %117 {offsets = [5, 0], sizes = [1, 256], strides = [1, 1]} : vector<10x256xf32> to vector<1x256xf32>
    %132 = arith.maximumf %130, %131 : vector<1x256xf32>
    %133 = vector.extract_strided_slice %117 {offsets = [6, 0], sizes = [1, 256], strides = [1, 1]} : vector<10x256xf32> to vector<1x256xf32>
    %134 = arith.maximumf %132, %133 : vector<1x256xf32>
    %c2_133 = arith.constant 2 : index
    %c0_134 = arith.constant 0 : index
    %135 = vector.load %arg19[%c2_133, %c0_134] : memref<16x256xf32, #tpu.memory_space<vmem>>, vector<1x256xf32>
    tpu.vector_store %arg19[%c2_133, %c0_134], %134 {strides = array<i32>} : memref<16x256xf32, #tpu.memory_space<vmem>>, vector<1x256xf32>,
    %136 = vector.extract_strided_slice %117 {offsets = [6, 0], sizes = [1, 256], strides = [1, 1]} : vector<10x256xf32> to vector<1x256xf32>
    %137 = vector.extract_strided_slice %117 {offsets = [7, 0], sizes = [1, 256], strides = [1, 1]} : vector<10x256xf32> to vector<1x256xf32>
    %138 = arith.maximumf %136, %137 : vector<1x256xf32>
    %139 = vector.extract_strided_slice %117 {offsets = [8, 0], sizes = [1, 256], strides = [1, 1]} : vector<10x256xf32> to vector<1x256xf32>
    %140 = arith.maximumf %138, %139 : vector<1x256xf32>
    %c3 = arith.constant 3 : index
    %c0_135 = arith.constant 0 : index
    %141 = vector.load %arg19[%c3, %c0_135] : memref<16x256xf32, #tpu.memory_space<vmem>>, vector<1x256xf32>
    tpu.vector_store %arg19[%c3, %c0_135], %140 {strides = array<i32>} : memref<16x256xf32, #tpu.memory_space<vmem>>, vector<1x256xf32>,
    %c2_136 = arith.constant 2 : index
    %c0_137 = arith.constant 0 : index
    %c0_138 = arith.constant 0 : index
    %142 = vector.load %arg18[%c2_136, %c0_137, %c0_138] : memref<10x10x256xf32, #tpu.memory_space<vmem>>, vector<1x10x256xf32>
    %143 = vector.shape_cast %142 : vector<1x10x256xf32> to vector<10x256xf32>
    %c3_139 = arith.constant 3 : index
    %c0_140 = arith.constant 0 : index
    %c0_141 = arith.constant 0 : index
    %144 = vector.load %arg18[%c3_139, %c0_140, %c0_141] : memref<10x10x256xf32, #tpu.memory_space<vmem>>, vector<1x10x256xf32>
    %145 = vector.shape_cast %144 : vector<1x10x256xf32> to vector<10x256xf32>
    %146 = arith.maximumf %143, %145 : vector<10x256xf32>
    %c4 = arith.constant 4 : index
    %c0_142 = arith.constant 0 : index
    %c0_143 = arith.constant 0 : index
    %147 = vector.load %arg18[%c4, %c0_142, %c0_143] : memref<10x10x256xf32, #tpu.memory_space<vmem>>, vector<1x10x256xf32>
    %148 = vector.shape_cast %147 : vector<1x10x256xf32> to vector<10x256xf32>
    %149 = arith.maximumf %146, %148 : vector<10x256xf32>
    %150 = vector.extract_strided_slice %149 {offsets = [0, 0], sizes = [1, 256], strides = [1, 1]} : vector<10x256xf32> to vector<1x256xf32>
    %151 = vector.extract_strided_slice %149 {offsets = [1, 0], sizes = [1, 256], strides = [1, 1]} : vector<10x256xf32> to vector<1x256xf32>
    %152 = arith.maximumf %150, %151 : vector<1x256xf32>
    %153 = vector.extract_strided_slice %149 {offsets = [2, 0], sizes = [1, 256], strides = [1, 1]} : vector<10x256xf32> to vector<1x256xf32>
    %154 = arith.maximumf %152, %153 : vector<1x256xf32>
    %c4_144 = arith.constant 4 : index
    %c0_145 = arith.constant 0 : index
    %155 = vector.load %arg19[%c4_144, %c0_145] : memref<16x256xf32, #tpu.memory_space<vmem>>, vector<1x256xf32>
    tpu.vector_store %arg19[%c4_144, %c0_145], %154 {strides = array<i32>} : memref<16x256xf32, #tpu.memory_space<vmem>>, vector<1x256xf32>,
    %156 = vector.extract_strided_slice %149 {offsets = [2, 0], sizes = [1, 256], strides = [1, 1]} : vector<10x256xf32> to vector<1x256xf32>
    %157 = vector.extract_strided_slice %149 {offsets = [3, 0], sizes = [1, 256], strides = [1, 1]} : vector<10x256xf32> to vector<1x256xf32>
    %158 = arith.maximumf %156, %157 : vector<1x256xf32>
    %159 = vector.extract_strided_slice %149 {offsets = [4, 0], sizes = [1, 256], strides = [1, 1]} : vector<10x256xf32> to vector<1x256xf32>
    %160 = arith.maximumf %158, %159 : vector<1x256xf32>
    %c5 = arith.constant 5 : index
    %c0_146 = arith.constant 0 : index
    %161 = vector.load %arg19[%c5, %c0_146] : memref<16x256xf32, #tpu.memory_space<vmem>>, vector<1x256xf32>
    tpu.vector_store %arg19[%c5, %c0_146], %160 {strides = array<i32>} : memref<16x256xf32, #tpu.memory_space<vmem>>, vector<1x256xf32>,
    %162 = vector.extract_strided_slice %149 {offsets = [4, 0], sizes = [1, 256], strides = [1, 1]} : vector<10x256xf32> to vector<1x256xf32>
    %163 = vector.extract_strided_slice %149 {offsets = [5, 0], sizes = [1, 256], strides = [1, 1]} : vector<10x256xf32> to vector<1x256xf32>
    %164 = arith.maximumf %162, %163 : vector<1x256xf32>
    %165 = vector.extract_strided_slice %149 {offsets = [6, 0], sizes = [1, 256], strides = [1, 1]} : vector<10x256xf32> to vector<1x256xf32>
    %166 = arith.maximumf %164, %165 : vector<1x256xf32>
    %c6 = arith.constant 6 : index
    %c0_147 = arith.constant 0 : index
    %167 = vector.load %arg19[%c6, %c0_147] : memref<16x256xf32, #tpu.memory_space<vmem>>, vector<1x256xf32>
    tpu.vector_store %arg19[%c6, %c0_147], %166 {strides = array<i32>} : memref<16x256xf32, #tpu.memory_space<vmem>>, vector<1x256xf32>,
    %168 = vector.extract_strided_slice %149 {offsets = [6, 0], sizes = [1, 256], strides = [1, 1]} : vector<10x256xf32> to vector<1x256xf32>
    %169 = vector.extract_strided_slice %149 {offsets = [7, 0], sizes = [1, 256], strides = [1, 1]} : vector<10x256xf32> to vector<1x256xf32>
    %170 = arith.maximumf %168, %169 : vector<1x256xf32>
    %171 = vector.extract_strided_slice %149 {offsets = [8, 0], sizes = [1, 256], strides = [1, 1]} : vector<10x256xf32> to vector<1x256xf32>
    %172 = arith.maximumf %170, %171 : vector<1x256xf32>
    %c7 = arith.constant 7 : index
    %c0_148 = arith.constant 0 : index
    %173 = vector.load %arg19[%c7, %c0_148] : memref<16x256xf32, #tpu.memory_space<vmem>>, vector<1x256xf32>
    tpu.vector_store %arg19[%c7, %c0_148], %172 {strides = array<i32>} : memref<16x256xf32, #tpu.memory_space<vmem>>, vector<1x256xf32>,
    %c4_149 = arith.constant 4 : index
    %c0_150 = arith.constant 0 : index
    %c0_151 = arith.constant 0 : index
    %174 = vector.load %arg18[%c4_149, %c0_150, %c0_151] : memref<10x10x256xf32, #tpu.memory_space<vmem>>, vector<1x10x256xf32>
    %175 = vector.shape_cast %174 : vector<1x10x256xf32> to vector<10x256xf32>
    %c5_152 = arith.constant 5 : index
    %c0_153 = arith.constant 0 : index
    %c0_154 = arith.constant 0 : index
    %176 = vector.load %arg18[%c5_152, %c0_153, %c0_154] : memref<10x10x256xf32, #tpu.memory_space<vmem>>, vector<1x10x256xf32>
    %177 = vector.shape_cast %176 : vector<1x10x256xf32> to vector<10x256xf32>
    %178 = arith.maximumf %175, %177 : vector<10x256xf32>
    %c6_155 = arith.constant 6 : index
    %c0_156 = arith.constant 0 : index
    %c0_157 = arith.constant 0 : index
    %179 = vector.load %arg18[%c6_155, %c0_156, %c0_157] : memref<10x10x256xf32, #tpu.memory_space<vmem>>, vector<1x10x256xf32>
    %180 = vector.shape_cast %179 : vector<1x10x256xf32> to vector<10x256xf32>
    %181 = arith.maximumf %178, %180 : vector<10x256xf32>
    %182 = vector.extract_strided_slice %181 {offsets = [0, 0], sizes = [1, 256], strides = [1, 1]} : vector<10x256xf32> to vector<1x256xf32>
    %183 = vector.extract_strided_slice %181 {offsets = [1, 0], sizes = [1, 256], strides = [1, 1]} : vector<10x256xf32> to vector<1x256xf32>
    %184 = arith.maximumf %182, %183 : vector<1x256xf32>
    %185 = vector.extract_strided_slice %181 {offsets = [2, 0], sizes = [1, 256], strides = [1, 1]} : vector<10x256xf32> to vector<1x256xf32>
    %186 = arith.maximumf %184, %185 : vector<1x256xf32>
    %c8 = arith.constant 8 : index
    %c0_158 = arith.constant 0 : index
    %187 = vector.load %arg19[%c8, %c0_158] : memref<16x256xf32, #tpu.memory_space<vmem>>, vector<1x256xf32>
    tpu.vector_store %arg19[%c8, %c0_158], %186 {strides = array<i32>} : memref<16x256xf32, #tpu.memory_space<vmem>>, vector<1x256xf32>,
    %188 = vector.extract_strided_slice %181 {offsets = [2, 0], sizes = [1, 256], strides = [1, 1]} : vector<10x256xf32> to vector<1x256xf32>
    %189 = vector.extract_strided_slice %181 {offsets = [3, 0], sizes = [1, 256], strides = [1, 1]} : vector<10x256xf32> to vector<1x256xf32>
    %190 = arith.maximumf %188, %189 : vector<1x256xf32>
    %191 = vector.extract_strided_slice %181 {offsets = [4, 0], sizes = [1, 256], strides = [1, 1]} : vector<10x256xf32> to vector<1x256xf32>
    %192 = arith.maximumf %190, %191 : vector<1x256xf32>
    %c9_159 = arith.constant 9 : index
    %c0_160 = arith.constant 0 : index
    %193 = vector.load %arg19[%c9_159, %c0_160] : memref<16x256xf32, #tpu.memory_space<vmem>>, vector<1x256xf32>
    tpu.vector_store %arg19[%c9_159, %c0_160], %192 {strides = array<i32>} : memref<16x256xf32, #tpu.memory_space<vmem>>, vector<1x256xf32>,
    %194 = vector.extract_strided_slice %181 {offsets = [4, 0], sizes = [1, 256], strides = [1, 1]} : vector<10x256xf32> to vector<1x256xf32>
    %195 = vector.extract_strided_slice %181 {offsets = [5, 0], sizes = [1, 256], strides = [1, 1]} : vector<10x256xf32> to vector<1x256xf32>
    %196 = arith.maximumf %194, %195 : vector<1x256xf32>
    %197 = vector.extract_strided_slice %181 {offsets = [6, 0], sizes = [1, 256], strides = [1, 1]} : vector<10x256xf32> to vector<1x256xf32>
    %198 = arith.maximumf %196, %197 : vector<1x256xf32>
    %c10 = arith.constant 10 : index
    %c0_161 = arith.constant 0 : index
    %199 = vector.load %arg19[%c10, %c0_161] : memref<16x256xf32, #tpu.memory_space<vmem>>, vector<1x256xf32>
    tpu.vector_store %arg19[%c10, %c0_161], %198 {strides = array<i32>} : memref<16x256xf32, #tpu.memory_space<vmem>>, vector<1x256xf32>,
    %200 = vector.extract_strided_slice %181 {offsets = [6, 0], sizes = [1, 256], strides = [1, 1]} : vector<10x256xf32> to vector<1x256xf32>
    %201 = vector.extract_strided_slice %181 {offsets = [7, 0], sizes = [1, 256], strides = [1, 1]} : vector<10x256xf32> to vector<1x256xf32>
    %202 = arith.maximumf %200, %201 : vector<1x256xf32>
    %203 = vector.extract_strided_slice %181 {offsets = [8, 0], sizes = [1, 256], strides = [1, 1]} : vector<10x256xf32> to vector<1x256xf32>
    %204 = arith.maximumf %202, %203 : vector<1x256xf32>
    %c11 = arith.constant 11 : index
    %c0_162 = arith.constant 0 : index
    %205 = vector.load %arg19[%c11, %c0_162] : memref<16x256xf32, #tpu.memory_space<vmem>>, vector<1x256xf32>
    tpu.vector_store %arg19[%c11, %c0_162], %204 {strides = array<i32>} : memref<16x256xf32, #tpu.memory_space<vmem>>, vector<1x256xf32>,
    %c6_163 = arith.constant 6 : index
    %c0_164 = arith.constant 0 : index
    %c0_165 = arith.constant 0 : index
    %206 = vector.load %arg18[%c6_163, %c0_164, %c0_165] : memref<10x10x256xf32, #tpu.memory_space<vmem>>, vector<1x10x256xf32>
    %207 = vector.shape_cast %206 : vector<1x10x256xf32> to vector<10x256xf32>
    %c7_166 = arith.constant 7 : index
    %c0_167 = arith.constant 0 : index
    %c0_168 = arith.constant 0 : index
    %208 = vector.load %arg18[%c7_166, %c0_167, %c0_168] : memref<10x10x256xf32, #tpu.memory_space<vmem>>, vector<1x10x256xf32>
    %209 = vector.shape_cast %208 : vector<1x10x256xf32> to vector<10x256xf32>
    %210 = arith.maximumf %207, %209 : vector<10x256xf32>
    %c8_169 = arith.constant 8 : index
    %c0_170 = arith.constant 0 : index
    %c0_171 = arith.constant 0 : index
    %211 = vector.load %arg18[%c8_169, %c0_170, %c0_171] : memref<10x10x256xf32, #tpu.memory_space<vmem>>, vector<1x10x256xf32>
    %212 = vector.shape_cast %211 : vector<1x10x256xf32> to vector<10x256xf32>
    %213 = arith.maximumf %210, %212 : vector<10x256xf32>
    %214 = vector.extract_strided_slice %213 {offsets = [0, 0], sizes = [1, 256], strides = [1, 1]} : vector<10x256xf32> to vector<1x256xf32>
    %215 = vector.extract_strided_slice %213 {offsets = [1, 0], sizes = [1, 256], strides = [1, 1]} : vector<10x256xf32> to vector<1x256xf32>
    %216 = arith.maximumf %214, %215 : vector<1x256xf32>
    %217 = vector.extract_strided_slice %213 {offsets = [2, 0], sizes = [1, 256], strides = [1, 1]} : vector<10x256xf32> to vector<1x256xf32>
    %218 = arith.maximumf %216, %217 : vector<1x256xf32>
    %c12 = arith.constant 12 : index
    %c0_172 = arith.constant 0 : index
    %219 = vector.load %arg19[%c12, %c0_172] : memref<16x256xf32, #tpu.memory_space<vmem>>, vector<1x256xf32>
    tpu.vector_store %arg19[%c12, %c0_172], %218 {strides = array<i32>} : memref<16x256xf32, #tpu.memory_space<vmem>>, vector<1x256xf32>,
    %220 = vector.extract_strided_slice %213 {offsets = [2, 0], sizes = [1, 256], strides = [1, 1]} : vector<10x256xf32> to vector<1x256xf32>
    %221 = vector.extract_strided_slice %213 {offsets = [3, 0], sizes = [1, 256], strides = [1, 1]} : vector<10x256xf32> to vector<1x256xf32>
    %222 = arith.maximumf %220, %221 : vector<1x256xf32>
    %223 = vector.extract_strided_slice %213 {offsets = [4, 0], sizes = [1, 256], strides = [1, 1]} : vector<10x256xf32> to vector<1x256xf32>
    %224 = arith.maximumf %222, %223 : vector<1x256xf32>
    %c13 = arith.constant 13 : index
    %c0_173 = arith.constant 0 : index
    %225 = vector.load %arg19[%c13, %c0_173] : memref<16x256xf32, #tpu.memory_space<vmem>>, vector<1x256xf32>
    tpu.vector_store %arg19[%c13, %c0_173], %224 {strides = array<i32>} : memref<16x256xf32, #tpu.memory_space<vmem>>, vector<1x256xf32>,
    %226 = vector.extract_strided_slice %213 {offsets = [4, 0], sizes = [1, 256], strides = [1, 1]} : vector<10x256xf32> to vector<1x256xf32>
    %227 = vector.extract_strided_slice %213 {offsets = [5, 0], sizes = [1, 256], strides = [1, 1]} : vector<10x256xf32> to vector<1x256xf32>
    %228 = arith.maximumf %226, %227 : vector<1x256xf32>
    %229 = vector.extract_strided_slice %213 {offsets = [6, 0], sizes = [1, 256], strides = [1, 1]} : vector<10x256xf32> to vector<1x256xf32>
    %230 = arith.maximumf %228, %229 : vector<1x256xf32>
    %c14 = arith.constant 14 : index
    %c0_174 = arith.constant 0 : index
    %231 = vector.load %arg19[%c14, %c0_174] : memref<16x256xf32, #tpu.memory_space<vmem>>, vector<1x256xf32>
    tpu.vector_store %arg19[%c14, %c0_174], %230 {strides = array<i32>} : memref<16x256xf32, #tpu.memory_space<vmem>>, vector<1x256xf32>,
    %232 = vector.extract_strided_slice %213 {offsets = [6, 0], sizes = [1, 256], strides = [1, 1]} : vector<10x256xf32> to vector<1x256xf32>
    %233 = vector.extract_strided_slice %213 {offsets = [7, 0], sizes = [1, 256], strides = [1, 1]} : vector<10x256xf32> to vector<1x256xf32>
    %234 = arith.maximumf %232, %233 : vector<1x256xf32>
    %235 = vector.extract_strided_slice %213 {offsets = [8, 0], sizes = [1, 256], strides = [1, 1]} : vector<10x256xf32> to vector<1x256xf32>
    %236 = arith.maximumf %234, %235 : vector<1x256xf32>
    %c15 = arith.constant 15 : index
    %c0_175 = arith.constant 0 : index
    %237 = vector.load %arg19[%c15, %c0_175] : memref<16x256xf32, #tpu.memory_space<vmem>>, vector<1x256xf32>
    tpu.vector_store %arg19[%c15, %c0_175], %236 {strides = array<i32>} : memref<16x256xf32, #tpu.memory_space<vmem>>, vector<1x256xf32>,
    %c0_176 = arith.constant 0 : index
    %c0_177 = arith.constant 0 : index
    %238 = vector.load %arg19[%c0_176, %c0_177] : memref<16x256xf32, #tpu.memory_space<vmem>>, vector<16x256xf32>
    %239 = arith.truncf %238 : vector<16x256xf32> to vector<16x256xbf16>
    %c0_178 = arith.constant 0 : index
    %c0_179 = arith.constant 0 : index
    %240 = vector.load %arg8[%c0_178, %c0_179] : memref<256x128xbf16, #tpu.memory_space<vmem>>, vector<256x128xbf16>
    %cst_180 = arith.constant dense<0.000000e+00> : vector<16x128xf32>
    %241 = tpu.matmul %239, %240, %cst_180 {dimension_numbers = #tpu.dot_dimension_numbers<[1], [0], [0], [1], [0, 0, 1, 1], [], []>} : vector<16x256xbf16>, vector<256x128xbf16>, vector<16x128xf32> -> vector<16x128xf32>
    %c0_181 = arith.constant 0 : index
    %c0_182 = arith.constant 0 : index
    %242 = vector.load %arg9[%c0_181, %c0_182] : memref<1x128xf32, #tpu.memory_space<vmem>>, vector<1x128xf32>
    %243 = vector.broadcast %242 : vector<1x128xf32> to vector<16x128xf32>
    %244 = arith.addf %241, %243 : vector<16x128xf32>
    %cst_183 = arith.constant 0.000000e+00 : f32
    %245 = vector.broadcast %cst_183 : f32 to vector<16x128xf32>
    %246 = arith.maximumf %244, %245 : vector<16x128xf32>
    %cst_184 = arith.constant 0.000000e+00 : f32
    %247 = vector.broadcast %cst_184 : f32 to vector<6x128xf32>
    %c0_185 = arith.constant 0 : index
    %c0_186 = arith.constant 0 : index
    %c0_187 = arith.constant 0 : index
    %248 = vector.load %arg20[%c0_185, %c0_186, %c0_187] : memref<6x6x128xf32, #tpu.memory_space<vmem>>, vector<1x6x128xf32>
    %249 = vector.shape_cast %248 : vector<1x6x128xf32> to vector<6x128xf32>
    %250 = vector.shape_cast %247 : vector<6x128xf32> to vector<1x6x128xf32>
    tpu.vector_store %arg20[%c0_185, %c0_186, %c0_187], %250 {strides = array<i32>} : memref<6x6x128xf32, #tpu.memory_space<vmem>>, vector<1x6x128xf32>,
    %c5_188 = arith.constant 5 : index
    %c0_189 = arith.constant 0 : index
    %c0_190 = arith.constant 0 : index
    %251 = vector.load %arg20[%c5_188, %c0_189, %c0_190] : memref<6x6x128xf32, #tpu.memory_space<vmem>>, vector<1x6x128xf32>
    %252 = vector.shape_cast %251 : vector<1x6x128xf32> to vector<6x128xf32>
    %253 = vector.shape_cast %247 : vector<6x128xf32> to vector<1x6x128xf32>
    tpu.vector_store %arg20[%c5_188, %c0_189, %c0_190], %253 {strides = array<i32>} : memref<6x6x128xf32, #tpu.memory_space<vmem>>, vector<1x6x128xf32>,
    %cst_191 = arith.constant 0.000000e+00 : f32
    %254 = vector.broadcast %cst_191 : f32 to vector<6x1x128xf32>
    %c0_192 = arith.constant 0 : index
    %c0_193 = arith.constant 0 : index
    %c0_194 = arith.constant 0 : index
    %255 = vector.load %arg20[%c0_192, %c0_193, %c0_194] : memref<6x6x128xf32, #tpu.memory_space<vmem>>, vector<6x1x128xf32>
    tpu.vector_store %arg20[%c0_192, %c0_193, %c0_194], %254 {strides = array<i32>} : memref<6x6x128xf32, #tpu.memory_space<vmem>>, vector<6x1x128xf32>,
    %c0_195 = arith.constant 0 : index
    %c5_196 = arith.constant 5 : index
    %c0_197 = arith.constant 0 : index
    %256 = vector.load %arg20[%c0_195, %c5_196, %c0_197] : memref<6x6x128xf32, #tpu.memory_space<vmem>>, vector<6x1x128xf32>
    tpu.vector_store %arg20[%c0_195, %c5_196, %c0_197], %254 {strides = array<i32>} : memref<6x6x128xf32, #tpu.memory_space<vmem>>, vector<6x1x128xf32>,
    %257 = vector.extract_strided_slice %246 {offsets = [0, 0], sizes = [4, 128], strides = [1, 1]} : vector<16x128xf32> to vector<4x128xf32>
    %c1_198 = arith.constant 1 : index
    %c1_199 = arith.constant 1 : index
    %c0_200 = arith.constant 0 : index
    %258 = vector.load %arg20[%c1_198, %c1_199, %c0_200] : memref<6x6x128xf32, #tpu.memory_space<vmem>>, vector<1x4x128xf32>
    %259 = vector.shape_cast %258 : vector<1x4x128xf32> to vector<4x128xf32>
    %260 = vector.shape_cast %257 : vector<4x128xf32> to vector<1x4x128xf32>
    tpu.vector_store %arg20[%c1_198, %c1_199, %c0_200], %260 {strides = array<i32>} : memref<6x6x128xf32, #tpu.memory_space<vmem>>, vector<1x4x128xf32>,
    %261 = vector.extract_strided_slice %246 {offsets = [4, 0], sizes = [4, 128], strides = [1, 1]} : vector<16x128xf32> to vector<4x128xf32>
    %c2_201 = arith.constant 2 : index
    %c1_202 = arith.constant 1 : index
    %c0_203 = arith.constant 0 : index
    %262 = vector.load %arg20[%c2_201, %c1_202, %c0_203] : memref<6x6x128xf32, #tpu.memory_space<vmem>>, vector<1x4x128xf32>
    %263 = vector.shape_cast %262 : vector<1x4x128xf32> to vector<4x128xf32>
    %264 = vector.shape_cast %261 : vector<4x128xf32> to vector<1x4x128xf32>
    tpu.vector_store %arg20[%c2_201, %c1_202, %c0_203], %264 {strides = array<i32>} : memref<6x6x128xf32, #tpu.memory_space<vmem>>, vector<1x4x128xf32>,
    %265 = vector.extract_strided_slice %246 {offsets = [8, 0], sizes = [4, 128], strides = [1, 1]} : vector<16x128xf32> to vector<4x128xf32>
    %c3_204 = arith.constant 3 : index
    %c1_205 = arith.constant 1 : index
    %c0_206 = arith.constant 0 : index
    %266 = vector.load %arg20[%c3_204, %c1_205, %c0_206] : memref<6x6x128xf32, #tpu.memory_space<vmem>>, vector<1x4x128xf32>
    %267 = vector.shape_cast %266 : vector<1x4x128xf32> to vector<4x128xf32>
    %268 = vector.shape_cast %265 : vector<4x128xf32> to vector<1x4x128xf32>
    tpu.vector_store %arg20[%c3_204, %c1_205, %c0_206], %268 {strides = array<i32>} : memref<6x6x128xf32, #tpu.memory_space<vmem>>, vector<1x4x128xf32>,
    %269 = vector.extract_strided_slice %246 {offsets = [12, 0], sizes = [4, 128], strides = [1, 1]} : vector<16x128xf32> to vector<4x128xf32>
    %c4_207 = arith.constant 4 : index
    %c1_208 = arith.constant 1 : index
    %c0_209 = arith.constant 0 : index
    %270 = vector.load %arg20[%c4_207, %c1_208, %c0_209] : memref<6x6x128xf32, #tpu.memory_space<vmem>>, vector<1x4x128xf32>
    %271 = vector.shape_cast %270 : vector<1x4x128xf32> to vector<4x128xf32>
    %272 = vector.shape_cast %269 : vector<4x128xf32> to vector<1x4x128xf32>
    tpu.vector_store %arg20[%c4_207, %c1_208, %c0_209], %272 {strides = array<i32>} : memref<6x6x128xf32, #tpu.memory_space<vmem>>, vector<1x4x128xf32>,
    %cst_210 = arith.constant 0.000000e+00 : f32
    %273 = vector.broadcast %cst_210 : f32 to vector<1x512xf32>
    %cst_211 = arith.constant 0.000000e+00 : f32
    %274 = vector.broadcast %cst_211 : f32 to vector<4x128xf32>
    %c0_212 = arith.constant 0 : index
    %c0_213 = arith.constant 0 : index
    %c0_214 = arith.constant 0 : index
    %275 = vector.load %arg20[%c0_212, %c0_213, %c0_214] : memref<6x6x128xf32, #tpu.memory_space<vmem>>, vector<1x4x128xf32>
    %276 = vector.shape_cast %275 : vector<1x4x128xf32> to vector<4x128xf32>
    %277 = arith.truncf %276 : vector<4x128xf32> to vector<4x128xbf16>
    %c0_215 = arith.constant 0 : index
    %c0_216 = arith.constant 0 : index
    %c0_217 = arith.constant 0 : index
    %c0_218 = arith.constant 0 : index
    %278 = vector.load %arg10[%c0_215, %c0_216, %c0_217, %c0_218] : memref<3x3x128x128xbf16, #tpu.memory_space<vmem>>, vector<1x1x128x128xbf16>
    %279 = vector.shape_cast %278 : vector<1x1x128x128xbf16> to vector<128x128xbf16>
    %cst_219 = arith.constant dense<0.000000e+00> : vector<4x128xf32>
    %280 = tpu.matmul %277, %279, %cst_219 {dimension_numbers = #tpu.dot_dimension_numbers<[1], [0], [0], [1], [0, 0, 1, 1], [], []>} : vector<4x128xbf16>, vector<128x128xbf16>, vector<4x128xf32> -> vector<4x128xf32>
    %281 = arith.addf %274, %280 : vector<4x128xf32>
    %c0_220 = arith.constant 0 : index
    %c1_221 = arith.constant 1 : index
    %c0_222 = arith.constant 0 : index
    %282 = vector.load %arg20[%c0_220, %c1_221, %c0_222] : memref<6x6x128xf32, #tpu.memory_space<vmem>>, vector<1x4x128xf32>
    %283 = vector.shape_cast %282 : vector<1x4x128xf32> to vector<4x128xf32>
    %284 = arith.truncf %283 : vector<4x128xf32> to vector<4x128xbf16>
    %c0_223 = arith.constant 0 : index
    %c1_224 = arith.constant 1 : index
    %c0_225 = arith.constant 0 : index
    %c0_226 = arith.constant 0 : index
    %285 = vector.load %arg10[%c0_223, %c1_224, %c0_225, %c0_226] : memref<3x3x128x128xbf16, #tpu.memory_space<vmem>>, vector<1x1x128x128xbf16>
    %286 = vector.shape_cast %285 : vector<1x1x128x128xbf16> to vector<128x128xbf16>
    %cst_227 = arith.constant dense<0.000000e+00> : vector<4x128xf32>
    %287 = tpu.matmul %284, %286, %cst_227 {dimension_numbers = #tpu.dot_dimension_numbers<[1], [0], [0], [1], [0, 0, 1, 1], [], []>} : vector<4x128xbf16>, vector<128x128xbf16>, vector<4x128xf32> -> vector<4x128xf32>
    %288 = arith.addf %281, %287 : vector<4x128xf32>
    %c0_228 = arith.constant 0 : index
    %c2_229 = arith.constant 2 : index
    %c0_230 = arith.constant 0 : index
    %289 = vector.load %arg20[%c0_228, %c2_229, %c0_230] : memref<6x6x128xf32, #tpu.memory_space<vmem>>, vector<1x4x128xf32>
    %290 = vector.shape_cast %289 : vector<1x4x128xf32> to vector<4x128xf32>
    %291 = arith.truncf %290 : vector<4x128xf32> to vector<4x128xbf16>
    %c0_231 = arith.constant 0 : index
    %c2_232 = arith.constant 2 : index
    %c0_233 = arith.constant 0 : index
    %c0_234 = arith.constant 0 : index
    %292 = vector.load %arg10[%c0_231, %c2_232, %c0_233, %c0_234] : memref<3x3x128x128xbf16, #tpu.memory_space<vmem>>, vector<1x1x128x128xbf16>
    %293 = vector.shape_cast %292 : vector<1x1x128x128xbf16> to vector<128x128xbf16>
    %cst_235 = arith.constant dense<0.000000e+00> : vector<4x128xf32>
    %294 = tpu.matmul %291, %293, %cst_235 {dimension_numbers = #tpu.dot_dimension_numbers<[1], [0], [0], [1], [0, 0, 1, 1], [], []>} : vector<4x128xbf16>, vector<128x128xbf16>, vector<4x128xf32> -> vector<4x128xf32>
    %295 = arith.addf %288, %294 : vector<4x128xf32>
    %c1_236 = arith.constant 1 : index
    %c0_237 = arith.constant 0 : index
    %c0_238 = arith.constant 0 : index
    %296 = vector.load %arg20[%c1_236, %c0_237, %c0_238] : memref<6x6x128xf32, #tpu.memory_space<vmem>>, vector<1x4x128xf32>
    %297 = vector.shape_cast %296 : vector<1x4x128xf32> to vector<4x128xf32>
    %298 = arith.truncf %297 : vector<4x128xf32> to vector<4x128xbf16>
    %c1_239 = arith.constant 1 : index
    %c0_240 = arith.constant 0 : index
    %c0_241 = arith.constant 0 : index
    %c0_242 = arith.constant 0 : index
    %299 = vector.load %arg10[%c1_239, %c0_240, %c0_241, %c0_242] : memref<3x3x128x128xbf16, #tpu.memory_space<vmem>>, vector<1x1x128x128xbf16>
    %300 = vector.shape_cast %299 : vector<1x1x128x128xbf16> to vector<128x128xbf16>
    %cst_243 = arith.constant dense<0.000000e+00> : vector<4x128xf32>
    %301 = tpu.matmul %298, %300, %cst_243 {dimension_numbers = #tpu.dot_dimension_numbers<[1], [0], [0], [1], [0, 0, 1, 1], [], []>} : vector<4x128xbf16>, vector<128x128xbf16>, vector<4x128xf32> -> vector<4x128xf32>
    %302 = arith.addf %295, %301 : vector<4x128xf32>
    %c1_244 = arith.constant 1 : index
    %c1_245 = arith.constant 1 : index
    %c0_246 = arith.constant 0 : index
    %303 = vector.load %arg20[%c1_244, %c1_245, %c0_246] : memref<6x6x128xf32, #tpu.memory_space<vmem>>, vector<1x4x128xf32>
    %304 = vector.shape_cast %303 : vector<1x4x128xf32> to vector<4x128xf32>
    %305 = arith.truncf %304 : vector<4x128xf32> to vector<4x128xbf16>
    %c1_247 = arith.constant 1 : index
    %c1_248 = arith.constant 1 : index
    %c0_249 = arith.constant 0 : index
    %c0_250 = arith.constant 0 : index
    %306 = vector.load %arg10[%c1_247, %c1_248, %c0_249, %c0_250] : memref<3x3x128x128xbf16, #tpu.memory_space<vmem>>, vector<1x1x128x128xbf16>
    %307 = vector.shape_cast %306 : vector<1x1x128x128xbf16> to vector<128x128xbf16>
    %cst_251 = arith.constant dense<0.000000e+00> : vector<4x128xf32>
    %308 = tpu.matmul %305, %307, %cst_251 {dimension_numbers = #tpu.dot_dimension_numbers<[1], [0], [0], [1], [0, 0, 1, 1], [], []>} : vector<4x128xbf16>, vector<128x128xbf16>, vector<4x128xf32> -> vector<4x128xf32>
    %309 = arith.addf %302, %308 : vector<4x128xf32>
    %c1_252 = arith.constant 1 : index
    %c2_253 = arith.constant 2 : index
    %c0_254 = arith.constant 0 : index
    %310 = vector.load %arg20[%c1_252, %c2_253, %c0_254] : memref<6x6x128xf32, #tpu.memory_space<vmem>>, vector<1x4x128xf32>
    %311 = vector.shape_cast %310 : vector<1x4x128xf32> to vector<4x128xf32>
    %312 = arith.truncf %311 : vector<4x128xf32> to vector<4x128xbf16>
    %c1_255 = arith.constant 1 : index
    %c2_256 = arith.constant 2 : index
    %c0_257 = arith.constant 0 : index
    %c0_258 = arith.constant 0 : index
    %313 = vector.load %arg10[%c1_255, %c2_256, %c0_257, %c0_258] : memref<3x3x128x128xbf16, #tpu.memory_space<vmem>>, vector<1x1x128x128xbf16>
    %314 = vector.shape_cast %313 : vector<1x1x128x128xbf16> to vector<128x128xbf16>
    %cst_259 = arith.constant dense<0.000000e+00> : vector<4x128xf32>
    %315 = tpu.matmul %312, %314, %cst_259 {dimension_numbers = #tpu.dot_dimension_numbers<[1], [0], [0], [1], [0, 0, 1, 1], [], []>} : vector<4x128xbf16>, vector<128x128xbf16>, vector<4x128xf32> -> vector<4x128xf32>
    %316 = arith.addf %309, %315 : vector<4x128xf32>
    %c2_260 = arith.constant 2 : index
    %c0_261 = arith.constant 0 : index
    %c0_262 = arith.constant 0 : index
    %317 = vector.load %arg20[%c2_260, %c0_261, %c0_262] : memref<6x6x128xf32, #tpu.memory_space<vmem>>, vector<1x4x128xf32>
    %318 = vector.shape_cast %317 : vector<1x4x128xf32> to vector<4x128xf32>
    %319 = arith.truncf %318 : vector<4x128xf32> to vector<4x128xbf16>
    %c2_263 = arith.constant 2 : index
    %c0_264 = arith.constant 0 : index
    %c0_265 = arith.constant 0 : index
    %c0_266 = arith.constant 0 : index
    %320 = vector.load %arg10[%c2_263, %c0_264, %c0_265, %c0_266] : memref<3x3x128x128xbf16, #tpu.memory_space<vmem>>, vector<1x1x128x128xbf16>
    %321 = vector.shape_cast %320 : vector<1x1x128x128xbf16> to vector<128x128xbf16>
    %cst_267 = arith.constant dense<0.000000e+00> : vector<4x128xf32>
    %322 = tpu.matmul %319, %321, %cst_267 {dimension_numbers = #tpu.dot_dimension_numbers<[1], [0], [0], [1], [0, 0, 1, 1], [], []>} : vector<4x128xbf16>, vector<128x128xbf16>, vector<4x128xf32> -> vector<4x128xf32>
    %323 = arith.addf %316, %322 : vector<4x128xf32>
    %c2_268 = arith.constant 2 : index
    %c1_269 = arith.constant 1 : index
    %c0_270 = arith.constant 0 : index
    %324 = vector.load %arg20[%c2_268, %c1_269, %c0_270] : memref<6x6x128xf32, #tpu.memory_space<vmem>>, vector<1x4x128xf32>
    %325 = vector.shape_cast %324 : vector<1x4x128xf32> to vector<4x128xf32>
    %326 = arith.truncf %325 : vector<4x128xf32> to vector<4x128xbf16>
    %c2_271 = arith.constant 2 : index
    %c1_272 = arith.constant 1 : index
    %c0_273 = arith.constant 0 : index
    %c0_274 = arith.constant 0 : index
    %327 = vector.load %arg10[%c2_271, %c1_272, %c0_273, %c0_274] : memref<3x3x128x128xbf16, #tpu.memory_space<vmem>>, vector<1x1x128x128xbf16>
    %328 = vector.shape_cast %327 : vector<1x1x128x128xbf16> to vector<128x128xbf16>
    %cst_275 = arith.constant dense<0.000000e+00> : vector<4x128xf32>
    %329 = tpu.matmul %326, %328, %cst_275 {dimension_numbers = #tpu.dot_dimension_numbers<[1], [0], [0], [1], [0, 0, 1, 1], [], []>} : vector<4x128xbf16>, vector<128x128xbf16>, vector<4x128xf32> -> vector<4x128xf32>
    %330 = arith.addf %323, %329 : vector<4x128xf32>
    %c2_276 = arith.constant 2 : index
    %c2_277 = arith.constant 2 : index
    %c0_278 = arith.constant 0 : index
    %331 = vector.load %arg20[%c2_276, %c2_277, %c0_278] : memref<6x6x128xf32, #tpu.memory_space<vmem>>, vector<1x4x128xf32>
    %332 = vector.shape_cast %331 : vector<1x4x128xf32> to vector<4x128xf32>
    %333 = arith.truncf %332 : vector<4x128xf32> to vector<4x128xbf16>
    %c2_279 = arith.constant 2 : index
    %c2_280 = arith.constant 2 : index
    %c0_281 = arith.constant 0 : index
    %c0_282 = arith.constant 0 : index
    %334 = vector.load %arg10[%c2_279, %c2_280, %c0_281, %c0_282] : memref<3x3x128x128xbf16, #tpu.memory_space<vmem>>, vector<1x1x128x128xbf16>
    %335 = vector.shape_cast %334 : vector<1x1x128x128xbf16> to vector<128x128xbf16>
    %cst_283 = arith.constant dense<0.000000e+00> : vector<4x128xf32>
    %336 = tpu.matmul %333, %335, %cst_283 {dimension_numbers = #tpu.dot_dimension_numbers<[1], [0], [0], [1], [0, 0, 1, 1], [], []>} : vector<4x128xbf16>, vector<128x128xbf16>, vector<4x128xf32> -> vector<4x128xf32>
    %337 = arith.addf %330, %336 : vector<4x128xf32>
    %c0_284 = arith.constant 0 : index
    %c0_285 = arith.constant 0 : index
    %338 = vector.load %arg11[%c0_284, %c0_285] : memref<1x128xf32, #tpu.memory_space<vmem>>, vector<1x128xf32>
    %339 = vector.broadcast %338 : vector<1x128xf32> to vector<4x128xf32>
    %340 = arith.addf %337, %339 : vector<4x128xf32>
    %cst_286 = arith.constant 0.000000e+00 : f32
    %341 = vector.broadcast %cst_286 : f32 to vector<4x128xf32>
    %342 = arith.maximumf %340, %341 : vector<4x128xf32>
    %343 = arith.truncf %342 : vector<4x128xf32> to vector<4x128xbf16>
    %c0_287 = arith.constant 0 : index
    %c0_288 = arith.constant 0 : index
    %344 = vector.load %arg12[%c0_287, %c0_288] : memref<128x512xbf16, #tpu.memory_space<vmem>>, vector<128x512xbf16>
    %cst_289 = arith.constant dense<0.000000e+00> : vector<4x512xf32>
    %345 = tpu.matmul %343, %344, %cst_289 {dimension_numbers = #tpu.dot_dimension_numbers<[1], [0], [0], [1], [0, 0, 1, 1], [], []>} : vector<4x128xbf16>, vector<128x512xbf16>, vector<4x512xf32> -> vector<4x512xf32>
    %c0_290 = arith.constant 0 : index
    %c0_291 = arith.constant 0 : index
    %346 = vector.load %arg13[%c0_290, %c0_291] : memref<1x512xf32, #tpu.memory_space<vmem>>, vector<1x512xf32>
    %347 = vector.broadcast %346 : vector<1x512xf32> to vector<4x512xf32>
    %348 = arith.addf %345, %347 : vector<4x512xf32>
    %cst_292 = arith.constant 0.000000e+00 : f32
    %349 = vector.broadcast %cst_292 : f32 to vector<4x512xf32>
    %350 = arith.maximumf %348, %349 : vector<4x512xf32>
    %cst_293 = arith.constant dense<0.000000e+00> : vector<512xf32>
    %351 = vector.multi_reduction <add>, %350, %cst_293 [0] : vector<4x512xf32> to vector<512xf32>
    %352 = vector.shape_cast %351 : vector<512xf32> to vector<1x512xf32>
    %353 = arith.addf %273, %352 : vector<1x512xf32>
    %cst_294 = arith.constant 0.000000e+00 : f32
    %354 = vector.broadcast %cst_294 : f32 to vector<4x128xf32>
    %c1_295 = arith.constant 1 : index
    %c0_296 = arith.constant 0 : index
    %c0_297 = arith.constant 0 : index
    %355 = vector.load %arg20[%c1_295, %c0_296, %c0_297] : memref<6x6x128xf32, #tpu.memory_space<vmem>>, vector<1x4x128xf32>
    %356 = vector.shape_cast %355 : vector<1x4x128xf32> to vector<4x128xf32>
    %357 = arith.truncf %356 : vector<4x128xf32> to vector<4x128xbf16>
    %c0_298 = arith.constant 0 : index
    %c0_299 = arith.constant 0 : index
    %c0_300 = arith.constant 0 : index
    %c0_301 = arith.constant 0 : index
    %358 = vector.load %arg10[%c0_298, %c0_299, %c0_300, %c0_301] : memref<3x3x128x128xbf16, #tpu.memory_space<vmem>>, vector<1x1x128x128xbf16>
    %359 = vector.shape_cast %358 : vector<1x1x128x128xbf16> to vector<128x128xbf16>
    %cst_302 = arith.constant dense<0.000000e+00> : vector<4x128xf32>
    %360 = tpu.matmul %357, %359, %cst_302 {dimension_numbers = #tpu.dot_dimension_numbers<[1], [0], [0], [1], [0, 0, 1, 1], [], []>} : vector<4x128xbf16>, vector<128x128xbf16>, vector<4x128xf32> -> vector<4x128xf32>
    %361 = arith.addf %354, %360 : vector<4x128xf32>
    %c1_303 = arith.constant 1 : index
    %c1_304 = arith.constant 1 : index
    %c0_305 = arith.constant 0 : index
    %362 = vector.load %arg20[%c1_303, %c1_304, %c0_305] : memref<6x6x128xf32, #tpu.memory_space<vmem>>, vector<1x4x128xf32>
    %363 = vector.shape_cast %362 : vector<1x4x128xf32> to vector<4x128xf32>
    %364 = arith.truncf %363 : vector<4x128xf32> to vector<4x128xbf16>
    %c0_306 = arith.constant 0 : index
    %c1_307 = arith.constant 1 : index
    %c0_308 = arith.constant 0 : index
    %c0_309 = arith.constant 0 : index
    %365 = vector.load %arg10[%c0_306, %c1_307, %c0_308, %c0_309] : memref<3x3x128x128xbf16, #tpu.memory_space<vmem>>, vector<1x1x128x128xbf16>
    %366 = vector.shape_cast %365 : vector<1x1x128x128xbf16> to vector<128x128xbf16>
    %cst_310 = arith.constant dense<0.000000e+00> : vector<4x128xf32>
    %367 = tpu.matmul %364, %366, %cst_310 {dimension_numbers = #tpu.dot_dimension_numbers<[1], [0], [0], [1], [0, 0, 1, 1], [], []>} : vector<4x128xbf16>, vector<128x128xbf16>, vector<4x128xf32> -> vector<4x128xf32>
    %368 = arith.addf %361, %367 : vector<4x128xf32>
    %c1_311 = arith.constant 1 : index
    %c2_312 = arith.constant 2 : index
    %c0_313 = arith.constant 0 : index
    %369 = vector.load %arg20[%c1_311, %c2_312, %c0_313] : memref<6x6x128xf32, #tpu.memory_space<vmem>>, vector<1x4x128xf32>
    %370 = vector.shape_cast %369 : vector<1x4x128xf32> to vector<4x128xf32>
    %371 = arith.truncf %370 : vector<4x128xf32> to vector<4x128xbf16>
    %c0_314 = arith.constant 0 : index
    %c2_315 = arith.constant 2 : index
    %c0_316 = arith.constant 0 : index
    %c0_317 = arith.constant 0 : index
    %372 = vector.load %arg10[%c0_314, %c2_315, %c0_316, %c0_317] : memref<3x3x128x128xbf16, #tpu.memory_space<vmem>>, vector<1x1x128x128xbf16>
    %373 = vector.shape_cast %372 : vector<1x1x128x128xbf16> to vector<128x128xbf16>
    %cst_318 = arith.constant dense<0.000000e+00> : vector<4x128xf32>
    %374 = tpu.matmul %371, %373, %cst_318 {dimension_numbers = #tpu.dot_dimension_numbers<[1], [0], [0], [1], [0, 0, 1, 1], [], []>} : vector<4x128xbf16>, vector<128x128xbf16>, vector<4x128xf32> -> vector<4x128xf32>
    %375 = arith.addf %368, %374 : vector<4x128xf32>
    %c2_319 = arith.constant 2 : index
    %c0_320 = arith.constant 0 : index
    %c0_321 = arith.constant 0 : index
    %376 = vector.load %arg20[%c2_319, %c0_320, %c0_321] : memref<6x6x128xf32, #tpu.memory_space<vmem>>, vector<1x4x128xf32>
    %377 = vector.shape_cast %376 : vector<1x4x128xf32> to vector<4x128xf32>
    %378 = arith.truncf %377 : vector<4x128xf32> to vector<4x128xbf16>
    %c1_322 = arith.constant 1 : index
    %c0_323 = arith.constant 0 : index
    %c0_324 = arith.constant 0 : index
    %c0_325 = arith.constant 0 : index
    %379 = vector.load %arg10[%c1_322, %c0_323, %c0_324, %c0_325] : memref<3x3x128x128xbf16, #tpu.memory_space<vmem>>, vector<1x1x128x128xbf16>
    %380 = vector.shape_cast %379 : vector<1x1x128x128xbf16> to vector<128x128xbf16>
    %cst_326 = arith.constant dense<0.000000e+00> : vector<4x128xf32>
    %381 = tpu.matmul %378, %380, %cst_326 {dimension_numbers = #tpu.dot_dimension_numbers<[1], [0], [0], [1], [0, 0, 1, 1], [], []>} : vector<4x128xbf16>, vector<128x128xbf16>, vector<4x128xf32> -> vector<4x128xf32>
    %382 = arith.addf %375, %381 : vector<4x128xf32>
    %c2_327 = arith.constant 2 : index
    %c1_328 = arith.constant 1 : index
    %c0_329 = arith.constant 0 : index
    %383 = vector.load %arg20[%c2_327, %c1_328, %c0_329] : memref<6x6x128xf32, #tpu.memory_space<vmem>>, vector<1x4x128xf32>
    %384 = vector.shape_cast %383 : vector<1x4x128xf32> to vector<4x128xf32>
    %385 = arith.truncf %384 : vector<4x128xf32> to vector<4x128xbf16>
    %c1_330 = arith.constant 1 : index
    %c1_331 = arith.constant 1 : index
    %c0_332 = arith.constant 0 : index
    %c0_333 = arith.constant 0 : index
    %386 = vector.load %arg10[%c1_330, %c1_331, %c0_332, %c0_333] : memref<3x3x128x128xbf16, #tpu.memory_space<vmem>>, vector<1x1x128x128xbf16>
    %387 = vector.shape_cast %386 : vector<1x1x128x128xbf16> to vector<128x128xbf16>
    %cst_334 = arith.constant dense<0.000000e+00> : vector<4x128xf32>
    %388 = tpu.matmul %385, %387, %cst_334 {dimension_numbers = #tpu.dot_dimension_numbers<[1], [0], [0], [1], [0, 0, 1, 1], [], []>} : vector<4x128xbf16>, vector<128x128xbf16>, vector<4x128xf32> -> vector<4x128xf32>
    %389 = arith.addf %382, %388 : vector<4x128xf32>
    %c2_335 = arith.constant 2 : index
    %c2_336 = arith.constant 2 : index
    %c0_337 = arith.constant 0 : index
    %390 = vector.load %arg20[%c2_335, %c2_336, %c0_337] : memref<6x6x128xf32, #tpu.memory_space<vmem>>, vector<1x4x128xf32>
    %391 = vector.shape_cast %390 : vector<1x4x128xf32> to vector<4x128xf32>
    %392 = arith.truncf %391 : vector<4x128xf32> to vector<4x128xbf16>
    %c1_338 = arith.constant 1 : index
    %c2_339 = arith.constant 2 : index
    %c0_340 = arith.constant 0 : index
    %c0_341 = arith.constant 0 : index
    %393 = vector.load %arg10[%c1_338, %c2_339, %c0_340, %c0_341] : memref<3x3x128x128xbf16, #tpu.memory_space<vmem>>, vector<1x1x128x128xbf16>
    %394 = vector.shape_cast %393 : vector<1x1x128x128xbf16> to vector<128x128xbf16>
    %cst_342 = arith.constant dense<0.000000e+00> : vector<4x128xf32>
    %395 = tpu.matmul %392, %394, %cst_342 {dimension_numbers = #tpu.dot_dimension_numbers<[1], [0], [0], [1], [0, 0, 1, 1], [], []>} : vector<4x128xbf16>, vector<128x128xbf16>, vector<4x128xf32> -> vector<4x128xf32>
    %396 = arith.addf %389, %395 : vector<4x128xf32>
    %c3_343 = arith.constant 3 : index
    %c0_344 = arith.constant 0 : index
    %c0_345 = arith.constant 0 : index
    %397 = vector.load %arg20[%c3_343, %c0_344, %c0_345] : memref<6x6x128xf32, #tpu.memory_space<vmem>>, vector<1x4x128xf32>
    %398 = vector.shape_cast %397 : vector<1x4x128xf32> to vector<4x128xf32>
    %399 = arith.truncf %398 : vector<4x128xf32> to vector<4x128xbf16>
    %c2_346 = arith.constant 2 : index
    %c0_347 = arith.constant 0 : index
    %c0_348 = arith.constant 0 : index
    %c0_349 = arith.constant 0 : index
    %400 = vector.load %arg10[%c2_346, %c0_347, %c0_348, %c0_349] : memref<3x3x128x128xbf16, #tpu.memory_space<vmem>>, vector<1x1x128x128xbf16>
    %401 = vector.shape_cast %400 : vector<1x1x128x128xbf16> to vector<128x128xbf16>
    %cst_350 = arith.constant dense<0.000000e+00> : vector<4x128xf32>
    %402 = tpu.matmul %399, %401, %cst_350 {dimension_numbers = #tpu.dot_dimension_numbers<[1], [0], [0], [1], [0, 0, 1, 1], [], []>} : vector<4x128xbf16>, vector<128x128xbf16>, vector<4x128xf32> -> vector<4x128xf32>
    %403 = arith.addf %396, %402 : vector<4x128xf32>
    %c3_351 = arith.constant 3 : index
    %c1_352 = arith.constant 1 : index
    %c0_353 = arith.constant 0 : index
    %404 = vector.load %arg20[%c3_351, %c1_352, %c0_353] : memref<6x6x128xf32, #tpu.memory_space<vmem>>, vector<1x4x128xf32>
    %405 = vector.shape_cast %404 : vector<1x4x128xf32> to vector<4x128xf32>
    %406 = arith.truncf %405 : vector<4x128xf32> to vector<4x128xbf16>
    %c2_354 = arith.constant 2 : index
    %c1_355 = arith.constant 1 : index
    %c0_356 = arith.constant 0 : index
    %c0_357 = arith.constant 0 : index
    %407 = vector.load %arg10[%c2_354, %c1_355, %c0_356, %c0_357] : memref<3x3x128x128xbf16, #tpu.memory_space<vmem>>, vector<1x1x128x128xbf16>
    %408 = vector.shape_cast %407 : vector<1x1x128x128xbf16> to vector<128x128xbf16>
    %cst_358 = arith.constant dense<0.000000e+00> : vector<4x128xf32>
    %409 = tpu.matmul %406, %408, %cst_358 {dimension_numbers = #tpu.dot_dimension_numbers<[1], [0], [0], [1], [0, 0, 1, 1], [], []>} : vector<4x128xbf16>, vector<128x128xbf16>, vector<4x128xf32> -> vector<4x128xf32>
    %410 = arith.addf %403, %409 : vector<4x128xf32>
    %c3_359 = arith.constant 3 : index
    %c2_360 = arith.constant 2 : index
    %c0_361 = arith.constant 0 : index
    %411 = vector.load %arg20[%c3_359, %c2_360, %c0_361] : memref<6x6x128xf32, #tpu.memory_space<vmem>>, vector<1x4x128xf32>
    %412 = vector.shape_cast %411 : vector<1x4x128xf32> to vector<4x128xf32>
    %413 = arith.truncf %412 : vector<4x128xf32> to vector<4x128xbf16>
    %c2_362 = arith.constant 2 : index
    %c2_363 = arith.constant 2 : index
    %c0_364 = arith.constant 0 : index
    %c0_365 = arith.constant 0 : index
    %414 = vector.load %arg10[%c2_362, %c2_363, %c0_364, %c0_365] : memref<3x3x128x128xbf16, #tpu.memory_space<vmem>>, vector<1x1x128x128xbf16>
    %415 = vector.shape_cast %414 : vector<1x1x128x128xbf16> to vector<128x128xbf16>
    %cst_366 = arith.constant dense<0.000000e+00> : vector<4x128xf32>
    %416 = tpu.matmul %413, %415, %cst_366 {dimension_numbers = #tpu.dot_dimension_numbers<[1], [0], [0], [1], [0, 0, 1, 1], [], []>} : vector<4x128xbf16>, vector<128x128xbf16>, vector<4x128xf32> -> vector<4x128xf32>
    %417 = arith.addf %410, %416 : vector<4x128xf32>
    %c0_367 = arith.constant 0 : index
    %c0_368 = arith.constant 0 : index
    %418 = vector.load %arg11[%c0_367, %c0_368] : memref<1x128xf32, #tpu.memory_space<vmem>>, vector<1x128xf32>
    %419 = vector.broadcast %418 : vector<1x128xf32> to vector<4x128xf32>
    %420 = arith.addf %417, %419 : vector<4x128xf32>
    %cst_369 = arith.constant 0.000000e+00 : f32
    %421 = vector.broadcast %cst_369 : f32 to vector<4x128xf32>
    %422 = arith.maximumf %420, %421 : vector<4x128xf32>
    %423 = arith.truncf %422 : vector<4x128xf32> to vector<4x128xbf16>
    %c0_370 = arith.constant 0 : index
    %c0_371 = arith.constant 0 : index
    %424 = vector.load %arg12[%c0_370, %c0_371] : memref<128x512xbf16, #tpu.memory_space<vmem>>, vector<128x512xbf16>
    %cst_372 = arith.constant dense<0.000000e+00> : vector<4x512xf32>
    %425 = tpu.matmul %423, %424, %cst_372 {dimension_numbers = #tpu.dot_dimension_numbers<[1], [0], [0], [1], [0, 0, 1, 1], [], []>} : vector<4x128xbf16>, vector<128x512xbf16>, vector<4x512xf32> -> vector<4x512xf32>
    %c0_373 = arith.constant 0 : index
    %c0_374 = arith.constant 0 : index
    %426 = vector.load %arg13[%c0_373, %c0_374] : memref<1x512xf32, #tpu.memory_space<vmem>>, vector<1x512xf32>
    %427 = vector.broadcast %426 : vector<1x512xf32> to vector<4x512xf32>
    %428 = arith.addf %425, %427 : vector<4x512xf32>
    %cst_375 = arith.constant 0.000000e+00 : f32
    %429 = vector.broadcast %cst_375 : f32 to vector<4x512xf32>
    %430 = arith.maximumf %428, %429 : vector<4x512xf32>
    %cst_376 = arith.constant dense<0.000000e+00> : vector<512xf32>
    %431 = vector.multi_reduction <add>, %430, %cst_376 [0] : vector<4x512xf32> to vector<512xf32>
    %432 = vector.shape_cast %431 : vector<512xf32> to vector<1x512xf32>
    %433 = arith.addf %353, %432 : vector<1x512xf32>
    %cst_377 = arith.constant 0.000000e+00 : f32
    %434 = vector.broadcast %cst_377 : f32 to vector<4x128xf32>
    %c2_378 = arith.constant 2 : index
    %c0_379 = arith.constant 0 : index
    %c0_380 = arith.constant 0 : index
    %435 = vector.load %arg20[%c2_378, %c0_379, %c0_380] : memref<6x6x128xf32, #tpu.memory_space<vmem>>, vector<1x4x128xf32>
    %436 = vector.shape_cast %435 : vector<1x4x128xf32> to vector<4x128xf32>
    %437 = arith.truncf %436 : vector<4x128xf32> to vector<4x128xbf16>
    %c0_381 = arith.constant 0 : index
    %c0_382 = arith.constant 0 : index
    %c0_383 = arith.constant 0 : index
    %c0_384 = arith.constant 0 : index
    %438 = vector.load %arg10[%c0_381, %c0_382, %c0_383, %c0_384] : memref<3x3x128x128xbf16, #tpu.memory_space<vmem>>, vector<1x1x128x128xbf16>
    %439 = vector.shape_cast %438 : vector<1x1x128x128xbf16> to vector<128x128xbf16>
    %cst_385 = arith.constant dense<0.000000e+00> : vector<4x128xf32>
    %440 = tpu.matmul %437, %439, %cst_385 {dimension_numbers = #tpu.dot_dimension_numbers<[1], [0], [0], [1], [0, 0, 1, 1], [], []>} : vector<4x128xbf16>, vector<128x128xbf16>, vector<4x128xf32> -> vector<4x128xf32>
    %441 = arith.addf %434, %440 : vector<4x128xf32>
    %c2_386 = arith.constant 2 : index
    %c1_387 = arith.constant 1 : index
    %c0_388 = arith.constant 0 : index
    %442 = vector.load %arg20[%c2_386, %c1_387, %c0_388] : memref<6x6x128xf32, #tpu.memory_space<vmem>>, vector<1x4x128xf32>
    %443 = vector.shape_cast %442 : vector<1x4x128xf32> to vector<4x128xf32>
    %444 = arith.truncf %443 : vector<4x128xf32> to vector<4x128xbf16>
    %c0_389 = arith.constant 0 : index
    %c1_390 = arith.constant 1 : index
    %c0_391 = arith.constant 0 : index
    %c0_392 = arith.constant 0 : index
    %445 = vector.load %arg10[%c0_389, %c1_390, %c0_391, %c0_392] : memref<3x3x128x128xbf16, #tpu.memory_space<vmem>>, vector<1x1x128x128xbf16>
    %446 = vector.shape_cast %445 : vector<1x1x128x128xbf16> to vector<128x128xbf16>
    %cst_393 = arith.constant dense<0.000000e+00> : vector<4x128xf32>
    %447 = tpu.matmul %444, %446, %cst_393 {dimension_numbers = #tpu.dot_dimension_numbers<[1], [0], [0], [1], [0, 0, 1, 1], [], []>} : vector<4x128xbf16>, vector<128x128xbf16>, vector<4x128xf32> -> vector<4x128xf32>
    %448 = arith.addf %441, %447 : vector<4x128xf32>
    %c2_394 = arith.constant 2 : index
    %c2_395 = arith.constant 2 : index
    %c0_396 = arith.constant 0 : index
    %449 = vector.load %arg20[%c2_394, %c2_395, %c0_396] : memref<6x6x128xf32, #tpu.memory_space<vmem>>, vector<1x4x128xf32>
    %450 = vector.shape_cast %449 : vector<1x4x128xf32> to vector<4x128xf32>
    %451 = arith.truncf %450 : vector<4x128xf32> to vector<4x128xbf16>
    %c0_397 = arith.constant 0 : index
    %c2_398 = arith.constant 2 : index
    %c0_399 = arith.constant 0 : index
    %c0_400 = arith.constant 0 : index
    %452 = vector.load %arg10[%c0_397, %c2_398, %c0_399, %c0_400] : memref<3x3x128x128xbf16, #tpu.memory_space<vmem>>, vector<1x1x128x128xbf16>
    %453 = vector.shape_cast %452 : vector<1x1x128x128xbf16> to vector<128x128xbf16>
    %cst_401 = arith.constant dense<0.000000e+00> : vector<4x128xf32>
    %454 = tpu.matmul %451, %453, %cst_401 {dimension_numbers = #tpu.dot_dimension_numbers<[1], [0], [0], [1], [0, 0, 1, 1], [], []>} : vector<4x128xbf16>, vector<128x128xbf16>, vector<4x128xf32> -> vector<4x128xf32>
    %455 = arith.addf %448, %454 : vector<4x128xf32>
    %c3_402 = arith.constant 3 : index
    %c0_403 = arith.constant 0 : index
    %c0_404 = arith.constant 0 : index
    %456 = vector.load %arg20[%c3_402, %c0_403, %c0_404] : memref<6x6x128xf32, #tpu.memory_space<vmem>>, vector<1x4x128xf32>
    %457 = vector.shape_cast %456 : vector<1x4x128xf32> to vector<4x128xf32>
    %458 = arith.truncf %457 : vector<4x128xf32> to vector<4x128xbf16>
    %c1_405 = arith.constant 1 : index
    %c0_406 = arith.constant 0 : index
    %c0_407 = arith.constant 0 : index
    %c0_408 = arith.constant 0 : index
    %459 = vector.load %arg10[%c1_405, %c0_406, %c0_407, %c0_408] : memref<3x3x128x128xbf16, #tpu.memory_space<vmem>>, vector<1x1x128x128xbf16>
    %460 = vector.shape_cast %459 : vector<1x1x128x128xbf16> to vector<128x128xbf16>
    %cst_409 = arith.constant dense<0.000000e+00> : vector<4x128xf32>
    %461 = tpu.matmul %458, %460, %cst_409 {dimension_numbers = #tpu.dot_dimension_numbers<[1], [0], [0], [1], [0, 0, 1, 1], [], []>} : vector<4x128xbf16>, vector<128x128xbf16>, vector<4x128xf32> -> vector<4x128xf32>
    %462 = arith.addf %455, %461 : vector<4x128xf32>
    %c3_410 = arith.constant 3 : index
    %c1_411 = arith.constant 1 : index
    %c0_412 = arith.constant 0 : index
    %463 = vector.load %arg20[%c3_410, %c1_411, %c0_412] : memref<6x6x128xf32, #tpu.memory_space<vmem>>, vector<1x4x128xf32>
    %464 = vector.shape_cast %463 : vector<1x4x128xf32> to vector<4x128xf32>
    %465 = arith.truncf %464 : vector<4x128xf32> to vector<4x128xbf16>
    %c1_413 = arith.constant 1 : index
    %c1_414 = arith.constant 1 : index
    %c0_415 = arith.constant 0 : index
    %c0_416 = arith.constant 0 : index
    %466 = vector.load %arg10[%c1_413, %c1_414, %c0_415, %c0_416] : memref<3x3x128x128xbf16, #tpu.memory_space<vmem>>, vector<1x1x128x128xbf16>
    %467 = vector.shape_cast %466 : vector<1x1x128x128xbf16> to vector<128x128xbf16>
    %cst_417 = arith.constant dense<0.000000e+00> : vector<4x128xf32>
    %468 = tpu.matmul %465, %467, %cst_417 {dimension_numbers = #tpu.dot_dimension_numbers<[1], [0], [0], [1], [0, 0, 1, 1], [], []>} : vector<4x128xbf16>, vector<128x128xbf16>, vector<4x128xf32> -> vector<4x128xf32>
    %469 = arith.addf %462, %468 : vector<4x128xf32>
    %c3_418 = arith.constant 3 : index
    %c2_419 = arith.constant 2 : index
    %c0_420 = arith.constant 0 : index
    %470 = vector.load %arg20[%c3_418, %c2_419, %c0_420] : memref<6x6x128xf32, #tpu.memory_space<vmem>>, vector<1x4x128xf32>
    %471 = vector.shape_cast %470 : vector<1x4x128xf32> to vector<4x128xf32>
    %472 = arith.truncf %471 : vector<4x128xf32> to vector<4x128xbf16>
    %c1_421 = arith.constant 1 : index
    %c2_422 = arith.constant 2 : index
    %c0_423 = arith.constant 0 : index
    %c0_424 = arith.constant 0 : index
    %473 = vector.load %arg10[%c1_421, %c2_422, %c0_423, %c0_424] : memref<3x3x128x128xbf16, #tpu.memory_space<vmem>>, vector<1x1x128x128xbf16>
    %474 = vector.shape_cast %473 : vector<1x1x128x128xbf16> to vector<128x128xbf16>
    %cst_425 = arith.constant dense<0.000000e+00> : vector<4x128xf32>
    %475 = tpu.matmul %472, %474, %cst_425 {dimension_numbers = #tpu.dot_dimension_numbers<[1], [0], [0], [1], [0, 0, 1, 1], [], []>} : vector<4x128xbf16>, vector<128x128xbf16>, vector<4x128xf32> -> vector<4x128xf32>
    %476 = arith.addf %469, %475 : vector<4x128xf32>
    %c4_426 = arith.constant 4 : index
    %c0_427 = arith.constant 0 : index
    %c0_428 = arith.constant 0 : index
    %477 = vector.load %arg20[%c4_426, %c0_427, %c0_428] : memref<6x6x128xf32, #tpu.memory_space<vmem>>, vector<1x4x128xf32>
    %478 = vector.shape_cast %477 : vector<1x4x128xf32> to vector<4x128xf32>
    %479 = arith.truncf %478 : vector<4x128xf32> to vector<4x128xbf16>
    %c2_429 = arith.constant 2 : index
    %c0_430 = arith.constant 0 : index
    %c0_431 = arith.constant 0 : index
    %c0_432 = arith.constant 0 : index
    %480 = vector.load %arg10[%c2_429, %c0_430, %c0_431, %c0_432] : memref<3x3x128x128xbf16, #tpu.memory_space<vmem>>, vector<1x1x128x128xbf16>
    %481 = vector.shape_cast %480 : vector<1x1x128x128xbf16> to vector<128x128xbf16>
    %cst_433 = arith.constant dense<0.000000e+00> : vector<4x128xf32>
    %482 = tpu.matmul %479, %481, %cst_433 {dimension_numbers = #tpu.dot_dimension_numbers<[1], [0], [0], [1], [0, 0, 1, 1], [], []>} : vector<4x128xbf16>, vector<128x128xbf16>, vector<4x128xf32> -> vector<4x128xf32>
    %483 = arith.addf %476, %482 : vector<4x128xf32>
    %c4_434 = arith.constant 4 : index
    %c1_435 = arith.constant 1 : index
    %c0_436 = arith.constant 0 : index
    %484 = vector.load %arg20[%c4_434, %c1_435, %c0_436] : memref<6x6x128xf32, #tpu.memory_space<vmem>>, vector<1x4x128xf32>
    %485 = vector.shape_cast %484 : vector<1x4x128xf32> to vector<4x128xf32>
    %486 = arith.truncf %485 : vector<4x128xf32> to vector<4x128xbf16>
    %c2_437 = arith.constant 2 : index
    %c1_438 = arith.constant 1 : index
    %c0_439 = arith.constant 0 : index
    %c0_440 = arith.constant 0 : index
    %487 = vector.load %arg10[%c2_437, %c1_438, %c0_439, %c0_440] : memref<3x3x128x128xbf16, #tpu.memory_space<vmem>>, vector<1x1x128x128xbf16>
    %488 = vector.shape_cast %487 : vector<1x1x128x128xbf16> to vector<128x128xbf16>
    %cst_441 = arith.constant dense<0.000000e+00> : vector<4x128xf32>
    %489 = tpu.matmul %486, %488, %cst_441 {dimension_numbers = #tpu.dot_dimension_numbers<[1], [0], [0], [1], [0, 0, 1, 1], [], []>} : vector<4x128xbf16>, vector<128x128xbf16>, vector<4x128xf32> -> vector<4x128xf32>
    %490 = arith.addf %483, %489 : vector<4x128xf32>
    %c4_442 = arith.constant 4 : index
    %c2_443 = arith.constant 2 : index
    %c0_444 = arith.constant 0 : index
    %491 = vector.load %arg20[%c4_442, %c2_443, %c0_444] : memref<6x6x128xf32, #tpu.memory_space<vmem>>, vector<1x4x128xf32>
    %492 = vector.shape_cast %491 : vector<1x4x128xf32> to vector<4x128xf32>
    %493 = arith.truncf %492 : vector<4x128xf32> to vector<4x128xbf16>
    %c2_445 = arith.constant 2 : index
    %c2_446 = arith.constant 2 : index
    %c0_447 = arith.constant 0 : index
    %c0_448 = arith.constant 0 : index
    %494 = vector.load %arg10[%c2_445, %c2_446, %c0_447, %c0_448] : memref<3x3x128x128xbf16, #tpu.memory_space<vmem>>, vector<1x1x128x128xbf16>
    %495 = vector.shape_cast %494 : vector<1x1x128x128xbf16> to vector<128x128xbf16>
    %cst_449 = arith.constant dense<0.000000e+00> : vector<4x128xf32>
    %496 = tpu.matmul %493, %495, %cst_449 {dimension_numbers = #tpu.dot_dimension_numbers<[1], [0], [0], [1], [0, 0, 1, 1], [], []>} : vector<4x128xbf16>, vector<128x128xbf16>, vector<4x128xf32> -> vector<4x128xf32>
    %497 = arith.addf %490, %496 : vector<4x128xf32>
    %c0_450 = arith.constant 0 : index
    %c0_451 = arith.constant 0 : index
    %498 = vector.load %arg11[%c0_450, %c0_451] : memref<1x128xf32, #tpu.memory_space<vmem>>, vector<1x128xf32>
    %499 = vector.broadcast %498 : vector<1x128xf32> to vector<4x128xf32>
    %500 = arith.addf %497, %499 : vector<4x128xf32>
    %cst_452 = arith.constant 0.000000e+00 : f32
    %501 = vector.broadcast %cst_452 : f32 to vector<4x128xf32>
    %502 = arith.maximumf %500, %501 : vector<4x128xf32>
    %503 = arith.truncf %502 : vector<4x128xf32> to vector<4x128xbf16>
    %c0_453 = arith.constant 0 : index
    %c0_454 = arith.constant 0 : index
    %504 = vector.load %arg12[%c0_453, %c0_454] : memref<128x512xbf16, #tpu.memory_space<vmem>>, vector<128x512xbf16>
    %cst_455 = arith.constant dense<0.000000e+00> : vector<4x512xf32>
    %505 = tpu.matmul %503, %504, %cst_455 {dimension_numbers = #tpu.dot_dimension_numbers<[1], [0], [0], [1], [0, 0, 1, 1], [], []>} : vector<4x128xbf16>, vector<128x512xbf16>, vector<4x512xf32> -> vector<4x512xf32>
    %c0_456 = arith.constant 0 : index
    %c0_457 = arith.constant 0 : index
    %506 = vector.load %arg13[%c0_456, %c0_457] : memref<1x512xf32, #tpu.memory_space<vmem>>, vector<1x512xf32>
    %507 = vector.broadcast %506 : vector<1x512xf32> to vector<4x512xf32>
    %508 = arith.addf %505, %507 : vector<4x512xf32>
    %cst_458 = arith.constant 0.000000e+00 : f32
    %509 = vector.broadcast %cst_458 : f32 to vector<4x512xf32>
    %510 = arith.maximumf %508, %509 : vector<4x512xf32>
    %cst_459 = arith.constant dense<0.000000e+00> : vector<512xf32>
    %511 = vector.multi_reduction <add>, %510, %cst_459 [0] : vector<4x512xf32> to vector<512xf32>
    %512 = vector.shape_cast %511 : vector<512xf32> to vector<1x512xf32>
    %513 = arith.addf %433, %512 : vector<1x512xf32>
    %cst_460 = arith.constant 0.000000e+00 : f32
    %514 = vector.broadcast %cst_460 : f32 to vector<4x128xf32>
    %c3_461 = arith.constant 3 : index
    %c0_462 = arith.constant 0 : index
    %c0_463 = arith.constant 0 : index
    %515 = vector.load %arg20[%c3_461, %c0_462, %c0_463] : memref<6x6x128xf32, #tpu.memory_space<vmem>>, vector<1x4x128xf32>
    %516 = vector.shape_cast %515 : vector<1x4x128xf32> to vector<4x128xf32>
    %517 = arith.truncf %516 : vector<4x128xf32> to vector<4x128xbf16>
    %c0_464 = arith.constant 0 : index
    %c0_465 = arith.constant 0 : index
    %c0_466 = arith.constant 0 : index
    %c0_467 = arith.constant 0 : index
    %518 = vector.load %arg10[%c0_464, %c0_465, %c0_466, %c0_467] : memref<3x3x128x128xbf16, #tpu.memory_space<vmem>>, vector<1x1x128x128xbf16>
    %519 = vector.shape_cast %518 : vector<1x1x128x128xbf16> to vector<128x128xbf16>
    %cst_468 = arith.constant dense<0.000000e+00> : vector<4x128xf32>
    %520 = tpu.matmul %517, %519, %cst_468 {dimension_numbers = #tpu.dot_dimension_numbers<[1], [0], [0], [1], [0, 0, 1, 1], [], []>} : vector<4x128xbf16>, vector<128x128xbf16>, vector<4x128xf32> -> vector<4x128xf32>
    %521 = arith.addf %514, %520 : vector<4x128xf32>
    %c3_469 = arith.constant 3 : index
    %c1_470 = arith.constant 1 : index
    %c0_471 = arith.constant 0 : index
    %522 = vector.load %arg20[%c3_469, %c1_470, %c0_471] : memref<6x6x128xf32, #tpu.memory_space<vmem>>, vector<1x4x128xf32>
    %523 = vector.shape_cast %522 : vector<1x4x128xf32> to vector<4x128xf32>
    %524 = arith.truncf %523 : vector<4x128xf32> to vector<4x128xbf16>
    %c0_472 = arith.constant 0 : index
    %c1_473 = arith.constant 1 : index
    %c0_474 = arith.constant 0 : index
    %c0_475 = arith.constant 0 : index
    %525 = vector.load %arg10[%c0_472, %c1_473, %c0_474, %c0_475] : memref<3x3x128x128xbf16, #tpu.memory_space<vmem>>, vector<1x1x128x128xbf16>
    %526 = vector.shape_cast %525 : vector<1x1x128x128xbf16> to vector<128x128xbf16>
    %cst_476 = arith.constant dense<0.000000e+00> : vector<4x128xf32>
    %527 = tpu.matmul %524, %526, %cst_476 {dimension_numbers = #tpu.dot_dimension_numbers<[1], [0], [0], [1], [0, 0, 1, 1], [], []>} : vector<4x128xbf16>, vector<128x128xbf16>, vector<4x128xf32> -> vector<4x128xf32>
    %528 = arith.addf %521, %527 : vector<4x128xf32>
    %c3_477 = arith.constant 3 : index
    %c2_478 = arith.constant 2 : index
    %c0_479 = arith.constant 0 : index
    %529 = vector.load %arg20[%c3_477, %c2_478, %c0_479] : memref<6x6x128xf32, #tpu.memory_space<vmem>>, vector<1x4x128xf32>
    %530 = vector.shape_cast %529 : vector<1x4x128xf32> to vector<4x128xf32>
    %531 = arith.truncf %530 : vector<4x128xf32> to vector<4x128xbf16>
    %c0_480 = arith.constant 0 : index
    %c2_481 = arith.constant 2 : index
    %c0_482 = arith.constant 0 : index
    %c0_483 = arith.constant 0 : index
    %532 = vector.load %arg10[%c0_480, %c2_481, %c0_482, %c0_483] : memref<3x3x128x128xbf16, #tpu.memory_space<vmem>>, vector<1x1x128x128xbf16>
    %533 = vector.shape_cast %532 : vector<1x1x128x128xbf16> to vector<128x128xbf16>
    %cst_484 = arith.constant dense<0.000000e+00> : vector<4x128xf32>
    %534 = tpu.matmul %531, %533, %cst_484 {dimension_numbers = #tpu.dot_dimension_numbers<[1], [0], [0], [1], [0, 0, 1, 1], [], []>} : vector<4x128xbf16>, vector<128x128xbf16>, vector<4x128xf32> -> vector<4x128xf32>
    %535 = arith.addf %528, %534 : vector<4x128xf32>
    %c4_485 = arith.constant 4 : index
    %c0_486 = arith.constant 0 : index
    %c0_487 = arith.constant 0 : index
    %536 = vector.load %arg20[%c4_485, %c0_486, %c0_487] : memref<6x6x128xf32, #tpu.memory_space<vmem>>, vector<1x4x128xf32>
    %537 = vector.shape_cast %536 : vector<1x4x128xf32> to vector<4x128xf32>
    %538 = arith.truncf %537 : vector<4x128xf32> to vector<4x128xbf16>
    %c1_488 = arith.constant 1 : index
    %c0_489 = arith.constant 0 : index
    %c0_490 = arith.constant 0 : index
    %c0_491 = arith.constant 0 : index
    %539 = vector.load %arg10[%c1_488, %c0_489, %c0_490, %c0_491] : memref<3x3x128x128xbf16, #tpu.memory_space<vmem>>, vector<1x1x128x128xbf16>
    %540 = vector.shape_cast %539 : vector<1x1x128x128xbf16> to vector<128x128xbf16>
    %cst_492 = arith.constant dense<0.000000e+00> : vector<4x128xf32>
    %541 = tpu.matmul %538, %540, %cst_492 {dimension_numbers = #tpu.dot_dimension_numbers<[1], [0], [0], [1], [0, 0, 1, 1], [], []>} : vector<4x128xbf16>, vector<128x128xbf16>, vector<4x128xf32> -> vector<4x128xf32>
    %542 = arith.addf %535, %541 : vector<4x128xf32>
    %c4_493 = arith.constant 4 : index
    %c1_494 = arith.constant 1 : index
    %c0_495 = arith.constant 0 : index
    %543 = vector.load %arg20[%c4_493, %c1_494, %c0_495] : memref<6x6x128xf32, #tpu.memory_space<vmem>>, vector<1x4x128xf32>
    %544 = vector.shape_cast %543 : vector<1x4x128xf32> to vector<4x128xf32>
    %545 = arith.truncf %544 : vector<4x128xf32> to vector<4x128xbf16>
    %c1_496 = arith.constant 1 : index
    %c1_497 = arith.constant 1 : index
    %c0_498 = arith.constant 0 : index
    %c0_499 = arith.constant 0 : index
    %546 = vector.load %arg10[%c1_496, %c1_497, %c0_498, %c0_499] : memref<3x3x128x128xbf16, #tpu.memory_space<vmem>>, vector<1x1x128x128xbf16>
    %547 = vector.shape_cast %546 : vector<1x1x128x128xbf16> to vector<128x128xbf16>
    %cst_500 = arith.constant dense<0.000000e+00> : vector<4x128xf32>
    %548 = tpu.matmul %545, %547, %cst_500 {dimension_numbers = #tpu.dot_dimension_numbers<[1], [0], [0], [1], [0, 0, 1, 1], [], []>} : vector<4x128xbf16>, vector<128x128xbf16>, vector<4x128xf32> -> vector<4x128xf32>
    %549 = arith.addf %542, %548 : vector<4x128xf32>
    %c4_501 = arith.constant 4 : index
    %c2_502 = arith.constant 2 : index
    %c0_503 = arith.constant 0 : index
    %550 = vector.load %arg20[%c4_501, %c2_502, %c0_503] : memref<6x6x128xf32, #tpu.memory_space<vmem>>, vector<1x4x128xf32>
    %551 = vector.shape_cast %550 : vector<1x4x128xf32> to vector<4x128xf32>
    %552 = arith.truncf %551 : vector<4x128xf32> to vector<4x128xbf16>
    %c1_504 = arith.constant 1 : index
    %c2_505 = arith.constant 2 : index
    %c0_506 = arith.constant 0 : index
    %c0_507 = arith.constant 0 : index
    %553 = vector.load %arg10[%c1_504, %c2_505, %c0_506, %c0_507] : memref<3x3x128x128xbf16, #tpu.memory_space<vmem>>, vector<1x1x128x128xbf16>
    %554 = vector.shape_cast %553 : vector<1x1x128x128xbf16> to vector<128x128xbf16>
    %cst_508 = arith.constant dense<0.000000e+00> : vector<4x128xf32>
    %555 = tpu.matmul %552, %554, %cst_508 {dimension_numbers = #tpu.dot_dimension_numbers<[1], [0], [0], [1], [0, 0, 1, 1], [], []>} : vector<4x128xbf16>, vector<128x128xbf16>, vector<4x128xf32> -> vector<4x128xf32>
    %556 = arith.addf %549, %555 : vector<4x128xf32>
    %c5_509 = arith.constant 5 : index
    %c0_510 = arith.constant 0 : index
    %c0_511 = arith.constant 0 : index
    %557 = vector.load %arg20[%c5_509, %c0_510, %c0_511] : memref<6x6x128xf32, #tpu.memory_space<vmem>>, vector<1x4x128xf32>
    %558 = vector.shape_cast %557 : vector<1x4x128xf32> to vector<4x128xf32>
    %559 = arith.truncf %558 : vector<4x128xf32> to vector<4x128xbf16>
    %c2_512 = arith.constant 2 : index
    %c0_513 = arith.constant 0 : index
    %c0_514 = arith.constant 0 : index
    %c0_515 = arith.constant 0 : index
    %560 = vector.load %arg10[%c2_512, %c0_513, %c0_514, %c0_515] : memref<3x3x128x128xbf16, #tpu.memory_space<vmem>>, vector<1x1x128x128xbf16>
    %561 = vector.shape_cast %560 : vector<1x1x128x128xbf16> to vector<128x128xbf16>
    %cst_516 = arith.constant dense<0.000000e+00> : vector<4x128xf32>
    %562 = tpu.matmul %559, %561, %cst_516 {dimension_numbers = #tpu.dot_dimension_numbers<[1], [0], [0], [1], [0, 0, 1, 1], [], []>} : vector<4x128xbf16>, vector<128x128xbf16>, vector<4x128xf32> -> vector<4x128xf32>
    %563 = arith.addf %556, %562 : vector<4x128xf32>
    %c5_517 = arith.constant 5 : index
    %c1_518 = arith.constant 1 : index
    %c0_519 = arith.constant 0 : index
    %564 = vector.load %arg20[%c5_517, %c1_518, %c0_519] : memref<6x6x128xf32, #tpu.memory_space<vmem>>, vector<1x4x128xf32>
    %565 = vector.shape_cast %564 : vector<1x4x128xf32> to vector<4x128xf32>
    %566 = arith.truncf %565 : vector<4x128xf32> to vector<4x128xbf16>
    %c2_520 = arith.constant 2 : index
    %c1_521 = arith.constant 1 : index
    %c0_522 = arith.constant 0 : index
    %c0_523 = arith.constant 0 : index
    %567 = vector.load %arg10[%c2_520, %c1_521, %c0_522, %c0_523] : memref<3x3x128x128xbf16, #tpu.memory_space<vmem>>, vector<1x1x128x128xbf16>
    %568 = vector.shape_cast %567 : vector<1x1x128x128xbf16> to vector<128x128xbf16>
    %cst_524 = arith.constant dense<0.000000e+00> : vector<4x128xf32>
    %569 = tpu.matmul %566, %568, %cst_524 {dimension_numbers = #tpu.dot_dimension_numbers<[1], [0], [0], [1], [0, 0, 1, 1], [], []>} : vector<4x128xbf16>, vector<128x128xbf16>, vector<4x128xf32> -> vector<4x128xf32>
    %570 = arith.addf %563, %569 : vector<4x128xf32>
    %c5_525 = arith.constant 5 : index
    %c2_526 = arith.constant 2 : index
    %c0_527 = arith.constant 0 : index
    %571 = vector.load %arg20[%c5_525, %c2_526, %c0_527] : memref<6x6x128xf32, #tpu.memory_space<vmem>>, vector<1x4x128xf32>
    %572 = vector.shape_cast %571 : vector<1x4x128xf32> to vector<4x128xf32>
    %573 = arith.truncf %572 : vector<4x128xf32> to vector<4x128xbf16>
    %c2_528 = arith.constant 2 : index
    %c2_529 = arith.constant 2 : index
    %c0_530 = arith.constant 0 : index
    %c0_531 = arith.constant 0 : index
    %574 = vector.load %arg10[%c2_528, %c2_529, %c0_530, %c0_531] : memref<3x3x128x128xbf16, #tpu.memory_space<vmem>>, vector<1x1x128x128xbf16>
    %575 = vector.shape_cast %574 : vector<1x1x128x128xbf16> to vector<128x128xbf16>
    %cst_532 = arith.constant dense<0.000000e+00> : vector<4x128xf32>
    %576 = tpu.matmul %573, %575, %cst_532 {dimension_numbers = #tpu.dot_dimension_numbers<[1], [0], [0], [1], [0, 0, 1, 1], [], []>} : vector<4x128xbf16>, vector<128x128xbf16>, vector<4x128xf32> -> vector<4x128xf32>
    %577 = arith.addf %570, %576 : vector<4x128xf32>
    %c0_533 = arith.constant 0 : index
    %c0_534 = arith.constant 0 : index
    %578 = vector.load %arg11[%c0_533, %c0_534] : memref<1x128xf32, #tpu.memory_space<vmem>>, vector<1x128xf32>
    %579 = vector.broadcast %578 : vector<1x128xf32> to vector<4x128xf32>
    %580 = arith.addf %577, %579 : vector<4x128xf32>
    %cst_535 = arith.constant 0.000000e+00 : f32
    %581 = vector.broadcast %cst_535 : f32 to vector<4x128xf32>
    %582 = arith.maximumf %580, %581 : vector<4x128xf32>
    %583 = arith.truncf %582 : vector<4x128xf32> to vector<4x128xbf16>
    %c0_536 = arith.constant 0 : index
    %c0_537 = arith.constant 0 : index
    %584 = vector.load %arg12[%c0_536, %c0_537] : memref<128x512xbf16, #tpu.memory_space<vmem>>, vector<128x512xbf16>
    %cst_538 = arith.constant dense<0.000000e+00> : vector<4x512xf32>
    %585 = tpu.matmul %583, %584, %cst_538 {dimension_numbers = #tpu.dot_dimension_numbers<[1], [0], [0], [1], [0, 0, 1, 1], [], []>} : vector<4x128xbf16>, vector<128x512xbf16>, vector<4x512xf32> -> vector<4x512xf32>
    %c0_539 = arith.constant 0 : index
    %c0_540 = arith.constant 0 : index
    %586 = vector.load %arg13[%c0_539, %c0_540] : memref<1x512xf32, #tpu.memory_space<vmem>>, vector<1x512xf32>
    %587 = vector.broadcast %586 : vector<1x512xf32> to vector<4x512xf32>
    %588 = arith.addf %585, %587 : vector<4x512xf32>
    %cst_541 = arith.constant 0.000000e+00 : f32
    %589 = vector.broadcast %cst_541 : f32 to vector<4x512xf32>
    %590 = arith.maximumf %588, %589 : vector<4x512xf32>
    %cst_542 = arith.constant dense<0.000000e+00> : vector<512xf32>
    %591 = vector.multi_reduction <add>, %590, %cst_542 [0] : vector<4x512xf32> to vector<512xf32>
    %592 = vector.shape_cast %591 : vector<512xf32> to vector<1x512xf32>
    %593 = arith.addf %513, %592 : vector<1x512xf32>
    %cst_543 = arith.constant 6.250000e-02 : f32
    %594 = vector.broadcast %cst_543 : f32 to vector<1x512xf32>
    %595 = arith.mulf %593, %594 : vector<1x512xf32>
    %c0_544 = arith.constant 0 : index
    %c0_545 = arith.constant 0 : index
    %596 = vector.load %arg14[%c0_544, %c0_545] : memref<512x100xf32, #tpu.memory_space<vmem>>, vector<512x100xf32>
    %cst_546 = arith.constant dense<0.000000e+00> : vector<1x100xf32>
    %597 = tpu.matmul %595, %596, %cst_546 {dimension_numbers = #tpu.dot_dimension_numbers<[1], [0], [0], [1], [0, 0, 1, 1], [], []>} : vector<1x512xf32>, vector<512x100xf32>, vector<1x100xf32> -> vector<1x100xf32>
    %c0_547 = arith.constant 0 : index
    %c0_548 = arith.constant 0 : index
    %598 = vector.load %arg15[%c0_547, %c0_548] : memref<1x100xf32, #tpu.memory_space<vmem>>, vector<1x100xf32>
    %599 = arith.addf %597, %598 : vector<1x100xf32>
    %c0_549 = arith.constant 0 : index
    %c0_550 = arith.constant 0 : index
    %c0_551 = arith.constant 0 : index
    %600 = vector.load %arg16[%c0_549, %c0_550, %c0_551] : memref<1x1x100xf32, #tpu.memory_space<vmem>>, vector<1x1x100xf32>
    %601 = vector.shape_cast %600 : vector<1x1x100xf32> to vector<1x100xf32>
    %602 = vector.shape_cast %599 : vector<1x100xf32> to vector<1x1x100xf32>
    tpu.vector_store %arg16[%c0_549, %c0_550, %c0_551], %602 {strides = array<i32>} : memref<1x1x100xf32, #tpu.memory_space<vmem>>, vector<1x1x100xf32>,
    return
  }
  func.func @transform_0(%arg0: i32) -> (i32, i32, i32) {
    %c0_i32 = arith.constant 0 : i32
    %c0_i32_0 = arith.constant 0 : i32
    %c0_i32_1 = arith.constant 0 : i32
    return %arg0, %c0_i32, %c0_i32_0 : i32, i32, i32
  }
  func.func @transform_1(%arg0: i32) -> (i32, i32) {
    %c0_i32 = arith.constant 0 : i32
    %c0_i32_0 = arith.constant 0 : i32
    %c0_i32_1 = arith.constant 0 : i32
    return %c0_i32, %c0_i32_0 : i32, i32
  }
  func.func @transform_2(%arg0: i32) -> (i32, i32) {
    %c0_i32 = arith.constant 0 : i32
    %c0_i32_0 = arith.constant 0 : i32
    %c0_i32_1 = arith.constant 0 : i32
    return %c0_i32, %c0_i32_0 : i32, i32
  }
  func.func @transform_3(%arg0: i32) -> (i32, i32, i32, i32) {
    %c0_i32 = arith.constant 0 : i32
    %c0_i32_0 = arith.constant 0 : i32
    %c0_i32_1 = arith.constant 0 : i32
    %c0_i32_2 = arith.constant 0 : i32
    %c0_i32_3 = arith.constant 0 : i32
    return %c0_i32, %c0_i32_0, %c0_i32_1, %c0_i32_2 : i32, i32, i32, i32
  }
  func.func @transform_4(%arg0: i32) -> (i32, i32) {
    %c0_i32 = arith.constant 0 : i32
    %c0_i32_0 = arith.constant 0 : i32
    %c0_i32_1 = arith.constant 0 : i32
    return %c0_i32, %c0_i32_0 : i32, i32
  }
  func.func @transform_5(%arg0: i32) -> (i32, i32) {
    %c0_i32 = arith.constant 0 : i32
    %c0_i32_0 = arith.constant 0 : i32
    %c0_i32_1 = arith.constant 0 : i32
    return %c0_i32, %c0_i32_0 : i32, i32
  }
  func.func @transform_6(%arg0: i32) -> (i32, i32) {
    %c0_i32 = arith.constant 0 : i32
    %c0_i32_0 = arith.constant 0 : i32
    %c0_i32_1 = arith.constant 0 : i32
    return %c0_i32, %c0_i32_0 : i32, i32
  }
  func.func @transform_7(%arg0: i32) -> (i32, i32) {
    %c0_i32 = arith.constant 0 : i32
    %c0_i32_0 = arith.constant 0 : i32
    %c0_i32_1 = arith.constant 0 : i32
    return %c0_i32, %c0_i32_0 : i32, i32
  }
  func.func @transform_8(%arg0: i32) -> (i32, i32) {
    %c0_i32 = arith.constant 0 : i32
    %c0_i32_0 = arith.constant 0 : i32
    %c0_i32_1 = arith.constant 0 : i32
    return %c0_i32, %c0_i32_0 : i32, i32
  }
  func.func @transform_9(%arg0: i32) -> (i32, i32, i32, i32) {
    %c0_i32 = arith.constant 0 : i32
    %c0_i32_0 = arith.constant 0 : i32
    %c0_i32_1 = arith.constant 0 : i32
    %c0_i32_2 = arith.constant 0 : i32
    %c0_i32_3 = arith.constant 0 : i32
    return %c0_i32, %c0_i32_0, %c0_i32_1, %c0_i32_2 : i32, i32, i32, i32
  }
  func.func @transform_10(%arg0: i32) -> (i32, i32) {
    %c0_i32 = arith.constant 0 : i32
    %c0_i32_0 = arith.constant 0 : i32
    %c0_i32_1 = arith.constant 0 : i32
    return %c0_i32, %c0_i32_0 : i32, i32
  }
  func.func @transform_11(%arg0: i32) -> (i32, i32) {
    %c0_i32 = arith.constant 0 : i32
    %c0_i32_0 = arith.constant 0 : i32
    %c0_i32_1 = arith.constant 0 : i32
    return %c0_i32, %c0_i32_0 : i32, i32
  }
  func.func @transform_12(%arg0: i32) -> (i32, i32) {
    %c0_i32 = arith.constant 0 : i32
    %c0_i32_0 = arith.constant 0 : i32
    %c0_i32_1 = arith.constant 0 : i32
    return %c0_i32, %c0_i32_0 : i32, i32
  }
  func.func @transform_13(%arg0: i32) -> (i32, i32) {
    %c0_i32 = arith.constant 0 : i32
    %c0_i32_0 = arith.constant 0 : i32
    %c0_i32_1 = arith.constant 0 : i32
    return %c0_i32, %c0_i32_0 : i32, i32
  }
  func.func @transform_14(%arg0: i32) -> (i32, i32) {
    %c0_i32 = arith.constant 0 : i32
    %c0_i32_0 = arith.constant 0 : i32
    %c0_i32_1 = arith.constant 0 : i32
    return %c0_i32, %c0_i32_0 : i32, i32
  }
  func.func @transform_15(%arg0: i32) -> (i32, i32, i32) {
    %c0_i32 = arith.constant 0 : i32
    %c0_i32_0 = arith.constant 0 : i32
    %c0_i32_1 = arith.constant 0 : i32
    return %arg0, %c0_i32, %c0_i32_0 : i32, i32, i32
  }
}

</mosaic_0001>

<llo_original>
// kernel: simplenet_forward.2
$region0: #{simplenet_forward.2}
  #allocation0 [shape = 'u32[]', space=smem, size = 0x4, offset = 0x4, fixed_abs, tag = 'smem constant byte address 0x4 - core index']
  #allocation1 [shape = 'u32[144,128]{1,0:T(1,128)}', space=vmem, size = 0x12000, scoped, tag = 'internal scratch']
  #allocation2 [shape = 'f32[18,18,64]{2,1,0:T(8,128)}', space=vmem, size = 0x36000, scoped, tag = 'scratch operand']
  #allocation3 [shape = 'f32[64,64]{1,0:T(8,128)}', space=vmem, size = 0x8000, scoped, tag = 'scratch operand']
  %s0 = inlined_call_operand.vmem [shape: bf16[2,256,147], index: 0, kind: input, shape index: {}]
  %s1 = inlined_call_operand.vmem [shape: bf16[147,64], index: 1, kind: input, shape index: {}]
  %s2 = inlined_call_operand.vmem [shape: f32[1,64], index: 2, kind: input, shape index: {}]
  %s3 = inlined_call_operand.vmem [shape: bf16[2,64,64], index: 3, kind: output, shape index: {}]
  %s4 = sld [smem:[#allocation0]]
  $region45: #{simplenet_forward.2} parent=0
    _
  %s6 = ssub.s32 1, %s4
  %s7 = scalar_select 0, %s6, %s4
  loop: start=0, step=1, limit=4
  $region2: #{simplenet_forward.2} parent=0 // loop_pre_header
    _
  $region3: #{simplenet_forward.2} parent=0 // loop_header
    %s9 = sphi 0, %s13
    %p10 = scmp.ge.s32.totalorder %s9, 4
    %s19 = sphi 0, %s21
    %s22 = sphi 0, %s19
    %s23 = sphi 0, %s22
    %s39 = sphi 0, %s23
    %s43 = sphi 0, %s43
    %s45 = sphi 0, %s43
    %s46 = sphi 0, %s45
    %s60 = sphi 0, %s46
    %s64 = sphi 0, %s64
    %s66 = sphi 0, %s64
    %s67 = sphi 0, %s66
    %s81 = sphi 0, %s67
    %s87 = sphi 0, %s89
    %s90 = sphi 0, %s87
    %s91 = sphi 0, %s90
    %s107 = sphi 0, %s91
  $region4: #{simplenet_forward.2} parent=0 // loop_header_branch
    %12 = sbr.rel (%p10) target = $region8
  $region5: #{simplenet_forward.2} parent=0 // loop_body
    %s14 = ssub.s32 %s9, 1
    %s15 = ssub.s32 %s9, 2
    %s16 = sadd.s32 %s9, 1
    %s17 = ssub.s32 %s9, %s16
    %p18 = scmp.eq.s32.totalorder %s17, 0
    %s20 = sadd.s32 %s19, 1
    %s21 = scalar_select %p18, %s19, %s20
    %p24 = pneg %p18
    %p25 = scmp.eq.s32.totalorder %s9, 1
    %p26 = por %p24, %p25
    %p27 = scmp.ne.s32.totalorder %s19, %s22
    %p28 = scmp.eq.s32.totalorder %s9, 0
    %p29 = por %p27, %p28
    %p30 = scmp.ne.s32.totalorder %s19, %s22
    %p31 = scmp.eq.s32.totalorder %s14, 1
    %p32 = por %p30, %p31
    %p33 = scmp.ne.s32.totalorder %s22, %s23
    %p34 = scmp.eq.s32.totalorder %s14, 0
    %p35 = por %p33, %p34
    %p36 = scmp.ne.s32.totalorder %s22, %s23
    %p37 = scmp.eq.s32.totalorder %s15, 1
    %p38 = por %p36, %p37
    %p40 = scmp.ne.s32.totalorder %s23, %s39
    %p41 = scmp.eq.s32.totalorder %s15, 0
    %p42 = por %p40, %p41
    %s44 = sadd.s32 %s43, 1
    %p47 = scmp.eq.s32.totalorder %s9, 1
    %p48 = scmp.ne.s32.totalorder %s43, %s45
    %p49 = scmp.eq.s32.totalorder %s9, 0
    %p50 = por %p48, %p49
    %p51 = scmp.ne.s32.totalorder %s43, %s45
    %p52 = scmp.eq.s32.totalorder %s14, 1
    %p53 = por %p51, %p52
    %p54 = scmp.ne.s32.totalorder %s45, %s46
    %p55 = scmp.eq.s32.totalorder %s14, 0
    %p56 = por %p54, %p55
    %p57 = scmp.ne.s32.totalorder %s45, %s46
    %p58 = scmp.eq.s32.totalorder %s15, 1
    %p59 = por %p57, %p58
    %p61 = scmp.ne.s32.totalorder %s46, %s60
    %p62 = scmp.eq.s32.totalorder %s15, 0
    %p63 = por %p61, %p62
    %s65 = sadd.s32 %s64, 1
    %p68 = scmp.eq.s32.totalorder %s9, 1
    %p69 = scmp.ne.s32.totalorder %s64, %s66
    %p70 = scmp.eq.s32.totalorder %s9, 0
    %p71 = por %p69, %p70
    %p72 = scmp.ne.s32.totalorder %s64, %s66
    %p73 = scmp.eq.s32.totalorder %s14, 1
    %p74 = por %p72, %p73
    %p75 = scmp.ne.s32.totalorder %s66, %s67
    %p76 = scmp.eq.s32.totalorder %s14, 0
    %p77 = por %p75, %p76
    %p78 = scmp.ne.s32.totalorder %s66, %s67
    %p79 = scmp.eq.s32.totalorder %s15, 1
    %p80 = por %p78, %p79
    %p82 = scmp.ne.s32.totalorder %s67, %s81
    %p83 = scmp.eq.s32.totalorder %s15, 0
    %p84 = por %p82, %p83
    %s85 = ssub.s32 %s9, %s16
    %p86 = scmp.eq.s32.totalorder %s85, 0
    %s88 = sadd.s32 %s87, 1
    %s89 = scalar_select %p86, %s87, %s88
    %p92 = pneg %p86
    %p93 = scmp.eq.s32.totalorder %s9, 1
    %p94 = por %p92, %p93
    %p95 = scmp.ne.s32.totalorder %s87, %s90
    %p96 = scmp.eq.s32.totalorder %s9, 0
    %p97 = por %p95, %p96
    %p98 = scmp.ne.s32.totalorder %s87, %s90
    %p99 = scmp.eq.s32.totalorder %s14, 1
    %p100 = por %p98, %p99
    %p101 = scmp.ne.s32.totalorder %s90, %s91
    %p102 = scmp.eq.s32.totalorder %s14, 0
    %p103 = por %p101, %p102
    %p104 = scmp.ne.s32.totalorder %s90, %s91
    %p105 = scmp.eq.s32.totalorder %s15, 1
    %p106 = por %p104, %p105
    %p108 = scmp.ne.s32.totalorder %s91, %s107
    %p109 = scmp.eq.s32.totalorder %s15, 0
    %p110 = por %p108, %p109
    %p111 = scmp.le.s32.totalorder 1, %s9
    %p112 = scmp.lt.s32.totalorder %s9, 3
    %p113 = pnand %p111, %p112
    %p114 = pneg %p113
    // Predicated region
    $region9: #{simplenet_forward.2} parent=5 // pred_check
      _
    $region10: #{simplenet_forward.2} parent=5 // pred_check_branch
      %116 = sbr.rel (%p113) target = $region12
    $region11: #{simplenet_forward.2} parent=5 // pred_region
      %s117 = ssub.s32 %s9, 1
      // Predicated region
      $region13: #{simplenet_forward.2} parent=11 // pred_check
        %p118 = pneg %p56
      $region14: #{simplenet_forward.2} parent=11 // pred_check_branch
        %120 = sbr.rel (%p118) target = $region16
      $region15: #{simplenet_forward.2} parent=11 // pred_region
        _
      $region16: #{simplenet_forward.2} parent=11 // pred_fallthru
        _
      // Predicated region
      $region17: #{simplenet_forward.2} parent=11 // pred_check
        %p121 = pneg %p77
      $region18: #{simplenet_forward.2} parent=11 // pred_check_branch
        %123 = sbr.rel (%p121) target = $region20
      $region19: #{simplenet_forward.2} parent=11 // pred_region
        _
      $region20: #{simplenet_forward.2} parent=11 // pred_fallthru
        _
    $region12: #{simplenet_forward.2} parent=5 // pred_fallthru
      _
    %p124 = scmp.lt.s32.totalorder %s9, 2
    // Predicated region
    $region21: #{simplenet_forward.2} parent=5 // pred_check
      %p125 = pneg %p124
    $region22: #{simplenet_forward.2} parent=5 // pred_check_branch
      %127 = sbr.rel (%p125) target = $region24
    $region23: #{simplenet_forward.2} parent=5 // pred_region
      // Predicated region
      $region25: #{simplenet_forward.2} parent=23 // pred_check
        %p128 = pneg %p29
      $region26: #{simplenet_forward.2} parent=23 // pred_check_branch
        %130 = sbr.rel (%p128) target = $region28
      $region27: #{simplenet_forward.2} parent=23 // pred_region
        %p131 = scmp.lt.s32.totalorder %s9, 1
        %s132 = scalar_select %p131, %s9, 1
        %s133 = smul.addr %s132, 64
        %s134 = smul.addr %s133, 4
        %s135 = scalar_lea.vmem %s0, %s134
      $region28: #{simplenet_forward.2} parent=23 // pred_fallthru
        _
    $region24: #{simplenet_forward.2} parent=5 // pred_fallthru
      _
    %p136 = scmp.le.s32.totalorder 1, %s9
    %p137 = scmp.lt.s32.totalorder %s9, 3
    %p138 = pnand %p136, %p137
    %p139 = pneg %p138
    // Predicated region
    $region29: #{simplenet_forward.2} parent=5 // pred_check
      _
    $region30: #{simplenet_forward.2} parent=5 // pred_check_branch
      %141 = sbr.rel (%p138) target = $region32
    $region31: #{simplenet_forward.2} parent=5 // pred_region
      %s142 = ssub.s32 %s9, 1
      %p143 = scmp.lt.s32.totalorder %s14, 1
      %s144 = scalar_select %p143, %s14, 1
      %s145 = smul.addr %s144, 64
      %s146 = smul.addr %s145, 4
      %s147 = scalar_lea.vmem %s0, %s146
      %p148 = pneg %p35
      %p149 = pneg %p32
      %p150 = pneg %p56
      %p151 = pneg %p53
      %p152 = pneg %p77
      %p153 = pneg %p74
      %p154 = pneg %p103
      %p155 = pneg %p100
      %p156 = scmp.lt.s32.totalorder %s14, 1
      %s157 = scalar_select %p156, %s14, 1
      %s158 = smul.addr %s157, 8
      %s159 = smul.addr %s158, 4
      %s160 = scalar_lea.vmem %s3, %s159
      %p161 = scmp.lt.s32.totalorder %s14, 1
      %s162 = scalar_select %p161, %s14, 1
      %s163 = smul.addr %s162, 64
      %s164 = smul.addr %s163, 4
      %s165 = scalar_lea.vmem %s0, %s164
      %p166 = scmp.lt.s32.totalorder %s14, 1
      %s167 = scalar_select %p166, %s14, 1
      %s168 = smul.addr %s167, 8
      %s169 = smul.addr %s168, 4
      %s170 = scalar_lea.vmem %s3, %s169
      %v172 = vld [vmem:[%s165] sm:$0xff]
      %v173 = vld [vmem:[%s165 + $0x8] sm:$0xff]
      %v174 = vld [vmem:[%s165 + $0x10] sm:$0xff]
      %v175 = vld [vmem:[%s165 + $0x18] sm:$0xff]
      %v176 = vld [vmem:[%s165 + $0x20] sm:$0xff]
      %v177 = vld [vmem:[%s165 + $0x28] sm:$0xff]
      %v178 = vld [vmem:[%s165 + $0x30] sm:$0xff]
      %v179 = vld [vmem:[%s165 + $0x38] sm:$0xff]
      %v180 = vld [vmem:[%s165 + $0x40] sm:$0xff]
      %v181 = vld [vmem:[%s165 + $0x48] sm:$0xff]
      %v182 = vld [vmem:[%s165 + $0x50] sm:$0xff]
      %v183 = vld [vmem:[%s165 + $0x58] sm:$0xff]
      %v184 = vld [vmem:[%s165 + $0x60] sm:$0xff]
      %v185 = vld [vmem:[%s165 + $0x68] sm:$0xff]
      %v186 = vld [vmem:[%s165 + $0x70] sm:$0xff]
      %v187 = vld [vmem:[%s165 + $0x78] sm:$0xff]
      %v188 = vld [vmem:[%s165 + $0x80] sm:$0xff]
      %v189 = vld [vmem:[%s165 + $0x88] sm:$0xff]
      %v190 = vld [vmem:[%s165 + $0x90] sm:$0xff]
      %v191 = vld [vmem:[%s165 + $0x98] sm:$0xff]
      %v192 = vld [vmem:[%s165 + $0xa0] sm:$0xff]
      %v193 = vld [vmem:[%s165 + $0xa8] sm:$0xff]
      %v194 = vld [vmem:[%s165 + $0xb0] sm:$0xff]
      %v195 = vld [vmem:[%s165 + $0xb8] sm:$0xff]
      %v196 = vld [vmem:[%s165 + $0xc0] sm:$0xff]
      %v197 = vld [vmem:[%s165 + $0xc8] sm:$0xff]
      %v198 = vld [vmem:[%s165 + $0xd0] sm:$0xff]
      %v199 = vld [vmem:[%s165 + $0xd8] sm:$0xff]
      %v200 = vld [vmem:[%s165 + $0xe0] sm:$0xff]
      %v201 = vld [vmem:[%s165 + $0xe8] sm:$0xff]
      %v202 = vld [vmem:[%s165 + $0xf0] sm:$0xff]
      %v203 = vld [vmem:[%s165 + $0xf8] sm:$0xff]
      %v204 = vld [vmem:[%s1] sm:$0xf]
      %v205 = vld [vmem:[%s1 + $0x4] sm:$0xf]
      %v206 = vld [vmem:[%s1 + $0x8] sm:$0xf]
      %v207 = vld [vmem:[%s1 + $0xc] sm:$0xf]
      %v208 = vld [vmem:[%s1 + $0x10] sm:$0xf]
      %v209 = vld [vmem:[%s1 + $0x14] sm:$0xf]
      %v210 = vld [vmem:[%s1 + $0x18] sm:$0xf]
      %v211 = vld [vmem:[%s1 + $0x1c] sm:$0xf]
      %v212 = vld [vmem:[%s1 + $0x20] sm:$0xf]
      %v213 = vld [vmem:[%s1 + $0x24] sm:$0xf]
      %v214 = vld [vmem:[%s1 + $0x28] sm:$0xf]
      %v215 = vld [vmem:[%s1 + $0x2c] sm:$0xf]
      %v216 = vld [vmem:[%s1 + $0x30] sm:$0xf]
      %v217 = vld [vmem:[%s1 + $0x34] sm:$0xf]
      %v218 = vld [vmem:[%s1 + $0x38] sm:$0xf]
      %v219 = vld [vmem:[%s1 + $0x3c] sm:$0xf]
      %v220 = vld [vmem:[%s1 + $0x40] sm:$0xf]
      %v221 = vld [vmem:[%s1 + $0x44] sm:$0xf]
      %v222 = vld [vmem:[%s1 + $0x48] sm:$0x3]
      %v223 = vld [vmem:[%s2] sm:$0x1]
      %v225 = vlaneseq
      %v226 = vshrl.u32 %v225, 7
      %v227 = vsub.s32 0, %v226
      %v228 = vrot.slane %v223, %v227
      %v262 = vunpack.c.l.b16 %v172
      %v263 = vunpack.c.h.b16 %v172
      %v264 = vunpack.c.l.b16 %v173
      %v265 = vunpack.c.h.b16 %v173
      %v266 = vunpack.c.l.b16 %v174
      %v267 = vunpack.c.h.b16 %v174
      %v268 = vunpack.c.l.b16 %v175
      %v269 = vunpack.c.h.b16 %v175
      %v270 = vunpack.c.l.b16 %v176
      %v271 = vunpack.c.h.b16 %v176
      %v272 = vunpack.c.l.b16 %v177
      %v273 = vunpack.c.h.b16 %v177
      %v274 = vunpack.c.l.b16 %v178
      %v275 = vunpack.c.h.b16 %v178
      %v276 = vunpack.c.l.b16 %v179
      %v277 = vunpack.c.h.b16 %v179
      %v278 = vunpack.c.l.b16 %v180
      %v279 = vunpack.c.h.b16 %v180
      %v280 = vunpack.c.l.b16 %v181
      %v281 = vunpack.c.h.b16 %v181
      %v282 = vunpack.c.l.b16 %v182
      %v283 = vunpack.c.h.b16 %v182
      %v284 = vunpack.c.l.b16 %v183
      %v285 = vunpack.c.h.b16 %v183
      %v286 = vunpack.c.l.b16 %v184
      %v287 = vunpack.c.h.b16 %v184
      %v288 = vunpack.c.l.b16 %v185
      %v289 = vunpack.c.h.b16 %v185
      %v290 = vunpack.c.l.b16 %v186
      %v291 = vunpack.c.h.b16 %v186
      %v292 = vunpack.c.l.b16 %v187
      %v293 = vunpack.c.h.b16 %v187
      %v294 = vunpack.c.l.b16 %v188
      %v295 = vunpack.c.h.b16 %v188
      %v296 = vunpack.c.l.b16 %v189
      %v297 = vunpack.c.h.b16 %v189
      %v298 = vunpack.c.l.b16 %v190
      %v299 = vunpack.c.h.b16 %v190
      %v300 = vunpack.c.l.b16 %v191
      %v301 = vunpack.c.h.b16 %v191
      %v302 = vunpack.c.l.b16 %v192
      %v303 = vunpack.c.h.b16 %v192
      %v304 = vunpack.c.l.b16 %v193
      %v305 = vunpack.c.h.b16 %v193
      %v306 = vunpack.c.l.b16 %v194
      %v307 = vunpack.c.h.b16 %v194
      %v308 = vunpack.c.l.b16 %v195
      %v309 = vunpack.c.h.b16 %v195
      %v310 = vunpack.c.l.b16 %v196
      %v311 = vunpack.c.h.b16 %v196
      %v312 = vunpack.c.l.b16 %v197
      %v313 = vunpack.c.h.b16 %v197
      %v314 = vunpack.c.l.b16 %v198
      %v315 = vunpack.c.h.b16 %v198
      %v316 = vunpack.c.l.b16 %v199
      %v317 = vunpack.c.h.b16 %v199
      %v318 = vunpack.c.l.b16 %v200
      %v319 = vunpack.c.h.b16 %v200
      %v320 = vunpack.c.l.b16 %v201
      %v321 = vunpack.c.h.b16 %v201
      %v322 = vunpack.c.l.b16 %v202
      %v323 = vunpack.c.h.b16 %v202
      %v324 = vunpack.c.l.b16 %v203
      %v325 = vunpack.c.h.b16 %v203
      %v326 = vpack.c.b16 %v264, %v262
      %v327 = vpack.c.b16 %v265, %v263
      %v328 = vpack.c.b16 %v268, %v266
      %v329 = vpack.c.b16 %v269, %v267
      %v330 = vpack.c.b16 %v272, %v270
      %v331 = vpack.c.b16 %v273, %v271
      %v332 = vpack.c.b16 %v276, %v274
      %v333 = vpack.c.b16 %v277, %v275
      %v334 = vpack.c.b16 %v280, %v278
      %v335 = vpack.c.b16 %v281, %v279
      %v336 = vpack.c.b16 %v284, %v282
      %v337 = vpack.c.b16 %v285, %v283
      %v338 = vpack.c.b16 %v288, %v286
      %v339 = vpack.c.b16 %v289, %v287
      %v340 = vpack.c.b16 %v292, %v290
      %v341 = vpack.c.b16 %v293, %v291
      %v342 = vpack.c.b16 %v296, %v294
      %v343 = vpack.c.b16 %v297, %v295
      %v344 = vpack.c.b16 %v300, %v298
      %v345 = vpack.c.b16 %v301, %v299
      %v346 = vpack.c.b16 %v304, %v302
      %v347 = vpack.c.b16 %v305, %v303
      %v348 = vpack.c.b16 %v308, %v306
      %v349 = vpack.c.b16 %v309, %v307
      %v350 = vpack.c.b16 %v312, %v310
      %v351 = vpack.c.b16 %v313, %v311
      %v352 = vpack.c.b16 %v316, %v314
      %v353 = vpack.c.b16 %v317, %v315
      %v354 = vpack.c.b16 %v320, %v318
      %v355 = vpack.c.b16 %v321, %v319
      %v356 = vpack.c.b16 %v324, %v322
      %v357 = vpack.c.b16 %v325, %v323
      %v393 = vunpack.c.l.b16 %v204
      %v394 = vunpack.c.l.b16 %v205
      %v395 = vunpack.c.l.b16 %v206
      %v396 = vunpack.c.l.b16 %v207
      %v397 = vunpack.c.l.b16 %v208
      %v398 = vunpack.c.l.b16 %v209
      %v399 = vunpack.c.l.b16 %v210
      %v400 = vunpack.c.l.b16 %v211
      %v401 = vunpack.c.l.b16 %v212
      %v402 = vunpack.c.l.b16 %v213
      %v403 = vunpack.c.l.b16 %v214
      %v404 = vunpack.c.l.b16 %v215
      %v405 = vunpack.c.l.b16 %v216
      %v406 = vunpack.c.l.b16 %v217
      %v407 = vunpack.c.l.b16 %v218
      %v408 = vunpack.c.l.b16 %v219
      %v409 = vunpack.c.l.b16 %v220
      %v410 = vunpack.c.l.b16 %v221
      %v411 = vunpack.c.l.b16 %v222
      %v412 = vpack.c.b16 %v394, %v393
      %v413 = vpack.c.b16 %v396, %v395
      %v414 = vpack.c.b16 %v398, %v397
      %v415 = vpack.c.b16 %v400, %v399
      %v416 = vpack.c.b16 %v402, %v401
      %v417 = vpack.c.b16 %v404, %v403
      %v418 = vpack.c.b16 %v406, %v405
      %v419 = vpack.c.b16 %v408, %v407
      %v420 = vpack.c.b16 %v410, %v409
      %v421 = vpack.c.b16 %v411, %v411
      %vm431 = vcmask 154624
      %v433 = vsel %vm431, %v327, 0
      %v436 = vsel %vm431, %v329, 0
      %v439 = vsel %vm431, %v331, 0
      %v442 = vsel %vm431, %v333, 0
      %v445 = vsel %vm431, %v335, 0
      %v448 = vsel %vm431, %v337, 0
      %v451 = vsel %vm431, %v339, 0
      %v454 = vsel %vm431, %v341, 0
      %v457 = vsel %vm431, %v343, 0
      %v460 = vsel %vm431, %v345, 0
      %v463 = vsel %vm431, %v347, 0
      %v466 = vsel %vm431, %v349, 0
      %v469 = vsel %vm431, %v351, 0
      %v472 = vsel %vm431, %v353, 0
      %v475 = vsel %vm431, %v355, 0
      %v478 = vsel %vm431, %v357, 0
      %vm480 = vcmask 1040384
      %vm481 = vcmask 1041408
      %v482 = vsel %vm480, 4294967295, 65535
      %v483 = vsel %vm481, %v482, 0
      %v485 = vand.u32 %v421, %v483
      %487 = vmatprep.subr.bf16.mxu0 0
      %488 = vmatpush1.bf16.msra.mxu0 %v419
      %489 = vmatprep.subr.bf16.mxu0 0
      %490 = vmatpush1.bf16.msra.mxu0 %v418
      %491 = vmatprep.subr.bf16.mxu0 0
      %492 = vmatpush1.bf16.msra.mxu0 %v417
      %493 = vmatprep.subr.bf16.mxu0 0
      %494 = vmatpush1.bf16.msra.mxu0 %v416
      %495 = vmatprep.subr.bf16.mxu0 0
      %496 = vmatpush1.bf16.msra.mxu0 %v415
      %497 = vmatprep.subr.bf16.mxu0 0
      %498 = vmatpush1.bf16.msra.mxu0 %v414
      %499 = vmatprep.subr.bf16.mxu0 0
      %500 = vmatpush1.bf16.msra.mxu0 %v413
      %501 = vmatprep.subr.bf16.mxu0 0
      %502 = vmatpush1.bf16.msra.mxu0 %v412
      %503 = vmatprep.subr.bf16.mxu0 0
      %504 = vmatpush2.bf16.msra.mxu0 0
      %505 = vmatprep.subr.bf16.mxu0 0
      %506 = vmatpush2.bf16.msra.mxu0 0
      %507 = vmatprep.subr.bf16.mxu0 0
      %508 = vmatpush2.bf16.msra.mxu0 0
      %509 = vmatprep.subr.bf16.mxu0 0
      %510 = vmatpush2.bf16.msra.mxu0 0
      %511 = vmatprep.subr.bf16.mxu0 0
      %512 = vmatpush2.bf16.msra.mxu0 0
      %513 = vmatprep.subr.bf16.mxu0 0
      %514 = vmatpush2.bf16.msra.mxu0 0
      %515 = vmatprep.subr.bf16.mxu0 0
      %516 = vmatpush2.bf16.msra.mxu0 %v485
      %517 = vmatprep.subr.bf16.mxu0 0
      %518 = vmatpush2.bf16.msra.mxu0 %v420
      %519 = vmatprep.mubr.bf16.mxu0 %v433
      %520 = vmatmul.mubr.bf16.gmra.mxu0 %v326
      %v521 = vpop.f32.mrf.mxu0
      %v522 = vadd.f32 %v228, %v521
      %v523 = vpop.f32.mrf.mxu0
      %v524 = vpop.f32.mrf.mxu0
      %v525 = vadd.f32 %v228, %v524
      %v526 = vpop.f32.mrf.mxu0
      %527 = vmatprep.mubr.bf16.mxu0 %v436
      %528 = vmatmul.mubr.bf16.gmra.mxu0 %v328
      %v529 = vpop.f32.mrf.mxu0
      %v530 = vadd.f32 %v228, %v529
      %v531 = vpop.f32.mrf.mxu0
      %v532 = vpop.f32.mrf.mxu0
      %v533 = vadd.f32 %v228, %v532
      %v534 = vpop.f32.mrf.mxu0
      %535 = vmatprep.mubr.bf16.mxu0 %v439
      %536 = vmatmul.mubr.bf16.gmra.mxu0 %v330
      %v537 = vpop.f32.mrf.mxu0
      %v538 = vadd.f32 %v228, %v537
      %v539 = vpop.f32.mrf.mxu0
      %v540 = vpop.f32.mrf.mxu0
      %v541 = vadd.f32 %v228, %v540
      %v542 = vpop.f32.mrf.mxu0
      %543 = vmatprep.mubr.bf16.mxu0 %v442
      %544 = vmatmul.mubr.bf16.gmra.mxu0 %v332
      %v545 = vpop.f32.mrf.mxu0
      %v546 = vadd.f32 %v228, %v545
      %v547 = vpop.f32.mrf.mxu0
      %v548 = vpop.f32.mrf.mxu0
      %v549 = vadd.f32 %v228, %v548
      %v550 = vpop.f32.mrf.mxu0
      %551 = vmatprep.mubr.bf16.mxu0 %v445
      %552 = vmatmul.mubr.bf16.gmra.mxu0 %v334
      %v553 = vpop.f32.mrf.mxu0
      %v554 = vadd.f32 %v228, %v553
      %v555 = vpop.f32.mrf.mxu0
      %v556 = vpop.f32.mrf.mxu0
      %v557 = vadd.f32 %v228, %v556
      %v558 = vpop.f32.mrf.mxu0
      %559 = vmatprep.mubr.bf16.mxu0 %v448
      %560 = vmatmul.mubr.bf16.gmra.mxu0 %v336
      %v561 = vpop.f32.mrf.mxu0
      %v562 = vadd.f32 %v228, %v561
      %v563 = vpop.f32.mrf.mxu0
      %v564 = vpop.f32.mrf.mxu0
      %v565 = vadd.f32 %v228, %v564
      %v566 = vpop.f32.mrf.mxu0
      %567 = vmatprep.mubr.bf16.mxu0 %v451
      %568 = vmatmul.mubr.bf16.gmra.mxu0 %v338
      %v569 = vpop.f32.mrf.mxu0
      %v570 = vadd.f32 %v228, %v569
      %v571 = vpop.f32.mrf.mxu0
      %v572 = vpop.f32.mrf.mxu0
      %v573 = vadd.f32 %v228, %v572
      %v574 = vpop.f32.mrf.mxu0
      %575 = vmatprep.mubr.bf16.mxu0 %v454
      %576 = vmatmul.mubr.bf16.gmra.mxu0 %v340
      %v577 = vpop.f32.mrf.mxu0
      %v578 = vadd.f32 %v228, %v577
      %v579 = vpop.f32.mrf.mxu0
      %v580 = vpop.f32.mrf.mxu0
      %v581 = vadd.f32 %v228, %v580
      %v582 = vpop.f32.mrf.mxu0
      %583 = vmatprep.mubr.bf16.mxu0 %v457
      %584 = vmatmul.mubr.bf16.gmra.mxu0 %v342
      %v585 = vpop.f32.mrf.mxu0
      %v586 = vadd.f32 %v228, %v585
      %v587 = vpop.f32.mrf.mxu0
      %v588 = vpop.f32.mrf.mxu0
      %v589 = vadd.f32 %v228, %v588
      %v590 = vpop.f32.mrf.mxu0
      %591 = vmatprep.mubr.bf16.mxu0 %v460
      %592 = vmatmul.mubr.bf16.gmra.mxu0 %v344
      %v593 = vpop.f32.mrf.mxu0
      %v594 = vadd.f32 %v228, %v593
      %v595 = vpop.f32.mrf.mxu0
      %v596 = vpop.f32.mrf.mxu0
      %v597 = vadd.f32 %v228, %v596
      %v598 = vpop.f32.mrf.mxu0
      %599 = vmatprep.mubr.bf16.mxu0 %v463
      %600 = vmatmul.mubr.bf16.gmra.mxu0 %v346
      %v601 = vpop.f32.mrf.mxu0
      %v602 = vadd.f32 %v228, %v601
      %v603 = vpop.f32.mrf.mxu0
      %v604 = vpop.f32.mrf.mxu0
      %v605 = vadd.f32 %v228, %v604
      %v606 = vpop.f32.mrf.mxu0
      %607 = vmatprep.mubr.bf16.mxu0 %v466
      %608 = vmatmul.mubr.bf16.gmra.mxu0 %v348
      %v609 = vpop.f32.mrf.mxu0
      %v610 = vadd.f32 %v228, %v609
      %v611 = vpop.f32.mrf.mxu0
      %v612 = vpop.f32.mrf.mxu0
      %v613 = vadd.f32 %v228, %v612
      %v614 = vpop.f32.mrf.mxu0
      %615 = vmatprep.mubr.bf16.mxu0 %v469
      %616 = vmatmul.mubr.bf16.gmra.mxu0 %v350
      %v617 = vpop.f32.mrf.mxu0
      %v618 = vadd.f32 %v228, %v617
      %v619 = vpop.f32.mrf.mxu0
      %v620 = vpop.f32.mrf.mxu0
      %v621 = vadd.f32 %v228, %v620
      %v622 = vpop.f32.mrf.mxu0
      %623 = vmatprep.mubr.bf16.mxu0 %v472
      %624 = vmatmul.mubr.bf16.gmra.mxu0 %v352
      %v625 = vpop.f32.mrf.mxu0
      %v626 = vadd.f32 %v228, %v625
      %v627 = vpop.f32.mrf.mxu0
      %v628 = vpop.f32.mrf.mxu0
      %v629 = vadd.f32 %v228, %v628
      %v630 = vpop.f32.mrf.mxu0
      %631 = vmatprep.mubr.bf16.mxu0 %v475
      %632 = vmatmul.mubr.bf16.gmra.mxu0 %v354
      %v633 = vpop.f32.mrf.mxu0
      %v634 = vadd.f32 %v228, %v633
      %v635 = vpop.f32.mrf.mxu0
      %v636 = vpop.f32.mrf.mxu0
      %v637 = vadd.f32 %v228, %v636
      %v638 = vpop.f32.mrf.mxu0
      %639 = vmatprep.mubr.bf16.mxu0 %v478
      %640 = vmatmul.mubr.bf16.gmra.mxu0 %v356
      %v641 = vpop.f32.mrf.mxu0
      %v642 = vadd.f32 %v228, %v641
      %v643 = vpop.f32.mrf.mxu0
      %v644 = vpop.f32.mrf.mxu0
      %v645 = vadd.f32 %v228, %v644
      %v646 = vpop.f32.mrf.mxu0
      %647 = vdwg.mxu0
      %v648 = vmax.f32 %v522, 0.0
      %v649 = vmax.f32 %v525, 0.0
      %v650 = vmax.f32 %v530, 0.0
      %v651 = vmax.f32 %v533, 0.0
      %v652 = vmax.f32 %v538, 0.0
      %v653 = vmax.f32 %v541, 0.0
      %v654 = vmax.f32 %v546, 0.0
      %v655 = vmax.f32 %v549, 0.0
      %v656 = vmax.f32 %v554, 0.0
      %v657 = vmax.f32 %v557, 0.0
      %v658 = vmax.f32 %v562, 0.0
      %v659 = vmax.f32 %v565, 0.0
      %v660 = vmax.f32 %v570, 0.0
      %v661 = vmax.f32 %v573, 0.0
      %v662 = vmax.f32 %v578, 0.0
      %v663 = vmax.f32 %v581, 0.0
      %v664 = vmax.f32 %v586, 0.0
      %v665 = vmax.f32 %v589, 0.0
      %v666 = vmax.f32 %v594, 0.0
      %v667 = vmax.f32 %v597, 0.0
      %v668 = vmax.f32 %v602, 0.0
      %v669 = vmax.f32 %v605, 0.0
      %v670 = vmax.f32 %v610, 0.0
      %v671 = vmax.f32 %v613, 0.0
      %v672 = vmax.f32 %v618, 0.0
      %v673 = vmax.f32 %v621, 0.0
      %v674 = vmax.f32 %v626, 0.0
      %v675 = vmax.f32 %v629, 0.0
      %v676 = vmax.f32 %v634, 0.0
      %v677 = vmax.f32 %v637, 0.0
      %v678 = vmax.f32 %v642, 0.0
      %v679 = vmax.f32 %v645, 0.0
      %vm680 = vcmask 523264
      %681 = vst.msk [vmem:[#allocation2] sm:$0xff] %vm680, 0.0
      %682 = vst.msk [vmem:[#allocation2 + $0x8] sm:$0xff] %vm680, 0.0
      %vm683 = vcmask 517120
      %684 = vst.msk [vmem:[#allocation2 + $0x10] sm:$0x3] %vm683, 0.0
      %s685 = scalar_lea.vmem [#allocation2], 408
      %686 = vst.msk [vmem:[%s685] sm:$0xff] %vm680, 0.0
      %687 = vst.msk [vmem:[%s685 + $0x8] sm:$0xff] %vm680, 0.0
      %688 = vst.msk [vmem:[%s685 + $0x10] sm:$0x3] %vm683, 0.0
      %vm689 = vcmask 516096
      %690 = vst.msk [vmem:[#allocation2] sm:$0x1] %vm689, 0.0
      %691 = vst.msk [vmem:[#allocation2 + $0x18] sm:$0x1] %vm689, 0.0
      %692 = vst.msk [vmem:[#allocation2 + $0x30] sm:$0x1] %vm689, 0.0
      %693 = vst.msk [vmem:[#allocation2 + $0x48] sm:$0x1] %vm689, 0.0
      %694 = vst.msk [vmem:[#allocation2 + $0x60] sm:$0x1] %vm689, 0.0
      %695 = vst.msk [vmem:[#allocation2 + $0x78] sm:$0x1] %vm689, 0.0
      %696 = vst.msk [vmem:[#allocation2 + $0x90] sm:$0x1] %vm689, 0.0
      %697 = vst.msk [vmem:[#allocation2 + $0xa8] sm:$0x1] %vm689, 0.0
      %698 = vst.msk [vmem:[#allocation2 + $0xc0] sm:$0x1] %vm689, 0.0
      %699 = vst.msk [vmem:[#allocation2 + $0xd8] sm:$0x1] %vm689, 0.0
      %700 = vst.msk [vmem:[#allocation2 + $0xf0] sm:$0x1] %vm689, 0.0
      %701 = vst.msk [vmem:[#allocation2 + $0x108] sm:$0x1] %vm689, 0.0
      %702 = vst.msk [vmem:[#allocation2 + $0x120] sm:$0x1] %vm689, 0.0
      %703 = vst.msk [vmem:[#allocation2 + $0x138] sm:$0x1] %vm689, 0.0
      %704 = vst.msk [vmem:[#allocation2 + $0x150] sm:$0x1] %vm689, 0.0
      %705 = vst.msk [vmem:[#allocation2 + $0x168] sm:$0x1] %vm689, 0.0
      %706 = vst.msk [vmem:[#allocation2 + $0x180] sm:$0x1] %vm689, 0.0
      %707 = vst.msk [vmem:[#allocation2 + $0x198] sm:$0x1] %vm689, 0.0
      %708 = vst.msk [vmem:[#allocation2 + $0x11] sm:$0x1] %vm689, 0.0
      %709 = vst.msk [vmem:[#allocation2 + $0x29] sm:$0x1] %vm689, 0.0
      %710 = vst.msk [vmem:[#allocation2 + $0x41] sm:$0x1] %vm689, 0.0
      %711 = vst.msk [vmem:[#allocation2 + $0x59] sm:$0x1] %vm689, 0.0
      %712 = vst.msk [vmem:[#allocation2 + $0x71] sm:$0x1] %vm689, 0.0
      %713 = vst.msk [vmem:[#allocation2 + $0x89] sm:$0x1] %vm689, 0.0
      %714 = vst.msk [vmem:[#allocation2 + $0xa1] sm:$0x1] %vm689, 0.0
      %715 = vst.msk [vmem:[#allocation2 + $0xb9] sm:$0x1] %vm689, 0.0
      %716 = vst.msk [vmem:[#allocation2 + $0xd1] sm:$0x1] %vm689, 0.0
      %717 = vst.msk [vmem:[#allocation2 + $0xe9] sm:$0x1] %vm689, 0.0
      %718 = vst.msk [vmem:[#allocation2 + $0x101] sm:$0x1] %vm689, 0.0
      %719 = vst.msk [vmem:[#allocation2 + $0x119] sm:$0x1] %vm689, 0.0
      %720 = vst.msk [vmem:[#allocation2 + $0x131] sm:$0x1] %vm689, 0.0
      %721 = vst.msk [vmem:[#allocation2 + $0x149] sm:$0x1] %vm689, 0.0
      %722 = vst.msk [vmem:[#allocation2 + $0x161] sm:$0x1] %vm689, 0.0
      %723 = vst.msk [vmem:[#allocation2 + $0x179] sm:$0x1] %vm689, 0.0
      %724 = vst.msk [vmem:[#allocation2 + $0x191] sm:$0x1] %vm689, 0.0
      %725 = vst.msk [vmem:[#allocation2 + $0x1a9] sm:$0x1] %vm689, 0.0
      %s726 = scalar_lea.vmem [#allocation2], 24
      %727 = vst.msk [vmem:[%s726 + $0x1] sm:$0xff] %vm680, %v648
      %728 = vst.msk [vmem:[%s726 + $0x9] sm:$0xff] %vm680, %v649
      %729 = vst.msk [vmem:[%s726 + $0x19] sm:$0xff] %vm680, %v650
      %730 = vst.msk [vmem:[%s726 + $0x21] sm:$0xff] %vm680, %v651
      %731 = vst.msk [vmem:[%s726 + $0x31] sm:$0xff] %vm680, %v652
      %732 = vst.msk [vmem:[%s726 + $0x39] sm:$0xff] %vm680, %v653
      %733 = vst.msk [vmem:[%s726 + $0x49] sm:$0xff] %vm680, %v654
      %734 = vst.msk [vmem:[%s726 + $0x51] sm:$0xff] %vm680, %v655
      %735 = vst.msk [vmem:[%s726 + $0x61] sm:$0xff] %vm680, %v656
      %736 = vst.msk [vmem:[%s726 + $0x69] sm:$0xff] %vm680, %v657
      %737 = vst.msk [vmem:[%s726 + $0x79] sm:$0xff] %vm680, %v658
      %738 = vst.msk [vmem:[%s726 + $0x81] sm:$0xff] %vm680, %v659
      %739 = vst.msk [vmem:[%s726 + $0x91] sm:$0xff] %vm680, %v660
      %740 = vst.msk [vmem:[%s726 + $0x99] sm:$0xff] %vm680, %v661
      %741 = vst.msk [vmem:[%s726 + $0xa9] sm:$0xff] %vm680, %v662
      %742 = vst.msk [vmem:[%s726 + $0xb1] sm:$0xff] %vm680, %v663
      %743 = vst.msk [vmem:[%s726 + $0xc1] sm:$0xff] %vm680, %v664
      %744 = vst.msk [vmem:[%s726 + $0xc9] sm:$0xff] %vm680, %v665
      %745 = vst.msk [vmem:[%s726 + $0xd9] sm:$0xff] %vm680, %v666
      %746 = vst.msk [vmem:[%s726 + $0xe1] sm:$0xff] %vm680, %v667
      %747 = vst.msk [vmem:[%s726 + $0xf1] sm:$0xff] %vm680, %v668
      %748 = vst.msk [vmem:[%s726 + $0xf9] sm:$0xff] %vm680, %v669
      %749 = vst.msk [vmem:[%s726 + $0x109] sm:$0xff] %vm680, %v670
      %750 = vst.msk [vmem:[%s726 + $0x111] sm:$0xff] %vm680, %v671
      %751 = vst.msk [vmem:[%s726 + $0x121] sm:$0xff] %vm680, %v672
      %752 = vst.msk [vmem:[%s726 + $0x129] sm:$0xff] %vm680, %v673
      %753 = vst.msk [vmem:[%s726 + $0x139] sm:$0xff] %vm680, %v674
      %754 = vst.msk [vmem:[%s726 + $0x141] sm:$0xff] %vm680, %v675
      %755 = vst.msk [vmem:[%s726 + $0x151] sm:$0xff] %vm680, %v676
      %756 = vst.msk [vmem:[%s726 + $0x159] sm:$0xff] %vm680, %v677
      %757 = vst.msk [vmem:[%s726 + $0x169] sm:$0xff] %vm680, %v678
      %758 = vst.msk [vmem:[%s726 + $0x171] sm:$0xff] %vm680, %v679
      %v759 = vld [vmem:[#allocation2] sm:$0xff]
      %v760 = vld [vmem:[#allocation2 + $0x8] sm:$0xff]
      %v761 = vld [vmem:[#allocation2 + $0x10] sm:$0x3]
      %v762 = vld [vmem:[%s726] sm:$0xff]
      %v763 = vld [vmem:[%s726 + $0x8] sm:$0xff]
      %v764 = vld [vmem:[%s726 + $0x10] sm:$0x3]
      %v765 = vmax.f32 %v759, %v762
      %v766 = vmax.f32 %v760, %v763
      %v767 = vmax.f32 %v761, %v764
      %s768 = scalar_lea.vmem [#allocation2], 48
      %v769 = vld [vmem:[%s768] sm:$0xff]
      %v770 = vld [vmem:[%s768 + $0x8] sm:$0xff]
      %v771 = vld [vmem:[%s768 + $0x10] sm:$0x3]
      %v772 = vmax.f32 %v765, %v769
      %v773 = vmax.f32 %v766, %v770
      %v774 = vmax.f32 %v767, %v771
      %v776 = vrot.slane %v772, 1
      %v778 = vmax.f32 %v772, %v776
      %v779 = vrot.slane %v772, 2
      %v781 = vmax.f32 %v778, %v779
      %782 = vst.msk [vmem:[#allocation3] sm:$0x1] %vm689, %v781
      %vm783 = vcmask 518146
      %784 = vst.msk [vmem:[#allocation3 - $0x1] sm:$0x4] %vm783, %v781
      %vm785 = vcmask 520196
      %786 = vst.msk [vmem:[#allocation3 - $0x2] sm:$0x10] %vm785, %v781
      %v788 = vrot.slane %v773, 2
      %v790 = vmax.f32 %v778, %v788
      %vm791 = vcmask 522246
      %792 = vst.msk [vmem:[#allocation3 - $0x3] sm:$0x40] %vm791, %v790
      %v793 = vrot.slane %v773, 1
      %v795 = vmax.f32 %v773, %v793
      %v796 = vmax.f32 %v795, %v788
      %797 = vst.msk [vmem:[#allocation3 + $0x4] sm:$0x1] %vm689, %v796
      %798 = vst.msk [vmem:[#allocation3 + $0x3] sm:$0x4] %vm783, %v796
      %799 = vst.msk [vmem:[#allocation3 + $0x2] sm:$0x10] %vm785, %v796
      %v801 = vrot.slane %v774, 2
      %v803 = vmax.f32 %v795, %v801
      %804 = vst.msk [vmem:[#allocation3 + $0x1] sm:$0x40] %vm791, %v803
      %v805 = vld [vmem:[%s768] sm:$0xff]
      %v806 = vld [vmem:[%s768 + $0x8] sm:$0xff]
      %v807 = vld [vmem:[%s768 + $0x10] sm:$0x3]
      %s808 = scalar_lea.vmem [#allocation2], 72
      %v809 = vld [vmem:[%s808] sm:$0xff]
      %v810 = vld [vmem:[%s808 + $0x8] sm:$0xff]
      %v811 = vld [vmem:[%s808 + $0x10] sm:$0x3]
      %v812 = vmax.f32 %v805, %v809
      %v813 = vmax.f32 %v806, %v810
      %v814 = vmax.f32 %v807, %v811
      %s815 = scalar_lea.vmem [#allocation2], 96
      %v816 = vld [vmem:[%s815] sm:$0xff]
      %v817 = vld [vmem:[%s815 + $0x8] sm:$0xff]
      %v818 = vld [vmem:[%s815 + $0x10] sm:$0x3]
      %v819 = vmax.f32 %v812, %v816
      %v820 = vmax.f32 %v813, %v817
      %v821 = vmax.f32 %v814, %v818
      %v823 = vrot.slane %v819, 1
      %v825 = vmax.f32 %v819, %v823
      %v826 = vrot.slane %v819, 2
      %v828 = vmax.f32 %v825, %v826
      %829 = vst.msk [vmem:[#allocation3 + $0x8] sm:$0x1] %vm689, %v828
      %830 = vst.msk [vmem:[#allocation3 + $0x7] sm:$0x4] %vm783, %v828
      %831 = vst.msk [vmem:[#allocation3 + $0x6] sm:$0x10] %vm785, %v828
      %v833 = vrot.slane %v820, 2
      %v835 = vmax.f32 %v825, %v833
      %836 = vst.msk [vmem:[#allocation3 + $0x5] sm:$0x40] %vm791, %v835
      %v837 = vrot.slane %v820, 1
      %v839 = vmax.f32 %v820, %v837
      %v840 = vmax.f32 %v839, %v833
      %841 = vst.msk [vmem:[#allocation3 + $0xc] sm:$0x1] %vm689, %v840
      %842 = vst.msk [vmem:[#allocation3 + $0xb] sm:$0x4] %vm783, %v840
      %843 = vst.msk [vmem:[#allocation3 + $0xa] sm:$0x10] %vm785, %v840
      %v845 = vrot.slane %v821, 2
      %v847 = vmax.f32 %v839, %v845
      %848 = vst.msk [vmem:[#allocation3 + $0x9] sm:$0x40] %vm791, %v847
      %v849 = vld [vmem:[%s815] sm:$0xff]
      %v850 = vld [vmem:[%s815 + $0x8] sm:$0xff]
      %v851 = vld [vmem:[%s815 + $0x10] sm:$0x3]
      %s852 = scalar_lea.vmem [#allocation2], 120
      %v853 = vld [vmem:[%s852] sm:$0xff]
      %v854 = vld [vmem:[%s852 + $0x8] sm:$0xff]
      %v855 = vld [vmem:[%s852 + $0x10] sm:$0x3]
      %v856 = vmax.f32 %v849, %v853
      %v857 = vmax.f32 %v850, %v854
      %v858 = vmax.f32 %v851, %v855
      %s859 = scalar_lea.vmem [#allocation2], 144
      %v860 = vld [vmem:[%s859] sm:$0xff]
      %v861 = vld [vmem:[%s859 + $0x8] sm:$0xff]
      %v862 = vld [vmem:[%s859 + $0x10] sm:$0x3]
      %v863 = vmax.f32 %v856, %v860
      %v864 = vmax.f32 %v857, %v861
      %v865 = vmax.f32 %v858, %v862
      %v867 = vrot.slane %v863, 1
      %v869 = vmax.f32 %v863, %v867
      %v870 = vrot.slane %v863, 2
      %v872 = vmax.f32 %v869, %v870
      %873 = vst.msk [vmem:[#allocation3 + $0x10] sm:$0x1] %vm689, %v872
      %874 = vst.msk [vmem:[#allocation3 + $0xf] sm:$0x4] %vm783, %v872
      %875 = vst.msk [vmem:[#allocation3 + $0xe] sm:$0x10] %vm785, %v872
      %v877 = vrot.slane %v864, 2
      %v879 = vmax.f32 %v869, %v877
      %880 = vst.msk [vmem:[#allocation3 + $0xd] sm:$0x40] %vm791, %v879
      %v881 = vrot.slane %v864, 1
      %v883 = vmax.f32 %v864, %v881
      %v884 = vmax.f32 %v883, %v877
      %885 = vst.msk [vmem:[#allocation3 + $0x14] sm:$0x1] %vm689, %v884
      %886 = vst.msk [vmem:[#allocation3 + $0x13] sm:$0x4] %vm783, %v884
      %887 = vst.msk [vmem:[#allocation3 + $0x12] sm:$0x10] %vm785, %v884
      %v889 = vrot.slane %v865, 2
      %v891 = vmax.f32 %v883, %v889
      %892 = vst.msk [vmem:[#allocation3 + $0x11] sm:$0x40] %vm791, %v891
      %v893 = vld [vmem:[%s859] sm:$0xff]
      %v894 = vld [vmem:[%s859 + $0x8] sm:$0xff]
      %v895 = vld [vmem:[%s859 + $0x10] sm:$0x3]
      %s896 = scalar_lea.vmem [#allocation2], 168
      %v897 = vld [vmem:[%s896] sm:$0xff]
      %v898 = vld [vmem:[%s896 + $0x8] sm:$0xff]
      %v899 = vld [vmem:[%s896 + $0x10] sm:$0x3]
      %v900 = vmax.f32 %v893, %v897
      %v901 = vmax.f32 %v894, %v898
      %v902 = vmax.f32 %v895, %v899
      %s903 = scalar_lea.vmem [#allocation2], 192
      %v904 = vld [vmem:[%s903] sm:$0xff]
      %v905 = vld [vmem:[%s903 + $0x8] sm:$0xff]
      %v906 = vld [vmem:[%s903 + $0x10] sm:$0x3]
      %v907 = vmax.f32 %v900, %v904
      %v908 = vmax.f32 %v901, %v905
      %v909 = vmax.f32 %v902, %v906
      %v911 = vrot.slane %v907, 1
      %v913 = vmax.f32 %v907, %v911
      %v914 = vrot.slane %v907, 2
      %v916 = vmax.f32 %v913, %v914
      %917 = vst.msk [vmem:[#allocation3 + $0x18] sm:$0x1] %vm689, %v916
      %918 = vst.msk [vmem:[#allocation3 + $0x17] sm:$0x4] %vm783, %v916
      %919 = vst.msk [vmem:[#allocation3 + $0x16] sm:$0x10] %vm785, %v916
      %v921 = vrot.slane %v908, 2
      %v923 = vmax.f32 %v913, %v921
      %924 = vst.msk [vmem:[#allocation3 + $0x15] sm:$0x40] %vm791, %v923
      %v925 = vrot.slane %v908, 1
      %v927 = vmax.f32 %v908, %v925
      %v928 = vmax.f32 %v927, %v921
      %929 = vst.msk [vmem:[#allocation3 + $0x1c] sm:$0x1] %vm689, %v928
      %930 = vst.msk [vmem:[#allocation3 + $0x1b] sm:$0x4] %vm783, %v928
      %931 = vst.msk [vmem:[#allocation3 + $0x1a] sm:$0x10] %vm785, %v928
      %v933 = vrot.slane %v909, 2
      %v935 = vmax.f32 %v927, %v933
      %936 = vst.msk [vmem:[#allocation3 + $0x19] sm:$0x40] %vm791, %v935
      %v937 = vld [vmem:[%s903] sm:$0xff]
      %v938 = vld [vmem:[%s903 + $0x8] sm:$0xff]
      %v939 = vld [vmem:[%s903 + $0x10] sm:$0x3]
      %s940 = scalar_lea.vmem [#allocation2], 216
      %v941 = vld [vmem:[%s940] sm:$0xff]
      %v942 = vld [vmem:[%s940 + $0x8] sm:$0xff]
      %v943 = vld [vmem:[%s940 + $0x10] sm:$0x3]
      %v944 = vmax.f32 %v937, %v941
      %v945 = vmax.f32 %v938, %v942
      %v946 = vmax.f32 %v939, %v943
      %s947 = scalar_lea.vmem [#allocation2], 240
      %v948 = vld [vmem:[%s947] sm:$0xff]
      %v949 = vld [vmem:[%s947 + $0x8] sm:$0xff]
      %v950 = vld [vmem:[%s947 + $0x10] sm:$0x3]
      %v951 = vmax.f32 %v944, %v948
      %v952 = vmax.f32 %v945, %v949
      %v953 = vmax.f32 %v946, %v950
      %v955 = vrot.slane %v951, 1
      %v957 = vmax.f32 %v951, %v955
      %v958 = vrot.slane %v951, 2
      %v960 = vmax.f32 %v957, %v958
      %961 = vst.msk [vmem:[#allocation3 + $0x20] sm:$0x1] %vm689, %v960
      %962 = vst.msk [vmem:[#allocation3 + $0x1f] sm:$0x4] %vm783, %v960
      %963 = vst.msk [vmem:[#allocation3 + $0x1e] sm:$0x10] %vm785, %v960
      %v965 = vrot.slane %v952, 2
      %v967 = vmax.f32 %v957, %v965
      %968 = vst.msk [vmem:[#allocation3 + $0x1d] sm:$0x40] %vm791, %v967
      %v969 = vrot.slane %v952, 1
      %v971 = vmax.f32 %v952, %v969
      %v972 = vmax.f32 %v971, %v965
      %973 = vst.msk [vmem:[#allocation3 + $0x24] sm:$0x1] %vm689, %v972
      %974 = vst.msk [vmem:[#allocation3 + $0x23] sm:$0x4] %vm783, %v972
      %975 = vst.msk [vmem:[#allocation3 + $0x22] sm:$0x10] %vm785, %v972
      %v977 = vrot.slane %v953, 2
      %v979 = vmax.f32 %v971, %v977
      %980 = vst.msk [vmem:[#allocation3 + $0x21] sm:$0x40] %vm791, %v979
      %v981 = vld [vmem:[%s947] sm:$0xff]
      %v982 = vld [vmem:[%s947 + $0x8] sm:$0xff]
      %v983 = vld [vmem:[%s947 + $0x10] sm:$0x3]
      %s984 = scalar_lea.vmem [#allocation2], 264
      %v985 = vld [vmem:[%s984] sm:$0xff]
      %v986 = vld [vmem:[%s984 + $0x8] sm:$0xff]
      %v987 = vld [vmem:[%s984 + $0x10] sm:$0x3]
      %v988 = vmax.f32 %v981, %v985
      %v989 = vmax.f32 %v982, %v986
      %v990 = vmax.f32 %v983, %v987
      %s991 = scalar_lea.vmem [#allocation2], 288
      %v992 = vld [vmem:[%s991] sm:$0xff]
      %v993 = vld [vmem:[%s991 + $0x8] sm:$0xff]
      %v994 = vld [vmem:[%s991 + $0x10] sm:$0x3]
      %v995 = vmax.f32 %v988, %v992
      %v996 = vmax.f32 %v989, %v993
      %v997 = vmax.f32 %v990, %v994
      %v999 = vrot.slane %v995, 1
      %v1001 = vmax.f32 %v995, %v999
      %v1002 = vrot.slane %v995, 2
      %v1004 = vmax.f32 %v1001, %v1002
      %1005 = vst.msk [vmem:[#allocation3 + $0x28] sm:$0x1] %vm689, %v1004
      %1006 = vst.msk [vmem:[#allocation3 + $0x27] sm:$0x4] %vm783, %v1004
      %1007 = vst.msk [vmem:[#allocation3 + $0x26] sm:$0x10] %vm785, %v1004
      %v1009 = vrot.slane %v996, 2
      %v1011 = vmax.f32 %v1001, %v1009
      %1012 = vst.msk [vmem:[#allocation3 + $0x25] sm:$0x40] %vm791, %v1011
      %v1013 = vrot.slane %v996, 1
      %v1015 = vmax.f32 %v996, %v1013
      %v1016 = vmax.f32 %v1015, %v1009
      %1017 = vst.msk [vmem:[#allocation3 + $0x2c] sm:$0x1] %vm689, %v1016
      %1018 = vst.msk [vmem:[#allocation3 + $0x2b] sm:$0x4] %vm783, %v1016
      %1019 = vst.msk [vmem:[#allocation3 + $0x2a] sm:$0x10] %vm785, %v1016
      %v1021 = vrot.slane %v997, 2
      %v1023 = vmax.f32 %v1015, %v1021
      %1024 = vst.msk [vmem:[#allocation3 + $0x29] sm:$0x40] %vm791, %v1023
      %v1025 = vld [vmem:[%s991] sm:$0xff]
      %v1026 = vld [vmem:[%s991 + $0x8] sm:$0xff]
      %v1027 = vld [vmem:[%s991 + $0x10] sm:$0x3]
      %s1028 = scalar_lea.vmem [#allocation2], 312
      %v1029 = vld [vmem:[%s1028] sm:$0xff]
      %v1030 = vld [vmem:[%s1028 + $0x8] sm:$0xff]
      %v1031 = vld [vmem:[%s1028 + $0x10] sm:$0x3]
      %v1032 = vmax.f32 %v1025, %v1029
      %v1033 = vmax.f32 %v1026, %v1030
      %v1034 = vmax.f32 %v1027, %v1031
      %s1035 = scalar_lea.vmem [#allocation2], 336
      %v1036 = vld [vmem:[%s1035] sm:$0xff]
      %v1037 = vld [vmem:[%s1035 + $0x8] sm:$0xff]
      %v1038 = vld [vmem:[%s1035 + $0x10] sm:$0x3]
      %v1039 = vmax.f32 %v1032, %v1036
      %v1040 = vmax.f32 %v1033, %v1037
      %v1041 = vmax.f32 %v1034, %v1038
      %v1043 = vrot.slane %v1039, 1
      %v1045 = vmax.f32 %v1039, %v1043
      %v1046 = vrot.slane %v1039, 2
      %v1048 = vmax.f32 %v1045, %v1046
      %1049 = vst.msk [vmem:[#allocation3 + $0x30] sm:$0x1] %vm689, %v1048
      %1050 = vst.msk [vmem:[#allocation3 + $0x2f] sm:$0x4] %vm783, %v1048
      %1051 = vst.msk [vmem:[#allocation3 + $0x2e] sm:$0x10] %vm785, %v1048
      %v1053 = vrot.slane %v1040, 2
      %v1055 = vmax.f32 %v1045, %v1053
      %1056 = vst.msk [vmem:[#allocation3 + $0x2d] sm:$0x40] %vm791, %v1055
      %v1057 = vrot.slane %v1040, 1
      %v1059 = vmax.f32 %v1040, %v1057
      %v1060 = vmax.f32 %v1059, %v1053
      %1061 = vst.msk [vmem:[#allocation3 + $0x34] sm:$0x1] %vm689, %v1060
      %1062 = vst.msk [vmem:[#allocation3 + $0x33] sm:$0x4] %vm783, %v1060
      %1063 = vst.msk [vmem:[#allocation3 + $0x32] sm:$0x10] %vm785, %v1060
      %v1065 = vrot.slane %v1041, 2
      %v1067 = vmax.f32 %v1059, %v1065
      %1068 = vst.msk [vmem:[#allocation3 + $0x31] sm:$0x40] %vm791, %v1067
      %v1069 = vld [vmem:[%s1035] sm:$0xff]
      %v1070 = vld [vmem:[%s1035 + $0x8] sm:$0xff]
      %v1071 = vld [vmem:[%s1035 + $0x10] sm:$0x3]
      %s1072 = scalar_lea.vmem [#allocation2], 360
      %v1073 = vld [vmem:[%s1072] sm:$0xff]
      %v1074 = vld [vmem:[%s1072 + $0x8] sm:$0xff]
      %v1075 = vld [vmem:[%s1072 + $0x10] sm:$0x3]
      %v1076 = vmax.f32 %v1069, %v1073
      %v1077 = vmax.f32 %v1070, %v1074
      %v1078 = vmax.f32 %v1071, %v1075
      %s1079 = scalar_lea.vmem [#allocation2], 384
      %v1080 = vld [vmem:[%s1079] sm:$0xff]
      %v1081 = vld [vmem:[%s1079 + $0x8] sm:$0xff]
      %v1082 = vld [vmem:[%s1079 + $0x10] sm:$0x3]
      %v1083 = vmax.f32 %v1076, %v1080
      %v1084 = vmax.f32 %v1077, %v1081
      %v1085 = vmax.f32 %v1078, %v1082
      %v1087 = vrot.slane %v1083, 1
      %v1089 = vmax.f32 %v1083, %v1087
      %v1090 = vrot.slane %v1083, 2
      %v1092 = vmax.f32 %v1089, %v1090
      %1093 = vst.msk [vmem:[#allocation3 + $0x38] sm:$0x1] %vm689, %v1092
      %1094 = vst.msk [vmem:[#allocation3 + $0x37] sm:$0x4] %vm783, %v1092
      %1095 = vst.msk [vmem:[#allocation3 + $0x36] sm:$0x10] %vm785, %v1092
      %v1097 = vrot.slane %v1084, 2
      %v1099 = vmax.f32 %v1089, %v1097
      %1100 = vst.msk [vmem:[#allocation3 + $0x35] sm:$0x40] %vm791, %v1099
      %v1101 = vrot.slane %v1084, 1
      %v1103 = vmax.f32 %v1084, %v1101
      %v1104 = vmax.f32 %v1103, %v1097
      %1105 = vst.msk [vmem:[#allocation3 + $0x3c] sm:$0x1] %vm689, %v1104
      %1106 = vst.msk [vmem:[#allocation3 + $0x3b] sm:$0x4] %vm783, %v1104
      %1107 = vst.msk [vmem:[#allocation3 + $0x3a] sm:$0x10] %vm785, %v1104
      %v1109 = vrot.slane %v1085, 2
      %v1111 = vmax.f32 %v1103, %v1109
      %1112 = vst.msk [vmem:[#allocation3 + $0x39] sm:$0x40] %vm791, %v1111
      %v1113 = vld [vmem:[#allocation3] sm:$0xff]
      %v1114 = vld [vmem:[#allocation3 + $0x8] sm:$0xff]
      %v1115 = vld [vmem:[#allocation3 + $0x10] sm:$0xff]
      %v1116 = vld [vmem:[#allocation3 + $0x18] sm:$0xff]
      %v1117 = vld [vmem:[#allocation3 + $0x20] sm:$0xff]
      %v1118 = vld [vmem:[#allocation3 + $0x28] sm:$0xff]
      %v1119 = vld [vmem:[#allocation3 + $0x30] sm:$0xff]
      %v1120 = vld [vmem:[#allocation3 + $0x38] sm:$0xff]
      %v1121 = vpack.c.bf16 %v1114, %v1113
      %v1122 = vpack.c.bf16 %v1116, %v1115
      %v1123 = vpack.c.bf16 %v1118, %v1117
      %v1124 = vpack.c.bf16 %v1120, %v1119
      %v1129 = vunpack.c.l.b16 %v1121
      %v1130 = vunpack.c.h.b16 %v1121
      %v1131 = vunpack.c.l.b16 %v1122
      %v1132 = vunpack.c.h.b16 %v1122
      %v1133 = vunpack.c.l.b16 %v1123
      %v1134 = vunpack.c.h.b16 %v1123
      %v1135 = vunpack.c.l.b16 %v1124
      %v1136 = vunpack.c.h.b16 %v1124
      %v1137 = vpack.c.b16 %v1129, %v1129
      %v1138 = vpack.c.b16 %v1130, %v1130
      %v1139 = vpack.c.b16 %v1131, %v1131
      %v1140 = vpack.c.b16 %v1132, %v1132
      %v1141 = vpack.c.b16 %v1133, %v1133
      %v1142 = vpack.c.b16 %v1134, %v1134
      %v1143 = vpack.c.b16 %v1135, %v1135
      %v1144 = vpack.c.b16 %v1136, %v1136
      %vm1153 = vcmask 519168
      %1154 = vst.msk [vmem:[%s170] sm:$0xf] %vm1153, %v1137
      %1155 = vst.msk [vmem:[%s170 + $0x4] sm:$0xf] %vm1153, %v1138
      %1156 = vst.msk [vmem:[%s170 + $0x8] sm:$0xf] %vm1153, %v1139
      %1157 = vst.msk [vmem:[%s170 + $0xc] sm:$0xf] %vm1153, %v1140
      %1158 = vst.msk [vmem:[%s170 + $0x10] sm:$0xf] %vm1153, %v1141
      %1159 = vst.msk [vmem:[%s170 + $0x14] sm:$0xf] %vm1153, %v1142
      %1160 = vst.msk [vmem:[%s170 + $0x18] sm:$0xf] %vm1153, %v1143
      %1161 = vst.msk [vmem:[%s170 + $0x1c] sm:$0xf] %vm1153, %v1144
      %p1162 = scmp.lt.s32.totalorder %s14, 1
      %s1163 = scalar_select %p1162, %s14, 1
      %s1164 = smul.addr %s1163, 8
      %s1165 = smul.addr %s1164, 4
      %s1166 = scalar_lea.vmem %s3, %s1165
      // Predicated region
      $region33: #{simplenet_forward.2} parent=31 // pred_check
        %p1167 = pneg %p100
      $region34: #{simplenet_forward.2} parent=31 // pred_check_branch
        %1169 = sbr.rel (%p1167) target = $region36
      $region35: #{simplenet_forward.2} parent=31 // pred_region
        _
      $region36: #{simplenet_forward.2} parent=31 // pred_fallthru
        _
    $region32: #{simplenet_forward.2} parent=5 // pred_fallthru
      _
    %p1170 = scmp.le.s32.totalorder 2, %s9
    // Predicated region
    $region37: #{simplenet_forward.2} parent=5 // pred_check
      %p1171 = pneg %p1170
    $region38: #{simplenet_forward.2} parent=5 // pred_check_branch
      %1173 = sbr.rel (%p1171) target = $region40
    $region39: #{simplenet_forward.2} parent=5 // pred_region
      %s1174 = ssub.s32 %s9, 2
      // Predicated region
      $region41: #{simplenet_forward.2} parent=39 // pred_check
        %p1175 = pneg %p106
      $region42: #{simplenet_forward.2} parent=39 // pred_check_branch
        %1177 = sbr.rel (%p1175) target = $region44
      $region43: #{simplenet_forward.2} parent=39 // pred_region
        %p1178 = scmp.lt.s32.totalorder %s15, 1
        %s1179 = scalar_select %p1178, %s15, 1
        %s1180 = smul.addr %s1179, 8
        %s1181 = smul.addr %s1180, 4
        %s1182 = scalar_lea.vmem %s3, %s1181
      $region44: #{simplenet_forward.2} parent=39 // pred_fallthru
        _
    $region40: #{simplenet_forward.2} parent=5 // pred_fallthru
      _
  $region6: #{simplenet_forward.2} parent=0 // loop_footer
    %s13 = sadd.s32 1, %s9
  $region7: #{simplenet_forward.2} parent=0 // loop_footer_branch
    %8 = sbr.rel target = $region3
  $region8: #{simplenet_forward.2} parent=0 // loop_exit
    _

// kernel: simplenet_forward.3
$region0: #{simplenet_forward.3}
  #allocation0 [shape = 'u32[]', space=smem, size = 0x4, offset = 0x4, fixed_abs, tag = 'smem constant byte address 0x4 - core index']
  #allocation1 [shape = 'u32[144,128]{1,0:T(1,128)}', space=vmem, size = 0x12000, scoped, tag = 'internal scratch']
  #allocation2 [shape = 'f32[10,10,64]{2,1,0:T(8,128)}', space=vmem, size = 0x14000, scoped, tag = 'scratch operand']
  #allocation3 [shape = 'f32[10,10,256]{2,1,0:T(8,128)}', space=vmem, size = 0x28000, scoped, tag = 'scratch operand']
  #allocation4 [shape = 'f32[16,256]{1,0:T(8,128)}', space=vmem, size = 0x4000, scoped, tag = 'scratch operand']
  #allocation5 [shape = 'f32[6,6,128]{2,1,0:T(8,128)}', space=vmem, size = 0x6000, scoped, tag = 'scratch operand']
  %s0 = inlined_call_operand.vmem [shape: bf16[2,64,64], index: 0, kind: input, shape index: {}]
  %s1 = inlined_call_operand.vmem [shape: bf16[64,64], index: 1, kind: input, shape index: {}]
  %s2 = inlined_call_operand.vmem [shape: f32[1,64], index: 2, kind: input, shape index: {}]
  %s3 = inlined_call_operand.vmem [shape: bf16[3,3,64,64], index: 3, kind: input, shape index: {}]
  %s4 = inlined_call_operand.vmem [shape: f32[1,64], index: 4, kind: input, shape index: {}]
  %s5 = inlined_call_operand.vmem [shape: bf16[64,256], index: 5, kind: input, shape index: {}]
  %s6 = inlined_call_operand.vmem [shape: f32[1,256], index: 6, kind: input, shape index: {}]
  %s7 = inlined_call_operand.vmem [shape: bf16[256,128], index: 7, kind: input, shape index: {}]
  %s8 = inlined_call_operand.vmem [shape: f32[1,128], index: 8, kind: input, shape index: {}]
  %s9 = inlined_call_operand.vmem [shape: bf16[3,3,128,128], index: 9, kind: input, shape index: {}]
  %s10 = inlined_call_operand.vmem [shape: f32[1,128], index: 10, kind: input, shape index: {}]
  %s11 = inlined_call_operand.vmem [shape: bf16[128,512], index: 11, kind: input, shape index: {}]
  %s12 = inlined_call_operand.vmem [shape: f32[1,512], index: 12, kind: input, shape index: {}]
  %s13 = inlined_call_operand.vmem [shape: f32[512,100], index: 13, kind: input, shape index: {}]
  %s14 = inlined_call_operand.vmem [shape: f32[1,100], index: 14, kind: input, shape index: {}]
  %s15 = inlined_call_operand.hbm [shape: f32[2,1,100], index: 15, kind: output, shape index: {}]
  %s16 = sld [smem:[#allocation0]]
  $region93: #{simplenet_forward.3} parent=0
    _
  %s18 = ssub.s32 1, %s16
  %s19 = scalar_select 0, %s18, %s16
  $region1: #{simplenet_forward.3} parent=0
    #allocation6 [shape = 'u8[1024]{0}', space=vmem, size = 0x400, scoped, tag = 'output window, operand 0']
    #allocation7 [shape = 's32[2]{0}', space=sflag, size = 0x8, scoped, tag = 'scoped memory for simplenet_forward.3']
    %20 = vsyncpa [#allocation7], 0
    %s21 = scalar_lea.sflag [#allocation7], 1
    %22 = vsyncpa %s21, 0
    loop: start=0, step=1, limit=4
    $region2: #{simplenet_forward.3} parent=1 // loop_pre_header
      _
    $region3: #{simplenet_forward.3} parent=1 // loop_header
      %s24 = sphi 0, %s28
      %p25 = scmp.ge.s32.totalorder %s24, 4
      %s34 = sphi 0, %s36
      %s37 = sphi 0, %s34
      %s38 = sphi 0, %s37
      %s54 = sphi 0, %s38
      %s58 = sphi 0, %s58
      %s60 = sphi 0, %s58
      %s61 = sphi 0, %s60
      %s75 = sphi 0, %s61
      %s79 = sphi 0, %s79
      %s81 = sphi 0, %s79
      %s82 = sphi 0, %s81
      %s96 = sphi 0, %s82
      %s100 = sphi 0, %s100
      %s102 = sphi 0, %s100
      %s103 = sphi 0, %s102
      %s117 = sphi 0, %s103
      %s121 = sphi 0, %s121
      %s123 = sphi 0, %s121
      %s124 = sphi 0, %s123
      %s138 = sphi 0, %s124
      %s142 = sphi 0, %s142
      %s144 = sphi 0, %s142
      %s145 = sphi 0, %s144
      %s159 = sphi 0, %s145
      %s163 = sphi 0, %s163
      %s165 = sphi 0, %s163
      %s166 = sphi 0, %s165
      %s180 = sphi 0, %s166
      %s184 = sphi 0, %s184
      %s186 = sphi 0, %s184
      %s187 = sphi 0, %s186
      %s201 = sphi 0, %s187
      %s205 = sphi 0, %s205
      %s207 = sphi 0, %s205
      %s208 = sphi 0, %s207
      %s222 = sphi 0, %s208
      %s226 = sphi 0, %s226
      %s228 = sphi 0, %s226
      %s229 = sphi 0, %s228
      %s243 = sphi 0, %s229
      %s247 = sphi 0, %s247
      %s249 = sphi 0, %s247
      %s250 = sphi 0, %s249
      %s264 = sphi 0, %s250
      %s268 = sphi 0, %s268
      %s270 = sphi 0, %s268
      %s271 = sphi 0, %s270
      %s285 = sphi 0, %s271
      %s289 = sphi 0, %s289
      %s291 = sphi 0, %s289
      %s292 = sphi 0, %s291
      %s306 = sphi 0, %s292
      %s310 = sphi 0, %s310
      %s312 = sphi 0, %s310
      %s313 = sphi 0, %s312
      %s327 = sphi 0, %s313
      %s331 = sphi 0, %s331
      %s333 = sphi 0, %s331
      %s334 = sphi 0, %s333
      %s348 = sphi 0, %s334
      %s354 = sphi 0, %s356
      %s357 = sphi 0, %s354
      %s358 = sphi 0, %s357
      %s374 = sphi 0, %s358
    $region4: #{simplenet_forward.3} parent=1 // loop_header_branch
      %27 = sbr.rel (%p25) target = $region8
    $region5: #{simplenet_forward.3} parent=1 // loop_body
      %s29 = ssub.s32 %s24, 1
      %s30 = ssub.s32 %s24, 2
      %s31 = sadd.s32 %s24, 1
      %s32 = ssub.s32 %s24, %s31
      %p33 = scmp.eq.s32.totalorder %s32, 0
      %s35 = sadd.s32 %s34, 1
      %s36 = scalar_select %p33, %s34, %s35
      %p39 = pneg %p33
      %p40 = scmp.eq.s32.totalorder %s24, 1
      %p41 = por %p39, %p40
      %p42 = scmp.ne.s32.totalorder %s34, %s37
      %p43 = scmp.eq.s32.totalorder %s24, 0
      %p44 = por %p42, %p43
      %p45 = scmp.ne.s32.totalorder %s34, %s37
      %p46 = scmp.eq.s32.totalorder %s29, 1
      %p47 = por %p45, %p46
      %p48 = scmp.ne.s32.totalorder %s37, %s38
      %p49 = scmp.eq.s32.totalorder %s29, 0
      %p50 = por %p48, %p49
      %p51 = scmp.ne.s32.totalorder %s37, %s38
      %p52 = scmp.eq.s32.totalorder %s30, 1
      %p53 = por %p51, %p52
      %p55 = scmp.ne.s32.totalorder %s38, %s54
      %p56 = scmp.eq.s32.totalorder %s30, 0
      %p57 = por %p55, %p56
      %s59 = sadd.s32 %s58, 1
      %p62 = scmp.eq.s32.totalorder %s24, 1
      %p63 = scmp.ne.s32.totalorder %s58, %s60
      %p64 = scmp.eq.s32.totalorder %s24, 0
      %p65 = por %p63, %p64
      %p66 = scmp.ne.s32.totalorder %s58, %s60
      %p67 = scmp.eq.s32.totalorder %s29, 1
      %p68 = por %p66, %p67
      %p69 = scmp.ne.s32.totalorder %s60, %s61
      %p70 = scmp.eq.s32.totalorder %s29, 0
      %p71 = por %p69, %p70
      %p72 = scmp.ne.s32.totalorder %s60, %s61
      %p73 = scmp.eq.s32.totalorder %s30, 1
      %p74 = por %p72, %p73
      %p76 = scmp.ne.s32.totalorder %s61, %s75
      %p77 = scmp.eq.s32.totalorder %s30, 0
      %p78 = por %p76, %p77
      %s80 = sadd.s32 %s79, 1
      %p83 = scmp.eq.s32.totalorder %s24, 1
      %p84 = scmp.ne.s32.totalorder %s79, %s81
      %p85 = scmp.eq.s32.totalorder %s24, 0
      %p86 = por %p84, %p85
      %p87 = scmp.ne.s32.totalorder %s79, %s81
      %p88 = scmp.eq.s32.totalorder %s29, 1
      %p89 = por %p87, %p88
      %p90 = scmp.ne.s32.totalorder %s81, %s82
      %p91 = scmp.eq.s32.totalorder %s29, 0
      %p92 = por %p90, %p91
      %p93 = scmp.ne.s32.totalorder %s81, %s82
      %p94 = scmp.eq.s32.totalorder %s30, 1
      %p95 = por %p93, %p94
      %p97 = scmp.ne.s32.totalorder %s82, %s96
      %p98 = scmp.eq.s32.totalorder %s30, 0
      %p99 = por %p97, %p98
      %s101 = sadd.s32 %s100, 1
      %p104 = scmp.eq.s32.totalorder %s24, 1
      %p105 = scmp.ne.s32.totalorder %s100, %s102
      %p106 = scmp.eq.s32.totalorder %s24, 0
      %p107 = por %p105, %p106
      %p108 = scmp.ne.s32.totalorder %s100, %s102
      %p109 = scmp.eq.s32.totalorder %s29, 1
      %p110 = por %p108, %p109
      %p111 = scmp.ne.s32.totalorder %s102, %s103
      %p112 = scmp.eq.s32.totalorder %s29, 0
      %p113 = por %p111, %p112
      %p114 = scmp.ne.s32.totalorder %s102, %s103
      %p115 = scmp.eq.s32.totalorder %s30, 1
      %p116 = por %p114, %p115
      %p118 = scmp.ne.s32.totalorder %s103, %s117
      %p119 = scmp.eq.s32.totalorder %s30, 0
      %p120 = por %p118, %p119
      %s122 = sadd.s32 %s121, 1
      %p125 = scmp.eq.s32.totalorder %s24, 1
      %p126 = scmp.ne.s32.totalorder %s121, %s123
      %p127 = scmp.eq.s32.totalorder %s24, 0
      %p128 = por %p126, %p127
      %p129 = scmp.ne.s32.totalorder %s121, %s123
      %p130 = scmp.eq.s32.totalorder %s29, 1
      %p131 = por %p129, %p130
      %p132 = scmp.ne.s32.totalorder %s123, %s124
      %p133 = scmp.eq.s32.totalorder %s29, 0
      %p134 = por %p132, %p133
      %p135 = scmp.ne.s32.totalorder %s123, %s124
      %p136 = scmp.eq.s32.totalorder %s30, 1
      %p137 = por %p135, %p136
      %p139 = scmp.ne.s32.totalorder %s124, %s138
      %p140 = scmp.eq.s32.totalorder %s30, 0
      %p141 = por %p139, %p140
      %s143 = sadd.s32 %s142, 1
      %p146 = scmp.eq.s32.totalorder %s24, 1
      %p147 = scmp.ne.s32.totalorder %s142, %s144
      %p148 = scmp.eq.s32.totalorder %s24, 0
      %p149 = por %p147, %p148
      %p150 = scmp.ne.s32.totalorder %s142, %s144
      %p151 = scmp.eq.s32.totalorder %s29, 1
      %p152 = por %p150, %p151
      %p153 = scmp.ne.s32.totalorder %s144, %s145
      %p154 = scmp.eq.s32.totalorder %s29, 0
      %p155 = por %p153, %p154
      %p156 = scmp.ne.s32.totalorder %s144, %s145
      %p157 = scmp.eq.s32.totalorder %s30, 1
      %p158 = por %p156, %p157
      %p160 = scmp.ne.s32.totalorder %s145, %s159
      %p161 = scmp.eq.s32.totalorder %s30, 0
      %p162 = por %p160, %p161
      %s164 = sadd.s32 %s163, 1
      %p167 = scmp.eq.s32.totalorder %s24, 1
      %p168 = scmp.ne.s32.totalorder %s163, %s165
      %p169 = scmp.eq.s32.totalorder %s24, 0
      %p170 = por %p168, %p169
      %p171 = scmp.ne.s32.totalorder %s163, %s165
      %p172 = scmp.eq.s32.totalorder %s29, 1
      %p173 = por %p171, %p172
      %p174 = scmp.ne.s32.totalorder %s165, %s166
      %p175 = scmp.eq.s32.totalorder %s29, 0
      %p176 = por %p174, %p175
      %p177 = scmp.ne.s32.totalorder %s165, %s166
      %p178 = scmp.eq.s32.totalorder %s30, 1
      %p179 = por %p177, %p178
      %p181 = scmp.ne.s32.totalorder %s166, %s180
      %p182 = scmp.eq.s32.totalorder %s30, 0
      %p183 = por %p181, %p182
      %s185 = sadd.s32 %s184, 1
      %p188 = scmp.eq.s32.totalorder %s24, 1
      %p189 = scmp.ne.s32.totalorder %s184, %s186
      %p190 = scmp.eq.s32.totalorder %s24, 0
      %p191 = por %p189, %p190
      %p192 = scmp.ne.s32.totalorder %s184, %s186
      %p193 = scmp.eq.s32.totalorder %s29, 1
      %p194 = por %p192, %p193
      %p195 = scmp.ne.s32.totalorder %s186, %s187
      %p196 = scmp.eq.s32.totalorder %s29, 0
      %p197 = por %p195, %p196
      %p198 = scmp.ne.s32.totalorder %s186, %s187
      %p199 = scmp.eq.s32.totalorder %s30, 1
      %p200 = por %p198, %p199
      %p202 = scmp.ne.s32.totalorder %s187, %s201
      %p203 = scmp.eq.s32.totalorder %s30, 0
      %p204 = por %p202, %p203
      %s206 = sadd.s32 %s205, 1
      %p209 = scmp.eq.s32.totalorder %s24, 1
      %p210 = scmp.ne.s32.totalorder %s205, %s207
      %p211 = scmp.eq.s32.totalorder %s24, 0
      %p212 = por %p210, %p211
      %p213 = scmp.ne.s32.totalorder %s205, %s207
      %p214 = scmp.eq.s32.totalorder %s29, 1
      %p215 = por %p213, %p214
      %p216 = scmp.ne.s32.totalorder %s207, %s208
      %p217 = scmp.eq.s32.totalorder %s29, 0
      %p218 = por %p216, %p217
      %p219 = scmp.ne.s32.totalorder %s207, %s208
      %p220 = scmp.eq.s32.totalorder %s30, 1
      %p221 = por %p219, %p220
      %p223 = scmp.ne.s32.totalorder %s208, %s222
      %p224 = scmp.eq.s32.totalorder %s30, 0
      %p225 = por %p223, %p224
      %s227 = sadd.s32 %s226, 1
      %p230 = scmp.eq.s32.totalorder %s24, 1
      %p231 = scmp.ne.s32.totalorder %s226, %s228
      %p232 = scmp.eq.s32.totalorder %s24, 0
      %p233 = por %p231, %p232
      %p234 = scmp.ne.s32.totalorder %s226, %s228
      %p235 = scmp.eq.s32.totalorder %s29, 1
      %p236 = por %p234, %p235
      %p237 = scmp.ne.s32.totalorder %s228, %s229
      %p238 = scmp.eq.s32.totalorder %s29, 0
      %p239 = por %p237, %p238
      %p240 = scmp.ne.s32.totalorder %s228, %s229
      %p241 = scmp.eq.s32.totalorder %s30, 1
      %p242 = por %p240, %p241
      %p244 = scmp.ne.s32.totalorder %s229, %s243
      %p245 = scmp.eq.s32.totalorder %s30, 0
      %p246 = por %p244, %p245
      %s248 = sadd.s32 %s247, 1
      %p251 = scmp.eq.s32.totalorder %s24, 1
      %p252 = scmp.ne.s32.totalorder %s247, %s249
      %p253 = scmp.eq.s32.totalorder %s24, 0
      %p254 = por %p252, %p253
      %p255 = scmp.ne.s32.totalorder %s247, %s249
      %p256 = scmp.eq.s32.totalorder %s29, 1
      %p257 = por %p255, %p256
      %p258 = scmp.ne.s32.totalorder %s249, %s250
      %p259 = scmp.eq.s32.totalorder %s29, 0
      %p260 = por %p258, %p259
      %p261 = scmp.ne.s32.totalorder %s249, %s250
      %p262 = scmp.eq.s32.totalorder %s30, 1
      %p263 = por %p261, %p262
      %p265 = scmp.ne.s32.totalorder %s250, %s264
      %p266 = scmp.eq.s32.totalorder %s30, 0
      %p267 = por %p265, %p266
      %s269 = sadd.s32 %s268, 1
      %p272 = scmp.eq.s32.totalorder %s24, 1
      %p273 = scmp.ne.s32.totalorder %s268, %s270
      %p274 = scmp.eq.s32.totalorder %s24, 0
      %p275 = por %p273, %p274
      %p276 = scmp.ne.s32.totalorder %s268, %s270
      %p277 = scmp.eq.s32.totalorder %s29, 1
      %p278 = por %p276, %p277
      %p279 = scmp.ne.s32.totalorder %s270, %s271
      %p280 = scmp.eq.s32.totalorder %s29, 0
      %p281 = por %p279, %p280
      %p282 = scmp.ne.s32.totalorder %s270, %s271
      %p283 = scmp.eq.s32.totalorder %s30, 1
      %p284 = por %p282, %p283
      %p286 = scmp.ne.s32.totalorder %s271, %s285
      %p287 = scmp.eq.s32.totalorder %s30, 0
      %p288 = por %p286, %p287
      %s290 = sadd.s32 %s289, 1
      %p293 = scmp.eq.s32.totalorder %s24, 1
      %p294 = scmp.ne.s32.totalorder %s289, %s291
      %p295 = scmp.eq.s32.totalorder %s24, 0
      %p296 = por %p294, %p295
      %p297 = scmp.ne.s32.totalorder %s289, %s291
      %p298 = scmp.eq.s32.totalorder %s29, 1
      %p299 = por %p297, %p298
      %p300 = scmp.ne.s32.totalorder %s291, %s292
      %p301 = scmp.eq.s32.totalorder %s29, 0
      %p302 = por %p300, %p301
      %p303 = scmp.ne.s32.totalorder %s291, %s292
      %p304 = scmp.eq.s32.totalorder %s30, 1
      %p305 = por %p303, %p304
      %p307 = scmp.ne.s32.totalorder %s292, %s306
      %p308 = scmp.eq.s32.totalorder %s30, 0
      %p309 = por %p307, %p308
      %s311 = sadd.s32 %s310, 1
      %p314 = scmp.eq.s32.totalorder %s24, 1
      %p315 = scmp.ne.s32.totalorder %s310, %s312
      %p316 = scmp.eq.s32.totalorder %s24, 0
      %p317 = por %p315, %p316
      %p318 = scmp.ne.s32.totalorder %s310, %s312
      %p319 = scmp.eq.s32.totalorder %s29, 1
      %p320 = por %p318, %p319
      %p321 = scmp.ne.s32.totalorder %s312, %s313
      %p322 = scmp.eq.s32.totalorder %s29, 0
      %p323 = por %p321, %p322
      %p324 = scmp.ne.s32.totalorder %s312, %s313
      %p325 = scmp.eq.s32.totalorder %s30, 1
      %p326 = por %p324, %p325
      %p328 = scmp.ne.s32.totalorder %s313, %s327
      %p329 = scmp.eq.s32.totalorder %s30, 0
      %p330 = por %p328, %p329
      %s332 = sadd.s32 %s331, 1
      %p335 = scmp.eq.s32.totalorder %s24, 1
      %p336 = scmp.ne.s32.totalorder %s331, %s333
      %p337 = scmp.eq.s32.totalorder %s24, 0
      %p338 = por %p336, %p337
      %p339 = scmp.ne.s32.totalorder %s331, %s333
      %p340 = scmp.eq.s32.totalorder %s29, 1
      %p341 = por %p339, %p340
      %p342 = scmp.ne.s32.totalorder %s333, %s334
      %p343 = scmp.eq.s32.totalorder %s29, 0
      %p344 = por %p342, %p343
      %p345 = scmp.ne.s32.totalorder %s333, %s334
      %p346 = scmp.eq.s32.totalorder %s30, 1
      %p347 = por %p345, %p346
      %p349 = scmp.ne.s32.totalorder %s334, %s348
      %p350 = scmp.eq.s32.totalorder %s30, 0
      %p351 = por %p349, %p350
      %s352 = ssub.s32 %s24, %s31
      %p353 = scmp.eq.s32.totalorder %s352, 0
      %s355 = sadd.s32 %s354, 1
      %s356 = scalar_select %p353, %s354, %s355
      %p359 = pneg %p353
      %p360 = scmp.eq.s32.totalorder %s24, 1
      %p361 = por %p359, %p360
      %p362 = scmp.ne.s32.totalorder %s354, %s357
      %p363 = scmp.eq.s32.totalorder %s24, 0
      %p364 = por %p362, %p363
      %p365 = scmp.ne.s32.totalorder %s354, %s357
      %p366 = scmp.eq.s32.totalorder %s29, 1
      %p367 = por %p365, %p366
      %p368 = scmp.ne.s32.totalorder %s357, %s358
      %p369 = scmp.eq.s32.totalorder %s29, 0
      %p370 = por %p368, %p369
      %p371 = scmp.ne.s32.totalorder %s357, %s358
      %p372 = scmp.eq.s32.totalorder %s30, 1
      %p373 = por %p371, %p372
      %p375 = scmp.ne.s32.totalorder %s358, %s374
      %p376 = scmp.eq.s32.totalorder %s30, 0
      %p377 = por %p375, %p376
      %p378 = scmp.le.s32.totalorder 1, %s24
      %p379 = scmp.lt.s32.totalorder %s24, 3
      %p380 = pnand %p378, %p379
      %p381 = pneg %p380
      // Predicated region
      $region9: #{simplenet_forward.3} parent=5 // pred_check
        _
      $region10: #{simplenet_forward.3} parent=5 // pred_check_branch
        %383 = sbr.rel (%p380) target = $region12
      $region11: #{simplenet_forward.3} parent=5 // pred_region
        %s384 = ssub.s32 %s24, 1
        // Predicated region
        $region13: #{simplenet_forward.3} parent=11 // pred_check
          %p385 = pneg %p71
        $region14: #{simplenet_forward.3} parent=11 // pred_check_branch
          %387 = sbr.rel (%p385) target = $region16
        $region15: #{simplenet_forward.3} parent=11 // pred_region
          _
        $region16: #{simplenet_forward.3} parent=11 // pred_fallthru
          _
        // Predicated region
        $region17: #{simplenet_forward.3} parent=11 // pred_check
          %p388 = pneg %p92
        $region18: #{simplenet_forward.3} parent=11 // pred_check_branch
          %390 = sbr.rel (%p388) target = $region20
        $region19: #{simplenet_forward.3} parent=11 // pred_region
          _
        $region20: #{simplenet_forward.3} parent=11 // pred_fallthru
          _
        // Predicated region
        $region21: #{simplenet_forward.3} parent=11 // pred_check
          %p391 = pneg %p113
        $region22: #{simplenet_forward.3} parent=11 // pred_check_branch
          %393 = sbr.rel (%p391) target = $region24
        $region23: #{simplenet_forward.3} parent=11 // pred_region
          _
        $region24: #{simplenet_forward.3} parent=11 // pred_fallthru
          _
        // Predicated region
        $region25: #{simplenet_forward.3} parent=11 // pred_check
          %p394 = pneg %p134
        $region26: #{simplenet_forward.3} parent=11 // pred_check_branch
          %396 = sbr.rel (%p394) target = $region28
        $region27: #{simplenet_forward.3} parent=11 // pred_region
          _
        $region28: #{simplenet_forward.3} parent=11 // pred_fallthru
          _
        // Predicated region
        $region29: #{simplenet_forward.3} parent=11 // pred_check
          %p397 = pneg %p155
        $region30: #{simplenet_forward.3} parent=11 // pred_check_branch
          %399 = sbr.rel (%p397) target = $region32
        $region31: #{simplenet_forward.3} parent=11 // pred_region
          _
        $region32: #{simplenet_forward.3} parent=11 // pred_fallthru
          _
        // Predicated region
        $region33: #{simplenet_forward.3} parent=11 // pred_check
          %p400 = pneg %p176
        $region34: #{simplenet_forward.3} parent=11 // pred_check_branch
          %402 = sbr.rel (%p400) target = $region36
        $region35: #{simplenet_forward.3} parent=11 // pred_region
          _
        $region36: #{simplenet_forward.3} parent=11 // pred_fallthru
          _
        // Predicated region
        $region37: #{simplenet_forward.3} parent=11 // pred_check
          %p403 = pneg %p197
        $region38: #{simplenet_forward.3} parent=11 // pred_check_branch
          %405 = sbr.rel (%p403) target = $region40
        $region39: #{simplenet_forward.3} parent=11 // pred_region
          _
        $region40: #{simplenet_forward.3} parent=11 // pred_fallthru
          _
        // Predicated region
        $region41: #{simplenet_forward.3} parent=11 // pred_check
          %p406 = pneg %p218
        $region42: #{simplenet_forward.3} parent=11 // pred_check_branch
          %408 = sbr.rel (%p406) target = $region44
        $region43: #{simplenet_forward.3} parent=11 // pred_region
          _
        $region44: #{simplenet_forward.3} parent=11 // pred_fallthru
          _
        // Predicated region
        $region45: #{simplenet_forward.3} parent=11 // pred_check
          %p409 = pneg %p239
        $region46: #{simplenet_forward.3} parent=11 // pred_check_branch
          %411 = sbr.rel (%p409) target = $region48
        $region47: #{simplenet_forward.3} parent=11 // pred_region
          _
        $region48: #{simplenet_forward.3} parent=11 // pred_fallthru
          _
        // Predicated region
        $region49: #{simplenet_forward.3} parent=11 // pred_check
          %p412 = pneg %p260
        $region50: #{simplenet_forward.3} parent=11 // pred_check_branch
          %414 = sbr.rel (%p412) target = $region52
        $region51: #{simplenet_forward.3} parent=11 // pred_region
          _
        $region52: #{simplenet_forward.3} parent=11 // pred_fallthru
          _
        // Predicated region
        $region53: #{simplenet_forward.3} parent=11 // pred_check
          %p415 = pneg %p281
        $region54: #{simplenet_forward.3} parent=11 // pred_check_branch
          %417 = sbr.rel (%p415) target = $region56
        $region55: #{simplenet_forward.3} parent=11 // pred_region
          _
        $region56: #{simplenet_forward.3} parent=11 // pred_fallthru
          _
        // Predicated region
        $region57: #{simplenet_forward.3} parent=11 // pred_check
          %p418 = pneg %p302
        $region58: #{simplenet_forward.3} parent=11 // pred_check_branch
          %420 = sbr.rel (%p418) target = $region60
        $region59: #{simplenet_forward.3} parent=11 // pred_region
          _
        $region60: #{simplenet_forward.3} parent=11 // pred_fallthru
          _
        // Predicated region
        $region61: #{simplenet_forward.3} parent=11 // pred_check
          %p421 = pneg %p323
        $region62: #{simplenet_forward.3} parent=11 // pred_check_branch
          %423 = sbr.rel (%p421) target = $region64
        $region63: #{simplenet_forward.3} parent=11 // pred_region
          _
        $region64: #{simplenet_forward.3} parent=11 // pred_fallthru
          _
        // Predicated region
        $region65: #{simplenet_forward.3} parent=11 // pred_check
          %p424 = pneg %p344
        $region66: #{simplenet_forward.3} parent=11 // pred_check_branch
          %426 = sbr.rel (%p424) target = $region68
        $region67: #{simplenet_forward.3} parent=11 // pred_region
          _
        $region68: #{simplenet_forward.3} parent=11 // pred_fallthru
          _
      $region12: #{simplenet_forward.3} parent=5 // pred_fallthru
        _
      %p427 = scmp.lt.s32.totalorder %s24, 2
      // Predicated region
      $region69: #{simplenet_forward.3} parent=5 // pred_check
        %p428 = pneg %p427
      $region70: #{simplenet_forward.3} parent=5 // pred_check_branch
        %430 = sbr.rel (%p428) target = $region72
      $region71: #{simplenet_forward.3} parent=5 // pred_region
        // Predicated region
        $region73: #{simplenet_forward.3} parent=71 // pred_check
          %p431 = pneg %p44
        $region74: #{simplenet_forward.3} parent=71 // pred_check_branch
          %433 = sbr.rel (%p431) target = $region76
        $region75: #{simplenet_forward.3} parent=71 // pred_region
          %p434 = scmp.lt.s32.totalorder %s24, 1
          %s435 = scalar_select %p434, %s24, 1
          %s436 = smul.addr %s435, 8
          %s437 = smul.addr %s436, 4
          %s438 = scalar_lea.vmem %s0, %s437
        $region76: #{simplenet_forward.3} parent=71 // pred_fallthru
          _
      $region72: #{simplenet_forward.3} parent=5 // pred_fallthru
        _
      %p439 = scmp.le.s32.totalorder 1, %s24
      %p440 = scmp.lt.s32.totalorder %s24, 3
      %p441 = pnand %p439, %p440
      %p442 = pneg %p441
      // Predicated region
      $region77: #{simplenet_forward.3} parent=5 // pred_check
        _
      $region78: #{simplenet_forward.3} parent=5 // pred_check_branch
        %444 = sbr.rel (%p441) target = $region80
      $region79: #{simplenet_forward.3} parent=5 // pred_region
        %s445 = ssub.s32 %s24, 1
        %p446 = scmp.lt.s32.totalorder %s29, 1
        %s447 = scalar_select %p446, %s29, 1
        %s448 = smul.addr %s447, 8
        %s449 = smul.addr %s448, 4
        %s450 = scalar_lea.vmem %s0, %s449
        %p451 = pneg %p50
        %p452 = pneg %p47
        %p453 = pneg %p71
        %p454 = pneg %p68
        %p455 = pneg %p92
        %p456 = pneg %p89
        %p457 = pneg %p113
        %p458 = pneg %p110
        %p459 = pneg %p134
        %p460 = pneg %p131
        %p461 = pneg %p155
        %p462 = pneg %p152
        %p463 = pneg %p176
        %p464 = pneg %p173
        %p465 = pneg %p197
        %p466 = pneg %p194
        %p467 = pneg %p218
        %p468 = pneg %p215
        %p469 = pneg %p239
        %p470 = pneg %p236
        %p471 = pneg %p260
        %p472 = pneg %p257
        %p473 = pneg %p281
        %p474 = pneg %p278
        %p475 = pneg %p302
        %p476 = pneg %p299
        %p477 = pneg %p323
        %p478 = pneg %p320
        %p479 = pneg %p344
        %p480 = pneg %p341
        %p481 = pneg %p370
        %p482 = pneg %p367
        %s483 = sand.u32 %s357, 1
        %s484 = scalar_lea.sflag [#allocation7], %s483
        %s485 = sand.u32 %s357, 1
        %s486 = scalar_lea.vmem [#allocation6], %s485
        %p487 = scmp.lt.s32.totalorder %s29, 1
        %s488 = scalar_select %p487, %s29, 1
        %s489 = smul.addr %s488, 8
        %s490 = smul.addr %s489, 4
        %s491 = scalar_lea.vmem %s0, %s490
        %v493 = vld [vmem:[%s491] sm:$0xf]
        %v494 = vld [vmem:[%s491 + $0x4] sm:$0xf]
        %v495 = vld [vmem:[%s491 + $0x8] sm:$0xf]
        %v496 = vld [vmem:[%s491 + $0xc] sm:$0xf]
        %v497 = vld [vmem:[%s491 + $0x10] sm:$0xf]
        %v498 = vld [vmem:[%s491 + $0x14] sm:$0xf]
        %v499 = vld [vmem:[%s491 + $0x18] sm:$0xf]
        %v500 = vld [vmem:[%s491 + $0x1c] sm:$0xf]
        %v501 = vld [vmem:[%s1] sm:$0xf]
        %v502 = vld [vmem:[%s1 + $0x4] sm:$0xf]
        %v503 = vld [vmem:[%s1 + $0x8] sm:$0xf]
        %v504 = vld [vmem:[%s1 + $0xc] sm:$0xf]
        %v505 = vld [vmem:[%s1 + $0x10] sm:$0xf]
        %v506 = vld [vmem:[%s1 + $0x14] sm:$0xf]
        %v507 = vld [vmem:[%s1 + $0x18] sm:$0xf]
        %v508 = vld [vmem:[%s1 + $0x1c] sm:$0xf]
        %v509 = vld [vmem:[%s2] sm:$0x1]
        %v511 = vlaneseq
        %v512 = vshrl.u32 %v511, 7
        %v513 = vsub.s32 0, %v512
        %v514 = vrot.slane %v509, %v513
        %v524 = vunpack.c.l.b16 %v493
        %v525 = vunpack.c.l.b16 %v494
        %v526 = vunpack.c.l.b16 %v495
        %v527 = vunpack.c.l.b16 %v496
        %v528 = vunpack.c.l.b16 %v497
        %v529 = vunpack.c.l.b16 %v498
        %v530 = vunpack.c.l.b16 %v499
        %v531 = vunpack.c.l.b16 %v500
        %v532 = vpack.c.b16 %v525, %v524
        %v533 = vpack.c.b16 %v527, %v526
        %v534 = vpack.c.b16 %v529, %v528
        %v535 = vpack.c.b16 %v531, %v530
        %v544 = vunpack.c.l.b16 %v501
        %v545 = vunpack.c.l.b16 %v502
        %v546 = vunpack.c.l.b16 %v503
        %v547 = vunpack.c.l.b16 %v504
        %v548 = vunpack.c.l.b16 %v505
        %v549 = vunpack.c.l.b16 %v506
        %v550 = vunpack.c.l.b16 %v507
        %v551 = vunpack.c.l.b16 %v508
        %v552 = vpack.c.b16 %v545, %v544
        %v553 = vpack.c.b16 %v547, %v546
        %v554 = vpack.c.b16 %v549, %v548
        %v555 = vpack.c.b16 %v551, %v550
        %vm560 = vcmask 523264
        %v562 = vsel %vm560, %v532, 0
        %v565 = vsel %vm560, %v533, 0
        %v568 = vsel %vm560, %v534, 0
        %v571 = vsel %vm560, %v535, 0
        %573 = vmatprep.subr.bf16.mxu0 0
        %574 = vmatpush1.bf16.msra.mxu0 0
        %575 = vmatprep.subr.bf16.mxu0 0
        %576 = vmatpush1.bf16.msra.mxu0 0
        %577 = vmatprep.subr.bf16.mxu0 0
        %578 = vmatpush1.bf16.msra.mxu0 0
        %579 = vmatprep.subr.bf16.mxu0 0
        %580 = vmatpush1.bf16.msra.mxu0 0
        %581 = vmatprep.subr.bf16.mxu0 0
        %582 = vmatpush1.bf16.msra.mxu0 %v555
        %583 = vmatprep.subr.bf16.mxu0 0
        %584 = vmatpush1.bf16.msra.mxu0 %v554
        %585 = vmatprep.subr.bf16.mxu0 0
        %586 = vmatpush1.bf16.msra.mxu0 %v553
        %587 = vmatprep.subr.bf16.mxu0 0
        %588 = vmatpush1.bf16.msra.mxu0 %v552
        %589 = vmatprep.subr.bf16.mxu0 0
        %590 = vmatpush2.bf16.msra.mxu0 0
        %591 = vmatprep.subr.bf16.mxu0 0
        %592 = vmatpush2.bf16.msra.mxu0 0
        %593 = vmatprep.subr.bf16.mxu0 0
        %594 = vmatpush2.bf16.msra.mxu0 0
        %595 = vmatprep.subr.bf16.mxu0 0
        %596 = vmatpush2.bf16.msra.mxu0 0
        %597 = vmatprep.subr.bf16.mxu0 0
        %598 = vmatpush2.bf16.msra.mxu0 0
        %599 = vmatprep.subr.bf16.mxu0 0
        %600 = vmatpush2.bf16.msra.mxu0 0
        %601 = vmatprep.subr.bf16.mxu0 0
        %602 = vmatpush2.bf16.msra.mxu0 0
        %603 = vmatprep.subr.bf16.mxu0 0
        %604 = vmatpush2.bf16.msra.mxu0 0
        %605 = vmatprep.mubr.bf16.mxu0 0
        %606 = vmatmul.mubr.bf16.gmra.mxu0 %v562
        %v607 = vpop.f32.mrf.mxu0
        %v608 = vadd.f32 %v514, %v607
        %v609 = vpop.f32.mrf.mxu0
        %v610 = vpop.f32.mrf.mxu0
        %v611 = vadd.f32 %v514, %v610
        %v612 = vpop.f32.mrf.mxu0
        %613 = vmatprep.mubr.bf16.mxu0 0
        %614 = vmatmul.mubr.bf16.gmra.mxu0 %v565
        %v615 = vpop.f32.mrf.mxu0
        %v616 = vadd.f32 %v514, %v615
        %v617 = vpop.f32.mrf.mxu0
        %v618 = vpop.f32.mrf.mxu0
        %v619 = vadd.f32 %v514, %v618
        %v620 = vpop.f32.mrf.mxu0
        %621 = vmatprep.mubr.bf16.mxu0 0
        %622 = vmatmul.mubr.bf16.gmra.mxu0 %v568
        %v623 = vpop.f32.mrf.mxu0
        %v624 = vadd.f32 %v514, %v623
        %v625 = vpop.f32.mrf.mxu0
        %v626 = vpop.f32.mrf.mxu0
        %v627 = vadd.f32 %v514, %v626
        %v628 = vpop.f32.mrf.mxu0
        %629 = vmatprep.mubr.bf16.mxu0 0
        %630 = vmatmul.mubr.bf16.gmra.mxu0 %v571
        %v631 = vpop.f32.mrf.mxu0
        %v632 = vadd.f32 %v514, %v631
        %v633 = vpop.f32.mrf.mxu0
        %v634 = vpop.f32.mrf.mxu0
        %v635 = vadd.f32 %v514, %v634
        %v636 = vpop.f32.mrf.mxu0
        %637 = vdwg.mxu0
        %v638 = vmax.f32 %v608, 0.0
        %v639 = vmax.f32 %v611, 0.0
        %v640 = vmax.f32 %v616, 0.0
        %v641 = vmax.f32 %v619, 0.0
        %v642 = vmax.f32 %v624, 0.0
        %v643 = vmax.f32 %v627, 0.0
        %v644 = vmax.f32 %v632, 0.0
        %v645 = vmax.f32 %v635, 0.0
        %646 = vst.msk [vmem:[#allocation2] sm:$0xff] %vm560, 0.0
        %vm647 = vcmask 517120
        %648 = vst.msk [vmem:[#allocation2 + $0x8] sm:$0x3] %vm647, 0.0
        %s649 = scalar_lea.vmem [#allocation2], 144
        %650 = vst.msk [vmem:[%s649] sm:$0xff] %vm560, 0.0
        %651 = vst.msk [vmem:[%s649 + $0x8] sm:$0x3] %vm647, 0.0
        %vm652 = vcmask 516096
        %653 = vst.msk [vmem:[#allocation2] sm:$0x1] %vm652, 0.0
        %654 = vst.msk [vmem:[#allocation2 + $0x10] sm:$0x1] %vm652, 0.0
        %655 = vst.msk [vmem:[#allocation2 + $0x20] sm:$0x1] %vm652, 0.0
        %656 = vst.msk [vmem:[#allocation2 + $0x30] sm:$0x1] %vm652, 0.0
        %657 = vst.msk [vmem:[#allocation2 + $0x40] sm:$0x1] %vm652, 0.0
        %658 = vst.msk [vmem:[#allocation2 + $0x50] sm:$0x1] %vm652, 0.0
        %659 = vst.msk [vmem:[#allocation2 + $0x60] sm:$0x1] %vm652, 0.0
        %660 = vst.msk [vmem:[#allocation2 + $0x70] sm:$0x1] %vm652, 0.0
        %661 = vst.msk [vmem:[#allocation2 + $0x80] sm:$0x1] %vm652, 0.0
        %662 = vst.msk [vmem:[#allocation2 + $0x90] sm:$0x1] %vm652, 0.0
        %663 = vst.msk [vmem:[#allocation2 + $0x9] sm:$0x1] %vm652, 0.0
        %664 = vst.msk [vmem:[#allocation2 + $0x19] sm:$0x1] %vm652, 0.0
        %665 = vst.msk [vmem:[#allocation2 + $0x29] sm:$0x1] %vm652, 0.0
        %666 = vst.msk [vmem:[#allocation2 + $0x39] sm:$0x1] %vm652, 0.0
        %667 = vst.msk [vmem:[#allocation2 + $0x49] sm:$0x1] %vm652, 0.0
        %668 = vst.msk [vmem:[#allocation2 + $0x59] sm:$0x1] %vm652, 0.0
        %669 = vst.msk [vmem:[#allocation2 + $0x69] sm:$0x1] %vm652, 0.0
        %670 = vst.msk [vmem:[#allocation2 + $0x79] sm:$0x1] %vm652, 0.0
        %671 = vst.msk [vmem:[#allocation2 + $0x89] sm:$0x1] %vm652, 0.0
        %672 = vst.msk [vmem:[#allocation2 + $0x99] sm:$0x1] %vm652, 0.0
        %s673 = scalar_lea.vmem [#allocation2], 16
        %674 = vst.msk [vmem:[%s673 + $0x1] sm:$0xff] %vm560, %v638
        %675 = vst.msk [vmem:[%s673 + $0x11] sm:$0xff] %vm560, %v639
        %676 = vst.msk [vmem:[%s673 + $0x21] sm:$0xff] %vm560, %v640
        %677 = vst.msk [vmem:[%s673 + $0x31] sm:$0xff] %vm560, %v641
        %678 = vst.msk [vmem:[%s673 + $0x41] sm:$0xff] %vm560, %v642
        %679 = vst.msk [vmem:[%s673 + $0x51] sm:$0xff] %vm560, %v643
        %680 = vst.msk [vmem:[%s673 + $0x61] sm:$0xff] %vm560, %v644
        %681 = vst.msk [vmem:[%s673 + $0x71] sm:$0xff] %vm560, %v645
        %v682 = vld [vmem:[#allocation2] sm:$0xff]
        %v683 = vld [vmem:[#allocation2 + $0x10] sm:$0xff]
        %v684 = vld [vmem:[#allocation2 + $0x20] sm:$0xff]
        %v685 = vld [vmem:[#allocation2 + $0x30] sm:$0xff]
        %v686 = vld [vmem:[#allocation2 + $0x40] sm:$0xff]
        %v687 = vld [vmem:[#allocation2 + $0x50] sm:$0xff]
        %v688 = vld [vmem:[#allocation2 + $0x60] sm:$0xff]
        %v689 = vld [vmem:[#allocation2 + $0x70] sm:$0xff]
        %v690 = vpack.c.bf16 %v683, %v682
        %v691 = vpack.c.bf16 %v685, %v684
        %v692 = vpack.c.bf16 %v687, %v686
        %v693 = vpack.c.bf16 %v689, %v688
        %v694 = vld [vmem:[%s3] sm:$0xf]
        %v695 = vld [vmem:[%s3 + $0x4] sm:$0xf]
        %v696 = vld [vmem:[%s3 + $0x8] sm:$0xf]
        %v697 = vld [vmem:[%s3 + $0xc] sm:$0xf]
        %v698 = vld [vmem:[%s3 + $0x10] sm:$0xf]
        %v699 = vld [vmem:[%s3 + $0x14] sm:$0xf]
        %v700 = vld [vmem:[%s3 + $0x18] sm:$0xf]
        %v701 = vld [vmem:[%s3 + $0x1c] sm:$0xf]
        %v702 = vld [vmem:[#allocation2 + $0x1] sm:$0xff]
        %v703 = vld [vmem:[#allocation2 + $0x11] sm:$0xff]
        %v704 = vld [vmem:[#allocation2 + $0x21] sm:$0xff]
        %v705 = vld [vmem:[#allocation2 + $0x31] sm:$0xff]
        %v706 = vld [vmem:[#allocation2 + $0x41] sm:$0xff]
        %v707 = vld [vmem:[#allocation2 + $0x51] sm:$0xff]
        %v708 = vld [vmem:[#allocation2 + $0x61] sm:$0xff]
        %v709 = vld [vmem:[#allocation2 + $0x71] sm:$0xff]
        %v710 = vpack.c.bf16 %v703, %v702
        %v711 = vpack.c.bf16 %v705, %v704
        %v712 = vpack.c.bf16 %v707, %v706
        %v713 = vpack.c.bf16 %v709, %v708
        %s714 = scalar_lea.vmem %s3, 32
        %v715 = vld [vmem:[%s714] sm:$0xf]
        %v716 = vld [vmem:[%s714 + $0x4] sm:$0xf]
        %v717 = vld [vmem:[%s714 + $0x8] sm:$0xf]
        %v718 = vld [vmem:[%s714 + $0xc] sm:$0xf]
        %v719 = vld [vmem:[%s714 + $0x10] sm:$0xf]
        %v720 = vld [vmem:[%s714 + $0x14] sm:$0xf]
        %v721 = vld [vmem:[%s714 + $0x18] sm:$0xf]
        %v722 = vld [vmem:[%s714 + $0x1c] sm:$0xf]
        %v731 = vunpack.c.l.b16 %v715
        %v732 = vunpack.c.l.b16 %v716
        %v733 = vunpack.c.l.b16 %v717
        %v734 = vunpack.c.l.b16 %v718
        %v735 = vunpack.c.l.b16 %v719
        %v736 = vunpack.c.l.b16 %v720
        %v737 = vunpack.c.l.b16 %v721
        %v738 = vunpack.c.l.b16 %v722
        %v739 = vpack.c.b16 %v732, %v731
        %v740 = vpack.c.b16 %v734, %v733
        %v741 = vpack.c.b16 %v736, %v735
        %v742 = vpack.c.b16 %v738, %v737
        %v748 = vsel %vm560, %v710, 0
        %v751 = vsel %vm560, %v711, 0
        %v754 = vsel %vm560, %v712, 0
        %v757 = vsel %vm560, %v713, 0
        %759 = vmatprep.subr.bf16.mxu0 0
        %760 = vmatpush1.bf16.msra.mxu0 0
        %761 = vmatprep.subr.bf16.mxu0 0
        %762 = vmatpush1.bf16.msra.mxu0 0
        %763 = vmatprep.subr.bf16.mxu0 0
        %764 = vmatpush1.bf16.msra.mxu0 0
        %765 = vmatprep.subr.bf16.mxu0 0
        %766 = vmatpush1.bf16.msra.mxu0 0
        %767 = vmatprep.subr.bf16.mxu0 0
        %768 = vmatpush1.bf16.msra.mxu0 %v742
        %769 = vmatprep.subr.bf16.mxu0 0
        %770 = vmatpush1.bf16.msra.mxu0 %v741
        %771 = vmatprep.subr.bf16.mxu0 0
        %772 = vmatpush1.bf16.msra.mxu0 %v740
        %773 = vmatprep.subr.bf16.mxu0 0
        %774 = vmatpush1.bf16.msra.mxu0 %v739
        %775 = vmatprep.subr.bf16.mxu0 0
        %776 = vmatpush2.bf16.msra.mxu0 0
        %777 = vmatprep.subr.bf16.mxu0 0
        %778 = vmatpush2.bf16.msra.mxu0 0
        %779 = vmatprep.subr.bf16.mxu0 0
        %780 = vmatpush2.bf16.msra.mxu0 0
        %781 = vmatprep.subr.bf16.mxu0 0
        %782 = vmatpush2.bf16.msra.mxu0 0
        %783 = vmatprep.subr.bf16.mxu0 0
        %784 = vmatpush2.bf16.msra.mxu0 0
        %785 = vmatprep.subr.bf16.mxu0 0
        %786 = vmatpush2.bf16.msra.mxu0 0
        %787 = vmatprep.subr.bf16.mxu0 0
        %788 = vmatpush2.bf16.msra.mxu0 0
        %789 = vmatprep.subr.bf16.mxu0 0
        %790 = vmatpush2.bf16.msra.mxu0 0
        %791 = vmatprep.mubr.bf16.mxu0 0
        %792 = vmatmul.mubr.bf16.gmra.mxu0 %v748
        %v793 = vpop.f32.mrf.mxu0
        %v794 = vadd.f32 0.0, %v793
        %v795 = vpop.f32.mrf.mxu0
        %v796 = vpop.f32.mrf.mxu0
        %v797 = vadd.f32 0.0, %v796
        %v798 = vpop.f32.mrf.mxu0
        %799 = vmatprep.mubr.bf16.mxu0 0
        %800 = vmatmul.mubr.bf16.gmra.mxu0 %v751
        %v801 = vpop.f32.mrf.mxu0
        %v802 = vadd.f32 0.0, %v801
        %v803 = vpop.f32.mrf.mxu0
        %v804 = vpop.f32.mrf.mxu0
        %v805 = vadd.f32 0.0, %v804
        %v806 = vpop.f32.mrf.mxu0
        %807 = vmatprep.mubr.bf16.mxu0 0
        %808 = vmatmul.mubr.bf16.gmra.mxu0 %v754
        %v809 = vpop.f32.mrf.mxu0
        %v810 = vadd.f32 0.0, %v809
        %v811 = vpop.f32.mrf.mxu0
        %v812 = vpop.f32.mrf.mxu0
        %v813 = vadd.f32 0.0, %v812
        %v814 = vpop.f32.mrf.mxu0
        %815 = vmatprep.mubr.bf16.mxu0 0
        %816 = vmatmul.mubr.bf16.gmra.mxu0 %v757
        %v817 = vpop.f32.mrf.mxu0
        %v818 = vadd.f32 0.0, %v817
        %v819 = vpop.f32.mrf.mxu0
        %v820 = vpop.f32.mrf.mxu0
        %v821 = vadd.f32 0.0, %v820
        %v822 = vpop.f32.mrf.mxu0
        %823 = vdwg.mxu0
        %v832 = vunpack.c.l.b16 %v694
        %v833 = vunpack.c.l.b16 %v695
        %v834 = vunpack.c.l.b16 %v696
        %v835 = vunpack.c.l.b16 %v697
        %v836 = vunpack.c.l.b16 %v698
        %v837 = vunpack.c.l.b16 %v699
        %v838 = vunpack.c.l.b16 %v700
        %v839 = vunpack.c.l.b16 %v701
        %v840 = vpack.c.b16 %v833, %v832
        %v841 = vpack.c.b16 %v835, %v834
        %v842 = vpack.c.b16 %v837, %v836
        %v843 = vpack.c.b16 %v839, %v838
        %v849 = vsel %vm560, %v690, 0
        %v852 = vsel %vm560, %v691, 0
        %v855 = vsel %vm560, %v692, 0
        %v858 = vsel %vm560, %v693, 0
        %860 = vmatprep.subr.bf16.mxu0 0
        %861 = vmatpush1.bf16.msra.mxu0 0
        %862 = vmatprep.subr.bf16.mxu0 0
        %863 = vmatpush1.bf16.msra.mxu0 0
        %864 = vmatprep.subr.bf16.mxu0 0
        %865 = vmatpush1.bf16.msra.mxu0 0
        %866 = vmatprep.subr.bf16.mxu0 0
        %867 = vmatpush1.bf16.msra.mxu0 0
        %868 = vmatprep.subr.bf16.mxu0 0
        %869 = vmatpush1.bf16.msra.mxu0 %v843
        %870 = vmatprep.subr.bf16.mxu0 0
        %871 = vmatpush1.bf16.msra.mxu0 %v842
        %872 = vmatprep.subr.bf16.mxu0 0
        %873 = vmatpush1.bf16.msra.mxu0 %v841
        %874 = vmatprep.subr.bf16.mxu0 0
        %875 = vmatpush1.bf16.msra.mxu0 %v840
        %876 = vmatprep.subr.bf16.mxu0 0
        %877 = vmatpush2.bf16.msra.mxu0 0
        %878 = vmatprep.subr.bf16.mxu0 0
        %879 = vmatpush2.bf16.msra.mxu0 0
        %880 = vmatprep.subr.bf16.mxu0 0
        %881 = vmatpush2.bf16.msra.mxu0 0
        %882 = vmatprep.subr.bf16.mxu0 0
        %883 = vmatpush2.bf16.msra.mxu0 0
        %884 = vmatprep.subr.bf16.mxu0 0
        %885 = vmatpush2.bf16.msra.mxu0 0
        %886 = vmatprep.subr.bf16.mxu0 0
        %887 = vmatpush2.bf16.msra.mxu0 0
        %888 = vmatprep.subr.bf16.mxu0 0
        %889 = vmatpush2.bf16.msra.mxu0 0
        %890 = vmatprep.subr.bf16.mxu0 0
        %891 = vmatpush2.bf16.msra.mxu0 0
        %892 = vmatprep.mubr.bf16.mxu0 0
        %893 = vmatmul.mubr.bf16.gmra.mxu0 %v849
        %v894 = vpop.f32.mrf.mxu0
        %v895 = vadd.f32 %v794, %v894
        %v896 = vpop.f32.mrf.mxu0
        %v897 = vpop.f32.mrf.mxu0
        %v898 = vadd.f32 %v797, %v897
        %v899 = vpop.f32.mrf.mxu0
        %900 = vmatprep.mubr.bf16.mxu0 0
        %901 = vmatmul.mubr.bf16.gmra.mxu0 %v852
        %v902 = vpop.f32.mrf.mxu0
        %v903 = vadd.f32 %v802, %v902
        %v904 = vpop.f32.mrf.mxu0
        %v905 = vpop.f32.mrf.mxu0
        %v906 = vadd.f32 %v805, %v905
        %v907 = vpop.f32.mrf.mxu0
        %908 = vmatprep.mubr.bf16.mxu0 0
        %909 = vmatmul.mubr.bf16.gmra.mxu0 %v855
        %v910 = vpop.f32.mrf.mxu0
        %v911 = vadd.f32 %v810, %v910
        %v912 = vpop.f32.mrf.mxu0
        %v913 = vpop.f32.mrf.mxu0
        %v914 = vadd.f32 %v813, %v913
        %v915 = vpop.f32.mrf.mxu0
        %916 = vmatprep.mubr.bf16.mxu0 0
        %917 = vmatmul.mubr.bf16.gmra.mxu0 %v858
        %v918 = vpop.f32.mrf.mxu0
        %v919 = vadd.f32 %v818, %v918
        %v920 = vpop.f32.mrf.mxu0
        %v921 = vpop.f32.mrf.mxu0
        %v922 = vadd.f32 %v821, %v921
        %v923 = vpop.f32.mrf.mxu0
        %924 = vdwg.mxu0
        %v925 = vld [vmem:[#allocation2 + $0x2] sm:$0xff]
        %v926 = vld [vmem:[#allocation2 + $0x12] sm:$0xff]
        %v927 = vld [vmem:[#allocation2 + $0x22] sm:$0xff]
        %v928 = vld [vmem:[#allocation2 + $0x32] sm:$0xff]
        %v929 = vld [vmem:[#allocation2 + $0x42] sm:$0xff]
        %v930 = vld [vmem:[#allocation2 + $0x52] sm:$0xff]
        %v931 = vld [vmem:[#allocation2 + $0x62] sm:$0xff]
        %v932 = vld [vmem:[#allocation2 + $0x72] sm:$0xff]
        %v933 = vpack.c.bf16 %v926, %v925
        %v934 = vpack.c.bf16 %v928, %v927
        %v935 = vpack.c.bf16 %v930, %v929
        %v936 = vpack.c.bf16 %v932, %v931
        %s937 = scalar_lea.vmem %s3, 64
        %v938 = vld [vmem:[%s937] sm:$0xf]
        %v939 = vld [vmem:[%s937 + $0x4] sm:$0xf]
        %v940 = vld [vmem:[%s937 + $0x8] sm:$0xf]
        %v941 = vld [vmem:[%s937 + $0xc] sm:$0xf]
        %v942 = vld [vmem:[%s937 + $0x10] sm:$0xf]
        %v943 = vld [vmem:[%s937 + $0x14] sm:$0xf]
        %v944 = vld [vmem:[%s937 + $0x18] sm:$0xf]
        %v945 = vld [vmem:[%s937 + $0x1c] sm:$0xf]
        %v954 = vunpack.c.l.b16 %v938
        %v955 = vunpack.c.l.b16 %v939
        %v956 = vunpack.c.l.b16 %v940
        %v957 = vunpack.c.l.b16 %v941
        %v958 = vunpack.c.l.b16 %v942
        %v959 = vunpack.c.l.b16 %v943
        %v960 = vunpack.c.l.b16 %v944
        %v961 = vunpack.c.l.b16 %v945
        %v962 = vpack.c.b16 %v955, %v954
        %v963 = vpack.c.b16 %v957, %v956
        %v964 = vpack.c.b16 %v959, %v958
        %v965 = vpack.c.b16 %v961, %v960
        %v971 = vsel %vm560, %v933, 0
        %v974 = vsel %vm560, %v934, 0
        %v977 = vsel %vm560, %v935, 0
        %v980 = vsel %vm560, %v936, 0
        %982 = vmatprep.subr.bf16.mxu0 0
        %983 = vmatpush1.bf16.msra.mxu0 0
        %984 = vmatprep.subr.bf16.mxu0 0
        %985 = vmatpush1.bf16.msra.mxu0 0
        %986 = vmatprep.subr.bf16.mxu0 0
        %987 = vmatpush1.bf16.msra.mxu0 0
        %988 = vmatprep.subr.bf16.mxu0 0
        %989 = vmatpush1.bf16.msra.mxu0 0
        %990 = vmatprep.subr.bf16.mxu0 0
        %991 = vmatpush1.bf16.msra.mxu0 %v965
        %992 = vmatprep.subr.bf16.mxu0 0
        %993 = vmatpush1.bf16.msra.mxu0 %v964
        %994 = vmatprep.subr.bf16.mxu0 0
        %995 = vmatpush1.bf16.msra.mxu0 %v963
        %996 = vmatprep.subr.bf16.mxu0 0
        %997 = vmatpush1.bf16.msra.mxu0 %v962
        %998 = vmatprep.subr.bf16.mxu0 0
        %999 = vmatpush2.bf16.msra.mxu0 0
        %1000 = vmatprep.subr.bf16.mxu0 0
        %1001 = vmatpush2.bf16.msra.mxu0 0
        %1002 = vmatprep.subr.bf16.mxu0 0
        %1003 = vmatpush2.bf16.msra.mxu0 0
        %1004 = vmatprep.subr.bf16.mxu0 0
        %1005 = vmatpush2.bf16.msra.mxu0 0
        %1006 = vmatprep.subr.bf16.mxu0 0
        %1007 = vmatpush2.bf16.msra.mxu0 0
        %1008 = vmatprep.subr.bf16.mxu0 0
        %1009 = vmatpush2.bf16.msra.mxu0 0
        %1010 = vmatprep.subr.bf16.mxu0 0
        %1011 = vmatpush2.bf16.msra.mxu0 0
        %1012 = vmatprep.subr.bf16.mxu0 0
        %1013 = vmatpush2.bf16.msra.mxu0 0
        %1014 = vmatprep.mubr.bf16.mxu0 0
        %1015 = vmatmul.mubr.bf16.gmra.mxu0 %v971
        %v1016 = vpop.f32.mrf.mxu0
        %v1017 = vadd.f32 0.0, %v1016
        %v1018 = vpop.f32.mrf.mxu0
        %v1019 = vpop.f32.mrf.mxu0
        %v1020 = vadd.f32 0.0, %v1019
        %v1021 = vpop.f32.mrf.mxu0
        %1022 = vmatprep.mubr.bf16.mxu0 0
        %1023 = vmatmul.mubr.bf16.gmra.mxu0 %v974
        %v1024 = vpop.f32.mrf.mxu0
        %v1025 = vadd.f32 0.0, %v1024
        %v1026 = vpop.f32.mrf.mxu0
        %v1027 = vpop.f32.mrf.mxu0
        %v1028 = vadd.f32 0.0, %v1027
        %v1029 = vpop.f32.mrf.mxu0
        %1030 = vmatprep.mubr.bf16.mxu0 0
        %1031 = vmatmul.mubr.bf16.gmra.mxu0 %v977
        %v1032 = vpop.f32.mrf.mxu0
        %v1033 = vadd.f32 0.0, %v1032
        %v1034 = vpop.f32.mrf.mxu0
        %v1035 = vpop.f32.mrf.mxu0
        %v1036 = vadd.f32 0.0, %v1035
        %v1037 = vpop.f32.mrf.mxu0
        %1038 = vmatprep.mubr.bf16.mxu0 0
        %1039 = vmatmul.mubr.bf16.gmra.mxu0 %v980
        %v1040 = vpop.f32.mrf.mxu0
        %v1041 = vadd.f32 0.0, %v1040
        %v1042 = vpop.f32.mrf.mxu0
        %v1043 = vpop.f32.mrf.mxu0
        %v1044 = vadd.f32 0.0, %v1043
        %v1045 = vpop.f32.mrf.mxu0
        %1046 = vdwg.mxu0
        %v1047 = vadd.f32 %v895, %v1017
        %v1048 = vadd.f32 %v898, %v1020
        %v1049 = vadd.f32 %v903, %v1025
        %v1050 = vadd.f32 %v906, %v1028
        %v1051 = vadd.f32 %v911, %v1033
        %v1052 = vadd.f32 %v914, %v1036
        %v1053 = vadd.f32 %v919, %v1041
        %v1054 = vadd.f32 %v922, %v1044
        %v1055 = vld [vmem:[%s673] sm:$0xff]
        %v1056 = vld [vmem:[%s673 + $0x10] sm:$0xff]
        %v1057 = vld [vmem:[%s673 + $0x20] sm:$0xff]
        %v1058 = vld [vmem:[%s673 + $0x30] sm:$0xff]
        %v1059 = vld [vmem:[%s673 + $0x40] sm:$0xff]
        %v1060 = vld [vmem:[%s673 + $0x50] sm:$0xff]
        %v1061 = vld [vmem:[%s673 + $0x60] sm:$0xff]
        %v1062 = vld [vmem:[%s673 + $0x70] sm:$0xff]
        %v1063 = vpack.c.bf16 %v1056, %v1055
        %v1064 = vpack.c.bf16 %v1058, %v1057
        %v1065 = vpack.c.bf16 %v1060, %v1059
        %v1066 = vpack.c.bf16 %v1062, %v1061
        %s1067 = scalar_lea.vmem %s3, 96
        %v1068 = vld [vmem:[%s1067] sm:$0xf]
        %v1069 = vld [vmem:[%s1067 + $0x4] sm:$0xf]
        %v1070 = vld [vmem:[%s1067 + $0x8] sm:$0xf]
        %v1071 = vld [vmem:[%s1067 + $0xc] sm:$0xf]
        %v1072 = vld [vmem:[%s1067 + $0x10] sm:$0xf]
        %v1073 = vld [vmem:[%s1067 + $0x14] sm:$0xf]
        %v1074 = vld [vmem:[%s1067 + $0x18] sm:$0xf]
        %v1075 = vld [vmem:[%s1067 + $0x1c] sm:$0xf]
        %v1084 = vunpack.c.l.b16 %v1068
        %v1085 = vunpack.c.l.b16 %v1069
        %v1086 = vunpack.c.l.b16 %v1070
        %v1087 = vunpack.c.l.b16 %v1071
        %v1088 = vunpack.c.l.b16 %v1072
        %v1089 = vunpack.c.l.b16 %v1073
        %v1090 = vunpack.c.l.b16 %v1074
        %v1091 = vunpack.c.l.b16 %v1075
        %v1092 = vpack.c.b16 %v1085, %v1084
        %v1093 = vpack.c.b16 %v1087, %v1086
        %v1094 = vpack.c.b16 %v1089, %v1088
        %v1095 = vpack.c.b16 %v1091, %v1090
        %v1101 = vsel %vm560, %v1063, 0
        %v1104 = vsel %vm560, %v1064, 0
        %v1107 = vsel %vm560, %v1065, 0
        %v1110 = vsel %vm560, %v1066, 0
        %1112 = vmatprep.subr.bf16.mxu0 0
        %1113 = vmatpush1.bf16.msra.mxu0 0
        %1114 = vmatprep.subr.bf16.mxu0 0
        %1115 = vmatpush1.bf16.msra.mxu0 0
        %1116 = vmatprep.subr.bf16.mxu0 0
        %1117 = vmatpush1.bf16.msra.mxu0 0
        %1118 = vmatprep.subr.bf16.mxu0 0
        %1119 = vmatpush1.bf16.msra.mxu0 0
        %1120 = vmatprep.subr.bf16.mxu0 0
        %1121 = vmatpush1.bf16.msra.mxu0 %v1095
        %1122 = vmatprep.subr.bf16.mxu0 0
        %1123 = vmatpush1.bf16.msra.mxu0 %v1094
        %1124 = vmatprep.subr.bf16.mxu0 0
        %1125 = vmatpush1.bf16.msra.mxu0 %v1093
        %1126 = vmatprep.subr.bf16.mxu0 0
        %1127 = vmatpush1.bf16.msra.mxu0 %v1092
        %1128 = vmatprep.subr.bf16.mxu0 0
        %1129 = vmatpush2.bf16.msra.mxu0 0
        %1130 = vmatprep.subr.bf16.mxu0 0
        %1131 = vmatpush2.bf16.msra.mxu0 0
        %1132 = vmatprep.subr.bf16.mxu0 0
        %1133 = vmatpush2.bf16.msra.mxu0 0
        %1134 = vmatprep.subr.bf16.mxu0 0
        %1135 = vmatpush2.bf16.msra.mxu0 0
        %1136 = vmatprep.subr.bf16.mxu0 0
        %1137 = vmatpush2.bf16.msra.mxu0 0
        %1138 = vmatprep.subr.bf16.mxu0 0
        %1139 = vmatpush2.bf16.msra.mxu0 0
        %1140 = vmatprep.subr.bf16.mxu0 0
        %1141 = vmatpush2.bf16.msra.mxu0 0
        %1142 = vmatprep.subr.bf16.mxu0 0
        %1143 = vmatpush2.bf16.msra.mxu0 0
        %1144 = vmatprep.mubr.bf16.mxu0 0
        %1145 = vmatmul.mubr.bf16.gmra.mxu0 %v1101
        %v1146 = vpop.f32.mrf.mxu0
        %v1147 = vadd.f32 0.0, %v1146
        %v1148 = vpop.f32.mrf.mxu0
        %v1149 = vpop.f32.mrf.mxu0
        %v1150 = vadd.f32 0.0, %v1149
        %v1151 = vpop.f32.mrf.mxu0
        %1152 = vmatprep.mubr.bf16.mxu0 0
        %1153 = vmatmul.mubr.bf16.gmra.mxu0 %v1104
        %v1154 = vpop.f32.mrf.mxu0
        %v1155 = vadd.f32 0.0, %v1154
        %v1156 = vpop.f32.mrf.mxu0
        %v1157 = vpop.f32.mrf.mxu0
        %v1158 = vadd.f32 0.0, %v1157
        %v1159 = vpop.f32.mrf.mxu0
        %1160 = vmatprep.mubr.bf16.mxu0 0
        %1161 = vmatmul.mubr.bf16.gmra.mxu0 %v1107
        %v1162 = vpop.f32.mrf.mxu0
        %v1163 = vadd.f32 0.0, %v1162
        %v1164 = vpop.f32.mrf.mxu0
        %v1165 = vpop.f32.mrf.mxu0
        %v1166 = vadd.f32 0.0, %v1165
        %v1167 = vpop.f32.mrf.mxu0
        %1168 = vmatprep.mubr.bf16.mxu0 0
        %1169 = vmatmul.mubr.bf16.gmra.mxu0 %v1110
        %v1170 = vpop.f32.mrf.mxu0
        %v1171 = vadd.f32 0.0, %v1170
        %v1172 = vpop.f32.mrf.mxu0
        %v1173 = vpop.f32.mrf.mxu0
        %v1174 = vadd.f32 0.0, %v1173
        %v1175 = vpop.f32.mrf.mxu0
        %1176 = vdwg.mxu0
        %v1177 = vadd.f32 %v1047, %v1147
        %v1178 = vadd.f32 %v1048, %v1150
        %v1179 = vadd.f32 %v1049, %v1155
        %v1180 = vadd.f32 %v1050, %v1158
        %v1181 = vadd.f32 %v1051, %v1163
        %v1182 = vadd.f32 %v1052, %v1166
        %v1183 = vadd.f32 %v1053, %v1171
        %v1184 = vadd.f32 %v1054, %v1174
        %v1185 = vld [vmem:[%s673 + $0x1] sm:$0xff]
        %v1186 = vld [vmem:[%s673 + $0x11] sm:$0xff]
        %v1187 = vld [vmem:[%s673 + $0x21] sm:$0xff]
        %v1188 = vld [vmem:[%s673 + $0x31] sm:$0xff]
        %v1189 = vld [vmem:[%s673 + $0x41] sm:$0xff]
        %v1190 = vld [vmem:[%s673 + $0x51] sm:$0xff]
        %v1191 = vld [vmem:[%s673 + $0x61] sm:$0xff]
        %v1192 = vld [vmem:[%s673 + $0x71] sm:$0xff]
        %v1193 = vpack.c.bf16 %v1186, %v1185
        %v1194 = vpack.c.bf16 %v1188, %v1187
        %v1195 = vpack.c.bf16 %v1190, %v1189
        %v1196 = vpack.c.bf16 %v1192, %v1191
        %s1197 = scalar_lea.vmem %s3, 128
        %v1198 = vld [vmem:[%s1197] sm:$0xf]
        %v1199 = vld [vmem:[%s1197 + $0x4] sm:$0xf]
        %v1200 = vld [vmem:[%s1197 + $0x8] sm:$0xf]
        %v1201 = vld [vmem:[%s1197 + $0xc] sm:$0xf]
        %v1202 = vld [vmem:[%s1197 + $0x10] sm:$0xf]
        %v1203 = vld [vmem:[%s1197 + $0x14] sm:$0xf]
        %v1204 = vld [vmem:[%s1197 + $0x18] sm:$0xf]
        %v1205 = vld [vmem:[%s1197 + $0x1c] sm:$0xf]
        %v1214 = vunpack.c.l.b16 %v1198
        %v1215 = vunpack.c.l.b16 %v1199
        %v1216 = vunpack.c.l.b16 %v1200
        %v1217 = vunpack.c.l.b16 %v1201
        %v1218 = vunpack.c.l.b16 %v1202
        %v1219 = vunpack.c.l.b16 %v1203
        %v1220 = vunpack.c.l.b16 %v1204
        %v1221 = vunpack.c.l.b16 %v1205
        %v1222 = vpack.c.b16 %v1215, %v1214
        %v1223 = vpack.c.b16 %v1217, %v1216
        %v1224 = vpack.c.b16 %v1219, %v1218
        %v1225 = vpack.c.b16 %v1221, %v1220
        %v1231 = vsel %vm560, %v1193, 0
        %v1234 = vsel %vm560, %v1194, 0
        %v1237 = vsel %vm560, %v1195, 0
        %v1240 = vsel %vm560, %v1196, 0
        %1242 = vmatprep.subr.bf16.mxu0 0
        %1243 = vmatpush1.bf16.msra.mxu0 0
        %1244 = vmatprep.subr.bf16.mxu0 0
        %1245 = vmatpush1.bf16.msra.mxu0 0
        %1246 = vmatprep.subr.bf16.mxu0 0
        %1247 = vmatpush1.bf16.msra.mxu0 0
        %1248 = vmatprep.subr.bf16.mxu0 0
        %1249 = vmatpush1.bf16.msra.mxu0 0
        %1250 = vmatprep.subr.bf16.mxu0 0
        %1251 = vmatpush1.bf16.msra.mxu0 %v1225
        %1252 = vmatprep.subr.bf16.mxu0 0
        %1253 = vmatpush1.bf16.msra.mxu0 %v1224
        %1254 = vmatprep.subr.bf16.mxu0 0
        %1255 = vmatpush1.bf16.msra.mxu0 %v1223
        %1256 = vmatprep.subr.bf16.mxu0 0
        %1257 = vmatpush1.bf16.msra.mxu0 %v1222
        %1258 = vmatprep.subr.bf16.mxu0 0
        %1259 = vmatpush2.bf16.msra.mxu0 0
        %1260 = vmatprep.subr.bf16.mxu0 0
        %1261 = vmatpush2.bf16.msra.mxu0 0
        %1262 = vmatprep.subr.bf16.mxu0 0
        %1263 = vmatpush2.bf16.msra.mxu0 0
        %1264 = vmatprep.subr.bf16.mxu0 0
        %1265 = vmatpush2.bf16.msra.mxu0 0
        %1266 = vmatprep.subr.bf16.mxu0 0
        %1267 = vmatpush2.bf16.msra.mxu0 0
        %1268 = vmatprep.subr.bf16.mxu0 0
        %1269 = vmatpush2.bf16.msra.mxu0 0
        %1270 = vmatprep.subr.bf16.mxu0 0
        %1271 = vmatpush2.bf16.msra.mxu0 0
        %1272 = vmatprep.subr.bf16.mxu0 0
        %1273 = vmatpush2.bf16.msra.mxu0 0
        %1274 = vmatprep.mubr.bf16.mxu0 0
        %1275 = vmatmul.mubr.bf16.gmra.mxu0 %v1231
        %v1276 = vpop.f32.mrf.mxu0
        %v1277 = vadd.f32 0.0, %v1276
        %v1278 = vpop.f32.mrf.mxu0
        %v1279 = vpop.f32.mrf.mxu0
        %v1280 = vadd.f32 0.0, %v1279
        %v1281 = vpop.f32.mrf.mxu0
        %1282 = vmatprep.mubr.bf16.mxu0 0
        %1283 = vmatmul.mubr.bf16.gmra.mxu0 %v1234
        %v1284 = vpop.f32.mrf.mxu0
        %v1285 = vadd.f32 0.0, %v1284
        %v1286 = vpop.f32.mrf.mxu0
        %v1287 = vpop.f32.mrf.mxu0
        %v1288 = vadd.f32 0.0, %v1287
        %v1289 = vpop.f32.mrf.mxu0
        %1290 = vmatprep.mubr.bf16.mxu0 0
        %1291 = vmatmul.mubr.bf16.gmra.mxu0 %v1237
        %v1292 = vpop.f32.mrf.mxu0
        %v1293 = vadd.f32 0.0, %v1292
        %v1294 = vpop.f32.mrf.mxu0
        %v1295 = vpop.f32.mrf.mxu0
        %v1296 = vadd.f32 0.0, %v1295
        %v1297 = vpop.f32.mrf.mxu0
        %1298 = vmatprep.mubr.bf16.mxu0 0
        %1299 = vmatmul.mubr.bf16.gmra.mxu0 %v1240
        %v1300 = vpop.f32.mrf.mxu0
        %v1301 = vadd.f32 0.0, %v1300
        %v1302 = vpop.f32.mrf.mxu0
        %v1303 = vpop.f32.mrf.mxu0
        %v1304 = vadd.f32 0.0, %v1303
        %v1305 = vpop.f32.mrf.mxu0
        %1306 = vdwg.mxu0
        %v1307 = vadd.f32 %v1177, %v1277
        %v1308 = vadd.f32 %v1178, %v1280
        %v1309 = vadd.f32 %v1179, %v1285
        %v1310 = vadd.f32 %v1180, %v1288
        %v1311 = vadd.f32 %v1181, %v1293
        %v1312 = vadd.f32 %v1182, %v1296
        %v1313 = vadd.f32 %v1183, %v1301
        %v1314 = vadd.f32 %v1184, %v1304
        %v1315 = vld [vmem:[%s673 + $0x2] sm:$0xff]
        %v1316 = vld [vmem:[%s673 + $0x12] sm:$0xff]
        %v1317 = vld [vmem:[%s673 + $0x22] sm:$0xff]
        %v1318 = vld [vmem:[%s673 + $0x32] sm:$0xff]
        %v1319 = vld [vmem:[%s673 + $0x42] sm:$0xff]
        %v1320 = vld [vmem:[%s673 + $0x52] sm:$0xff]
        %v1321 = vld [vmem:[%s673 + $0x62] sm:$0xff]
        %v1322 = vld [vmem:[%s673 + $0x72] sm:$0xff]
        %v1323 = vpack.c.bf16 %v1316, %v1315
        %v1324 = vpack.c.bf16 %v1318, %v1317
        %v1325 = vpack.c.bf16 %v1320, %v1319
        %v1326 = vpack.c.bf16 %v1322, %v1321
        %s1327 = scalar_lea.vmem %s3, 160
        %v1328 = vld [vmem:[%s1327] sm:$0xf]
        %v1329 = vld [vmem:[%s1327 + $0x4] sm:$0xf]
        %v1330 = vld [vmem:[%s1327 + $0x8] sm:$0xf]
        %v1331 = vld [vmem:[%s1327 + $0xc] sm:$0xf]
        %v1332 = vld [vmem:[%s1327 + $0x10] sm:$0xf]
        %v1333 = vld [vmem:[%s1327 + $0x14] sm:$0xf]
        %v1334 = vld [vmem:[%s1327 + $0x18] sm:$0xf]
        %v1335 = vld [vmem:[%s1327 + $0x1c] sm:$0xf]
        %v1344 = vunpack.c.l.b16 %v1328
        %v1345 = vunpack.c.l.b16 %v1329
        %v1346 = vunpack.c.l.b16 %v1330
        %v1347 = vunpack.c.l.b16 %v1331
        %v1348 = vunpack.c.l.b16 %v1332
        %v1349 = vunpack.c.l.b16 %v1333
        %v1350 = vunpack.c.l.b16 %v1334
        %v1351 = vunpack.c.l.b16 %v1335
        %v1352 = vpack.c.b16 %v1345, %v1344
        %v1353 = vpack.c.b16 %v1347, %v1346
        %v1354 = vpack.c.b16 %v1349, %v1348
        %v1355 = vpack.c.b16 %v1351, %v1350
        %v1361 = vsel %vm560, %v1323, 0
        %v1364 = vsel %vm560, %v1324, 0
        %v1367 = vsel %vm560, %v1325, 0
        %v1370 = vsel %vm560, %v1326, 0
        %1372 = vmatprep.subr.bf16.mxu0 0
        %1373 = vmatpush1.bf16.msra.mxu0 0
        %1374 = vmatprep.subr.bf16.mxu0 0
        %1375 = vmatpush1.bf16.msra.mxu0 0
        %1376 = vmatprep.subr.bf16.mxu0 0
        %1377 = vmatpush1.bf16.msra.mxu0 0
        %1378 = vmatprep.subr.bf16.mxu0 0
        %1379 = vmatpush1.bf16.msra.mxu0 0
        %1380 = vmatprep.subr.bf16.mxu0 0
        %1381 = vmatpush1.bf16.msra.mxu0 %v1355
        %1382 = vmatprep.subr.bf16.mxu0 0
        %1383 = vmatpush1.bf16.msra.mxu0 %v1354
        %1384 = vmatprep.subr.bf16.mxu0 0
        %1385 = vmatpush1.bf16.msra.mxu0 %v1353
        %1386 = vmatprep.subr.bf16.mxu0 0
        %1387 = vmatpush1.bf16.msra.mxu0 %v1352
        %1388 = vmatprep.subr.bf16.mxu0 0
        %1389 = vmatpush2.bf16.msra.mxu0 0
        %1390 = vmatprep.subr.bf16.mxu0 0
        %1391 = vmatpush2.bf16.msra.mxu0 0
        %1392 = vmatprep.subr.bf16.mxu0 0
        %1393 = vmatpush2.bf16.msra.mxu0 0
        %1394 = vmatprep.subr.bf16.mxu0 0
        %1395 = vmatpush2.bf16.msra.mxu0 0
        %1396 = vmatprep.subr.bf16.mxu0 0
        %1397 = vmatpush2.bf16.msra.mxu0 0
        %1398 = vmatprep.subr.bf16.mxu0 0
        %1399 = vmatpush2.bf16.msra.mxu0 0
        %1400 = vmatprep.subr.bf16.mxu0 0
        %1401 = vmatpush2.bf16.msra.mxu0 0
        %1402 = vmatprep.subr.bf16.mxu0 0
        %1403 = vmatpush2.bf16.msra.mxu0 0
        %1404 = vmatprep.mubr.bf16.mxu0 0
        %1405 = vmatmul.mubr.bf16.gmra.mxu0 %v1361
        %v1406 = vpop.f32.mrf.mxu0
        %v1407 = vadd.f32 0.0, %v1406
        %v1408 = vpop.f32.mrf.mxu0
        %v1409 = vpop.f32.mrf.mxu0
        %v1410 = vadd.f32 0.0, %v1409
        %v1411 = vpop.f32.mrf.mxu0
        %1412 = vmatprep.mubr.bf16.mxu0 0
        %1413 = vmatmul.mubr.bf16.gmra.mxu0 %v1364
        %v1414 = vpop.f32.mrf.mxu0
        %v1415 = vadd.f32 0.0, %v1414
        %v1416 = vpop.f32.mrf.mxu0
        %v1417 = vpop.f32.mrf.mxu0
        %v1418 = vadd.f32 0.0, %v1417
        %v1419 = vpop.f32.mrf.mxu0
        %1420 = vmatprep.mubr.bf16.mxu0 0
        %1421 = vmatmul.mubr.bf16.gmra.mxu0 %v1367
        %v1422 = vpop.f32.mrf.mxu0
        %v1423 = vadd.f32 0.0, %v1422
        %v1424 = vpop.f32.mrf.mxu0
        %v1425 = vpop.f32.mrf.mxu0
        %v1426 = vadd.f32 0.0, %v1425
        %v1427 = vpop.f32.mrf.mxu0
        %1428 = vmatprep.mubr.bf16.mxu0 0
        %1429 = vmatmul.mubr.bf16.gmra.mxu0 %v1370
        %v1430 = vpop.f32.mrf.mxu0
        %v1431 = vadd.f32 0.0, %v1430
        %v1432 = vpop.f32.mrf.mxu0
        %v1433 = vpop.f32.mrf.mxu0
        %v1434 = vadd.f32 0.0, %v1433
        %v1435 = vpop.f32.mrf.mxu0
        %1436 = vdwg.mxu0
        %v1437 = vadd.f32 %v1307, %v1407
        %v1438 = vadd.f32 %v1308, %v1410
        %v1439 = vadd.f32 %v1309, %v1415
        %v1440 = vadd.f32 %v1310, %v1418
        %v1441 = vadd.f32 %v1311, %v1423
        %v1442 = vadd.f32 %v1312, %v1426
        %v1443 = vadd.f32 %v1313, %v1431
        %v1444 = vadd.f32 %v1314, %v1434
        %s1445 = scalar_lea.vmem [#allocation2], 32
        %v1446 = vld [vmem:[%s1445] sm:$0xff]
        %v1447 = vld [vmem:[%s1445 + $0x10] sm:$0xff]
        %v1448 = vld [vmem:[%s1445 + $0x20] sm:$0xff]
        %v1449 = vld [vmem:[%s1445 + $0x30] sm:$0xff]
        %v1450 = vld [vmem:[%s1445 + $0x40] sm:$0xff]
        %v1451 = vld [vmem:[%s1445 + $0x50] sm:$0xff]
        %v1452 = vld [vmem:[%s1445 + $0x60] sm:$0xff]
        %v1453 = vld [vmem:[%s1445 + $0x70] sm:$0xff]
        %v1454 = vpack.c.bf16 %v1447, %v1446
        %v1455 = vpack.c.bf16 %v1449, %v1448
        %v1456 = vpack.c.bf16 %v1451, %v1450
        %v1457 = vpack.c.bf16 %v1453, %v1452
        %s1458 = scalar_lea.vmem %s3, 192
        %v1459 = vld [vmem:[%s1458] sm:$0xf]
        %v1460 = vld [vmem:[%s1458 + $0x4] sm:$0xf]
        %v1461 = vld [vmem:[%s1458 + $0x8] sm:$0xf]
        %v1462 = vld [vmem:[%s1458 + $0xc] sm:$0xf]
        %v1463 = vld [vmem:[%s1458 + $0x10] sm:$0xf]
        %v1464 = vld [vmem:[%s1458 + $0x14] sm:$0xf]
        %v1465 = vld [vmem:[%s1458 + $0x18] sm:$0xf]
        %v1466 = vld [vmem:[%s1458 + $0x1c] sm:$0xf]
        %v1475 = vunpack.c.l.b16 %v1459
        %v1476 = vunpack.c.l.b16 %v1460
        %v1477 = vunpack.c.l.b16 %v1461
        %v1478 = vunpack.c.l.b16 %v1462
        %v1479 = vunpack.c.l.b16 %v1463
        %v1480 = vunpack.c.l.b16 %v1464
        %v1481 = vunpack.c.l.b16 %v1465
        %v1482 = vunpack.c.l.b16 %v1466
        %v1483 = vpack.c.b16 %v1476, %v1475
        %v1484 = vpack.c.b16 %v1478, %v1477
        %v1485 = vpack.c.b16 %v1480, %v1479
        %v1486 = vpack.c.b16 %v1482, %v1481
        %v1492 = vsel %vm560, %v1454, 0
        %v1495 = vsel %vm560, %v1455, 0
        %v1498 = vsel %vm560, %v1456, 0
        %v1501 = vsel %vm560, %v1457, 0
        %1503 = vmatprep.subr.bf16.mxu0 0
        %1504 = vmatpush1.bf16.msra.mxu0 0
        %1505 = vmatprep.subr.bf16.mxu0 0
        %1506 = vmatpush1.bf16.msra.mxu0 0
        %1507 = vmatprep.subr.bf16.mxu0 0
        %1508 = vmatpush1.bf16.msra.mxu0 0
        %1509 = vmatprep.subr.bf16.mxu0 0
        %1510 = vmatpush1.bf16.msra.mxu0 0
        %1511 = vmatprep.subr.bf16.mxu0 0
        %1512 = vmatpush1.bf16.msra.mxu0 %v1486
        %1513 = vmatprep.subr.bf16.mxu0 0
        %1514 = vmatpush1.bf16.msra.mxu0 %v1485
        %1515 = vmatprep.subr.bf16.mxu0 0
        %1516 = vmatpush1.bf16.msra.mxu0 %v1484
        %1517 = vmatprep.subr.bf16.mxu0 0
        %1518 = vmatpush1.bf16.msra.mxu0 %v1483
        %1519 = vmatprep.subr.bf16.mxu0 0
        %1520 = vmatpush2.bf16.msra.mxu0 0
        %1521 = vmatprep.subr.bf16.mxu0 0
        %1522 = vmatpush2.bf16.msra.mxu0 0
        %1523 = vmatprep.subr.bf16.mxu0 0
        %1524 = vmatpush2.bf16.msra.mxu0 0
        %1525 = vmatprep.subr.bf16.mxu0 0
        %1526 = vmatpush2.bf16.msra.mxu0 0
        %1527 = vmatprep.subr.bf16.mxu0 0
        %1528 = vmatpush2.bf16.msra.mxu0 0
        %1529 = vmatprep.subr.bf16.mxu0 0
        %1530 = vmatpush2.bf16.msra.mxu0 0
        %1531 = vmatprep.subr.bf16.mxu0 0
        %1532 = vmatpush2.bf16.msra.mxu0 0
        %1533 = vmatprep.subr.bf16.mxu0 0
        %1534 = vmatpush2.bf16.msra.mxu0 0
        %1535 = vmatprep.mubr.bf16.mxu0 0
        %1536 = vmatmul.mubr.bf16.gmra.mxu0 %v1492
        %v1537 = vpop.f32.mrf.mxu0
        %v1538 = vadd.f32 0.0, %v1537
        %v1539 = vpop.f32.mrf.mxu0
        %v1540 = vpop.f32.mrf.mxu0
        %v1541 = vadd.f32 0.0, %v1540
        %v1542 = vpop.f32.mrf.mxu0
        %1543 = vmatprep.mubr.bf16.mxu0 0
        %1544 = vmatmul.mubr.bf16.gmra.mxu0 %v1495
        %v1545 = vpop.f32.mrf.mxu0
        %v1546 = vadd.f32 0.0, %v1545
        %v1547 = vpop.f32.mrf.mxu0
        %v1548 = vpop.f32.mrf.mxu0
        %v1549 = vadd.f32 0.0, %v1548
        %v1550 = vpop.f32.mrf.mxu0
        %1551 = vmatprep.mubr.bf16.mxu0 0
        %1552 = vmatmul.mubr.bf16.gmra.mxu0 %v1498
        %v1553 = vpop.f32.mrf.mxu0
        %v1554 = vadd.f32 0.0, %v1553
        %v1555 = vpop.f32.mrf.mxu0
        %v1556 = vpop.f32.mrf.mxu0
        %v1557 = vadd.f32 0.0, %v1556
        %v1558 = vpop.f32.mrf.mxu0
        %1559 = vmatprep.mubr.bf16.mxu0 0
        %1560 = vmatmul.mubr.bf16.gmra.mxu0 %v1501
        %v1561 = vpop.f32.mrf.mxu0
        %v1562 = vadd.f32 0.0, %v1561
        %v1563 = vpop.f32.mrf.mxu0
        %v1564 = vpop.f32.mrf.mxu0
        %v1565 = vadd.f32 0.0, %v1564
        %v1566 = vpop.f32.mrf.mxu0
        %1567 = vdwg.mxu0
        %v1568 = vadd.f32 %v1437, %v1538
        %v1569 = vadd.f32 %v1438, %v1541
        %v1570 = vadd.f32 %v1439, %v1546
        %v1571 = vadd.f32 %v1440, %v1549
        %v1572 = vadd.f32 %v1441, %v1554
        %v1573 = vadd.f32 %v1442, %v1557
        %v1574 = vadd.f32 %v1443, %v1562
        %v1575 = vadd.f32 %v1444, %v1565
        %v1576 = vld [vmem:[%s1445 + $0x1] sm:$0xff]
        %v1577 = vld [vmem:[%s1445 + $0x11] sm:$0xff]
        %v1578 = vld [vmem:[%s1445 + $0x21] sm:$0xff]
        %v1579 = vld [vmem:[%s1445 + $0x31] sm:$0xff]
        %v1580 = vld [vmem:[%s1445 + $0x41] sm:$0xff]
        %v1581 = vld [vmem:[%s1445 + $0x51] sm:$0xff]
        %v1582 = vld [vmem:[%s1445 + $0x61] sm:$0xff]
        %v1583 = vld [vmem:[%s1445 + $0x71] sm:$0xff]
        %v1584 = vpack.c.bf16 %v1577, %v1576
        %v1585 = vpack.c.bf16 %v1579, %v1578
        %v1586 = vpack.c.bf16 %v1581, %v1580
        %v1587 = vpack.c.bf16 %v1583, %v1582
        %s1588 = scalar_lea.vmem %s3, 224
        %v1589 = vld [vmem:[%s1588] sm:$0xf]
        %v1590 = vld [vmem:[%s1588 + $0x4] sm:$0xf]
        %v1591 = vld [vmem:[%s1588 + $0x8] sm:$0xf]
        %v1592 = vld [vmem:[%s1588 + $0xc] sm:$0xf]
        %v1593 = vld [vmem:[%s1588 + $0x10] sm:$0xf]
        %v1594 = vld [vmem:[%s1588 + $0x14] sm:$0xf]
        %v1595 = vld [vmem:[%s1588 + $0x18] sm:$0xf]
        %v1596 = vld [vmem:[%s1588 + $0x1c] sm:$0xf]
        %v1605 = vunpack.c.l.b16 %v1589
        %v1606 = vunpack.c.l.b16 %v1590
        %v1607 = vunpack.c.l.b16 %v1591
        %v1608 = vunpack.c.l.b16 %v1592
        %v1609 = vunpack.c.l.b16 %v1593
        %v1610 = vunpack.c.l.b16 %v1594
        %v1611 = vunpack.c.l.b16 %v1595
        %v1612 = vunpack.c.l.b16 %v1596
        %v1613 = vpack.c.b16 %v1606, %v1605
        %v1614 = vpack.c.b16 %v1608, %v1607
        %v1615 = vpack.c.b16 %v1610, %v1609
        %v1616 = vpack.c.b16 %v1612, %v1611
        %v1622 = vsel %vm560, %v1584, 0
        %v1625 = vsel %vm560, %v1585, 0
        %v1628 = vsel %vm560, %v1586, 0
        %v1631 = vsel %vm560, %v1587, 0
        %1633 = vmatprep.subr.bf16.mxu0 0
        %1634 = vmatpush1.bf16.msra.mxu0 0
        %1635 = vmatprep.subr.bf16.mxu0 0
        %1636 = vmatpush1.bf16.msra.mxu0 0
        %1637 = vmatprep.subr.bf16.mxu0 0
        %1638 = vmatpush1.bf16.msra.mxu0 0
        %1639 = vmatprep.subr.bf16.mxu0 0
        %1640 = vmatpush1.bf16.msra.mxu0 0
        %1641 = vmatprep.subr.bf16.mxu0 0
        %1642 = vmatpush1.bf16.msra.mxu0 %v1616
        %1643 = vmatprep.subr.bf16.mxu0 0
        %1644 = vmatpush1.bf16.msra.mxu0 %v1615
        %1645 = vmatprep.subr.bf16.mxu0 0
        %1646 = vmatpush1.bf16.msra.mxu0 %v1614
        %1647 = vmatprep.subr.bf16.mxu0 0
        %1648 = vmatpush1.bf16.msra.mxu0 %v1613
        %1649 = vmatprep.subr.bf16.mxu0 0
        %1650 = vmatpush2.bf16.msra.mxu0 0
        %1651 = vmatprep.subr.bf16.mxu0 0
        %1652 = vmatpush2.bf16.msra.mxu0 0
        %1653 = vmatprep.subr.bf16.mxu0 0
        %1654 = vmatpush2.bf16.msra.mxu0 0
        %1655 = vmatprep.subr.bf16.mxu0 0
        %1656 = vmatpush2.bf16.msra.mxu0 0
        %1657 = vmatprep.subr.bf16.mxu0 0
        %1658 = vmatpush2.bf16.msra.mxu0 0
        %1659 = vmatprep.subr.bf16.mxu0 0
        %1660 = vmatpush2.bf16.msra.mxu0 0
        %1661 = vmatprep.subr.bf16.mxu0 0
        %1662 = vmatpush2.bf16.msra.mxu0 0
        %1663 = vmatprep.subr.bf16.mxu0 0
        %1664 = vmatpush2.bf16.msra.mxu0 0
        %1665 = vmatprep.mubr.bf16.mxu0 0
        %1666 = vmatmul.mubr.bf16.gmra.mxu0 %v1622
        %v1667 = vpop.f32.mrf.mxu0
        %v1668 = vadd.f32 0.0, %v1667
        %v1669 = vpop.f32.mrf.mxu0
        %v1670 = vpop.f32.mrf.mxu0
        %v1671 = vadd.f32 0.0, %v1670
        %v1672 = vpop.f32.mrf.mxu0
        %1673 = vmatprep.mubr.bf16.mxu0 0
        %1674 = vmatmul.mubr.bf16.gmra.mxu0 %v1625
        %v1675 = vpop.f32.mrf.mxu0
        %v1676 = vadd.f32 0.0, %v1675
        %v1677 = vpop.f32.mrf.mxu0
        %v1678 = vpop.f32.mrf.mxu0
        %v1679 = vadd.f32 0.0, %v1678
        %v1680 = vpop.f32.mrf.mxu0
        %1681 = vmatprep.mubr.bf16.mxu0 0
        %1682 = vmatmul.mubr.bf16.gmra.mxu0 %v1628
        %v1683 = vpop.f32.mrf.mxu0
        %v1684 = vadd.f32 0.0, %v1683
        %v1685 = vpop.f32.mrf.mxu0
        %v1686 = vpop.f32.mrf.mxu0
        %v1687 = vadd.f32 0.0, %v1686
        %v1688 = vpop.f32.mrf.mxu0
        %1689 = vmatprep.mubr.bf16.mxu0 0
        %1690 = vmatmul.mubr.bf16.gmra.mxu0 %v1631
        %v1691 = vpop.f32.mrf.mxu0
        %v1692 = vadd.f32 0.0, %v1691
        %v1693 = vpop.f32.mrf.mxu0
        %v1694 = vpop.f32.mrf.mxu0
        %v1695 = vadd.f32 0.0, %v1694
        %v1696 = vpop.f32.mrf.mxu0
        %1697 = vdwg.mxu0
        %v1698 = vadd.f32 %v1568, %v1668
        %v1699 = vadd.f32 %v1569, %v1671
        %v1700 = vadd.f32 %v1570, %v1676
        %v1701 = vadd.f32 %v1571, %v1679
        %v1702 = vadd.f32 %v1572, %v1684
        %v1703 = vadd.f32 %v1573, %v1687
        %v1704 = vadd.f32 %v1574, %v1692
        %v1705 = vadd.f32 %v1575, %v1695
        %v1706 = vld [vmem:[%s1445 + $0x2] sm:$0xff]
        %v1707 = vld [vmem:[%s1445 + $0x12] sm:$0xff]
        %v1708 = vld [vmem:[%s1445 + $0x22] sm:$0xff]
        %v1709 = vld [vmem:[%s1445 + $0x32] sm:$0xff]
        %v1710 = vld [vmem:[%s1445 + $0x42] sm:$0xff]
        %v1711 = vld [vmem:[%s1445 + $0x52] sm:$0xff]
        %v1712 = vld [vmem:[%s1445 + $0x62] sm:$0xff]
        %v1713 = vld [vmem:[%s1445 + $0x72] sm:$0xff]
        %v1714 = vpack.c.bf16 %v1707, %v1706
        %v1715 = vpack.c.bf16 %v1709, %v1708
        %v1716 = vpack.c.bf16 %v1711, %v1710
        %v1717 = vpack.c.bf16 %v1713, %v1712
        %s1718 = scalar_lea.vmem %s3, 256
        %v1719 = vld [vmem:[%s1718] sm:$0xf]
        %v1720 = vld [vmem:[%s1718 + $0x4] sm:$0xf]
        %v1721 = vld [vmem:[%s1718 + $0x8] sm:$0xf]
        %v1722 = vld [vmem:[%s1718 + $0xc] sm:$0xf]
        %v1723 = vld [vmem:[%s1718 + $0x10] sm:$0xf]
        %v1724 = vld [vmem:[%s1718 + $0x14] sm:$0xf]
        %v1725 = vld [vmem:[%s1718 + $0x18] sm:$0xf]
        %v1726 = vld [vmem:[%s1718 + $0x1c] sm:$0xf]
        %v1735 = vunpack.c.l.b16 %v1719
        %v1736 = vunpack.c.l.b16 %v1720
        %v1737 = vunpack.c.l.b16 %v1721
        %v1738 = vunpack.c.l.b16 %v1722
        %v1739 = vunpack.c.l.b16 %v1723
        %v1740 = vunpack.c.l.b16 %v1724
        %v1741 = vunpack.c.l.b16 %v1725
        %v1742 = vunpack.c.l.b16 %v1726
        %v1743 = vpack.c.b16 %v1736, %v1735
        %v1744 = vpack.c.b16 %v1738, %v1737
        %v1745 = vpack.c.b16 %v1740, %v1739
        %v1746 = vpack.c.b16 %v1742, %v1741
        %v1752 = vsel %vm560, %v1714, 0
        %v1755 = vsel %vm560, %v1715, 0
        %v1758 = vsel %vm560, %v1716, 0
        %v1761 = vsel %vm560, %v1717, 0
        %1763 = vmatprep.subr.bf16.mxu0 0
        %1764 = vmatpush1.bf16.msra.mxu0 0
        %1765 = vmatprep.subr.bf16.mxu0 0
        %1766 = vmatpush1.bf16.msra.mxu0 0
        %1767 = vmatprep.subr.bf16.mxu0 0
        %1768 = vmatpush1.bf16.msra.mxu0 0
        %1769 = vmatprep.subr.bf16.mxu0 0
        %1770 = vmatpush1.bf16.msra.mxu0 0
        %1771 = vmatprep.subr.bf16.mxu0 0
        %1772 = vmatpush1.bf16.msra.mxu0 %v1746
        %1773 = vmatprep.subr.bf16.mxu0 0
        %1774 = vmatpush1.bf16.msra.mxu0 %v1745
        %1775 = vmatprep.subr.bf16.mxu0 0
        %1776 = vmatpush1.bf16.msra.mxu0 %v1744
        %1777 = vmatprep.subr.bf16.mxu0 0
        %1778 = vmatpush1.bf16.msra.mxu0 %v1743
        %1779 = vmatprep.subr.bf16.mxu0 0
        %1780 = vmatpush2.bf16.msra.mxu0 0
        %1781 = vmatprep.subr.bf16.mxu0 0
        %1782 = vmatpush2.bf16.msra.mxu0 0
        %1783 = vmatprep.subr.bf16.mxu0 0
        %1784 = vmatpush2.bf16.msra.mxu0 0
        %1785 = vmatprep.subr.bf16.mxu0 0
        %1786 = vmatpush2.bf16.msra.mxu0 0
        %1787 = vmatprep.subr.bf16.mxu0 0
        %1788 = vmatpush2.bf16.msra.mxu0 0
        %1789 = vmatprep.subr.bf16.mxu0 0
        %1790 = vmatpush2.bf16.msra.mxu0 0
        %1791 = vmatprep.subr.bf16.mxu0 0
        %1792 = vmatpush2.bf16.msra.mxu0 0
        %1793 = vmatprep.subr.bf16.mxu0 0
        %1794 = vmatpush2.bf16.msra.mxu0 0
        %1795 = vmatprep.mubr.bf16.mxu0 0
        %1796 = vmatmul.mubr.bf16.gmra.mxu0 %v1752
        %v1797 = vpop.f32.mrf.mxu0
        %v1798 = vadd.f32 0.0, %v1797
        %v1799 = vpop.f32.mrf.mxu0
        %v1800 = vpop.f32.mrf.mxu0
        %v1801 = vadd.f32 0.0, %v1800
        %v1802 = vpop.f32.mrf.mxu0
        %1803 = vmatprep.mubr.bf16.mxu0 0
        %1804 = vmatmul.mubr.bf16.gmra.mxu0 %v1755
        %v1805 = vpop.f32.mrf.mxu0
        %v1806 = vadd.f32 0.0, %v1805
        %v1807 = vpop.f32.mrf.mxu0
        %v1808 = vpop.f32.mrf.mxu0
        %v1809 = vadd.f32 0.0, %v1808
        %v1810 = vpop.f32.mrf.mxu0
        %1811 = vmatprep.mubr.bf16.mxu0 0
        %1812 = vmatmul.mubr.bf16.gmra.mxu0 %v1758
        %v1813 = vpop.f32.mrf.mxu0
        %v1814 = vadd.f32 0.0, %v1813
        %v1815 = vpop.f32.mrf.mxu0
        %v1816 = vpop.f32.mrf.mxu0
        %v1817 = vadd.f32 0.0, %v1816
        %v1818 = vpop.f32.mrf.mxu0
        %1819 = vmatprep.mubr.bf16.mxu0 0
        %1820 = vmatmul.mubr.bf16.gmra.mxu0 %v1761
        %v1821 = vpop.f32.mrf.mxu0
        %v1822 = vadd.f32 0.0, %v1821
        %v1823 = vpop.f32.mrf.mxu0
        %v1824 = vpop.f32.mrf.mxu0
        %v1825 = vadd.f32 0.0, %v1824
        %v1826 = vpop.f32.mrf.mxu0
        %1827 = vdwg.mxu0
        %v1828 = vadd.f32 %v1698, %v1798
        %v1829 = vadd.f32 %v1699, %v1801
        %v1830 = vadd.f32 %v1700, %v1806
        %v1831 = vadd.f32 %v1701, %v1809
        %v1832 = vadd.f32 %v1702, %v1814
        %v1833 = vadd.f32 %v1703, %v1817
        %v1834 = vadd.f32 %v1704, %v1822
        %v1835 = vadd.f32 %v1705, %v1825
        %v1836 = vld [vmem:[%s4] sm:$0x1]
        %v1838 = vlaneseq
        %v1839 = vshrl.u32 %v1838, 7
        %v1840 = vsub.s32 0, %v1839
        %v1841 = vrot.slane %v1836, %v1840
        %v1843 = vadd.f32 %v1828, %v1841
        %v1844 = vadd.f32 %v1829, %v1841
        %v1845 = vadd.f32 %v1830, %v1841
        %v1846 = vadd.f32 %v1831, %v1841
        %v1847 = vadd.f32 %v1832, %v1841
        %v1848 = vadd.f32 %v1833, %v1841
        %v1849 = vadd.f32 %v1834, %v1841
        %v1850 = vadd.f32 %v1835, %v1841
        %v1851 = vmax.f32 %v1843, 0.0
        %v1852 = vmax.f32 %v1844, 0.0
        %v1853 = vmax.f32 %v1845, 0.0
        %v1854 = vmax.f32 %v1846, 0.0
        %v1855 = vmax.f32 %v1847, 0.0
        %v1856 = vmax.f32 %v1848, 0.0
        %v1857 = vmax.f32 %v1849, 0.0
        %v1858 = vmax.f32 %v1850, 0.0
        %v1859 = vpack.c.bf16 %v1852, %v1851
        %v1860 = vpack.c.bf16 %v1854, %v1853
        %v1861 = vpack.c.bf16 %v1856, %v1855
        %v1862 = vpack.c.bf16 %v1858, %v1857
        %v1863 = vld [vmem:[%s5] sm:$0xff]
        %v1864 = vld [vmem:[%s5 + $0x8] sm:$0xff]
        %v1865 = vld [vmem:[%s5 + $0x10] sm:$0xff]
        %v1866 = vld [vmem:[%s5 + $0x18] sm:$0xff]
        %v1867 = vld [vmem:[%s5 + $0x20] sm:$0xff]
        %v1868 = vld [vmem:[%s5 + $0x28] sm:$0xff]
        %v1869 = vld [vmem:[%s5 + $0x30] sm:$0xff]
        %v1870 = vld [vmem:[%s5 + $0x38] sm:$0xff]
        %v1871 = vld [vmem:[%s6] sm:$0x3]
        %v1873 = vlaneseq
        %v1874 = vshrl.u32 %v1873, 7
        %v1875 = vsub.s32 0, %v1874
        %v1876 = vrot.slane %v1871, %v1875
        %v1877 = vlaneseq
        %v1878 = vshrl.u32 %v1877, 7
        %v1879 = vsub.s32 1, %v1878
        %v1880 = vrot.slane %v1871, %v1879
        %v1891 = vunpack.c.l.b16 %v1863
        %v1892 = vunpack.c.h.b16 %v1863
        %v1893 = vunpack.c.l.b16 %v1864
        %v1894 = vunpack.c.h.b16 %v1864
        %v1895 = vunpack.c.l.b16 %v1865
        %v1896 = vunpack.c.h.b16 %v1865
        %v1897 = vunpack.c.l.b16 %v1866
        %v1898 = vunpack.c.h.b16 %v1866
        %v1899 = vunpack.c.l.b16 %v1867
        %v1900 = vunpack.c.h.b16 %v1867
        %v1901 = vunpack.c.l.b16 %v1868
        %v1902 = vunpack.c.h.b16 %v1868
        %v1903 = vunpack.c.l.b16 %v1869
        %v1904 = vunpack.c.h.b16 %v1869
        %v1905 = vunpack.c.l.b16 %v1870
        %v1906 = vunpack.c.h.b16 %v1870
        %v1907 = vpack.c.b16 %v1893, %v1891
        %v1908 = vpack.c.b16 %v1894, %v1892
        %v1909 = vpack.c.b16 %v1897, %v1895
        %v1910 = vpack.c.b16 %v1898, %v1896
        %v1911 = vpack.c.b16 %v1901, %v1899
        %v1912 = vpack.c.b16 %v1902, %v1900
        %v1913 = vpack.c.b16 %v1905, %v1903
        %v1914 = vpack.c.b16 %v1906, %v1904
        %v1924 = vsel %vm560, %v1859, 0
        %v1927 = vsel %vm560, %v1860, 0
        %v1930 = vsel %vm560, %v1861, 0
        %v1933 = vsel %vm560, %v1862, 0
        %1935 = vmatprep.subr.bf16.mxu0 0
        %1936 = vmatpush1.bf16.msra.mxu0 0
        %1937 = vmatprep.subr.bf16.mxu0 0
        %1938 = vmatpush1.bf16.msra.mxu0 0
        %1939 = vmatprep.subr.bf16.mxu0 0
        %1940 = vmatpush1.bf16.msra.mxu0 0
        %1941 = vmatprep.subr.bf16.mxu0 0
        %1942 = vmatpush1.bf16.msra.mxu0 0
        %1943 = vmatprep.subr.bf16.mxu0 %v1914
        %1944 = vmatpush1.bf16.msra.mxu0 %v1913
        %1945 = vmatprep.subr.bf16.mxu0 %v1912
        %1946 = vmatpush1.bf16.msra.mxu0 %v1911
        %1947 = vmatprep.subr.bf16.mxu0 %v1910
        %1948 = vmatpush1.bf16.msra.mxu0 %v1909
        %1949 = vmatprep.subr.bf16.mxu0 %v1908
        %1950 = vmatpush1.bf16.msra.mxu0 %v1907
        %1951 = vmatprep.subr.bf16.mxu0 0
        %1952 = vmatpush2.bf16.msra.mxu0 0
        %1953 = vmatprep.subr.bf16.mxu0 0
        %1954 = vmatpush2.bf16.msra.mxu0 0
        %1955 = vmatprep.subr.bf16.mxu0 0
        %1956 = vmatpush2.bf16.msra.mxu0 0
        %1957 = vmatprep.subr.bf16.mxu0 0
        %1958 = vmatpush2.bf16.msra.mxu0 0
        %1959 = vmatprep.subr.bf16.mxu0 0
        %1960 = vmatpush2.bf16.msra.mxu0 0
        %1961 = vmatprep.subr.bf16.mxu0 0
        %1962 = vmatpush2.bf16.msra.mxu0 0
        %1963 = vmatprep.subr.bf16.mxu0 0
        %1964 = vmatpush2.bf16.msra.mxu0 0
        %1965 = vmatprep.subr.bf16.mxu0 0
        %1966 = vmatpush2.bf16.msra.mxu0 0
        %1967 = vmatprep.mubr.bf16.mxu0 0
        %1968 = vmatmul.mubr.bf16.gmra.mxu0 %v1924
        %v1969 = vpop.f32.mrf.mxu0
        %v1970 = vadd.f32 %v1876, %v1969
        %v1971 = vpop.f32.mrf.mxu0
        %v1972 = vadd.f32 %v1880, %v1971
        %v1973 = vpop.f32.mrf.mxu0
        %v1974 = vadd.f32 %v1876, %v1973
        %v1975 = vpop.f32.mrf.mxu0
        %v1976 = vadd.f32 %v1880, %v1975
        %1977 = vmatprep.mubr.bf16.mxu0 0
        %1978 = vmatmul.mubr.bf16.gmra.mxu0 %v1927
        %v1979 = vpop.f32.mrf.mxu0
        %v1980 = vadd.f32 %v1876, %v1979
        %v1981 = vpop.f32.mrf.mxu0
        %v1982 = vadd.f32 %v1880, %v1981
        %v1983 = vpop.f32.mrf.mxu0
        %v1984 = vadd.f32 %v1876, %v1983
        %v1985 = vpop.f32.mrf.mxu0
        %v1986 = vadd.f32 %v1880, %v1985
        %1987 = vmatprep.mubr.bf16.mxu0 0
        %1988 = vmatmul.mubr.bf16.gmra.mxu0 %v1930
        %v1989 = vpop.f32.mrf.mxu0
        %v1990 = vadd.f32 %v1876, %v1989
        %v1991 = vpop.f32.mrf.mxu0
        %v1992 = vadd.f32 %v1880, %v1991
        %v1993 = vpop.f32.mrf.mxu0
        %v1994 = vadd.f32 %v1876, %v1993
        %v1995 = vpop.f32.mrf.mxu0
        %v1996 = vadd.f32 %v1880, %v1995
        %1997 = vmatprep.mubr.bf16.mxu0 0
        %1998 = vmatmul.mubr.bf16.gmra.mxu0 %v1933
        %v1999 = vpop.f32.mrf.mxu0
        %v2000 = vadd.f32 %v1876, %v1999
        %v2001 = vpop.f32.mrf.mxu0
        %v2002 = vadd.f32 %v1880, %v2001
        %v2003 = vpop.f32.mrf.mxu0
        %v2004 = vadd.f32 %v1876, %v2003
        %v2005 = vpop.f32.mrf.mxu0
        %v2006 = vadd.f32 %v1880, %v2005
        %2007 = vdwg.mxu0
        %v2008 = vmax.f32 %v1970, 0.0
        %v2009 = vmax.f32 %v1972, 0.0
        %v2010 = vmax.f32 %v1974, 0.0
        %v2011 = vmax.f32 %v1976, 0.0
        %v2012 = vmax.f32 %v1980, 0.0
        %v2013 = vmax.f32 %v1982, 0.0
        %v2014 = vmax.f32 %v1984, 0.0
        %v2015 = vmax.f32 %v1986, 0.0
        %v2016 = vmax.f32 %v1990, 0.0
        %v2017 = vmax.f32 %v1992, 0.0
        %v2018 = vmax.f32 %v1994, 0.0
        %v2019 = vmax.f32 %v1996, 0.0
        %v2020 = vmax.f32 %v2000, 0.0
        %v2021 = vmax.f32 %v2002, 0.0
        %v2022 = vmax.f32 %v2004, 0.0
        %v2023 = vmax.f32 %v2006, 0.0
        %2024 = vst [vmem:[#allocation3] sm:$0xff] 0.0
        %2025 = vst [vmem:[#allocation3 + $0x8] sm:$0xff] 0.0
        %2026 = vst [vmem:[#allocation3 + $0x10] sm:$0x3] 0.0
        %2027 = vst [vmem:[#allocation3 + $0x18] sm:$0x3] 0.0
        %s2028 = scalar_lea.vmem [#allocation3], 288
        %2029 = vst [vmem:[%s2028] sm:$0xff] 0.0
        %2030 = vst [vmem:[%s2028 + $0x8] sm:$0xff] 0.0
        %2031 = vst [vmem:[%s2028 + $0x10] sm:$0x3] 0.0
        %2032 = vst [vmem:[%s2028 + $0x18] sm:$0x3] 0.0
        %v2033 = vlaneseq
        %vm2034 = vcmp.ge.s32.totalorder %v2033, 0
        %vm2035 = vcmp.lt.s32.totalorder %v2033, 256
        %vm2036 = vmand %vm2034, %vm2035
        %2037 = vst.msk [vmem:[#allocation3] ss:$8 sm:$0x3] %vm2036, 0.0
        %2038 = vst.msk [vmem:[#allocation3] ss:$8 sm:$0x0] %vm2036, 0.0
        %s2039 = scalar_lea.vmem [#allocation3], 32
        %2040 = vst.msk [vmem:[%s2039] ss:$8 sm:$0x3] %vm2036, 0.0
        %2041 = vst.msk [vmem:[%s2039] ss:$8 sm:$0x0] %vm2036, 0.0
        %s2042 = scalar_lea.vmem [#allocation3], 64
        %2043 = vst.msk [vmem:[%s2042] ss:$8 sm:$0x3] %vm2036, 0.0
        %2044 = vst.msk [vmem:[%s2042] ss:$8 sm:$0x0] %vm2036, 0.0
        %s2045 = scalar_lea.vmem [#allocation3], 96
        %2046 = vst.msk [vmem:[%s2045] ss:$8 sm:$0x3] %vm2036, 0.0
        %2047 = vst.msk [vmem:[%s2045] ss:$8 sm:$0x0] %vm2036, 0.0
        %s2048 = scalar_lea.vmem [#allocation3], 128
        %2049 = vst.msk [vmem:[%s2048] ss:$8 sm:$0x3] %vm2036, 0.0
        %2050 = vst.msk [vmem:[%s2048] ss:$8 sm:$0x0] %vm2036, 0.0
        %s2051 = scalar_lea.vmem [#allocation3], 160
        %2052 = vst.msk [vmem:[%s2051] ss:$8 sm:$0x3] %vm2036, 0.0
        %2053 = vst.msk [vmem:[%s2051] ss:$8 sm:$0x0] %vm2036, 0.0
        %s2054 = scalar_lea.vmem [#allocation3], 192
        %2055 = vst.msk [vmem:[%s2054] ss:$8 sm:$0x3] %vm2036, 0.0
        %2056 = vst.msk [vmem:[%s2054] ss:$8 sm:$0x0] %vm2036, 0.0
        %s2057 = scalar_lea.vmem [#allocation3], 224
        %2058 = vst.msk [vmem:[%s2057] ss:$8 sm:$0x3] %vm2036, 0.0
        %2059 = vst.msk [vmem:[%s2057] ss:$8 sm:$0x0] %vm2036, 0.0
        %s2060 = scalar_lea.vmem [#allocation3], 256
        %2061 = vst.msk [vmem:[%s2060] ss:$8 sm:$0x3] %vm2036, 0.0
        %2062 = vst.msk [vmem:[%s2060] ss:$8 sm:$0x0] %vm2036, 0.0
        %s2063 = scalar_lea.vmem [#allocation3], 288
        %2064 = vst.msk [vmem:[%s2063] ss:$8 sm:$0x3] %vm2036, 0.0
        %2065 = vst.msk [vmem:[%s2063] ss:$8 sm:$0x0] %vm2036, 0.0
        %s2066 = scalar_lea.vmem [#allocation3], 17
        %2067 = vst.msk [vmem:[%s2066] ss:$8 sm:$0x3] %vm2036, 0.0
        %2068 = vst.msk [vmem:[%s2066] ss:$8 sm:$0x0] %vm2036, 0.0
        %s2069 = scalar_lea.vmem [#allocation3], 49
        %2070 = vst.msk [vmem:[%s2069] ss:$8 sm:$0x3] %vm2036, 0.0
        %2071 = vst.msk [vmem:[%s2069] ss:$8 sm:$0x0] %vm2036, 0.0
        %s2072 = scalar_lea.vmem [#allocation3], 81
        %2073 = vst.msk [vmem:[%s2072] ss:$8 sm:$0x3] %vm2036, 0.0
        %2074 = vst.msk [vmem:[%s2072] ss:$8 sm:$0x0] %vm2036, 0.0
        %s2075 = scalar_lea.vmem [#allocation3], 113
        %2076 = vst.msk [vmem:[%s2075] ss:$8 sm:$0x3] %vm2036, 0.0
        %2077 = vst.msk [vmem:[%s2075] ss:$8 sm:$0x0] %vm2036, 0.0
        %s2078 = scalar_lea.vmem [#allocation3], 145
        %2079 = vst.msk [vmem:[%s2078] ss:$8 sm:$0x3] %vm2036, 0.0
        %2080 = vst.msk [vmem:[%s2078] ss:$8 sm:$0x0] %vm2036, 0.0
        %s2081 = scalar_lea.vmem [#allocation3], 177
        %2082 = vst.msk [vmem:[%s2081] ss:$8 sm:$0x3] %vm2036, 0.0
        %2083 = vst.msk [vmem:[%s2081] ss:$8 sm:$0x0] %vm2036, 0.0
        %s2084 = scalar_lea.vmem [#allocation3], 209
        %2085 = vst.msk [vmem:[%s2084] ss:$8 sm:$0x3] %vm2036, 0.0
        %2086 = vst.msk [vmem:[%s2084] ss:$8 sm:$0x0] %vm2036, 0.0
        %s2087 = scalar_lea.vmem [#allocation3], 241
        %2088 = vst.msk [vmem:[%s2087] ss:$8 sm:$0x3] %vm2036, 0.0
        %2089 = vst.msk [vmem:[%s2087] ss:$8 sm:$0x0] %vm2036, 0.0
        %s2090 = scalar_lea.vmem [#allocation3], 273
        %2091 = vst.msk [vmem:[%s2090] ss:$8 sm:$0x3] %vm2036, 0.0
        %2092 = vst.msk [vmem:[%s2090] ss:$8 sm:$0x0] %vm2036, 0.0
        %s2093 = scalar_lea.vmem [#allocation3], 305
        %2094 = vst.msk [vmem:[%s2093] ss:$8 sm:$0x3] %vm2036, 0.0
        %2095 = vst.msk [vmem:[%s2093] ss:$8 sm:$0x0] %vm2036, 0.0
        %v2112 = vrot.slane %v2008, 7
        %v2113 = vrot.slane %v2009, 7
        %v2114 = vrot.slane %v2010, 7
        %v2115 = vrot.slane %v2011, 7
        %v2116 = vrot.slane %v2012, 7
        %v2117 = vrot.slane %v2013, 7
        %v2118 = vrot.slane %v2014, 7
        %v2119 = vrot.slane %v2015, 7
        %v2120 = vrot.slane %v2016, 7
        %v2121 = vrot.slane %v2017, 7
        %v2122 = vrot.slane %v2018, 7
        %v2123 = vrot.slane %v2019, 7
        %v2124 = vrot.slane %v2020, 7
        %v2125 = vrot.slane %v2021, 7
        %v2126 = vrot.slane %v2022, 7
        %v2127 = vrot.slane %v2023, 7
        %s2144 = scalar_lea.vmem [#allocation3], 32
        %2145 = vst [vmem:[%s2144] sm:$0xfe] %v2112
        %2146 = vst [vmem:[%s2144 + $0x8] sm:$0xfe] %v2113
        %2147 = vst [vmem:[%s2144 + $0x10] sm:$0x1] %v2112
        %2148 = vst [vmem:[%s2144 + $0x18] sm:$0x1] %v2113
        %2149 = vst [vmem:[%s2144 + $0x20] sm:$0xfe] %v2114
        %2150 = vst [vmem:[%s2144 + $0x28] sm:$0xfe] %v2115
        %2151 = vst [vmem:[%s2144 + $0x30] sm:$0x1] %v2114
        %2152 = vst [vmem:[%s2144 + $0x38] sm:$0x1] %v2115
        %2153 = vst [vmem:[%s2144 + $0x40] sm:$0xfe] %v2116
        %2154 = vst [vmem:[%s2144 + $0x48] sm:$0xfe] %v2117
        %2155 = vst [vmem:[%s2144 + $0x50] sm:$0x1] %v2116
        %2156 = vst [vmem:[%s2144 + $0x58] sm:$0x1] %v2117
        %2157 = vst [vmem:[%s2144 + $0x60] sm:$0xfe] %v2118
        %2158 = vst [vmem:[%s2144 + $0x68] sm:$0xfe] %v2119
        %2159 = vst [vmem:[%s2144 + $0x70] sm:$0x1] %v2118
        %2160 = vst [vmem:[%s2144 + $0x78] sm:$0x1] %v2119
        %2161 = vst [vmem:[%s2144 + $0x80] sm:$0xfe] %v2120
        %2162 = vst [vmem:[%s2144 + $0x88] sm:$0xfe] %v2121
        %2163 = vst [vmem:[%s2144 + $0x90] sm:$0x1] %v2120
        %2164 = vst [vmem:[%s2144 + $0x98] sm:$0x1] %v2121
        %2165 = vst [vmem:[%s2144 + $0xa0] sm:$0xfe] %v2122
        %2166 = vst [vmem:[%s2144 + $0xa8] sm:$0xfe] %v2123
        %2167 = vst [vmem:[%s2144 + $0xb0] sm:$0x1] %v2122
        %2168 = vst [vmem:[%s2144 + $0xb8] sm:$0x1] %v2123
        %2169 = vst [vmem:[%s2144 + $0xc0] sm:$0xfe] %v2124
        %2170 = vst [vmem:[%s2144 + $0xc8] sm:$0xfe] %v2125
        %2171 = vst [vmem:[%s2144 + $0xd0] sm:$0x1] %v2124
        %2172 = vst [vmem:[%s2144 + $0xd8] sm:$0x1] %v2125
        %2173 = vst [vmem:[%s2144 + $0xe0] sm:$0xfe] %v2126
        %2174 = vst [vmem:[%s2144 + $0xe8] sm:$0xfe] %v2127
        %2175 = vst [vmem:[%s2144 + $0xf0] sm:$0x1] %v2126
        %2176 = vst [vmem:[%s2144 + $0xf8] sm:$0x1] %v2127
        %v2177 = vld [vmem:[#allocation3] sm:$0xff]
        %v2178 = vld [vmem:[#allocation3 + $0x8] sm:$0xff]
        %v2179 = vld [vmem:[#allocation3 + $0x10] sm:$0x3]
        %v2180 = vld [vmem:[#allocation3 + $0x18] sm:$0x3]
        %v2181 = vld [vmem:[%s2144] sm:$0xff]
        %v2182 = vld [vmem:[%s2144 + $0x8] sm:$0xff]
        %v2183 = vld [vmem:[%s2144 + $0x10] sm:$0x3]
        %v2184 = vld [vmem:[%s2144 + $0x18] sm:$0x3]
        %v2185 = vmax.f32 %v2177, %v2181
        %v2186 = vmax.f32 %v2178, %v2182
        %v2187 = vmax.f32 %v2179, %v2183
        %v2188 = vmax.f32 %v2180, %v2184
        %s2189 = scalar_lea.vmem [#allocation3], 64
        %v2190 = vld [vmem:[%s2189] sm:$0xff]
        %v2191 = vld [vmem:[%s2189 + $0x8] sm:$0xff]
        %v2192 = vld [vmem:[%s2189 + $0x10] sm:$0x3]
        %v2193 = vld [vmem:[%s2189 + $0x18] sm:$0x3]
        %v2194 = vmax.f32 %v2185, %v2190
        %v2195 = vmax.f32 %v2186, %v2191
        %v2196 = vmax.f32 %v2187, %v2192
        %v2197 = vmax.f32 %v2188, %v2193
        %v2200 = vrot.slane %v2194, 1
        %v2201 = vrot.slane %v2195, 1
        %v2204 = vmax.f32 %v2194, %v2200
        %v2205 = vmax.f32 %v2195, %v2201
        %v2206 = vrot.slane %v2194, 2
        %v2207 = vrot.slane %v2195, 2
        %v2210 = vmax.f32 %v2204, %v2206
        %v2211 = vmax.f32 %v2205, %v2207
        %v2214 = vcombine.low %v2210, %v2211
        %v2216 = vunpack.c.l.s4 1966171168
        %v2217 = vunpack.c.0.s8 %v2216
        %v2218 = vlaneseq
        %v2219 = vshrl.u32 %v2218, 7
        %v2220 = vsub.s32 %v2217, %v2219
        %v2221 = vrot.slane %v2214, %v2220
        %v2223 = vunpack.c.l.s4 1966171168
        %v2224 = vunpack.c.0.s8 %v2223
        %v2225 = vlaneseq
        %v2226 = vshrl.u32 %v2225, 7
        %v2227 = vsub.s32 %v2224, %v2226
        %v2228 = vrot.slane %v2221, %v2227
        %2230 = vst.msk [vmem:[#allocation4] ss:$8 sm:$0x3] %vm2036, %v2228
        %2231 = vst.msk [vmem:[#allocation4] ss:$8 sm:$0x0] %vm2036, %v2228
        %v2232 = vcombine.high %v2228, %v2228
        %s2234 = scalar_lea.vmem [#allocation4], 1
        %2235 = vst.msk [vmem:[%s2234] ss:$8 sm:$0x3] %vm2036, %v2232
        %2236 = vst.msk [vmem:[%s2234] ss:$8 sm:$0x0] %vm2036, %v2232
        %v2237 = vcombine.high %v2210, %v2211
        %v2239 = vunpack.c.l.s4 1966171168
        %v2240 = vunpack.c.0.s8 %v2239
        %v2241 = vlaneseq
        %v2242 = vshrl.u32 %v2241, 7
        %v2243 = vsub.s32 %v2240, %v2242
        %v2244 = vrot.slane %v2237, %v2243
        %v2246 = vunpack.c.l.s4 1966171168
        %v2247 = vunpack.c.0.s8 %v2246
        %v2248 = vlaneseq
        %v2249 = vshrl.u32 %v2248, 7
        %v2250 = vsub.s32 %v2247, %v2249
        %v2251 = vrot.slane %v2244, %v2250
        %s2253 = scalar_lea.vmem [#allocation4], 2
        %2254 = vst.msk [vmem:[%s2253] ss:$8 sm:$0x3] %vm2036, %v2251
        %2255 = vst.msk [vmem:[%s2253] ss:$8 sm:$0x0] %vm2036, %v2251
        %v2258 = vrot.slane %v2196, 2
        %v2259 = vrot.slane %v2197, 2
        %v2262 = vmax.f32 %v2204, %v2258
        %v2263 = vmax.f32 %v2205, %v2259
        %v2266 = vcombine.high %v2262, %v2263
        %v2268 = vunpack.c.l.s4 1966171168
        %v2269 = vunpack.c.0.s8 %v2268
        %v2270 = vlaneseq
        %v2271 = vshrl.u32 %v2270, 7
        %v2272 = vsub.s32 %v2269, %v2271
        %v2273 = vrot.slane %v2266, %v2272
        %v2275 = vunpack.c.l.s4 1966171168
        %v2276 = vunpack.c.0.s8 %v2275
        %v2277 = vlaneseq
        %v2278 = vshrl.u32 %v2277, 7
        %v2279 = vsub.s32 %v2276, %v2278
        %v2280 = vrot.slane %v2273, %v2279
        %v2281 = vcombine.high %v2280, %v2280
        %s2283 = scalar_lea.vmem [#allocation4], 3
        %2284 = vst.msk [vmem:[%s2283] ss:$8 sm:$0x3] %vm2036, %v2281
        %2285 = vst.msk [vmem:[%s2283] ss:$8 sm:$0x0] %vm2036, %v2281
        %v2286 = vld [vmem:[%s2189] sm:$0xff]
        %v2287 = vld [vmem:[%s2189 + $0x8] sm:$0xff]
        %v2288 = vld [vmem:[%s2189 + $0x10] sm:$0x3]
        %v2289 = vld [vmem:[%s2189 + $0x18] sm:$0x3]
        %s2290 = scalar_lea.vmem [#allocation3], 96
        %v2291 = vld [vmem:[%s2290] sm:$0xff]
        %v2292 = vld [vmem:[%s2290 + $0x8] sm:$0xff]
        %v2293 = vld [vmem:[%s2290 + $0x10] sm:$0x3]
        %v2294 = vld [vmem:[%s2290 + $0x18] sm:$0x3]
        %v2295 = vmax.f32 %v2286, %v2291
        %v2296 = vmax.f32 %v2287, %v2292
        %v2297 = vmax.f32 %v2288, %v2293
        %v2298 = vmax.f32 %v2289, %v2294
        %s2299 = scalar_lea.vmem [#allocation3], 128
        %v2300 = vld [vmem:[%s2299] sm:$0xff]
        %v2301 = vld [vmem:[%s2299 + $0x8] sm:$0xff]
        %v2302 = vld [vmem:[%s2299 + $0x10] sm:$0x3]
        %v2303 = vld [vmem:[%s2299 + $0x18] sm:$0x3]
        %v2304 = vmax.f32 %v2295, %v2300
        %v2305 = vmax.f32 %v2296, %v2301
        %v2306 = vmax.f32 %v2297, %v2302
        %v2307 = vmax.f32 %v2298, %v2303
        %v2310 = vrot.slane %v2304, 1
        %v2311 = vrot.slane %v2305, 1
        %v2314 = vmax.f32 %v2304, %v2310
        %v2315 = vmax.f32 %v2305, %v2311
        %v2316 = vrot.slane %v2304, 2
        %v2317 = vrot.slane %v2305, 2
        %v2320 = vmax.f32 %v2314, %v2316
        %v2321 = vmax.f32 %v2315, %v2317
        %v2324 = vcombine.low %v2320, %v2321
        %v2326 = vunpack.c.l.s4 1966171168
        %v2327 = vunpack.c.0.s8 %v2326
        %v2328 = vlaneseq
        %v2329 = vshrl.u32 %v2328, 7
        %v2330 = vsub.s32 %v2327, %v2329
        %v2331 = vrot.slane %v2324, %v2330
        %v2333 = vunpack.c.l.s4 1966171168
        %v2334 = vunpack.c.0.s8 %v2333
        %v2335 = vlaneseq
        %v2336 = vshrl.u32 %v2335, 7
        %v2337 = vsub.s32 %v2334, %v2336
        %v2338 = vrot.slane %v2331, %v2337
        %s2340 = scalar_lea.vmem [#allocation4], 4
        %2341 = vst.msk [vmem:[%s2340] ss:$8 sm:$0x3] %vm2036, %v2338
        %2342 = vst.msk [vmem:[%s2340] ss:$8 sm:$0x0] %vm2036, %v2338
        %v2343 = vcombine.high %v2338, %v2338
        %s2345 = scalar_lea.vmem [#allocation4], 5
        %2346 = vst.msk [vmem:[%s2345] ss:$8 sm:$0x3] %vm2036, %v2343
        %2347 = vst.msk [vmem:[%s2345] ss:$8 sm:$0x0] %vm2036, %v2343
        %v2348 = vcombine.high %v2320, %v2321
        %v2350 = vunpack.c.l.s4 1966171168
        %v2351 = vunpack.c.0.s8 %v2350
        %v2352 = vlaneseq
        %v2353 = vshrl.u32 %v2352, 7
        %v2354 = vsub.s32 %v2351, %v2353
        %v2355 = vrot.slane %v2348, %v2354
        %v2357 = vunpack.c.l.s4 1966171168
        %v2358 = vunpack.c.0.s8 %v2357
        %v2359 = vlaneseq
        %v2360 = vshrl.u32 %v2359, 7
        %v2361 = vsub.s32 %v2358, %v2360
        %v2362 = vrot.slane %v2355, %v2361
        %s2364 = scalar_lea.vmem [#allocation4], 6
        %2365 = vst.msk [vmem:[%s2364] ss:$8 sm:$0x3] %vm2036, %v2362
        %2366 = vst.msk [vmem:[%s2364] ss:$8 sm:$0x0] %vm2036, %v2362
        %v2369 = vrot.slane %v2306, 2
        %v2370 = vrot.slane %v2307, 2
        %v2373 = vmax.f32 %v2314, %v2369
        %v2374 = vmax.f32 %v2315, %v2370
        %v2377 = vcombine.high %v2373, %v2374
        %v2379 = vunpack.c.l.s4 1966171168
        %v2380 = vunpack.c.0.s8 %v2379
        %v2381 = vlaneseq
        %v2382 = vshrl.u32 %v2381, 7
        %v2383 = vsub.s32 %v2380, %v2382
        %v2384 = vrot.slane %v2377, %v2383
        %v2386 = vunpack.c.l.s4 1966171168
        %v2387 = vunpack.c.0.s8 %v2386
        %v2388 = vlaneseq
        %v2389 = vshrl.u32 %v2388, 7
        %v2390 = vsub.s32 %v2387, %v2389
        %v2391 = vrot.slane %v2384, %v2390
        %v2392 = vcombine.high %v2391, %v2391
        %s2394 = scalar_lea.vmem [#allocation4], 7
        %2395 = vst.msk [vmem:[%s2394] ss:$8 sm:$0x3] %vm2036, %v2392
        %2396 = vst.msk [vmem:[%s2394] ss:$8 sm:$0x0] %vm2036, %v2392
        %v2397 = vld [vmem:[%s2299] sm:$0xff]
        %v2398 = vld [vmem:[%s2299 + $0x8] sm:$0xff]
        %v2399 = vld [vmem:[%s2299 + $0x10] sm:$0x3]
        %v2400 = vld [vmem:[%s2299 + $0x18] sm:$0x3]
        %s2401 = scalar_lea.vmem [#allocation3], 160
        %v2402 = vld [vmem:[%s2401] sm:$0xff]
        %v2403 = vld [vmem:[%s2401 + $0x8] sm:$0xff]
        %v2404 = vld [vmem:[%s2401 + $0x10] sm:$0x3]
        %v2405 = vld [vmem:[%s2401 + $0x18] sm:$0x3]
        %v2406 = vmax.f32 %v2397, %v2402
        %v2407 = vmax.f32 %v2398, %v2403
        %v2408 = vmax.f32 %v2399, %v2404
        %v2409 = vmax.f32 %v2400, %v2405
        %s2410 = scalar_lea.vmem [#allocation3], 192
        %v2411 = vld [vmem:[%s2410] sm:$0xff]
        %v2412 = vld [vmem:[%s2410 + $0x8] sm:$0xff]
        %v2413 = vld [vmem:[%s2410 + $0x10] sm:$0x3]
        %v2414 = vld [vmem:[%s2410 + $0x18] sm:$0x3]
        %v2415 = vmax.f32 %v2406, %v2411
        %v2416 = vmax.f32 %v2407, %v2412
        %v2417 = vmax.f32 %v2408, %v2413
        %v2418 = vmax.f32 %v2409, %v2414
        %v2421 = vrot.slane %v2415, 1
        %v2422 = vrot.slane %v2416, 1
        %v2425 = vmax.f32 %v2415, %v2421
        %v2426 = vmax.f32 %v2416, %v2422
        %v2427 = vrot.slane %v2415, 2
        %v2428 = vrot.slane %v2416, 2
        %v2431 = vmax.f32 %v2425, %v2427
        %v2432 = vmax.f32 %v2426, %v2428
        %v2435 = vcombine.low %v2431, %v2432
        %v2437 = vunpack.c.l.s4 1966171168
        %v2438 = vunpack.c.0.s8 %v2437
        %v2439 = vlaneseq
        %v2440 = vshrl.u32 %v2439, 7
        %v2441 = vsub.s32 %v2438, %v2440
        %v2442 = vrot.slane %v2435, %v2441
        %v2444 = vunpack.c.l.s4 1966171168
        %v2445 = vunpack.c.0.s8 %v2444
        %v2446 = vlaneseq
        %v2447 = vshrl.u32 %v2446, 7
        %v2448 = vsub.s32 %v2445, %v2447
        %v2449 = vrot.slane %v2442, %v2448
        %s2451 = scalar_lea.vmem [#allocation4], 16
        %2452 = vst.msk [vmem:[%s2451] ss:$8 sm:$0x3] %vm2036, %v2449
        %2453 = vst.msk [vmem:[%s2451] ss:$8 sm:$0x0] %vm2036, %v2449
        %v2454 = vcombine.high %v2449, %v2449
        %s2456 = scalar_lea.vmem [#allocation4], 17
        %2457 = vst.msk [vmem:[%s2456] ss:$8 sm:$0x3] %vm2036, %v2454
        %2458 = vst.msk [vmem:[%s2456] ss:$8 sm:$0x0] %vm2036, %v2454
        %v2459 = vcombine.high %v2431, %v2432
        %v2461 = vunpack.c.l.s4 1966171168
        %v2462 = vunpack.c.0.s8 %v2461
        %v2463 = vlaneseq
        %v2464 = vshrl.u32 %v2463, 7
        %v2465 = vsub.s32 %v2462, %v2464
        %v2466 = vrot.slane %v2459, %v2465
        %v2468 = vunpack.c.l.s4 1966171168
        %v2469 = vunpack.c.0.s8 %v2468
        %v2470 = vlaneseq
        %v2471 = vshrl.u32 %v2470, 7
        %v2472 = vsub.s32 %v2469, %v2471
        %v2473 = vrot.slane %v2466, %v2472
        %s2475 = scalar_lea.vmem [#allocation4], 18
        %2476 = vst.msk [vmem:[%s2475] ss:$8 sm:$0x3] %vm2036, %v2473
        %2477 = vst.msk [vmem:[%s2475] ss:$8 sm:$0x0] %vm2036, %v2473
        %v2480 = vrot.slane %v2417, 2
        %v2481 = vrot.slane %v2418, 2
        %v2484 = vmax.f32 %v2425, %v2480
        %v2485 = vmax.f32 %v2426, %v2481
        %v2488 = vcombine.high %v2484, %v2485
        %v2490 = vunpack.c.l.s4 1966171168
        %v2491 = vunpack.c.0.s8 %v2490
        %v2492 = vlaneseq
        %v2493 = vshrl.u32 %v2492, 7
        %v2494 = vsub.s32 %v2491, %v2493
        %v2495 = vrot.slane %v2488, %v2494
        %v2497 = vunpack.c.l.s4 1966171168
        %v2498 = vunpack.c.0.s8 %v2497
        %v2499 = vlaneseq
        %v2500 = vshrl.u32 %v2499, 7
        %v2501 = vsub.s32 %v2498, %v2500
        %v2502 = vrot.slane %v2495, %v2501
        %v2503 = vcombine.high %v2502, %v2502
        %s2505 = scalar_lea.vmem [#allocation4], 19
        %2506 = vst.msk [vmem:[%s2505] ss:$8 sm:$0x3] %vm2036, %v2503
        %2507 = vst.msk [vmem:[%s2505] ss:$8 sm:$0x0] %vm2036, %v2503
        %v2508 = vld [vmem:[%s2410] sm:$0xff]
        %v2509 = vld [vmem:[%s2410 + $0x8] sm:$0xff]
        %v2510 = vld [vmem:[%s2410 + $0x10] sm:$0x3]
        %v2511 = vld [vmem:[%s2410 + $0x18] sm:$0x3]
        %s2512 = scalar_lea.vmem [#allocation3], 224
        %v2513 = vld [vmem:[%s2512] sm:$0xff]
        %v2514 = vld [vmem:[%s2512 + $0x8] sm:$0xff]
        %v2515 = vld [vmem:[%s2512 + $0x10] sm:$0x3]
        %v2516 = vld [vmem:[%s2512 + $0x18] sm:$0x3]
        %v2517 = vmax.f32 %v2508, %v2513
        %v2518 = vmax.f32 %v2509, %v2514
        %v2519 = vmax.f32 %v2510, %v2515
        %v2520 = vmax.f32 %v2511, %v2516
        %s2521 = scalar_lea.vmem [#allocation3], 256
        %v2522 = vld [vmem:[%s2521] sm:$0xff]
        %v2523 = vld [vmem:[%s2521 + $0x8] sm:$0xff]
        %v2524 = vld [vmem:[%s2521 + $0x10] sm:$0x3]
        %v2525 = vld [vmem:[%s2521 + $0x18] sm:$0x3]
        %v2526 = vmax.f32 %v2517, %v2522
        %v2527 = vmax.f32 %v2518, %v2523
        %v2528 = vmax.f32 %v2519, %v2524
        %v2529 = vmax.f32 %v2520, %v2525
        %v2532 = vrot.slane %v2526, 1
        %v2533 = vrot.slane %v2527, 1
        %v2536 = vmax.f32 %v2526, %v2532
        %v2537 = vmax.f32 %v2527, %v2533
        %v2538 = vrot.slane %v2526, 2
        %v2539 = vrot.slane %v2527, 2
        %v2542 = vmax.f32 %v2536, %v2538
        %v2543 = vmax.f32 %v2537, %v2539
        %v2546 = vcombine.low %v2542, %v2543
        %v2548 = vunpack.c.l.s4 1966171168
        %v2549 = vunpack.c.0.s8 %v2548
        %v2550 = vlaneseq
        %v2551 = vshrl.u32 %v2550, 7
        %v2552 = vsub.s32 %v2549, %v2551
        %v2553 = vrot.slane %v2546, %v2552
        %v2555 = vunpack.c.l.s4 1966171168
        %v2556 = vunpack.c.0.s8 %v2555
        %v2557 = vlaneseq
        %v2558 = vshrl.u32 %v2557, 7
        %v2559 = vsub.s32 %v2556, %v2558
        %v2560 = vrot.slane %v2553, %v2559
        %s2562 = scalar_lea.vmem [#allocation4], 20
        %2563 = vst.msk [vmem:[%s2562] ss:$8 sm:$0x3] %vm2036, %v2560
        %2564 = vst.msk [vmem:[%s2562] ss:$8 sm:$0x0] %vm2036, %v2560
        %v2565 = vcombine.high %v2560, %v2560
        %s2567 = scalar_lea.vmem [#allocation4], 21
        %2568 = vst.msk [vmem:[%s2567] ss:$8 sm:$0x3] %vm2036, %v2565
        %2569 = vst.msk [vmem:[%s2567] ss:$8 sm:$0x0] %vm2036, %v2565
        %v2570 = vcombine.high %v2542, %v2543
        %v2572 = vunpack.c.l.s4 1966171168
        %v2573 = vunpack.c.0.s8 %v2572
        %v2574 = vlaneseq
        %v2575 = vshrl.u32 %v2574, 7
        %v2576 = vsub.s32 %v2573, %v2575
        %v2577 = vrot.slane %v2570, %v2576
        %v2579 = vunpack.c.l.s4 1966171168
        %v2580 = vunpack.c.0.s8 %v2579
        %v2581 = vlaneseq
        %v2582 = vshrl.u32 %v2581, 7
        %v2583 = vsub.s32 %v2580, %v2582
        %v2584 = vrot.slane %v2577, %v2583
        %s2586 = scalar_lea.vmem [#allocation4], 22
        %2587 = vst.msk [vmem:[%s2586] ss:$8 sm:$0x3] %vm2036, %v2584
        %2588 = vst.msk [vmem:[%s2586] ss:$8 sm:$0x0] %vm2036, %v2584
        %v2591 = vrot.slane %v2528, 2
        %v2592 = vrot.slane %v2529, 2
        %v2595 = vmax.f32 %v2536, %v2591
        %v2596 = vmax.f32 %v2537, %v2592
        %v2599 = vcombine.high %v2595, %v2596
        %v2601 = vunpack.c.l.s4 1966171168
        %v2602 = vunpack.c.0.s8 %v2601
        %v2603 = vlaneseq
        %v2604 = vshrl.u32 %v2603, 7
        %v2605 = vsub.s32 %v2602, %v2604
        %v2606 = vrot.slane %v2599, %v2605
        %v2608 = vunpack.c.l.s4 1966171168
        %v2609 = vunpack.c.0.s8 %v2608
        %v2610 = vlaneseq
        %v2611 = vshrl.u32 %v2610, 7
        %v2612 = vsub.s32 %v2609, %v2611
        %v2613 = vrot.slane %v2606, %v2612
        %v2614 = vcombine.high %v2613, %v2613
        %s2616 = scalar_lea.vmem [#allocation4], 23
        %2617 = vst.msk [vmem:[%s2616] ss:$8 sm:$0x3] %vm2036, %v2614
        %2618 = vst.msk [vmem:[%s2616] ss:$8 sm:$0x0] %vm2036, %v2614
        %v2619 = vld [vmem:[#allocation4] sm:$0xff]
        %v2620 = vld [vmem:[#allocation4 + $0x8] sm:$0xff]
        %v2621 = vld [vmem:[#allocation4 + $0x10] sm:$0xff]
        %v2622 = vld [vmem:[#allocation4 + $0x18] sm:$0xff]
        %v2623 = vpack.c.bf16 %v2621, %v2619
        %v2624 = vpack.c.bf16 %v2622, %v2620
        %v2625 = vld [vmem:[%s7] sm:$0xf]
        %v2626 = vld [vmem:[%s7 + $0x4] sm:$0xf]
        %v2627 = vld [vmem:[%s7 + $0x8] sm:$0xf]
        %v2628 = vld [vmem:[%s7 + $0xc] sm:$0xf]
        %v2629 = vld [vmem:[%s7 + $0x10] sm:$0xf]
        %v2630 = vld [vmem:[%s7 + $0x14] sm:$0xf]
        %v2631 = vld [vmem:[%s7 + $0x18] sm:$0xf]
        %v2632 = vld [vmem:[%s7 + $0x1c] sm:$0xf]
        %v2633 = vld [vmem:[%s7 + $0x20] sm:$0xf]
        %v2634 = vld [vmem:[%s7 + $0x24] sm:$0xf]
        %v2635 = vld [vmem:[%s7 + $0x28] sm:$0xf]
        %v2636 = vld [vmem:[%s7 + $0x2c] sm:$0xf]
        %v2637 = vld [vmem:[%s7 + $0x30] sm:$0xf]
        %v2638 = vld [vmem:[%s7 + $0x34] sm:$0xf]
        %v2639 = vld [vmem:[%s7 + $0x38] sm:$0xf]
        %v2640 = vld [vmem:[%s7 + $0x3c] sm:$0xf]
        %v2641 = vld [vmem:[%s7 + $0x40] sm:$0xf]
        %v2642 = vld [vmem:[%s7 + $0x44] sm:$0xf]
        %v2643 = vld [vmem:[%s7 + $0x48] sm:$0xf]
        %v2644 = vld [vmem:[%s7 + $0x4c] sm:$0xf]
        %v2645 = vld [vmem:[%s7 + $0x50] sm:$0xf]
        %v2646 = vld [vmem:[%s7 + $0x54] sm:$0xf]
        %v2647 = vld [vmem:[%s7 + $0x58] sm:$0xf]
        %v2648 = vld [vmem:[%s7 + $0x5c] sm:$0xf]
        %v2649 = vld [vmem:[%s7 + $0x60] sm:$0xf]
        %v2650 = vld [vmem:[%s7 + $0x64] sm:$0xf]
        %v2651 = vld [vmem:[%s7 + $0x68] sm:$0xf]
        %v2652 = vld [vmem:[%s7 + $0x6c] sm:$0xf]
        %v2653 = vld [vmem:[%s7 + $0x70] sm:$0xf]
        %v2654 = vld [vmem:[%s7 + $0x74] sm:$0xf]
        %v2655 = vld [vmem:[%s7 + $0x78] sm:$0xf]
        %v2656 = vld [vmem:[%s7 + $0x7c] sm:$0xf]
        %v2657 = vld [vmem:[%s8] sm:$0x1]
        %v2659 = vlaneseq
        %v2660 = vshrl.u32 %v2659, 7
        %v2661 = vsub.s32 0, %v2660
        %v2662 = vrot.slane %v2657, %v2661
        %v2696 = vunpack.c.l.b16 %v2625
        %v2697 = vunpack.c.l.b16 %v2626
        %v2698 = vunpack.c.l.b16 %v2627
        %v2699 = vunpack.c.l.b16 %v2628
        %v2700 = vunpack.c.l.b16 %v2629
        %v2701 = vunpack.c.l.b16 %v2630
        %v2702 = vunpack.c.l.b16 %v2631
        %v2703 = vunpack.c.l.b16 %v2632
        %v2704 = vunpack.c.l.b16 %v2633
        %v2705 = vunpack.c.l.b16 %v2634
        %v2706 = vunpack.c.l.b16 %v2635
        %v2707 = vunpack.c.l.b16 %v2636
        %v2708 = vunpack.c.l.b16 %v2637
        %v2709 = vunpack.c.l.b16 %v2638
        %v2710 = vunpack.c.l.b16 %v2639
        %v2711 = vunpack.c.l.b16 %v2640
        %v2712 = vunpack.c.l.b16 %v2641
        %v2713 = vunpack.c.l.b16 %v2642
        %v2714 = vunpack.c.l.b16 %v2643
        %v2715 = vunpack.c.l.b16 %v2644
        %v2716 = vunpack.c.l.b16 %v2645
        %v2717 = vunpack.c.l.b16 %v2646
        %v2718 = vunpack.c.l.b16 %v2647
        %v2719 = vunpack.c.l.b16 %v2648
        %v2720 = vunpack.c.l.b16 %v2649
        %v2721 = vunpack.c.l.b16 %v2650
        %v2722 = vunpack.c.l.b16 %v2651
        %v2723 = vunpack.c.l.b16 %v2652
        %v2724 = vunpack.c.l.b16 %v2653
        %v2725 = vunpack.c.l.b16 %v2654
        %v2726 = vunpack.c.l.b16 %v2655
        %v2727 = vunpack.c.l.b16 %v2656
        %v2728 = vpack.c.b16 %v2697, %v2696
        %v2729 = vpack.c.b16 %v2699, %v2698
        %v2730 = vpack.c.b16 %v2701, %v2700
        %v2731 = vpack.c.b16 %v2703, %v2702
        %v2732 = vpack.c.b16 %v2705, %v2704
        %v2733 = vpack.c.b16 %v2707, %v2706
        %v2734 = vpack.c.b16 %v2709, %v2708
        %v2735 = vpack.c.b16 %v2711, %v2710
        %v2736 = vpack.c.b16 %v2713, %v2712
        %v2737 = vpack.c.b16 %v2715, %v2714
        %v2738 = vpack.c.b16 %v2717, %v2716
        %v2739 = vpack.c.b16 %v2719, %v2718
        %v2740 = vpack.c.b16 %v2721, %v2720
        %v2741 = vpack.c.b16 %v2723, %v2722
        %v2742 = vpack.c.b16 %v2725, %v2724
        %v2743 = vpack.c.b16 %v2727, %v2726
        %2760 = vmatprep.subr.bf16.mxu0 0
        %2761 = vmatpush1.bf16.msra.mxu0 %v2735
        %2762 = vmatprep.subr.bf16.mxu0 0
        %2763 = vmatpush1.bf16.msra.mxu0 %v2734
        %2764 = vmatprep.subr.bf16.mxu0 0
        %2765 = vmatpush1.bf16.msra.mxu0 %v2733
        %2766 = vmatprep.subr.bf16.mxu0 0
        %2767 = vmatpush1.bf16.msra.mxu0 %v2732
        %2768 = vmatprep.subr.bf16.mxu0 0
        %2769 = vmatpush1.bf16.msra.mxu0 %v2731
        %2770 = vmatprep.subr.bf16.mxu0 0
        %2771 = vmatpush1.bf16.msra.mxu0 %v2730
        %2772 = vmatprep.subr.bf16.mxu0 0
        %2773 = vmatpush1.bf16.msra.mxu0 %v2729
        %2774 = vmatprep.subr.bf16.mxu0 0
        %2775 = vmatpush1.bf16.msra.mxu0 %v2728
        %2776 = vmatprep.subr.bf16.mxu0 0
        %2777 = vmatpush2.bf16.msra.mxu0 %v2743
        %2778 = vmatprep.subr.bf16.mxu0 0
        %2779 = vmatpush2.bf16.msra.mxu0 %v2742
        %2780 = vmatprep.subr.bf16.mxu0 0
        %2781 = vmatpush2.bf16.msra.mxu0 %v2741
        %2782 = vmatprep.subr.bf16.mxu0 0
        %2783 = vmatpush2.bf16.msra.mxu0 %v2740
        %2784 = vmatprep.subr.bf16.mxu0 0
        %2785 = vmatpush2.bf16.msra.mxu0 %v2739
        %2786 = vmatprep.subr.bf16.mxu0 0
        %2787 = vmatpush2.bf16.msra.mxu0 %v2738
        %2788 = vmatprep.subr.bf16.mxu0 0
        %2789 = vmatpush2.bf16.msra.mxu0 %v2737
        %2790 = vmatprep.subr.bf16.mxu0 0
        %2791 = vmatpush2.bf16.msra.mxu0 %v2736
        %2792 = vmatprep.mubr.bf16.mxu0 %v2624
        %2793 = vmatmul.mubr.bf16.gmra.mxu0 %v2623
        %v2794 = vpop.f32.mrf.mxu0
        %v2795 = vadd.f32 %v2662, %v2794
        %v2796 = vpop.f32.mrf.mxu0
        %v2797 = vpop.f32.mrf.mxu0
        %v2798 = vadd.f32 %v2662, %v2797
        %v2799 = vpop.f32.mrf.mxu0
        %2800 = vdwg.mxu0
        %v2801 = vmax.f32 %v2795, 0.0
        %v2802 = vmax.f32 %v2798, 0.0
        %2803 = vst [vmem:[#allocation5] sm:$0x3f] 0.0
        %s2804 = scalar_lea.vmem [#allocation5], 40
        %2805 = vst [vmem:[%s2804] sm:$0x3f] 0.0
        %2806 = vst [vmem:[#allocation5] sm:$0x1] 0.0
        %2807 = vst [vmem:[#allocation5 + $0x8] sm:$0x1] 0.0
        %2808 = vst [vmem:[#allocation5 + $0x10] sm:$0x1] 0.0
        %2809 = vst [vmem:[#allocation5 + $0x18] sm:$0x1] 0.0
        %2810 = vst [vmem:[#allocation5 + $0x20] sm:$0x1] 0.0
        %2811 = vst [vmem:[#allocation5 + $0x28] sm:$0x1] 0.0
        %2812 = vst [vmem:[#allocation5 + $0x5] sm:$0x1] 0.0
        %2813 = vst [vmem:[#allocation5 + $0xd] sm:$0x1] 0.0
        %2814 = vst [vmem:[#allocation5 + $0x15] sm:$0x1] 0.0
        %2815 = vst [vmem:[#allocation5 + $0x1d] sm:$0x1] 0.0
        %2816 = vst [vmem:[#allocation5 + $0x25] sm:$0x1] 0.0
        %2817 = vst [vmem:[#allocation5 + $0x2d] sm:$0x1] 0.0
        %s2818 = scalar_lea.vmem [#allocation5], 8
        %2819 = vst [vmem:[%s2818 + $0x1] sm:$0xf] %v2801
        %s2820 = scalar_lea.vmem [#allocation5], 16
        %2821 = vst [vmem:[%s2820 - $0x3] sm:$0xf0] %v2801
        %s2822 = scalar_lea.vmem [#allocation5], 24
        %2823 = vst [vmem:[%s2822 + $0x1] sm:$0xf] %v2802
        %s2824 = scalar_lea.vmem [#allocation5], 32
        %2825 = vst [vmem:[%s2824 - $0x3] sm:$0xf0] %v2802
        %v2826 = vld [vmem:[#allocation5] sm:$0xf]
        %v2827 = vpack.c.bf16 %v2826, %v2826
        %v2828 = vld [vmem:[%s9] sm:$0xf]
        %v2829 = vld [vmem:[%s9 + $0x4] sm:$0xf]
        %v2830 = vld [vmem:[%s9 + $0x8] sm:$0xf]
        %v2831 = vld [vmem:[%s9 + $0xc] sm:$0xf]
        %v2832 = vld [vmem:[%s9 + $0x10] sm:$0xf]
        %v2833 = vld [vmem:[%s9 + $0x14] sm:$0xf]
        %v2834 = vld [vmem:[%s9 + $0x18] sm:$0xf]
        %v2835 = vld [vmem:[%s9 + $0x1c] sm:$0xf]
        %v2836 = vld [vmem:[%s9 + $0x20] sm:$0xf]
        %v2837 = vld [vmem:[%s9 + $0x24] sm:$0xf]
        %v2838 = vld [vmem:[%s9 + $0x28] sm:$0xf]
        %v2839 = vld [vmem:[%s9 + $0x2c] sm:$0xf]
        %v2840 = vld [vmem:[%s9 + $0x30] sm:$0xf]
        %v2841 = vld [vmem:[%s9 + $0x34] sm:$0xf]
        %v2842 = vld [vmem:[%s9 + $0x38] sm:$0xf]
        %v2843 = vld [vmem:[%s9 + $0x3c] sm:$0xf]
        %v2844 = vld [vmem:[#allocation5 + $0x1] sm:$0xf]
        %v2845 = vpack.c.bf16 %v2844, %v2844
        %s2846 = scalar_lea.vmem %s9, 64
        %v2847 = vld [vmem:[%s2846] sm:$0xf]
        %v2848 = vld [vmem:[%s2846 + $0x4] sm:$0xf]
        %v2849 = vld [vmem:[%s2846 + $0x8] sm:$0xf]
        %v2850 = vld [vmem:[%s2846 + $0xc] sm:$0xf]
        %v2851 = vld [vmem:[%s2846 + $0x10] sm:$0xf]
        %v2852 = vld [vmem:[%s2846 + $0x14] sm:$0xf]
        %v2853 = vld [vmem:[%s2846 + $0x18] sm:$0xf]
        %v2854 = vld [vmem:[%s2846 + $0x1c] sm:$0xf]
        %v2855 = vld [vmem:[%s2846 + $0x20] sm:$0xf]
        %v2856 = vld [vmem:[%s2846 + $0x24] sm:$0xf]
        %v2857 = vld [vmem:[%s2846 + $0x28] sm:$0xf]
        %v2858 = vld [vmem:[%s2846 + $0x2c] sm:$0xf]
        %v2859 = vld [vmem:[%s2846 + $0x30] sm:$0xf]
        %v2860 = vld [vmem:[%s2846 + $0x34] sm:$0xf]
        %v2861 = vld [vmem:[%s2846 + $0x38] sm:$0xf]
        %v2862 = vld [vmem:[%s2846 + $0x3c] sm:$0xf]
        %v2879 = vunpack.c.l.b16 %v2847
        %v2880 = vunpack.c.l.b16 %v2848
        %v2881 = vunpack.c.l.b16 %v2849
        %v2882 = vunpack.c.l.b16 %v2850
        %v2883 = vunpack.c.l.b16 %v2851
        %v2884 = vunpack.c.l.b16 %v2852
        %v2885 = vunpack.c.l.b16 %v2853
        %v2886 = vunpack.c.l.b16 %v2854
        %v2887 = vunpack.c.l.b16 %v2855
        %v2888 = vunpack.c.l.b16 %v2856
        %v2889 = vunpack.c.l.b16 %v2857
        %v2890 = vunpack.c.l.b16 %v2858
        %v2891 = vunpack.c.l.b16 %v2859
        %v2892 = vunpack.c.l.b16 %v2860
        %v2893 = vunpack.c.l.b16 %v2861
        %v2894 = vunpack.c.l.b16 %v2862
        %v2895 = vpack.c.b16 %v2880, %v2879
        %v2896 = vpack.c.b16 %v2882, %v2881
        %v2897 = vpack.c.b16 %v2884, %v2883
        %v2898 = vpack.c.b16 %v2886, %v2885
        %v2899 = vpack.c.b16 %v2888, %v2887
        %v2900 = vpack.c.b16 %v2890, %v2889
        %v2901 = vpack.c.b16 %v2892, %v2891
        %v2902 = vpack.c.b16 %v2894, %v2893
        %2911 = vmatprep.subr.bf16.mxu0 0
        %2912 = vmatpush1.bf16.msra.mxu0 %v2902
        %2913 = vmatprep.subr.bf16.mxu0 0
        %2914 = vmatpush1.bf16.msra.mxu0 %v2901
        %2915 = vmatprep.subr.bf16.mxu0 0
        %2916 = vmatpush1.bf16.msra.mxu0 %v2900
        %2917 = vmatprep.subr.bf16.mxu0 0
        %2918 = vmatpush1.bf16.msra.mxu0 %v2899
        %2919 = vmatprep.subr.bf16.mxu0 0
        %2920 = vmatpush1.bf16.msra.mxu0 %v2898
        %2921 = vmatprep.subr.bf16.mxu0 0
        %2922 = vmatpush1.bf16.msra.mxu0 %v2897
        %2923 = vmatprep.subr.bf16.mxu0 0
        %2924 = vmatpush1.bf16.msra.mxu0 %v2896
        %2925 = vmatprep.subr.bf16.mxu0 0
        %2926 = vmatpush1.bf16.msra.mxu0 %v2895
        %2927 = vmatprep.subr.bf16.mxu0 0
        %2928 = vmatpush2.bf16.msra.mxu0 0
        %2929 = vmatprep.subr.bf16.mxu0 0
        %2930 = vmatpush2.bf16.msra.mxu0 0
        %2931 = vmatprep.subr.bf16.mxu0 0
        %2932 = vmatpush2.bf16.msra.mxu0 0
        %2933 = vmatprep.subr.bf16.mxu0 0
        %2934 = vmatpush2.bf16.msra.mxu0 0
        %2935 = vmatprep.subr.bf16.mxu0 0
        %2936 = vmatpush2.bf16.msra.mxu0 0
        %2937 = vmatprep.subr.bf16.mxu0 0
        %2938 = vmatpush2.bf16.msra.mxu0 0
        %2939 = vmatprep.subr.bf16.mxu0 0
        %2940 = vmatpush2.bf16.msra.mxu0 0
        %2941 = vmatprep.subr.bf16.mxu0 0
        %2942 = vmatpush2.bf16.msra.mxu0 0
        %2943 = vmatprep.mubr.bf16.mxu0 0
        %2944 = vmatmul.mubr.bf16.gmra.mxu0 %v2845
        %v2945 = vpop.f32.mrf.mxu0
        %v2946 = vadd.f32 0.0, %v2945
        %v2947 = vpop.f32.mrf.mxu0
        %v2948 = vpop.f32.mrf.mxu0
        %v2949 = vpop.f32.mrf.mxu0
        %2950 = vdwg.mxu0
        %v2967 = vunpack.c.l.b16 %v2828
        %v2968 = vunpack.c.l.b16 %v2829
        %v2969 = vunpack.c.l.b16 %v2830
        %v2970 = vunpack.c.l.b16 %v2831
        %v2971 = vunpack.c.l.b16 %v2832
        %v2972 = vunpack.c.l.b16 %v2833
        %v2973 = vunpack.c.l.b16 %v2834
        %v2974 = vunpack.c.l.b16 %v2835
        %v2975 = vunpack.c.l.b16 %v2836
        %v2976 = vunpack.c.l.b16 %v2837
        %v2977 = vunpack.c.l.b16 %v2838
        %v2978 = vunpack.c.l.b16 %v2839
        %v2979 = vunpack.c.l.b16 %v2840
        %v2980 = vunpack.c.l.b16 %v2841
        %v2981 = vunpack.c.l.b16 %v2842
        %v2982 = vunpack.c.l.b16 %v2843
        %v2983 = vpack.c.b16 %v2968, %v2967
        %v2984 = vpack.c.b16 %v2970, %v2969
        %v2985 = vpack.c.b16 %v2972, %v2971
        %v2986 = vpack.c.b16 %v2974, %v2973
        %v2987 = vpack.c.b16 %v2976, %v2975
        %v2988 = vpack.c.b16 %v2978, %v2977
        %v2989 = vpack.c.b16 %v2980, %v2979
        %v2990 = vpack.c.b16 %v2982, %v2981
        %2999 = vmatprep.subr.bf16.mxu0 0
        %3000 = vmatpush1.bf16.msra.mxu0 %v2990
        %3001 = vmatprep.subr.bf16.mxu0 0
        %3002 = vmatpush1.bf16.msra.mxu0 %v2989
        %3003 = vmatprep.subr.bf16.mxu0 0
        %3004 = vmatpush1.bf16.msra.mxu0 %v2988
        %3005 = vmatprep.subr.bf16.mxu0 0
        %3006 = vmatpush1.bf16.msra.mxu0 %v2987
        %3007 = vmatprep.subr.bf16.mxu0 0
        %3008 = vmatpush1.bf16.msra.mxu0 %v2986
        %3009 = vmatprep.subr.bf16.mxu0 0
        %3010 = vmatpush1.bf16.msra.mxu0 %v2985
        %3011 = vmatprep.subr.bf16.mxu0 0
        %3012 = vmatpush1.bf16.msra.mxu0 %v2984
        %3013 = vmatprep.subr.bf16.mxu0 0
        %3014 = vmatpush1.bf16.msra.mxu0 %v2983
        %3015 = vmatprep.subr.bf16.mxu0 0
        %3016 = vmatpush2.bf16.msra.mxu0 0
        %3017 = vmatprep.subr.bf16.mxu0 0
        %3018 = vmatpush2.bf16.msra.mxu0 0
        %3019 = vmatprep.subr.bf16.mxu0 0
        %3020 = vmatpush2.bf16.msra.mxu0 0
        %3021 = vmatprep.subr.bf16.mxu0 0
        %3022 = vmatpush2.bf16.msra.mxu0 0
        %3023 = vmatprep.subr.bf16.mxu0 0
        %3024 = vmatpush2.bf16.msra.mxu0 0
        %3025 = vmatprep.subr.bf16.mxu0 0
        %3026 = vmatpush2.bf16.msra.mxu0 0
        %3027 = vmatprep.subr.bf16.mxu0 0
        %3028 = vmatpush2.bf16.msra.mxu0 0
        %3029 = vmatprep.subr.bf16.mxu0 0
        %3030 = vmatpush2.bf16.msra.mxu0 0
        %3031 = vmatprep.mubr.bf16.mxu0 0
        %3032 = vmatmul.mubr.bf16.gmra.mxu0 %v2827
        %v3033 = vpop.f32.mrf.mxu0
        %v3034 = vadd.f32 %v2946, %v3033
        %v3035 = vpop.f32.mrf.mxu0
        %v3036 = vpop.f32.mrf.mxu0
        %v3037 = vpop.f32.mrf.mxu0
        %3038 = vdwg.mxu0
        %v3039 = vld [vmem:[#allocation5 + $0x2] sm:$0xf]
        %v3040 = vpack.c.bf16 %v3039, %v3039
        %s3041 = scalar_lea.vmem %s9, 128
        %v3042 = vld [vmem:[%s3041] sm:$0xf]
        %v3043 = vld [vmem:[%s3041 + $0x4] sm:$0xf]
        %v3044 = vld [vmem:[%s3041 + $0x8] sm:$0xf]
        %v3045 = vld [vmem:[%s3041 + $0xc] sm:$0xf]
        %v3046 = vld [vmem:[%s3041 + $0x10] sm:$0xf]
        %v3047 = vld [vmem:[%s3041 + $0x14] sm:$0xf]
        %v3048 = vld [vmem:[%s3041 + $0x18] sm:$0xf]
        %v3049 = vld [vmem:[%s3041 + $0x1c] sm:$0xf]
        %v3050 = vld [vmem:[%s3041 + $0x20] sm:$0xf]
        %v3051 = vld [vmem:[%s3041 + $0x24] sm:$0xf]
        %v3052 = vld [vmem:[%s3041 + $0x28] sm:$0xf]
        %v3053 = vld [vmem:[%s3041 + $0x2c] sm:$0xf]
        %v3054 = vld [vmem:[%s3041 + $0x30] sm:$0xf]
        %v3055 = vld [vmem:[%s3041 + $0x34] sm:$0xf]
        %v3056 = vld [vmem:[%s3041 + $0x38] sm:$0xf]
        %v3057 = vld [vmem:[%s3041 + $0x3c] sm:$0xf]
        %v3074 = vunpack.c.l.b16 %v3042
        %v3075 = vunpack.c.l.b16 %v3043
        %v3076 = vunpack.c.l.b16 %v3044
        %v3077 = vunpack.c.l.b16 %v3045
        %v3078 = vunpack.c.l.b16 %v3046
        %v3079 = vunpack.c.l.b16 %v3047
        %v3080 = vunpack.c.l.b16 %v3048
        %v3081 = vunpack.c.l.b16 %v3049
        %v3082 = vunpack.c.l.b16 %v3050
        %v3083 = vunpack.c.l.b16 %v3051
        %v3084 = vunpack.c.l.b16 %v3052
        %v3085 = vunpack.c.l.b16 %v3053
        %v3086 = vunpack.c.l.b16 %v3054
        %v3087 = vunpack.c.l.b16 %v3055
        %v3088 = vunpack.c.l.b16 %v3056
        %v3089 = vunpack.c.l.b16 %v3057
        %v3090 = vpack.c.b16 %v3075, %v3074
        %v3091 = vpack.c.b16 %v3077, %v3076
        %v3092 = vpack.c.b16 %v3079, %v3078
        %v3093 = vpack.c.b16 %v3081, %v3080
        %v3094 = vpack.c.b16 %v3083, %v3082
        %v3095 = vpack.c.b16 %v3085, %v3084
        %v3096 = vpack.c.b16 %v3087, %v3086
        %v3097 = vpack.c.b16 %v3089, %v3088
        %3106 = vmatprep.subr.bf16.mxu0 0
        %3107 = vmatpush1.bf16.msra.mxu0 %v3097
        %3108 = vmatprep.subr.bf16.mxu0 0
        %3109 = vmatpush1.bf16.msra.mxu0 %v3096
        %3110 = vmatprep.subr.bf16.mxu0 0
        %3111 = vmatpush1.bf16.msra.mxu0 %v3095
        %3112 = vmatprep.subr.bf16.mxu0 0
        %3113 = vmatpush1.bf16.msra.mxu0 %v3094
        %3114 = vmatprep.subr.bf16.mxu0 0
        %3115 = vmatpush1.bf16.msra.mxu0 %v3093
        %3116 = vmatprep.subr.bf16.mxu0 0
        %3117 = vmatpush1.bf16.msra.mxu0 %v3092
        %3118 = vmatprep.subr.bf16.mxu0 0
        %3119 = vmatpush1.bf16.msra.mxu0 %v3091
        %3120 = vmatprep.subr.bf16.mxu0 0
        %3121 = vmatpush1.bf16.msra.mxu0 %v3090
        %3122 = vmatprep.subr.bf16.mxu0 0
        %3123 = vmatpush2.bf16.msra.mxu0 0
        %3124 = vmatprep.subr.bf16.mxu0 0
        %3125 = vmatpush2.bf16.msra.mxu0 0
        %3126 = vmatprep.subr.bf16.mxu0 0
        %3127 = vmatpush2.bf16.msra.mxu0 0
        %3128 = vmatprep.subr.bf16.mxu0 0
        %3129 = vmatpush2.bf16.msra.mxu0 0
        %3130 = vmatprep.subr.bf16.mxu0 0
        %3131 = vmatpush2.bf16.msra.mxu0 0
        %3132 = vmatprep.subr.bf16.mxu0 0
        %3133 = vmatpush2.bf16.msra.mxu0 0
        %3134 = vmatprep.subr.bf16.mxu0 0
        %3135 = vmatpush2.bf16.msra.mxu0 0
        %3136 = vmatprep.subr.bf16.mxu0 0
        %3137 = vmatpush2.bf16.msra.mxu0 0
        %3138 = vmatprep.mubr.bf16.mxu0 0
        %3139 = vmatmul.mubr.bf16.gmra.mxu0 %v3040
        %v3140 = vpop.f32.mrf.mxu0
        %v3141 = vadd.f32 0.0, %v3140
        %v3142 = vpop.f32.mrf.mxu0
        %v3143 = vpop.f32.mrf.mxu0
        %v3144 = vpop.f32.mrf.mxu0
        %3145 = vdwg.mxu0
        %v3146 = vadd.f32 %v3034, %v3141
        %v3147 = vld [vmem:[%s2818] sm:$0xf]
        %v3148 = vpack.c.bf16 %v3147, %v3147
        %s3149 = scalar_lea.vmem %s9, 192
        %v3150 = vld [vmem:[%s3149] sm:$0xf]
        %v3151 = vld [vmem:[%s3149 + $0x4] sm:$0xf]
        %v3152 = vld [vmem:[%s3149 + $0x8] sm:$0xf]
        %v3153 = vld [vmem:[%s3149 + $0xc] sm:$0xf]
        %v3154 = vld [vmem:[%s3149 + $0x10] sm:$0xf]
        %v3155 = vld [vmem:[%s3149 + $0x14] sm:$0xf]
        %v3156 = vld [vmem:[%s3149 + $0x18] sm:$0xf]
        %v3157 = vld [vmem:[%s3149 + $0x1c] sm:$0xf]
        %v3158 = vld [vmem:[%s3149 + $0x20] sm:$0xf]
        %v3159 = vld [vmem:[%s3149 + $0x24] sm:$0xf]
        %v3160 = vld [vmem:[%s3149 + $0x28] sm:$0xf]
        %v3161 = vld [vmem:[%s3149 + $0x2c] sm:$0xf]
        %v3162 = vld [vmem:[%s3149 + $0x30] sm:$0xf]
        %v3163 = vld [vmem:[%s3149 + $0x34] sm:$0xf]
        %v3164 = vld [vmem:[%s3149 + $0x38] sm:$0xf]
        %v3165 = vld [vmem:[%s3149 + $0x3c] sm:$0xf]
        %v3182 = vunpack.c.l.b16 %v3150
        %v3183 = vunpack.c.l.b16 %v3151
        %v3184 = vunpack.c.l.b16 %v3152
        %v3185 = vunpack.c.l.b16 %v3153
        %v3186 = vunpack.c.l.b16 %v3154
        %v3187 = vunpack.c.l.b16 %v3155
        %v3188 = vunpack.c.l.b16 %v3156
        %v3189 = vunpack.c.l.b16 %v3157
        %v3190 = vunpack.c.l.b16 %v3158
        %v3191 = vunpack.c.l.b16 %v3159
        %v3192 = vunpack.c.l.b16 %v3160
        %v3193 = vunpack.c.l.b16 %v3161
        %v3194 = vunpack.c.l.b16 %v3162
        %v3195 = vunpack.c.l.b16 %v3163
        %v3196 = vunpack.c.l.b16 %v3164
        %v3197 = vunpack.c.l.b16 %v3165
        %v3198 = vpack.c.b16 %v3183, %v3182
        %v3199 = vpack.c.b16 %v3185, %v3184
        %v3200 = vpack.c.b16 %v3187, %v3186
        %v3201 = vpack.c.b16 %v3189, %v3188
        %v3202 = vpack.c.b16 %v3191, %v3190
        %v3203 = vpack.c.b16 %v3193, %v3192
        %v3204 = vpack.c.b16 %v3195, %v3194
        %v3205 = vpack.c.b16 %v3197, %v3196
        %3214 = vmatprep.subr.bf16.mxu0 0
        %3215 = vmatpush1.bf16.msra.mxu0 %v3205
        %3216 = vmatprep.subr.bf16.mxu0 0
        %3217 = vmatpush1.bf16.msra.mxu0 %v3204
        %3218 = vmatprep.subr.bf16.mxu0 0
        %3219 = vmatpush1.bf16.msra.mxu0 %v3203
        %3220 = vmatprep.subr.bf16.mxu0 0
        %3221 = vmatpush1.bf16.msra.mxu0 %v3202
        %3222 = vmatprep.subr.bf16.mxu0 0
        %3223 = vmatpush1.bf16.msra.mxu0 %v3201
        %3224 = vmatprep.subr.bf16.mxu0 0
        %3225 = vmatpush1.bf16.msra.mxu0 %v3200
        %3226 = vmatprep.subr.bf16.mxu0 0
        %3227 = vmatpush1.bf16.msra.mxu0 %v3199
        %3228 = vmatprep.subr.bf16.mxu0 0
        %3229 = vmatpush1.bf16.msra.mxu0 %v3198
        %3230 = vmatprep.subr.bf16.mxu0 0
        %3231 = vmatpush2.bf16.msra.mxu0 0
        %3232 = vmatprep.subr.bf16.mxu0 0
        %3233 = vmatpush2.bf16.msra.mxu0 0
        %3234 = vmatprep.subr.bf16.mxu0 0
        %3235 = vmatpush2.bf16.msra.mxu0 0
        %3236 = vmatprep.subr.bf16.mxu0 0
        %3237 = vmatpush2.bf16.msra.mxu0 0
        %3238 = vmatprep.subr.bf16.mxu0 0
        %3239 = vmatpush2.bf16.msra.mxu0 0
        %3240 = vmatprep.subr.bf16.mxu0 0
        %3241 = vmatpush2.bf16.msra.mxu0 0
        %3242 = vmatprep.subr.bf16.mxu0 0
        %3243 = vmatpush2.bf16.msra.mxu0 0
        %3244 = vmatprep.subr.bf16.mxu0 0
        %3245 = vmatpush2.bf16.msra.mxu0 0
        %3246 = vmatprep.mubr.bf16.mxu0 0
        %3247 = vmatmul.mubr.bf16.gmra.mxu0 %v3148
        %v3248 = vpop.f32.mrf.mxu0
        %v3249 = vadd.f32 0.0, %v3248
        %v3250 = vpop.f32.mrf.mxu0
        %v3251 = vpop.f32.mrf.mxu0
        %v3252 = vpop.f32.mrf.mxu0
        %3253 = vdwg.mxu0
        %v3254 = vadd.f32 %v3146, %v3249
        %v3255 = vld [vmem:[%s2818 + $0x1] sm:$0xf]
        %v3256 = vpack.c.bf16 %v3255, %v3255
        %s3257 = scalar_lea.vmem %s9, 256
        %v3258 = vld [vmem:[%s3257] sm:$0xf]
        %v3259 = vld [vmem:[%s3257 + $0x4] sm:$0xf]
        %v3260 = vld [vmem:[%s3257 + $0x8] sm:$0xf]
        %v3261 = vld [vmem:[%s3257 + $0xc] sm:$0xf]
        %v3262 = vld [vmem:[%s3257 + $0x10] sm:$0xf]
        %v3263 = vld [vmem:[%s3257 + $0x14] sm:$0xf]
        %v3264 = vld [vmem:[%s3257 + $0x18] sm:$0xf]
        %v3265 = vld [vmem:[%s3257 + $0x1c] sm:$0xf]
        %v3266 = vld [vmem:[%s3257 + $0x20] sm:$0xf]
        %v3267 = vld [vmem:[%s3257 + $0x24] sm:$0xf]
        %v3268 = vld [vmem:[%s3257 + $0x28] sm:$0xf]
        %v3269 = vld [vmem:[%s3257 + $0x2c] sm:$0xf]
        %v3270 = vld [vmem:[%s3257 + $0x30] sm:$0xf]
        %v3271 = vld [vmem:[%s3257 + $0x34] sm:$0xf]
        %v3272 = vld [vmem:[%s3257 + $0x38] sm:$0xf]
        %v3273 = vld [vmem:[%s3257 + $0x3c] sm:$0xf]
        %v3290 = vunpack.c.l.b16 %v3258
        %v3291 = vunpack.c.l.b16 %v3259
        %v3292 = vunpack.c.l.b16 %v3260
        %v3293 = vunpack.c.l.b16 %v3261
        %v3294 = vunpack.c.l.b16 %v3262
        %v3295 = vunpack.c.l.b16 %v3263
        %v3296 = vunpack.c.l.b16 %v3264
        %v3297 = vunpack.c.l.b16 %v3265
        %v3298 = vunpack.c.l.b16 %v3266
        %v3299 = vunpack.c.l.b16 %v3267
        %v3300 = vunpack.c.l.b16 %v3268
        %v3301 = vunpack.c.l.b16 %v3269
        %v3302 = vunpack.c.l.b16 %v3270
        %v3303 = vunpack.c.l.b16 %v3271
        %v3304 = vunpack.c.l.b16 %v3272
        %v3305 = vunpack.c.l.b16 %v3273
        %v3306 = vpack.c.b16 %v3291, %v3290
        %v3307 = vpack.c.b16 %v3293, %v3292
        %v3308 = vpack.c.b16 %v3295, %v3294
        %v3309 = vpack.c.b16 %v3297, %v3296
        %v3310 = vpack.c.b16 %v3299, %v3298
        %v3311 = vpack.c.b16 %v3301, %v3300
        %v3312 = vpack.c.b16 %v3303, %v3302
        %v3313 = vpack.c.b16 %v3305, %v3304
        %3322 = vmatprep.subr.bf16.mxu0 0
        %3323 = vmatpush1.bf16.msra.mxu0 %v3313
        %3324 = vmatprep.subr.bf16.mxu0 0
        %3325 = vmatpush1.bf16.msra.mxu0 %v3312
        %3326 = vmatprep.subr.bf16.mxu0 0
        %3327 = vmatpush1.bf16.msra.mxu0 %v3311
        %3328 = vmatprep.subr.bf16.mxu0 0
        %3329 = vmatpush1.bf16.msra.mxu0 %v3310
        %3330 = vmatprep.subr.bf16.mxu0 0
        %3331 = vmatpush1.bf16.msra.mxu0 %v3309
        %3332 = vmatprep.subr.bf16.mxu0 0
        %3333 = vmatpush1.bf16.msra.mxu0 %v3308
        %3334 = vmatprep.subr.bf16.mxu0 0
        %3335 = vmatpush1.bf16.msra.mxu0 %v3307
        %3336 = vmatprep.subr.bf16.mxu0 0
        %3337 = vmatpush1.bf16.msra.mxu0 %v3306
        %3338 = vmatprep.subr.bf16.mxu0 0
        %3339 = vmatpush2.bf16.msra.mxu0 0
        %3340 = vmatprep.subr.bf16.mxu0 0
        %3341 = vmatpush2.bf16.msra.mxu0 0
        %3342 = vmatprep.subr.bf16.mxu0 0
        %3343 = vmatpush2.bf16.msra.mxu0 0
        %3344 = vmatprep.subr.bf16.mxu0 0
        %3345 = vmatpush2.bf16.msra.mxu0 0
        %3346 = vmatprep.subr.bf16.mxu0 0
        %3347 = vmatpush2.bf16.msra.mxu0 0
        %3348 = vmatprep.subr.bf16.mxu0 0
        %3349 = vmatpush2.bf16.msra.mxu0 0
        %3350 = vmatprep.subr.bf16.mxu0 0
        %3351 = vmatpush2.bf16.msra.mxu0 0
        %3352 = vmatprep.subr.bf16.mxu0 0
        %3353 = vmatpush2.bf16.msra.mxu0 0
        %3354 = vmatprep.mubr.bf16.mxu0 0
        %3355 = vmatmul.mubr.bf16.gmra.mxu0 %v3256
        %v3356 = vpop.f32.mrf.mxu0
        %v3357 = vadd.f32 0.0, %v3356
        %v3358 = vpop.f32.mrf.mxu0
        %v3359 = vpop.f32.mrf.mxu0
        %v3360 = vpop.f32.mrf.mxu0
        %3361 = vdwg.mxu0
        %v3362 = vadd.f32 %v3254, %v3357
        %v3363 = vld [vmem:[%s2818 + $0x2] sm:$0xf]
        %v3364 = vpack.c.bf16 %v3363, %v3363
        %s3365 = scalar_lea.vmem %s9, 320
        %v3366 = vld [vmem:[%s3365] sm:$0xf]
        %v3367 = vld [vmem:[%s3365 + $0x4] sm:$0xf]
        %v3368 = vld [vmem:[%s3365 + $0x8] sm:$0xf]
        %v3369 = vld [vmem:[%s3365 + $0xc] sm:$0xf]
        %v3370 = vld [vmem:[%s3365 + $0x10] sm:$0xf]
        %v3371 = vld [vmem:[%s3365 + $0x14] sm:$0xf]
        %v3372 = vld [vmem:[%s3365 + $0x18] sm:$0xf]
        %v3373 = vld [vmem:[%s3365 + $0x1c] sm:$0xf]
        %v3374 = vld [vmem:[%s3365 + $0x20] sm:$0xf]
        %v3375 = vld [vmem:[%s3365 + $0x24] sm:$0xf]
        %v3376 = vld [vmem:[%s3365 + $0x28] sm:$0xf]
        %v3377 = vld [vmem:[%s3365 + $0x2c] sm:$0xf]
        %v3378 = vld [vmem:[%s3365 + $0x30] sm:$0xf]
        %v3379 = vld [vmem:[%s3365 + $0x34] sm:$0xf]
        %v3380 = vld [vmem:[%s3365 + $0x38] sm:$0xf]
        %v3381 = vld [vmem:[%s3365 + $0x3c] sm:$0xf]
        %v3398 = vunpack.c.l.b16 %v3366
        %v3399 = vunpack.c.l.b16 %v3367
        %v3400 = vunpack.c.l.b16 %v3368
        %v3401 = vunpack.c.l.b16 %v3369
        %v3402 = vunpack.c.l.b16 %v3370
        %v3403 = vunpack.c.l.b16 %v3371
        %v3404 = vunpack.c.l.b16 %v3372
        %v3405 = vunpack.c.l.b16 %v3373
        %v3406 = vunpack.c.l.b16 %v3374
        %v3407 = vunpack.c.l.b16 %v3375
        %v3408 = vunpack.c.l.b16 %v3376
        %v3409 = vunpack.c.l.b16 %v3377
        %v3410 = vunpack.c.l.b16 %v3378
        %v3411 = vunpack.c.l.b16 %v3379
        %v3412 = vunpack.c.l.b16 %v3380
        %v3413 = vunpack.c.l.b16 %v3381
        %v3414 = vpack.c.b16 %v3399, %v3398
        %v3415 = vpack.c.b16 %v3401, %v3400
        %v3416 = vpack.c.b16 %v3403, %v3402
        %v3417 = vpack.c.b16 %v3405, %v3404
        %v3418 = vpack.c.b16 %v3407, %v3406
        %v3419 = vpack.c.b16 %v3409, %v3408
        %v3420 = vpack.c.b16 %v3411, %v3410
        %v3421 = vpack.c.b16 %v3413, %v3412
        %3430 = vmatprep.subr.bf16.mxu0 0
        %3431 = vmatpush1.bf16.msra.mxu0 %v3421
        %3432 = vmatprep.subr.bf16.mxu0 0
        %3433 = vmatpush1.bf16.msra.mxu0 %v3420
        %3434 = vmatprep.subr.bf16.mxu0 0
        %3435 = vmatpush1.bf16.msra.mxu0 %v3419
        %3436 = vmatprep.subr.bf16.mxu0 0
        %3437 = vmatpush1.bf16.msra.mxu0 %v3418
        %3438 = vmatprep.subr.bf16.mxu0 0
        %3439 = vmatpush1.bf16.msra.mxu0 %v3417
        %3440 = vmatprep.subr.bf16.mxu0 0
        %3441 = vmatpush1.bf16.msra.mxu0 %v3416
        %3442 = vmatprep.subr.bf16.mxu0 0
        %3443 = vmatpush1.bf16.msra.mxu0 %v3415
        %3444 = vmatprep.subr.bf16.mxu0 0
        %3445 = vmatpush1.bf16.msra.mxu0 %v3414
        %3446 = vmatprep.subr.bf16.mxu0 0
        %3447 = vmatpush2.bf16.msra.mxu0 0
        %3448 = vmatprep.subr.bf16.mxu0 0
        %3449 = vmatpush2.bf16.msra.mxu0 0
        %3450 = vmatprep.subr.bf16.mxu0 0
        %3451 = vmatpush2.bf16.msra.mxu0 0
        %3452 = vmatprep.subr.bf16.mxu0 0
        %3453 = vmatpush2.bf16.msra.mxu0 0
        %3454 = vmatprep.subr.bf16.mxu0 0
        %3455 = vmatpush2.bf16.msra.mxu0 0
        %3456 = vmatprep.subr.bf16.mxu0 0
        %3457 = vmatpush2.bf16.msra.mxu0 0
        %3458 = vmatprep.subr.bf16.mxu0 0
        %3459 = vmatpush2.bf16.msra.mxu0 0
        %3460 = vmatprep.subr.bf16.mxu0 0
        %3461 = vmatpush2.bf16.msra.mxu0 0
        %3462 = vmatprep.mubr.bf16.mxu0 0
        %3463 = vmatmul.mubr.bf16.gmra.mxu0 %v3364
        %v3464 = vpop.f32.mrf.mxu0
        %v3465 = vadd.f32 0.0, %v3464
        %v3466 = vpop.f32.mrf.mxu0
        %v3467 = vpop.f32.mrf.mxu0
        %v3468 = vpop.f32.mrf.mxu0
        %3469 = vdwg.mxu0
        %v3470 = vadd.f32 %v3362, %v3465
        %v3471 = vld [vmem:[%s2820] sm:$0xf]
        %v3472 = vpack.c.bf16 %v3471, %v3471
        %s3473 = scalar_lea.vmem %s9, 384
        %v3474 = vld [vmem:[%s3473] sm:$0xf]
        %v3475 = vld [vmem:[%s3473 + $0x4] sm:$0xf]
        %v3476 = vld [vmem:[%s3473 + $0x8] sm:$0xf]
        %v3477 = vld [vmem:[%s3473 + $0xc] sm:$0xf]
        %v3478 = vld [vmem:[%s3473 + $0x10] sm:$0xf]
        %v3479 = vld [vmem:[%s3473 + $0x14] sm:$0xf]
        %v3480 = vld [vmem:[%s3473 + $0x18] sm:$0xf]
        %v3481 = vld [vmem:[%s3473 + $0x1c] sm:$0xf]
        %v3482 = vld [vmem:[%s3473 + $0x20] sm:$0xf]
        %v3483 = vld [vmem:[%s3473 + $0x24] sm:$0xf]
        %v3484 = vld [vmem:[%s3473 + $0x28] sm:$0xf]
        %v3485 = vld [vmem:[%s3473 + $0x2c] sm:$0xf]
        %v3486 = vld [vmem:[%s3473 + $0x30] sm:$0xf]
        %v3487 = vld [vmem:[%s3473 + $0x34] sm:$0xf]
        %v3488 = vld [vmem:[%s3473 + $0x38] sm:$0xf]
        %v3489 = vld [vmem:[%s3473 + $0x3c] sm:$0xf]
        %v3506 = vunpack.c.l.b16 %v3474
        %v3507 = vunpack.c.l.b16 %v3475
        %v3508 = vunpack.c.l.b16 %v3476
        %v3509 = vunpack.c.l.b16 %v3477
        %v3510 = vunpack.c.l.b16 %v3478
        %v3511 = vunpack.c.l.b16 %v3479
        %v3512 = vunpack.c.l.b16 %v3480
        %v3513 = vunpack.c.l.b16 %v3481
        %v3514 = vunpack.c.l.b16 %v3482
        %v3515 = vunpack.c.l.b16 %v3483
        %v3516 = vunpack.c.l.b16 %v3484
        %v3517 = vunpack.c.l.b16 %v3485
        %v3518 = vunpack.c.l.b16 %v3486
        %v3519 = vunpack.c.l.b16 %v3487
        %v3520 = vunpack.c.l.b16 %v3488
        %v3521 = vunpack.c.l.b16 %v3489
        %v3522 = vpack.c.b16 %v3507, %v3506
        %v3523 = vpack.c.b16 %v3509, %v3508
        %v3524 = vpack.c.b16 %v3511, %v3510
        %v3525 = vpack.c.b16 %v3513, %v3512
        %v3526 = vpack.c.b16 %v3515, %v3514
        %v3527 = vpack.c.b16 %v3517, %v3516
        %v3528 = vpack.c.b16 %v3519, %v3518
        %v3529 = vpack.c.b16 %v3521, %v3520
        %3538 = vmatprep.subr.bf16.mxu0 0
        %3539 = vmatpush1.bf16.msra.mxu0 %v3529
        %3540 = vmatprep.subr.bf16.mxu0 0
        %3541 = vmatpush1.bf16.msra.mxu0 %v3528
        %3542 = vmatprep.subr.bf16.mxu0 0
        %3543 = vmatpush1.bf16.msra.mxu0 %v3527
        %3544 = vmatprep.subr.bf16.mxu0 0
        %3545 = vmatpush1.bf16.msra.mxu0 %v3526
        %3546 = vmatprep.subr.bf16.mxu0 0
        %3547 = vmatpush1.bf16.msra.mxu0 %v3525
        %3548 = vmatprep.subr.bf16.mxu0 0
        %3549 = vmatpush1.bf16.msra.mxu0 %v3524
        %3550 = vmatprep.subr.bf16.mxu0 0
        %3551 = vmatpush1.bf16.msra.mxu0 %v3523
        %3552 = vmatprep.subr.bf16.mxu0 0
        %3553 = vmatpush1.bf16.msra.mxu0 %v3522
        %3554 = vmatprep.subr.bf16.mxu0 0
        %3555 = vmatpush2.bf16.msra.mxu0 0
        %3556 = vmatprep.subr.bf16.mxu0 0
        %3557 = vmatpush2.bf16.msra.mxu0 0
        %3558 = vmatprep.subr.bf16.mxu0 0
        %3559 = vmatpush2.bf16.msra.mxu0 0
        %3560 = vmatprep.subr.bf16.mxu0 0
        %3561 = vmatpush2.bf16.msra.mxu0 0
        %3562 = vmatprep.subr.bf16.mxu0 0
        %3563 = vmatpush2.bf16.msra.mxu0 0
        %3564 = vmatprep.subr.bf16.mxu0 0
        %3565 = vmatpush2.bf16.msra.mxu0 0
        %3566 = vmatprep.subr.bf16.mxu0 0
        %3567 = vmatpush2.bf16.msra.mxu0 0
        %3568 = vmatprep.subr.bf16.mxu0 0
        %3569 = vmatpush2.bf16.msra.mxu0 0
        %3570 = vmatprep.mubr.bf16.mxu0 0
        %3571 = vmatmul.mubr.bf16.gmra.mxu0 %v3472
        %v3572 = vpop.f32.mrf.mxu0
        %v3573 = vadd.f32 0.0, %v3572
        %v3574 = vpop.f32.mrf.mxu0
        %v3575 = vpop.f32.mrf.mxu0
        %v3576 = vpop.f32.mrf.mxu0
        %3577 = vdwg.mxu0
        %v3578 = vadd.f32 %v3470, %v3573
        %v3579 = vld [vmem:[%s2820 + $0x1] sm:$0xf]
        %v3580 = vpack.c.bf16 %v3579, %v3579
        %s3581 = scalar_lea.vmem %s9, 448
        %v3582 = vld [vmem:[%s3581] sm:$0xf]
        %v3583 = vld [vmem:[%s3581 + $0x4] sm:$0xf]
        %v3584 = vld [vmem:[%s3581 + $0x8] sm:$0xf]
        %v3585 = vld [vmem:[%s3581 + $0xc] sm:$0xf]
        %v3586 = vld [vmem:[%s3581 + $0x10] sm:$0xf]
        %v3587 = vld [vmem:[%s3581 + $0x14] sm:$0xf]
        %v3588 = vld [vmem:[%s3581 + $0x18] sm:$0xf]
        %v3589 = vld [vmem:[%s3581 + $0x1c] sm:$0xf]
        %v3590 = vld [vmem:[%s3581 + $0x20] sm:$0xf]
        %v3591 = vld [vmem:[%s3581 + $0x24] sm:$0xf]
        %v3592 = vld [vmem:[%s3581 + $0x28] sm:$0xf]
        %v3593 = vld [vmem:[%s3581 + $0x2c] sm:$0xf]
        %v3594 = vld [vmem:[%s3581 + $0x30] sm:$0xf]
        %v3595 = vld [vmem:[%s3581 + $0x34] sm:$0xf]
        %v3596 = vld [vmem:[%s3581 + $0x38] sm:$0xf]
        %v3597 = vld [vmem:[%s3581 + $0x3c] sm:$0xf]
        %v3614 = vunpack.c.l.b16 %v3582
        %v3615 = vunpack.c.l.b16 %v3583
        %v3616 = vunpack.c.l.b16 %v3584
        %v3617 = vunpack.c.l.b16 %v3585
        %v3618 = vunpack.c.l.b16 %v3586
        %v3619 = vunpack.c.l.b16 %v3587
        %v3620 = vunpack.c.l.b16 %v3588
        %v3621 = vunpack.c.l.b16 %v3589
        %v3622 = vunpack.c.l.b16 %v3590
        %v3623 = vunpack.c.l.b16 %v3591
        %v3624 = vunpack.c.l.b16 %v3592
        %v3625 = vunpack.c.l.b16 %v3593
        %v3626 = vunpack.c.l.b16 %v3594
        %v3627 = vunpack.c.l.b16 %v3595
        %v3628 = vunpack.c.l.b16 %v3596
        %v3629 = vunpack.c.l.b16 %v3597
        %v3630 = vpack.c.b16 %v3615, %v3614
        %v3631 = vpack.c.b16 %v3617, %v3616
        %v3632 = vpack.c.b16 %v3619, %v3618
        %v3633 = vpack.c.b16 %v3621, %v3620
        %v3634 = vpack.c.b16 %v3623, %v3622
        %v3635 = vpack.c.b16 %v3625, %v3624
        %v3636 = vpack.c.b16 %v3627, %v3626
        %v3637 = vpack.c.b16 %v3629, %v3628
        %3646 = vmatprep.subr.bf16.mxu0 0
        %3647 = vmatpush1.bf16.msra.mxu0 %v3637
        %3648 = vmatprep.subr.bf16.mxu0 0
        %3649 = vmatpush1.bf16.msra.mxu0 %v3636
        %3650 = vmatprep.subr.bf16.mxu0 0
        %3651 = vmatpush1.bf16.msra.mxu0 %v3635
        %3652 = vmatprep.subr.bf16.mxu0 0
        %3653 = vmatpush1.bf16.msra.mxu0 %v3634
        %3654 = vmatprep.subr.bf16.mxu0 0
        %3655 = vmatpush1.bf16.msra.mxu0 %v3633
        %3656 = vmatprep.subr.bf16.mxu0 0
        %3657 = vmatpush1.bf16.msra.mxu0 %v3632
        %3658 = vmatprep.subr.bf16.mxu0 0
        %3659 = vmatpush1.bf16.msra.mxu0 %v3631
        %3660 = vmatprep.subr.bf16.mxu0 0
        %3661 = vmatpush1.bf16.msra.mxu0 %v3630
        %3662 = vmatprep.subr.bf16.mxu0 0
        %3663 = vmatpush2.bf16.msra.mxu0 0
        %3664 = vmatprep.subr.bf16.mxu0 0
        %3665 = vmatpush2.bf16.msra.mxu0 0
        %3666 = vmatprep.subr.bf16.mxu0 0
        %3667 = vmatpush2.bf16.msra.mxu0 0
        %3668 = vmatprep.subr.bf16.mxu0 0
        %3669 = vmatpush2.bf16.msra.mxu0 0
        %3670 = vmatprep.subr.bf16.mxu0 0
        %3671 = vmatpush2.bf16.msra.mxu0 0
        %3672 = vmatprep.subr.bf16.mxu0 0
        %3673 = vmatpush2.bf16.msra.mxu0 0
        %3674 = vmatprep.subr.bf16.mxu0 0
        %3675 = vmatpush2.bf16.msra.mxu0 0
        %3676 = vmatprep.subr.bf16.mxu0 0
        %3677 = vmatpush2.bf16.msra.mxu0 0
        %3678 = vmatprep.mubr.bf16.mxu0 0
        %3679 = vmatmul.mubr.bf16.gmra.mxu0 %v3580
        %v3680 = vpop.f32.mrf.mxu0
        %v3681 = vadd.f32 0.0, %v3680
        %v3682 = vpop.f32.mrf.mxu0
        %v3683 = vpop.f32.mrf.mxu0
        %v3684 = vpop.f32.mrf.mxu0
        %3685 = vdwg.mxu0
        %v3686 = vadd.f32 %v3578, %v3681
        %v3687 = vld [vmem:[%s2820 + $0x2] sm:$0xf]
        %v3688 = vpack.c.bf16 %v3687, %v3687
        %s3689 = scalar_lea.vmem %s9, 512
        %v3690 = vld [vmem:[%s3689] sm:$0xf]
        %v3691 = vld [vmem:[%s3689 + $0x4] sm:$0xf]
        %v3692 = vld [vmem:[%s3689 + $0x8] sm:$0xf]
        %v3693 = vld [vmem:[%s3689 + $0xc] sm:$0xf]
        %v3694 = vld [vmem:[%s3689 + $0x10] sm:$0xf]
        %v3695 = vld [vmem:[%s3689 + $0x14] sm:$0xf]
        %v3696 = vld [vmem:[%s3689 + $0x18] sm:$0xf]
        %v3697 = vld [vmem:[%s3689 + $0x1c] sm:$0xf]
        %v3698 = vld [vmem:[%s3689 + $0x20] sm:$0xf]
        %v3699 = vld [vmem:[%s3689 + $0x24] sm:$0xf]
        %v3700 = vld [vmem:[%s3689 + $0x28] sm:$0xf]
        %v3701 = vld [vmem:[%s3689 + $0x2c] sm:$0xf]
        %v3702 = vld [vmem:[%s3689 + $0x30] sm:$0xf]
        %v3703 = vld [vmem:[%s3689 + $0x34] sm:$0xf]
        %v3704 = vld [vmem:[%s3689 + $0x38] sm:$0xf]
        %v3705 = vld [vmem:[%s3689 + $0x3c] sm:$0xf]
        %v3722 = vunpack.c.l.b16 %v3690
        %v3723 = vunpack.c.l.b16 %v3691
        %v3724 = vunpack.c.l.b16 %v3692
        %v3725 = vunpack.c.l.b16 %v3693
        %v3726 = vunpack.c.l.b16 %v3694
        %v3727 = vunpack.c.l.b16 %v3695
        %v3728 = vunpack.c.l.b16 %v3696
        %v3729 = vunpack.c.l.b16 %v3697
        %v3730 = vunpack.c.l.b16 %v3698
        %v3731 = vunpack.c.l.b16 %v3699
        %v3732 = vunpack.c.l.b16 %v3700
        %v3733 = vunpack.c.l.b16 %v3701
        %v3734 = vunpack.c.l.b16 %v3702
        %v3735 = vunpack.c.l.b16 %v3703
        %v3736 = vunpack.c.l.b16 %v3704
        %v3737 = vunpack.c.l.b16 %v3705
        %v3738 = vpack.c.b16 %v3723, %v3722
        %v3739 = vpack.c.b16 %v3725, %v3724
        %v3740 = vpack.c.b16 %v3727, %v3726
        %v3741 = vpack.c.b16 %v3729, %v3728
        %v3742 = vpack.c.b16 %v3731, %v3730
        %v3743 = vpack.c.b16 %v3733, %v3732
        %v3744 = vpack.c.b16 %v3735, %v3734
        %v3745 = vpack.c.b16 %v3737, %v3736
        %3754 = vmatprep.subr.bf16.mxu0 0
        %3755 = vmatpush1.bf16.msra.mxu0 %v3745
        %3756 = vmatprep.subr.bf16.mxu0 0
        %3757 = vmatpush1.bf16.msra.mxu0 %v3744
        %3758 = vmatprep.subr.bf16.mxu0 0
        %3759 = vmatpush1.bf16.msra.mxu0 %v3743
        %3760 = vmatprep.subr.bf16.mxu0 0
        %3761 = vmatpush1.bf16.msra.mxu0 %v3742
        %3762 = vmatprep.subr.bf16.mxu0 0
        %3763 = vmatpush1.bf16.msra.mxu0 %v3741
        %3764 = vmatprep.subr.bf16.mxu0 0
        %3765 = vmatpush1.bf16.msra.mxu0 %v3740
        %3766 = vmatprep.subr.bf16.mxu0 0
        %3767 = vmatpush1.bf16.msra.mxu0 %v3739
        %3768 = vmatprep.subr.bf16.mxu0 0
        %3769 = vmatpush1.bf16.msra.mxu0 %v3738
        %3770 = vmatprep.subr.bf16.mxu0 0
        %3771 = vmatpush2.bf16.msra.mxu0 0
        %3772 = vmatprep.subr.bf16.mxu0 0
        %3773 = vmatpush2.bf16.msra.mxu0 0
        %3774 = vmatprep.subr.bf16.mxu0 0
        %3775 = vmatpush2.bf16.msra.mxu0 0
        %3776 = vmatprep.subr.bf16.mxu0 0
        %3777 = vmatpush2.bf16.msra.mxu0 0
        %3778 = vmatprep.subr.bf16.mxu0 0
        %3779 = vmatpush2.bf16.msra.mxu0 0
        %3780 = vmatprep.subr.bf16.mxu0 0
        %3781 = vmatpush2.bf16.msra.mxu0 0
        %3782 = vmatprep.subr.bf16.mxu0 0
        %3783 = vmatpush2.bf16.msra.mxu0 0
        %3784 = vmatprep.subr.bf16.mxu0 0
        %3785 = vmatpush2.bf16.msra.mxu0 0
        %3786 = vmatprep.mubr.bf16.mxu0 0
        %3787 = vmatmul.mubr.bf16.gmra.mxu0 %v3688
        %v3788 = vpop.f32.mrf.mxu0
        %v3789 = vadd.f32 0.0, %v3788
        %v3790 = vpop.f32.mrf.mxu0
        %v3791 = vpop.f32.mrf.mxu0
        %v3792 = vpop.f32.mrf.mxu0
        %3793 = vdwg.mxu0
        %v3794 = vadd.f32 %v3686, %v3789
        %v3795 = vld [vmem:[%s10] sm:$0x1]
        %v3797 = vlaneseq
        %v3798 = vshrl.u32 %v3797, 7
        %v3799 = vsub.s32 0, %v3798
        %v3800 = vrot.slane %v3795, %v3799
        %v3802 = vadd.f32 %v3794, %v3800
        %v3803 = vmax.f32 %v3802, 0.0
        %v3804 = vpack.c.bf16 %v3803, %v3803
        %v3805 = vld [vmem:[%s11] sm:$0xff]
        %v3806 = vld [vmem:[%s11 + $0x8] sm:$0xff]
        %v3807 = vld [vmem:[%s11 + $0x10] sm:$0xff]
        %v3808 = vld [vmem:[%s11 + $0x18] sm:$0xff]
        %v3809 = vld [vmem:[%s11 + $0x20] sm:$0xff]
        %v3810 = vld [vmem:[%s11 + $0x28] sm:$0xff]
        %v3811 = vld [vmem:[%s11 + $0x30] sm:$0xff]
        %v3812 = vld [vmem:[%s11 + $0x38] sm:$0xff]
        %v3813 = vld [vmem:[%s11 + $0x40] sm:$0xff]
        %v3814 = vld [vmem:[%s11 + $0x48] sm:$0xff]
        %v3815 = vld [vmem:[%s11 + $0x50] sm:$0xff]
        %v3816 = vld [vmem:[%s11 + $0x58] sm:$0xff]
        %v3817 = vld [vmem:[%s11 + $0x60] sm:$0xff]
        %v3818 = vld [vmem:[%s11 + $0x68] sm:$0xff]
        %v3819 = vld [vmem:[%s11 + $0x70] sm:$0xff]
        %v3820 = vld [vmem:[%s11 + $0x78] sm:$0xff]
        %v3821 = vld [vmem:[%s11 + $0x80] sm:$0xff]
        %v3822 = vld [vmem:[%s11 + $0x88] sm:$0xff]
        %v3823 = vld [vmem:[%s11 + $0x90] sm:$0xff]
        %v3824 = vld [vmem:[%s11 + $0x98] sm:$0xff]
        %v3825 = vld [vmem:[%s11 + $0xa0] sm:$0xff]
        %v3826 = vld [vmem:[%s11 + $0xa8] sm:$0xff]
        %v3827 = vld [vmem:[%s11 + $0xb0] sm:$0xff]
        %v3828 = vld [vmem:[%s11 + $0xb8] sm:$0xff]
        %v3829 = vld [vmem:[%s11 + $0xc0] sm:$0xff]
        %v3830 = vld [vmem:[%s11 + $0xc8] sm:$0xff]
        %v3831 = vld [vmem:[%s11 + $0xd0] sm:$0xff]
        %v3832 = vld [vmem:[%s11 + $0xd8] sm:$0xff]
        %v3833 = vld [vmem:[%s11 + $0xe0] sm:$0xff]
        %v3834 = vld [vmem:[%s11 + $0xe8] sm:$0xff]
        %v3835 = vld [vmem:[%s11 + $0xf0] sm:$0xff]
        %v3836 = vld [vmem:[%s11 + $0xf8] sm:$0xff]
        %v3837 = vld [vmem:[%s12] sm:$0xf]
        %v3839 = vlaneseq
        %v3840 = vshrl.u32 %v3839, 7
        %v3841 = vsub.s32 0, %v3840
        %v3842 = vrot.slane %v3837, %v3841
        %v3843 = vlaneseq
        %v3844 = vshrl.u32 %v3843, 7
        %v3845 = vsub.s32 1, %v3844
        %v3846 = vrot.slane %v3837, %v3845
        %v3847 = vlaneseq
        %v3848 = vshrl.u32 %v3847, 7
        %v3849 = vsub.s32 2, %v3848
        %v3850 = vrot.slane %v3837, %v3849
        %v3851 = vlaneseq
        %v3852 = vshrl.u32 %v3851, 7
        %v3853 = vsub.s32 3, %v3852
        %v3854 = vrot.slane %v3837, %v3853
        %v3891 = vunpack.c.l.b16 %v3805
        %v3892 = vunpack.c.h.b16 %v3805
        %v3893 = vunpack.c.l.b16 %v3806
        %v3894 = vunpack.c.h.b16 %v3806
        %v3895 = vunpack.c.l.b16 %v3807
        %v3896 = vunpack.c.h.b16 %v3807
        %v3897 = vunpack.c.l.b16 %v3808
        %v3898 = vunpack.c.h.b16 %v3808
        %v3899 = vunpack.c.l.b16 %v3809
        %v3900 = vunpack.c.h.b16 %v3809
        %v3901 = vunpack.c.l.b16 %v3810
        %v3902 = vunpack.c.h.b16 %v3810
        %v3903 = vunpack.c.l.b16 %v3811
        %v3904 = vunpack.c.h.b16 %v3811
        %v3905 = vunpack.c.l.b16 %v3812
        %v3906 = vunpack.c.h.b16 %v3812
        %v3907 = vunpack.c.l.b16 %v3813
        %v3908 = vunpack.c.h.b16 %v3813
        %v3909 = vunpack.c.l.b16 %v3814
        %v3910 = vunpack.c.h.b16 %v3814
        %v3911 = vunpack.c.l.b16 %v3815
        %v3912 = vunpack.c.h.b16 %v3815
        %v3913 = vunpack.c.l.b16 %v3816
        %v3914 = vunpack.c.h.b16 %v3816
        %v3915 = vunpack.c.l.b16 %v3817
        %v3916 = vunpack.c.h.b16 %v3817
        %v3917 = vunpack.c.l.b16 %v3818
        %v3918 = vunpack.c.h.b16 %v3818
        %v3919 = vunpack.c.l.b16 %v3819
        %v3920 = vunpack.c.h.b16 %v3819
        %v3921 = vunpack.c.l.b16 %v3820
        %v3922 = vunpack.c.h.b16 %v3820
        %v3923 = vunpack.c.l.b16 %v3821
        %v3924 = vunpack.c.h.b16 %v3821
        %v3925 = vunpack.c.l.b16 %v3822
        %v3926 = vunpack.c.h.b16 %v3822
        %v3927 = vunpack.c.l.b16 %v3823
        %v3928 = vunpack.c.h.b16 %v3823
        %v3929 = vunpack.c.l.b16 %v3824
        %v3930 = vunpack.c.h.b16 %v3824
        %v3931 = vunpack.c.l.b16 %v3825
        %v3932 = vunpack.c.h.b16 %v3825
        %v3933 = vunpack.c.l.b16 %v3826
        %v3934 = vunpack.c.h.b16 %v3826
        %v3935 = vunpack.c.l.b16 %v3827
        %v3936 = vunpack.c.h.b16 %v3827
        %v3937 = vunpack.c.l.b16 %v3828
        %v3938 = vunpack.c.h.b16 %v3828
        %v3939 = vunpack.c.l.b16 %v3829
        %v3940 = vunpack.c.h.b16 %v3829
        %v3941 = vunpack.c.l.b16 %v3830
        %v3942 = vunpack.c.h.b16 %v3830
        %v3943 = vunpack.c.l.b16 %v3831
        %v3944 = vunpack.c.h.b16 %v3831
        %v3945 = vunpack.c.l.b16 %v3832
        %v3946 = vunpack.c.h.b16 %v3832
        %v3947 = vunpack.c.l.b16 %v3833
        %v3948 = vunpack.c.h.b16 %v3833
        %v3949 = vunpack.c.l.b16 %v3834
        %v3950 = vunpack.c.h.b16 %v3834
        %v3951 = vunpack.c.l.b16 %v3835
        %v3952 = vunpack.c.h.b16 %v3835
        %v3953 = vunpack.c.l.b16 %v3836
        %v3954 = vunpack.c.h.b16 %v3836
        %v3955 = vpack.c.b16 %v3895, %v3891
        %v3956 = vpack.c.b16 %v3896, %v3892
        %v3957 = vpack.c.b16 %v3897, %v3893
        %v3958 = vpack.c.b16 %v3898, %v3894
        %v3959 = vpack.c.b16 %v3903, %v3899
        %v3960 = vpack.c.b16 %v3904, %v3900
        %v3961 = vpack.c.b16 %v3905, %v3901
        %v3962 = vpack.c.b16 %v3906, %v3902
        %v3963 = vpack.c.b16 %v3911, %v3907
        %v3964 = vpack.c.b16 %v3912, %v3908
        %v3965 = vpack.c.b16 %v3913, %v3909
        %v3966 = vpack.c.b16 %v3914, %v3910
        %v3967 = vpack.c.b16 %v3919, %v3915
        %v3968 = vpack.c.b16 %v3920, %v3916
        %v3969 = vpack.c.b16 %v3921, %v3917
        %v3970 = vpack.c.b16 %v3922, %v3918
        %v3971 = vpack.c.b16 %v3927, %v3923
        %v3972 = vpack.c.b16 %v3928, %v3924
        %v3973 = vpack.c.b16 %v3929, %v3925
        %v3974 = vpack.c.b16 %v3930, %v3926
        %v3975 = vpack.c.b16 %v3935, %v3931
        %v3976 = vpack.c.b16 %v3936, %v3932
        %v3977 = vpack.c.b16 %v3937, %v3933
        %v3978 = vpack.c.b16 %v3938, %v3934
        %v3979 = vpack.c.b16 %v3943, %v3939
        %v3980 = vpack.c.b16 %v3944, %v3940
        %v3981 = vpack.c.b16 %v3945, %v3941
        %v3982 = vpack.c.b16 %v3946, %v3942
        %v3983 = vpack.c.b16 %v3951, %v3947
        %v3984 = vpack.c.b16 %v3952, %v3948
        %v3985 = vpack.c.b16 %v3953, %v3949
        %v3986 = vpack.c.b16 %v3954, %v3950
        %4019 = vmatprep.subr.bf16.mxu0 %v3984
        %4020 = vmatpush1.bf16.msra.mxu0 %v3983
        %4021 = vmatprep.subr.bf16.mxu0 %v3980
        %4022 = vmatpush1.bf16.msra.mxu0 %v3979
        %4023 = vmatprep.subr.bf16.mxu0 %v3976
        %4024 = vmatpush1.bf16.msra.mxu0 %v3975
        %4025 = vmatprep.subr.bf16.mxu0 %v3972
        %4026 = vmatpush1.bf16.msra.mxu0 %v3971
        %4027 = vmatprep.subr.bf16.mxu0 %v3968
        %4028 = vmatpush1.bf16.msra.mxu0 %v3967
        %4029 = vmatprep.subr.bf16.mxu0 %v3964
        %4030 = vmatpush1.bf16.msra.mxu0 %v3963
        %4031 = vmatprep.subr.bf16.mxu0 %v3960
        %4032 = vmatpush1.bf16.msra.mxu0 %v3959
        %4033 = vmatprep.subr.bf16.mxu0 %v3956
        %4034 = vmatpush1.bf16.msra.mxu0 %v3955
        %4035 = vmatprep.subr.bf16.mxu0 0
        %4036 = vmatpush2.bf16.msra.mxu0 0
        %4037 = vmatprep.subr.bf16.mxu0 0
        %4038 = vmatpush2.bf16.msra.mxu0 0
        %4039 = vmatprep.subr.bf16.mxu0 0
        %4040 = vmatpush2.bf16.msra.mxu0 0
        %4041 = vmatprep.subr.bf16.mxu0 0
        %4042 = vmatpush2.bf16.msra.mxu0 0
        %4043 = vmatprep.subr.bf16.mxu0 0
        %4044 = vmatpush2.bf16.msra.mxu0 0
        %4045 = vmatprep.subr.bf16.mxu0 0
        %4046 = vmatpush2.bf16.msra.mxu0 0
        %4047 = vmatprep.subr.bf16.mxu0 0
        %4048 = vmatpush2.bf16.msra.mxu0 0
        %4049 = vmatprep.subr.bf16.mxu0 0
        %4050 = vmatpush2.bf16.msra.mxu0 0
        %4051 = vmatprep.mubr.bf16.mxu0 0
        %4052 = vmatmul.mubr.bf16.gmra.mxu0 %v3804
        %v4053 = vpop.f32.mrf.mxu0
        %v4054 = vadd.f32 %v3842, %v4053
        %v4055 = vpop.f32.mrf.mxu0
        %v4056 = vadd.f32 %v3846, %v4055
        %v4057 = vpop.f32.mrf.mxu0
        %v4058 = vpop.f32.mrf.mxu0
        %4059 = vdwg.mxu0
        %4060 = vmatprep.subr.bf16.mxu0 %v3986
        %4061 = vmatpush1.bf16.msra.mxu0 %v3985
        %4062 = vmatprep.subr.bf16.mxu0 %v3982
        %4063 = vmatpush1.bf16.msra.mxu0 %v3981
        %4064 = vmatprep.subr.bf16.mxu0 %v3978
        %4065 = vmatpush1.bf16.msra.mxu0 %v3977
        %4066 = vmatprep.subr.bf16.mxu0 %v3974
        %4067 = vmatpush1.bf16.msra.mxu0 %v3973
        %4068 = vmatprep.subr.bf16.mxu0 %v3970
        %4069 = vmatpush1.bf16.msra.mxu0 %v3969
        %4070 = vmatprep.subr.bf16.mxu0 %v3966
        %4071 = vmatpush1.bf16.msra.mxu0 %v3965
        %4072 = vmatprep.subr.bf16.mxu0 %v3962
        %4073 = vmatpush1.bf16.msra.mxu0 %v3961
        %4074 = vmatprep.subr.bf16.mxu0 %v3958
        %4075 = vmatpush1.bf16.msra.mxu0 %v3957
        %4076 = vmatprep.subr.bf16.mxu0 0
        %4077 = vmatpush2.bf16.msra.mxu0 0
        %4078 = vmatprep.subr.bf16.mxu0 0
        %4079 = vmatpush2.bf16.msra.mxu0 0
        %4080 = vmatprep.subr.bf16.mxu0 0
        %4081 = vmatpush2.bf16.msra.mxu0 0
        %4082 = vmatprep.subr.bf16.mxu0 0
        %4083 = vmatpush2.bf16.msra.mxu0 0
        %4084 = vmatprep.subr.bf16.mxu0 0
        %4085 = vmatpush2.bf16.msra.mxu0 0
        %4086 = vmatprep.subr.bf16.mxu0 0
        %4087 = vmatpush2.bf16.msra.mxu0 0
        %4088 = vmatprep.subr.bf16.mxu0 0
        %4089 = vmatpush2.bf16.msra.mxu0 0
        %4090 = vmatprep.subr.bf16.mxu0 0
        %4091 = vmatpush2.bf16.msra.mxu0 0
        %4092 = vmatprep.mubr.bf16.mxu0 0
        %4093 = vmatmul.mubr.bf16.gmra.mxu0 %v3804
        %v4094 = vpop.f32.mrf.mxu0
        %v4095 = vadd.f32 %v3850, %v4094
        %v4096 = vpop.f32.mrf.mxu0
        %v4097 = vadd.f32 %v3854, %v4096
        %v4098 = vpop.f32.mrf.mxu0
        %v4099 = vpop.f32.mrf.mxu0
        %4100 = vdwg.mxu0
        %v4101 = vmax.f32 %v4054, 0.0
        %v4102 = vmax.f32 %v4056, 0.0
        %v4103 = vmax.f32 %v4095, 0.0
        %v4104 = vmax.f32 %v4097, 0.0
        %vm4105 = vcmask 1043456
        %v4106 = vsel %vm4105, %v4101, 0.0
        %v4107 = vrot.slane %v4106, 4
        %v4108 = vadd.f32 %v4106, %v4107
        %v4109 = vrot.slane %v4108, 2
        %v4110 = vadd.f32 %v4108, %v4109
        %v4111 = vrot.slane %v4110, 1
        %v4112 = vadd.f32 %v4110, %v4111
        %v4113 = vsel %vm4105, %v4102, 0.0
        %v4114 = vrot.slane %v4113, 4
        %v4115 = vadd.f32 %v4113, %v4114
        %v4116 = vrot.slane %v4115, 2
        %v4117 = vadd.f32 %v4115, %v4116
        %v4118 = vrot.slane %v4117, 1
        %v4119 = vadd.f32 %v4117, %v4118
        %v4120 = vsel %vm4105, %v4103, 0.0
        %v4121 = vrot.slane %v4120, 4
        %v4122 = vadd.f32 %v4120, %v4121
        %v4123 = vrot.slane %v4122, 2
        %v4124 = vadd.f32 %v4122, %v4123
        %v4125 = vrot.slane %v4124, 1
        %v4126 = vadd.f32 %v4124, %v4125
        %v4127 = vsel %vm4105, %v4104, 0.0
        %v4128 = vrot.slane %v4127, 4
        %v4129 = vadd.f32 %v4127, %v4128
        %v4130 = vrot.slane %v4129, 2
        %v4131 = vadd.f32 %v4129, %v4130
        %v4132 = vrot.slane %v4131, 1
        %v4133 = vadd.f32 %v4131, %v4132
        %v4134 = vadd.f32 %v4112, 0.0
        %v4135 = vadd.f32 %v4119, 0.0
        %v4136 = vadd.f32 %v4126, 0.0
        %v4137 = vadd.f32 %v4133, 0.0
        %4138 = vmatprep.subr.bf16.mxu0 0
        %4139 = vmatpush1.bf16.msra.mxu0 %v2902
        %4140 = vmatprep.subr.bf16.mxu0 0
        %4141 = vmatpush1.bf16.msra.mxu0 %v2901
        %4142 = vmatprep.subr.bf16.mxu0 0
        %4143 = vmatpush1.bf16.msra.mxu0 %v2900
        %4144 = vmatprep.subr.bf16.mxu0 0
        %4145 = vmatpush1.bf16.msra.mxu0 %v2899
        %4146 = vmatprep.subr.bf16.mxu0 0
        %4147 = vmatpush1.bf16.msra.mxu0 %v2898
        %4148 = vmatprep.subr.bf16.mxu0 0
        %4149 = vmatpush1.bf16.msra.mxu0 %v2897
        %4150 = vmatprep.subr.bf16.mxu0 0
        %4151 = vmatpush1.bf16.msra.mxu0 %v2896
        %4152 = vmatprep.subr.bf16.mxu0 0
        %4153 = vmatpush1.bf16.msra.mxu0 %v2895
        %4154 = vmatprep.subr.bf16.mxu0 0
        %4155 = vmatpush2.bf16.msra.mxu0 0
        %4156 = vmatprep.subr.bf16.mxu0 0
        %4157 = vmatpush2.bf16.msra.mxu0 0
        %4158 = vmatprep.subr.bf16.mxu0 0
        %4159 = vmatpush2.bf16.msra.mxu0 0
        %4160 = vmatprep.subr.bf16.mxu0 0
        %4161 = vmatpush2.bf16.msra.mxu0 0
        %4162 = vmatprep.subr.bf16.mxu0 0
        %4163 = vmatpush2.bf16.msra.mxu0 0
        %4164 = vmatprep.subr.bf16.mxu0 0
        %4165 = vmatpush2.bf16.msra.mxu0 0
        %4166 = vmatprep.subr.bf16.mxu0 0
        %4167 = vmatpush2.bf16.msra.mxu0 0
        %4168 = vmatprep.subr.bf16.mxu0 0
        %4169 = vmatpush2.bf16.msra.mxu0 0
        %4170 = vmatprep.mubr.bf16.mxu0 0
        %4171 = vmatmul.mubr.bf16.gmra.mxu0 %v3256
        %v4172 = vpop.f32.mrf.mxu0
        %v4173 = vadd.f32 0.0, %v4172
        %v4174 = vpop.f32.mrf.mxu0
        %v4175 = vpop.f32.mrf.mxu0
        %v4176 = vpop.f32.mrf.mxu0
        %4177 = vdwg.mxu0
        %4178 = vmatprep.subr.bf16.mxu0 0
        %4179 = vmatpush1.bf16.msra.mxu0 %v2990
        %4180 = vmatprep.subr.bf16.mxu0 0
        %4181 = vmatpush1.bf16.msra.mxu0 %v2989
        %4182 = vmatprep.subr.bf16.mxu0 0
        %4183 = vmatpush1.bf16.msra.mxu0 %v2988
        %4184 = vmatprep.subr.bf16.mxu0 0
        %4185 = vmatpush1.bf16.msra.mxu0 %v2987
        %4186 = vmatprep.subr.bf16.mxu0 0
        %4187 = vmatpush1.bf16.msra.mxu0 %v2986
        %4188 = vmatprep.subr.bf16.mxu0 0
        %4189 = vmatpush1.bf16.msra.mxu0 %v2985
        %4190 = vmatprep.subr.bf16.mxu0 0
        %4191 = vmatpush1.bf16.msra.mxu0 %v2984
        %4192 = vmatprep.subr.bf16.mxu0 0
        %4193 = vmatpush1.bf16.msra.mxu0 %v2983
        %4194 = vmatprep.subr.bf16.mxu0 0
        %4195 = vmatpush2.bf16.msra.mxu0 0
        %4196 = vmatprep.subr.bf16.mxu0 0
        %4197 = vmatpush2.bf16.msra.mxu0 0
        %4198 = vmatprep.subr.bf16.mxu0 0
        %4199 = vmatpush2.bf16.msra.mxu0 0
        %4200 = vmatprep.subr.bf16.mxu0 0
        %4201 = vmatpush2.bf16.msra.mxu0 0
        %4202 = vmatprep.subr.bf16.mxu0 0
        %4203 = vmatpush2.bf16.msra.mxu0 0
        %4204 = vmatprep.subr.bf16.mxu0 0
        %4205 = vmatpush2.bf16.msra.mxu0 0
        %4206 = vmatprep.subr.bf16.mxu0 0
        %4207 = vmatpush2.bf16.msra.mxu0 0
        %4208 = vmatprep.subr.bf16.mxu0 0
        %4209 = vmatpush2.bf16.msra.mxu0 0
        %4210 = vmatprep.mubr.bf16.mxu0 0
        %4211 = vmatmul.mubr.bf16.gmra.mxu0 %v3148
        %v4212 = vpop.f32.mrf.mxu0
        %v4213 = vadd.f32 %v4173, %v4212
        %v4214 = vpop.f32.mrf.mxu0
        %v4215 = vpop.f32.mrf.mxu0
        %v4216 = vpop.f32.mrf.mxu0
        %4217 = vdwg.mxu0
        %4218 = vmatprep.subr.bf16.mxu0 0
        %4219 = vmatpush1.bf16.msra.mxu0 %v3097
        %4220 = vmatprep.subr.bf16.mxu0 0
        %4221 = vmatpush1.bf16.msra.mxu0 %v3096
        %4222 = vmatprep.subr.bf16.mxu0 0
        %4223 = vmatpush1.bf16.msra.mxu0 %v3095
        %4224 = vmatprep.subr.bf16.mxu0 0
        %4225 = vmatpush1.bf16.msra.mxu0 %v3094
        %4226 = vmatprep.subr.bf16.mxu0 0
        %4227 = vmatpush1.bf16.msra.mxu0 %v3093
        %4228 = vmatprep.subr.bf16.mxu0 0
        %4229 = vmatpush1.bf16.msra.mxu0 %v3092
        %4230 = vmatprep.subr.bf16.mxu0 0
        %4231 = vmatpush1.bf16.msra.mxu0 %v3091
        %4232 = vmatprep.subr.bf16.mxu0 0
        %4233 = vmatpush1.bf16.msra.mxu0 %v3090
        %4234 = vmatprep.subr.bf16.mxu0 0
        %4235 = vmatpush2.bf16.msra.mxu0 0
        %4236 = vmatprep.subr.bf16.mxu0 0
        %4237 = vmatpush2.bf16.msra.mxu0 0
        %4238 = vmatprep.subr.bf16.mxu0 0
        %4239 = vmatpush2.bf16.msra.mxu0 0
        %4240 = vmatprep.subr.bf16.mxu0 0
        %4241 = vmatpush2.bf16.msra.mxu0 0
        %4242 = vmatprep.subr.bf16.mxu0 0
        %4243 = vmatpush2.bf16.msra.mxu0 0
        %4244 = vmatprep.subr.bf16.mxu0 0
        %4245 = vmatpush2.bf16.msra.mxu0 0
        %4246 = vmatprep.subr.bf16.mxu0 0
        %4247 = vmatpush2.bf16.msra.mxu0 0
        %4248 = vmatprep.subr.bf16.mxu0 0
        %4249 = vmatpush2.bf16.msra.mxu0 0
        %4250 = vmatprep.mubr.bf16.mxu0 0
        %4251 = vmatmul.mubr.bf16.gmra.mxu0 %v3364
        %v4252 = vpop.f32.mrf.mxu0
        %v4253 = vadd.f32 0.0, %v4252
        %v4254 = vpop.f32.mrf.mxu0
        %v4255 = vpop.f32.mrf.mxu0
        %v4256 = vpop.f32.mrf.mxu0
        %4257 = vdwg.mxu0
        %v4258 = vadd.f32 %v4213, %v4253
        %4259 = vmatprep.subr.bf16.mxu0 0
        %4260 = vmatpush1.bf16.msra.mxu0 %v3205
        %4261 = vmatprep.subr.bf16.mxu0 0
        %4262 = vmatpush1.bf16.msra.mxu0 %v3204
        %4263 = vmatprep.subr.bf16.mxu0 0
        %4264 = vmatpush1.bf16.msra.mxu0 %v3203
        %4265 = vmatprep.subr.bf16.mxu0 0
        %4266 = vmatpush1.bf16.msra.mxu0 %v3202
        %4267 = vmatprep.subr.bf16.mxu0 0
        %4268 = vmatpush1.bf16.msra.mxu0 %v3201
        %4269 = vmatprep.subr.bf16.mxu0 0
        %4270 = vmatpush1.bf16.msra.mxu0 %v3200
        %4271 = vmatprep.subr.bf16.mxu0 0
        %4272 = vmatpush1.bf16.msra.mxu0 %v3199
        %4273 = vmatprep.subr.bf16.mxu0 0
        %4274 = vmatpush1.bf16.msra.mxu0 %v3198
        %4275 = vmatprep.subr.bf16.mxu0 0
        %4276 = vmatpush2.bf16.msra.mxu0 0
        %4277 = vmatprep.subr.bf16.mxu0 0
        %4278 = vmatpush2.bf16.msra.mxu0 0
        %4279 = vmatprep.subr.bf16.mxu0 0
        %4280 = vmatpush2.bf16.msra.mxu0 0
        %4281 = vmatprep.subr.bf16.mxu0 0
        %4282 = vmatpush2.bf16.msra.mxu0 0
        %4283 = vmatprep.subr.bf16.mxu0 0
        %4284 = vmatpush2.bf16.msra.mxu0 0
        %4285 = vmatprep.subr.bf16.mxu0 0
        %4286 = vmatpush2.bf16.msra.mxu0 0
        %4287 = vmatprep.subr.bf16.mxu0 0
        %4288 = vmatpush2.bf16.msra.mxu0 0
        %4289 = vmatprep.subr.bf16.mxu0 0
        %4290 = vmatpush2.bf16.msra.mxu0 0
        %4291 = vmatprep.mubr.bf16.mxu0 0
        %4292 = vmatmul.mubr.bf16.gmra.mxu0 %v3472
        %v4293 = vpop.f32.mrf.mxu0
        %v4294 = vadd.f32 0.0, %v4293
        %v4295 = vpop.f32.mrf.mxu0
        %v4296 = vpop.f32.mrf.mxu0
        %v4297 = vpop.f32.mrf.mxu0
        %4298 = vdwg.mxu0
        %v4299 = vadd.f32 %v4258, %v4294
        %4300 = vmatprep.subr.bf16.mxu0 0
        %4301 = vmatpush1.bf16.msra.mxu0 %v3313
        %4302 = vmatprep.subr.bf16.mxu0 0
        %4303 = vmatpush1.bf16.msra.mxu0 %v3312
        %4304 = vmatprep.subr.bf16.mxu0 0
        %4305 = vmatpush1.bf16.msra.mxu0 %v3311
        %4306 = vmatprep.subr.bf16.mxu0 0
        %4307 = vmatpush1.bf16.msra.mxu0 %v3310
        %4308 = vmatprep.subr.bf16.mxu0 0
        %4309 = vmatpush1.bf16.msra.mxu0 %v3309
        %4310 = vmatprep.subr.bf16.mxu0 0
        %4311 = vmatpush1.bf16.msra.mxu0 %v3308
        %4312 = vmatprep.subr.bf16.mxu0 0
        %4313 = vmatpush1.bf16.msra.mxu0 %v3307
        %4314 = vmatprep.subr.bf16.mxu0 0
        %4315 = vmatpush1.bf16.msra.mxu0 %v3306
        %4316 = vmatprep.subr.bf16.mxu0 0
        %4317 = vmatpush2.bf16.msra.mxu0 0
        %4318 = vmatprep.subr.bf16.mxu0 0
        %4319 = vmatpush2.bf16.msra.mxu0 0
        %4320 = vmatprep.subr.bf16.mxu0 0
        %4321 = vmatpush2.bf16.msra.mxu0 0
        %4322 = vmatprep.subr.bf16.mxu0 0
        %4323 = vmatpush2.bf16.msra.mxu0 0
        %4324 = vmatprep.subr.bf16.mxu0 0
        %4325 = vmatpush2.bf16.msra.mxu0 0
        %4326 = vmatprep.subr.bf16.mxu0 0
        %4327 = vmatpush2.bf16.msra.mxu0 0
        %4328 = vmatprep.subr.bf16.mxu0 0
        %4329 = vmatpush2.bf16.msra.mxu0 0
        %4330 = vmatprep.subr.bf16.mxu0 0
        %4331 = vmatpush2.bf16.msra.mxu0 0
        %4332 = vmatprep.mubr.bf16.mxu0 0
        %4333 = vmatmul.mubr.bf16.gmra.mxu0 %v3580
        %v4334 = vpop.f32.mrf.mxu0
        %v4335 = vadd.f32 0.0, %v4334
        %v4336 = vpop.f32.mrf.mxu0
        %v4337 = vpop.f32.mrf.mxu0
        %v4338 = vpop.f32.mrf.mxu0
        %4339 = vdwg.mxu0
        %v4340 = vadd.f32 %v4299, %v4335
        %4341 = vmatprep.subr.bf16.mxu0 0
        %4342 = vmatpush1.bf16.msra.mxu0 %v3421
        %4343 = vmatprep.subr.bf16.mxu0 0
        %4344 = vmatpush1.bf16.msra.mxu0 %v3420
        %4345 = vmatprep.subr.bf16.mxu0 0
        %4346 = vmatpush1.bf16.msra.mxu0 %v3419
        %4347 = vmatprep.subr.bf16.mxu0 0
        %4348 = vmatpush1.bf16.msra.mxu0 %v3418
        %4349 = vmatprep.subr.bf16.mxu0 0
        %4350 = vmatpush1.bf16.msra.mxu0 %v3417
        %4351 = vmatprep.subr.bf16.mxu0 0
        %4352 = vmatpush1.bf16.msra.mxu0 %v3416
        %4353 = vmatprep.subr.bf16.mxu0 0
        %4354 = vmatpush1.bf16.msra.mxu0 %v3415
        %4355 = vmatprep.subr.bf16.mxu0 0
        %4356 = vmatpush1.bf16.msra.mxu0 %v3414
        %4357 = vmatprep.subr.bf16.mxu0 0
        %4358 = vmatpush2.bf16.msra.mxu0 0
        %4359 = vmatprep.subr.bf16.mxu0 0
        %4360 = vmatpush2.bf16.msra.mxu0 0
        %4361 = vmatprep.subr.bf16.mxu0 0
        %4362 = vmatpush2.bf16.msra.mxu0 0
        %4363 = vmatprep.subr.bf16.mxu0 0
        %4364 = vmatpush2.bf16.msra.mxu0 0
        %4365 = vmatprep.subr.bf16.mxu0 0
        %4366 = vmatpush2.bf16.msra.mxu0 0
        %4367 = vmatprep.subr.bf16.mxu0 0
        %4368 = vmatpush2.bf16.msra.mxu0 0
        %4369 = vmatprep.subr.bf16.mxu0 0
        %4370 = vmatpush2.bf16.msra.mxu0 0
        %4371 = vmatprep.subr.bf16.mxu0 0
        %4372 = vmatpush2.bf16.msra.mxu0 0
        %4373 = vmatprep.mubr.bf16.mxu0 0
        %4374 = vmatmul.mubr.bf16.gmra.mxu0 %v3688
        %v4375 = vpop.f32.mrf.mxu0
        %v4376 = vadd.f32 0.0, %v4375
        %v4377 = vpop.f32.mrf.mxu0
        %v4378 = vpop.f32.mrf.mxu0
        %v4379 = vpop.f32.mrf.mxu0
        %4380 = vdwg.mxu0
        %v4381 = vadd.f32 %v4340, %v4376
        %v4382 = vld [vmem:[%s2822] sm:$0xf]
        %v4383 = vpack.c.bf16 %v4382, %v4382
        %4384 = vmatprep.subr.bf16.mxu0 0
        %4385 = vmatpush1.bf16.msra.mxu0 %v3529
        %4386 = vmatprep.subr.bf16.mxu0 0
        %4387 = vmatpush1.bf16.msra.mxu0 %v3528
        %4388 = vmatprep.subr.bf16.mxu0 0
        %4389 = vmatpush1.bf16.msra.mxu0 %v3527
        %4390 = vmatprep.subr.bf16.mxu0 0
        %4391 = vmatpush1.bf16.msra.mxu0 %v3526
        %4392 = vmatprep.subr.bf16.mxu0 0
        %4393 = vmatpush1.bf16.msra.mxu0 %v3525
        %4394 = vmatprep.subr.bf16.mxu0 0
        %4395 = vmatpush1.bf16.msra.mxu0 %v3524
        %4396 = vmatprep.subr.bf16.mxu0 0
        %4397 = vmatpush1.bf16.msra.mxu0 %v3523
        %4398 = vmatprep.subr.bf16.mxu0 0
        %4399 = vmatpush1.bf16.msra.mxu0 %v3522
        %4400 = vmatprep.subr.bf16.mxu0 0
        %4401 = vmatpush2.bf16.msra.mxu0 0
        %4402 = vmatprep.subr.bf16.mxu0 0
        %4403 = vmatpush2.bf16.msra.mxu0 0
        %4404 = vmatprep.subr.bf16.mxu0 0
        %4405 = vmatpush2.bf16.msra.mxu0 0
        %4406 = vmatprep.subr.bf16.mxu0 0
        %4407 = vmatpush2.bf16.msra.mxu0 0
        %4408 = vmatprep.subr.bf16.mxu0 0
        %4409 = vmatpush2.bf16.msra.mxu0 0
        %4410 = vmatprep.subr.bf16.mxu0 0
        %4411 = vmatpush2.bf16.msra.mxu0 0
        %4412 = vmatprep.subr.bf16.mxu0 0
        %4413 = vmatpush2.bf16.msra.mxu0 0
        %4414 = vmatprep.subr.bf16.mxu0 0
        %4415 = vmatpush2.bf16.msra.mxu0 0
        %4416 = vmatprep.mubr.bf16.mxu0 0
        %4417 = vmatmul.mubr.bf16.gmra.mxu0 %v4383
        %v4418 = vpop.f32.mrf.mxu0
        %v4419 = vadd.f32 0.0, %v4418
        %v4420 = vpop.f32.mrf.mxu0
        %v4421 = vpop.f32.mrf.mxu0
        %v4422 = vpop.f32.mrf.mxu0
        %4423 = vdwg.mxu0
        %v4424 = vadd.f32 %v4381, %v4419
        %v4425 = vld [vmem:[%s2822 + $0x1] sm:$0xf]
        %v4426 = vpack.c.bf16 %v4425, %v4425
        %4427 = vmatprep.subr.bf16.mxu0 0
        %4428 = vmatpush1.bf16.msra.mxu0 %v3637
        %4429 = vmatprep.subr.bf16.mxu0 0
        %4430 = vmatpush1.bf16.msra.mxu0 %v3636
        %4431 = vmatprep.subr.bf16.mxu0 0
        %4432 = vmatpush1.bf16.msra.mxu0 %v3635
        %4433 = vmatprep.subr.bf16.mxu0 0
        %4434 = vmatpush1.bf16.msra.mxu0 %v3634
        %4435 = vmatprep.subr.bf16.mxu0 0
        %4436 = vmatpush1.bf16.msra.mxu0 %v3633
        %4437 = vmatprep.subr.bf16.mxu0 0
        %4438 = vmatpush1.bf16.msra.mxu0 %v3632
        %4439 = vmatprep.subr.bf16.mxu0 0
        %4440 = vmatpush1.bf16.msra.mxu0 %v3631
        %4441 = vmatprep.subr.bf16.mxu0 0
        %4442 = vmatpush1.bf16.msra.mxu0 %v3630
        %4443 = vmatprep.subr.bf16.mxu0 0
        %4444 = vmatpush2.bf16.msra.mxu0 0
        %4445 = vmatprep.subr.bf16.mxu0 0
        %4446 = vmatpush2.bf16.msra.mxu0 0
        %4447 = vmatprep.subr.bf16.mxu0 0
        %4448 = vmatpush2.bf16.msra.mxu0 0
        %4449 = vmatprep.subr.bf16.mxu0 0
        %4450 = vmatpush2.bf16.msra.mxu0 0
        %4451 = vmatprep.subr.bf16.mxu0 0
        %4452 = vmatpush2.bf16.msra.mxu0 0
        %4453 = vmatprep.subr.bf16.mxu0 0
        %4454 = vmatpush2.bf16.msra.mxu0 0
        %4455 = vmatprep.subr.bf16.mxu0 0
        %4456 = vmatpush2.bf16.msra.mxu0 0
        %4457 = vmatprep.subr.bf16.mxu0 0
        %4458 = vmatpush2.bf16.msra.mxu0 0
        %4459 = vmatprep.mubr.bf16.mxu0 0
        %4460 = vmatmul.mubr.bf16.gmra.mxu0 %v4426
        %v4461 = vpop.f32.mrf.mxu0
        %v4462 = vadd.f32 0.0, %v4461
        %v4463 = vpop.f32.mrf.mxu0
        %v4464 = vpop.f32.mrf.mxu0
        %v4465 = vpop.f32.mrf.mxu0
        %4466 = vdwg.mxu0
        %v4467 = vadd.f32 %v4424, %v4462
        %v4468 = vld [vmem:[%s2822 + $0x2] sm:$0xf]
        %v4469 = vpack.c.bf16 %v4468, %v4468
        %4470 = vmatprep.subr.bf16.mxu0 0
        %4471 = vmatpush1.bf16.msra.mxu0 %v3745
        %4472 = vmatprep.subr.bf16.mxu0 0
        %4473 = vmatpush1.bf16.msra.mxu0 %v3744
        %4474 = vmatprep.subr.bf16.mxu0 0
        %4475 = vmatpush1.bf16.msra.mxu0 %v3743
        %4476 = vmatprep.subr.bf16.mxu0 0
        %4477 = vmatpush1.bf16.msra.mxu0 %v3742
        %4478 = vmatprep.subr.bf16.mxu0 0
        %4479 = vmatpush1.bf16.msra.mxu0 %v3741
        %4480 = vmatprep.subr.bf16.mxu0 0
        %4481 = vmatpush1.bf16.msra.mxu0 %v3740
        %4482 = vmatprep.subr.bf16.mxu0 0
        %4483 = vmatpush1.bf16.msra.mxu0 %v3739
        %4484 = vmatprep.subr.bf16.mxu0 0
        %4485 = vmatpush1.bf16.msra.mxu0 %v3738
        %4486 = vmatprep.subr.bf16.mxu0 0
        %4487 = vmatpush2.bf16.msra.mxu0 0
        %4488 = vmatprep.subr.bf16.mxu0 0
        %4489 = vmatpush2.bf16.msra.mxu0 0
        %4490 = vmatprep.subr.bf16.mxu0 0
        %4491 = vmatpush2.bf16.msra.mxu0 0
        %4492 = vmatprep.subr.bf16.mxu0 0
        %4493 = vmatpush2.bf16.msra.mxu0 0
        %4494 = vmatprep.subr.bf16.mxu0 0
        %4495 = vmatpush2.bf16.msra.mxu0 0
        %4496 = vmatprep.subr.bf16.mxu0 0
        %4497 = vmatpush2.bf16.msra.mxu0 0
        %4498 = vmatprep.subr.bf16.mxu0 0
        %4499 = vmatpush2.bf16.msra.mxu0 0
        %4500 = vmatprep.subr.bf16.mxu0 0
        %4501 = vmatpush2.bf16.msra.mxu0 0
        %4502 = vmatprep.mubr.bf16.mxu0 0
        %4503 = vmatmul.mubr.bf16.gmra.mxu0 %v4469
        %v4504 = vpop.f32.mrf.mxu0
        %v4505 = vadd.f32 0.0, %v4504
        %v4506 = vpop.f32.mrf.mxu0
        %v4507 = vpop.f32.mrf.mxu0
        %v4508 = vpop.f32.mrf.mxu0
        %4509 = vdwg.mxu0
        %v4510 = vadd.f32 %v4467, %v4505
        %v4511 = vadd.f32 %v4510, %v3800
        %v4512 = vmax.f32 %v4511, 0.0
        %v4513 = vpack.c.bf16 %v4512, %v4512
        %4514 = vmatprep.subr.bf16.mxu0 %v3984
        %4515 = vmatpush1.bf16.msra.mxu0 %v3983
        %4516 = vmatprep.subr.bf16.mxu0 %v3980
        %4517 = vmatpush1.bf16.msra.mxu0 %v3979
        %4518 = vmatprep.subr.bf16.mxu0 %v3976
        %4519 = vmatpush1.bf16.msra.mxu0 %v3975
        %4520 = vmatprep.subr.bf16.mxu0 %v3972
        %4521 = vmatpush1.bf16.msra.mxu0 %v3971
        %4522 = vmatprep.subr.bf16.mxu0 %v3968
        %4523 = vmatpush1.bf16.msra.mxu0 %v3967
        %4524 = vmatprep.subr.bf16.mxu0 %v3964
        %4525 = vmatpush1.bf16.msra.mxu0 %v3963
        %4526 = vmatprep.subr.bf16.mxu0 %v3960
        %4527 = vmatpush1.bf16.msra.mxu0 %v3959
        %4528 = vmatprep.subr.bf16.mxu0 %v3956
        %4529 = vmatpush1.bf16.msra.mxu0 %v3955
        %4530 = vmatprep.subr.bf16.mxu0 0
        %4531 = vmatpush2.bf16.msra.mxu0 0
        %4532 = vmatprep.subr.bf16.mxu0 0
        %4533 = vmatpush2.bf16.msra.mxu0 0
        %4534 = vmatprep.subr.bf16.mxu0 0
        %4535 = vmatpush2.bf16.msra.mxu0 0
        %4536 = vmatprep.subr.bf16.mxu0 0
        %4537 = vmatpush2.bf16.msra.mxu0 0
        %4538 = vmatprep.subr.bf16.mxu0 0
        %4539 = vmatpush2.bf16.msra.mxu0 0
        %4540 = vmatprep.subr.bf16.mxu0 0
        %4541 = vmatpush2.bf16.msra.mxu0 0
        %4542 = vmatprep.subr.bf16.mxu0 0
        %4543 = vmatpush2.bf16.msra.mxu0 0
        %4544 = vmatprep.subr.bf16.mxu0 0
        %4545 = vmatpush2.bf16.msra.mxu0 0
        %4546 = vmatprep.mubr.bf16.mxu0 0
        %4547 = vmatmul.mubr.bf16.gmra.mxu0 %v4513
        %v4548 = vpop.f32.mrf.mxu0
        %v4549 = vadd.f32 %v3842, %v4548
        %v4550 = vpop.f32.mrf.mxu0
        %v4551 = vadd.f32 %v3846, %v4550
        %v4552 = vpop.f32.mrf.mxu0
        %v4553 = vpop.f32.mrf.mxu0
        %4554 = vdwg.mxu0
        %4555 = vmatprep.subr.bf16.mxu0 %v3986
        %4556 = vmatpush1.bf16.msra.mxu0 %v3985
        %4557 = vmatprep.subr.bf16.mxu0 %v3982
        %4558 = vmatpush1.bf16.msra.mxu0 %v3981
        %4559 = vmatprep.subr.bf16.mxu0 %v3978
        %4560 = vmatpush1.bf16.msra.mxu0 %v3977
        %4561 = vmatprep.subr.bf16.mxu0 %v3974
        %4562 = vmatpush1.bf16.msra.mxu0 %v3973
        %4563 = vmatprep.subr.bf16.mxu0 %v3970
        %4564 = vmatpush1.bf16.msra.mxu0 %v3969
        %4565 = vmatprep.subr.bf16.mxu0 %v3966
        %4566 = vmatpush1.bf16.msra.mxu0 %v3965
        %4567 = vmatprep.subr.bf16.mxu0 %v3962
        %4568 = vmatpush1.bf16.msra.mxu0 %v3961
        %4569 = vmatprep.subr.bf16.mxu0 %v3958
        %4570 = vmatpush1.bf16.msra.mxu0 %v3957
        %4571 = vmatprep.subr.bf16.mxu0 0
        %4572 = vmatpush2.bf16.msra.mxu0 0
        %4573 = vmatprep.subr.bf16.mxu0 0
        %4574 = vmatpush2.bf16.msra.mxu0 0
        %4575 = vmatprep.subr.bf16.mxu0 0
        %4576 = vmatpush2.bf16.msra.mxu0 0
        %4577 = vmatprep.subr.bf16.mxu0 0
        %4578 = vmatpush2.bf16.msra.mxu0 0
        %4579 = vmatprep.subr.bf16.mxu0 0
        %4580 = vmatpush2.bf16.msra.mxu0 0
        %4581 = vmatprep.subr.bf16.mxu0 0
        %4582 = vmatpush2.bf16.msra.mxu0 0
        %4583 = vmatprep.subr.bf16.mxu0 0
        %4584 = vmatpush2.bf16.msra.mxu0 0
        %4585 = vmatprep.subr.bf16.mxu0 0
        %4586 = vmatpush2.bf16.msra.mxu0 0
        %4587 = vmatprep.mubr.bf16.mxu0 0
        %4588 = vmatmul.mubr.bf16.gmra.mxu0 %v4513
        %v4589 = vpop.f32.mrf.mxu0
        %v4590 = vadd.f32 %v3850, %v4589
        %v4591 = vpop.f32.mrf.mxu0
        %v4592 = vadd.f32 %v3854, %v4591
        %v4593 = vpop.f32.mrf.mxu0
        %v4594 = vpop.f32.mrf.mxu0
        %4595 = vdwg.mxu0
        %v4596 = vmax.f32 %v4549, 0.0
        %v4597 = vmax.f32 %v4551, 0.0
        %v4598 = vmax.f32 %v4590, 0.0
        %v4599 = vmax.f32 %v4592, 0.0
        %v4600 = vsel %vm4105, %v4596, 0.0
        %v4601 = vrot.slane %v4600, 4
        %v4602 = vadd.f32 %v4600, %v4601
        %v4603 = vrot.slane %v4602, 2
        %v4604 = vadd.f32 %v4602, %v4603
        %v4605 = vrot.slane %v4604, 1
        %v4606 = vadd.f32 %v4604, %v4605
        %v4607 = vsel %vm4105, %v4597, 0.0
        %v4608 = vrot.slane %v4607, 4
        %v4609 = vadd.f32 %v4607, %v4608
        %v4610 = vrot.slane %v4609, 2
        %v4611 = vadd.f32 %v4609, %v4610
        %v4612 = vrot.slane %v4611, 1
        %v4613 = vadd.f32 %v4611, %v4612
        %v4614 = vsel %vm4105, %v4598, 0.0
        %v4615 = vrot.slane %v4614, 4
        %v4616 = vadd.f32 %v4614, %v4615
        %v4617 = vrot.slane %v4616, 2
        %v4618 = vadd.f32 %v4616, %v4617
        %v4619 = vrot.slane %v4618, 1
        %v4620 = vadd.f32 %v4618, %v4619
        %v4621 = vsel %vm4105, %v4599, 0.0
        %v4622 = vrot.slane %v4621, 4
        %v4623 = vadd.f32 %v4621, %v4622
        %v4624 = vrot.slane %v4623, 2
        %v4625 = vadd.f32 %v4623, %v4624
        %v4626 = vrot.slane %v4625, 1
        %v4627 = vadd.f32 %v4625, %v4626
        %v4628 = vadd.f32 %v4134, %v4606
        %v4629 = vadd.f32 %v4135, %v4613
        %v4630 = vadd.f32 %v4136, %v4620
        %v4631 = vadd.f32 %v4137, %v4627
        %4632 = vmatprep.subr.bf16.mxu0 0
        %4633 = vmatpush1.bf16.msra.mxu0 %v2902
        %4634 = vmatprep.subr.bf16.mxu0 0
        %4635 = vmatpush1.bf16.msra.mxu0 %v2901
        %4636 = vmatprep.subr.bf16.mxu0 0
        %4637 = vmatpush1.bf16.msra.mxu0 %v2900
        %4638 = vmatprep.subr.bf16.mxu0 0
        %4639 = vmatpush1.bf16.msra.mxu0 %v2899
        %4640 = vmatprep.subr.bf16.mxu0 0
        %4641 = vmatpush1.bf16.msra.mxu0 %v2898
        %4642 = vmatprep.subr.bf16.mxu0 0
        %4643 = vmatpush1.bf16.msra.mxu0 %v2897
        %4644 = vmatprep.subr.bf16.mxu0 0
        %4645 = vmatpush1.bf16.msra.mxu0 %v2896
        %4646 = vmatprep.subr.bf16.mxu0 0
        %4647 = vmatpush1.bf16.msra.mxu0 %v2895
        %4648 = vmatprep.subr.bf16.mxu0 0
        %4649 = vmatpush2.bf16.msra.mxu0 0
        %4650 = vmatprep.subr.bf16.mxu0 0
        %4651 = vmatpush2.bf16.msra.mxu0 0
        %4652 = vmatprep.subr.bf16.mxu0 0
        %4653 = vmatpush2.bf16.msra.mxu0 0
        %4654 = vmatprep.subr.bf16.mxu0 0
        %4655 = vmatpush2.bf16.msra.mxu0 0
        %4656 = vmatprep.subr.bf16.mxu0 0
        %4657 = vmatpush2.bf16.msra.mxu0 0
        %4658 = vmatprep.subr.bf16.mxu0 0
        %4659 = vmatpush2.bf16.msra.mxu0 0
        %4660 = vmatprep.subr.bf16.mxu0 0
        %4661 = vmatpush2.bf16.msra.mxu0 0
        %4662 = vmatprep.subr.bf16.mxu0 0
        %4663 = vmatpush2.bf16.msra.mxu0 0
        %4664 = vmatprep.mubr.bf16.mxu0 0
        %4665 = vmatmul.mubr.bf16.gmra.mxu0 %v3580
        %v4666 = vpop.f32.mrf.mxu0
        %v4667 = vadd.f32 0.0, %v4666
        %v4668 = vpop.f32.mrf.mxu0
        %v4669 = vpop.f32.mrf.mxu0
        %v4670 = vpop.f32.mrf.mxu0
        %4671 = vdwg.mxu0
        %4672 = vmatprep.subr.bf16.mxu0 0
        %4673 = vmatpush1.bf16.msra.mxu0 %v2990
        %4674 = vmatprep.subr.bf16.mxu0 0
        %4675 = vmatpush1.bf16.msra.mxu0 %v2989
        %4676 = vmatprep.subr.bf16.mxu0 0
        %4677 = vmatpush1.bf16.msra.mxu0 %v2988
        %4678 = vmatprep.subr.bf16.mxu0 0
        %4679 = vmatpush1.bf16.msra.mxu0 %v2987
        %4680 = vmatprep.subr.bf16.mxu0 0
        %4681 = vmatpush1.bf16.msra.mxu0 %v2986
        %4682 = vmatprep.subr.bf16.mxu0 0
        %4683 = vmatpush1.bf16.msra.mxu0 %v2985
        %4684 = vmatprep.subr.bf16.mxu0 0
        %4685 = vmatpush1.bf16.msra.mxu0 %v2984
        %4686 = vmatprep.subr.bf16.mxu0 0
        %4687 = vmatpush1.bf16.msra.mxu0 %v2983
        %4688 = vmatprep.subr.bf16.mxu0 0
        %4689 = vmatpush2.bf16.msra.mxu0 0
        %4690 = vmatprep.subr.bf16.mxu0 0
        %4691 = vmatpush2.bf16.msra.mxu0 0
        %4692 = vmatprep.subr.bf16.mxu0 0
        %4693 = vmatpush2.bf16.msra.mxu0 0
        %4694 = vmatprep.subr.bf16.mxu0 0
        %4695 = vmatpush2.bf16.msra.mxu0 0
        %4696 = vmatprep.subr.bf16.mxu0 0
        %4697 = vmatpush2.bf16.msra.mxu0 0
        %4698 = vmatprep.subr.bf16.mxu0 0
        %4699 = vmatpush2.bf16.msra.mxu0 0
        %4700 = vmatprep.subr.bf16.mxu0 0
        %4701 = vmatpush2.bf16.msra.mxu0 0
        %4702 = vmatprep.subr.bf16.mxu0 0
        %4703 = vmatpush2.bf16.msra.mxu0 0
        %4704 = vmatprep.mubr.bf16.mxu0 0
        %4705 = vmatmul.mubr.bf16.gmra.mxu0 %v3472
        %v4706 = vpop.f32.mrf.mxu0
        %v4707 = vadd.f32 %v4667, %v4706
        %v4708 = vpop.f32.mrf.mxu0
        %v4709 = vpop.f32.mrf.mxu0
        %v4710 = vpop.f32.mrf.mxu0
        %4711 = vdwg.mxu0
        %4712 = vmatprep.subr.bf16.mxu0 0
        %4713 = vmatpush1.bf16.msra.mxu0 %v3097
        %4714 = vmatprep.subr.bf16.mxu0 0
        %4715 = vmatpush1.bf16.msra.mxu0 %v3096
        %4716 = vmatprep.subr.bf16.mxu0 0
        %4717 = vmatpush1.bf16.msra.mxu0 %v3095
        %4718 = vmatprep.subr.bf16.mxu0 0
        %4719 = vmatpush1.bf16.msra.mxu0 %v3094
        %4720 = vmatprep.subr.bf16.mxu0 0
        %4721 = vmatpush1.bf16.msra.mxu0 %v3093
        %4722 = vmatprep.subr.bf16.mxu0 0
        %4723 = vmatpush1.bf16.msra.mxu0 %v3092
        %4724 = vmatprep.subr.bf16.mxu0 0
        %4725 = vmatpush1.bf16.msra.mxu0 %v3091
        %4726 = vmatprep.subr.bf16.mxu0 0
        %4727 = vmatpush1.bf16.msra.mxu0 %v3090
        %4728 = vmatprep.subr.bf16.mxu0 0
        %4729 = vmatpush2.bf16.msra.mxu0 0
        %4730 = vmatprep.subr.bf16.mxu0 0
        %4731 = vmatpush2.bf16.msra.mxu0 0
        %4732 = vmatprep.subr.bf16.mxu0 0
        %4733 = vmatpush2.bf16.msra.mxu0 0
        %4734 = vmatprep.subr.bf16.mxu0 0
        %4735 = vmatpush2.bf16.msra.mxu0 0
        %4736 = vmatprep.subr.bf16.mxu0 0
        %4737 = vmatpush2.bf16.msra.mxu0 0
        %4738 = vmatprep.subr.bf16.mxu0 0
        %4739 = vmatpush2.bf16.msra.mxu0 0
        %4740 = vmatprep.subr.bf16.mxu0 0
        %4741 = vmatpush2.bf16.msra.mxu0 0
        %4742 = vmatprep.subr.bf16.mxu0 0
        %4743 = vmatpush2.bf16.msra.mxu0 0
        %4744 = vmatprep.mubr.bf16.mxu0 0
        %4745 = vmatmul.mubr.bf16.gmra.mxu0 %v3688
        %v4746 = vpop.f32.mrf.mxu0
        %v4747 = vadd.f32 0.0, %v4746
        %v4748 = vpop.f32.mrf.mxu0
        %v4749 = vpop.f32.mrf.mxu0
        %v4750 = vpop.f32.mrf.mxu0
        %4751 = vdwg.mxu0
        %v4752 = vadd.f32 %v4707, %v4747
        %4753 = vmatprep.subr.bf16.mxu0 0
        %4754 = vmatpush1.bf16.msra.mxu0 %v3205
        %4755 = vmatprep.subr.bf16.mxu0 0
        %4756 = vmatpush1.bf16.msra.mxu0 %v3204
        %4757 = vmatprep.subr.bf16.mxu0 0
        %4758 = vmatpush1.bf16.msra.mxu0 %v3203
        %4759 = vmatprep.subr.bf16.mxu0 0
        %4760 = vmatpush1.bf16.msra.mxu0 %v3202
        %4761 = vmatprep.subr.bf16.mxu0 0
        %4762 = vmatpush1.bf16.msra.mxu0 %v3201
        %4763 = vmatprep.subr.bf16.mxu0 0
        %4764 = vmatpush1.bf16.msra.mxu0 %v3200
        %4765 = vmatprep.subr.bf16.mxu0 0
        %4766 = vmatpush1.bf16.msra.mxu0 %v3199
        %4767 = vmatprep.subr.bf16.mxu0 0
        %4768 = vmatpush1.bf16.msra.mxu0 %v3198
        %4769 = vmatprep.subr.bf16.mxu0 0
        %4770 = vmatpush2.bf16.msra.mxu0 0
        %4771 = vmatprep.subr.bf16.mxu0 0
        %4772 = vmatpush2.bf16.msra.mxu0 0
        %4773 = vmatprep.subr.bf16.mxu0 0
        %4774 = vmatpush2.bf16.msra.mxu0 0
        %4775 = vmatprep.subr.bf16.mxu0 0
        %4776 = vmatpush2.bf16.msra.mxu0 0
        %4777 = vmatprep.subr.bf16.mxu0 0
        %4778 = vmatpush2.bf16.msra.mxu0 0
        %4779 = vmatprep.subr.bf16.mxu0 0
        %4780 = vmatpush2.bf16.msra.mxu0 0
        %4781 = vmatprep.subr.bf16.mxu0 0
        %4782 = vmatpush2.bf16.msra.mxu0 0
        %4783 = vmatprep.subr.bf16.mxu0 0
        %4784 = vmatpush2.bf16.msra.mxu0 0
        %4785 = vmatprep.mubr.bf16.mxu0 0
        %4786 = vmatmul.mubr.bf16.gmra.mxu0 %v4383
        %v4787 = vpop.f32.mrf.mxu0
        %v4788 = vadd.f32 0.0, %v4787
        %v4789 = vpop.f32.mrf.mxu0
        %v4790 = vpop.f32.mrf.mxu0
        %v4791 = vpop.f32.mrf.mxu0
        %4792 = vdwg.mxu0
        %v4793 = vadd.f32 %v4752, %v4788
        %4794 = vmatprep.subr.bf16.mxu0 0
        %4795 = vmatpush1.bf16.msra.mxu0 %v3313
        %4796 = vmatprep.subr.bf16.mxu0 0
        %4797 = vmatpush1.bf16.msra.mxu0 %v3312
        %4798 = vmatprep.subr.bf16.mxu0 0
        %4799 = vmatpush1.bf16.msra.mxu0 %v3311
        %4800 = vmatprep.subr.bf16.mxu0 0
        %4801 = vmatpush1.bf16.msra.mxu0 %v3310
        %4802 = vmatprep.subr.bf16.mxu0 0
        %4803 = vmatpush1.bf16.msra.mxu0 %v3309
        %4804 = vmatprep.subr.bf16.mxu0 0
        %4805 = vmatpush1.bf16.msra.mxu0 %v3308
        %4806 = vmatprep.subr.bf16.mxu0 0
        %4807 = vmatpush1.bf16.msra.mxu0 %v3307
        %4808 = vmatprep.subr.bf16.mxu0 0
        %4809 = vmatpush1.bf16.msra.mxu0 %v3306
        %4810 = vmatprep.subr.bf16.mxu0 0
        %4811 = vmatpush2.bf16.msra.mxu0 0
        %4812 = vmatprep.subr.bf16.mxu0 0
        %4813 = vmatpush2.bf16.msra.mxu0 0
        %4814 = vmatprep.subr.bf16.mxu0 0
        %4815 = vmatpush2.bf16.msra.mxu0 0
        %4816 = vmatprep.subr.bf16.mxu0 0
        %4817 = vmatpush2.bf16.msra.mxu0 0
        %4818 = vmatprep.subr.bf16.mxu0 0
        %4819 = vmatpush2.bf16.msra.mxu0 0
        %4820 = vmatprep.subr.bf16.mxu0 0
        %4821 = vmatpush2.bf16.msra.mxu0 0
        %4822 = vmatprep.subr.bf16.mxu0 0
        %4823 = vmatpush2.bf16.msra.mxu0 0
        %4824 = vmatprep.subr.bf16.mxu0 0
        %4825 = vmatpush2.bf16.msra.mxu0 0
        %4826 = vmatprep.mubr.bf16.mxu0 0
        %4827 = vmatmul.mubr.bf16.gmra.mxu0 %v4426
        %v4828 = vpop.f32.mrf.mxu0
        %v4829 = vadd.f32 0.0, %v4828
        %v4830 = vpop.f32.mrf.mxu0
        %v4831 = vpop.f32.mrf.mxu0
        %v4832 = vpop.f32.mrf.mxu0
        %4833 = vdwg.mxu0
        %v4834 = vadd.f32 %v4793, %v4829
        %4835 = vmatprep.subr.bf16.mxu0 0
        %4836 = vmatpush1.bf16.msra.mxu0 %v3421
        %4837 = vmatprep.subr.bf16.mxu0 0
        %4838 = vmatpush1.bf16.msra.mxu0 %v3420
        %4839 = vmatprep.subr.bf16.mxu0 0
        %4840 = vmatpush1.bf16.msra.mxu0 %v3419
        %4841 = vmatprep.subr.bf16.mxu0 0
        %4842 = vmatpush1.bf16.msra.mxu0 %v3418
        %4843 = vmatprep.subr.bf16.mxu0 0
        %4844 = vmatpush1.bf16.msra.mxu0 %v3417
        %4845 = vmatprep.subr.bf16.mxu0 0
        %4846 = vmatpush1.bf16.msra.mxu0 %v3416
        %4847 = vmatprep.subr.bf16.mxu0 0
        %4848 = vmatpush1.bf16.msra.mxu0 %v3415
        %4849 = vmatprep.subr.bf16.mxu0 0
        %4850 = vmatpush1.bf16.msra.mxu0 %v3414
        %4851 = vmatprep.subr.bf16.mxu0 0
        %4852 = vmatpush2.bf16.msra.mxu0 0
        %4853 = vmatprep.subr.bf16.mxu0 0
        %4854 = vmatpush2.bf16.msra.mxu0 0
        %4855 = vmatprep.subr.bf16.mxu0 0
        %4856 = vmatpush2.bf16.msra.mxu0 0
        %4857 = vmatprep.subr.bf16.mxu0 0
        %4858 = vmatpush2.bf16.msra.mxu0 0
        %4859 = vmatprep.subr.bf16.mxu0 0
        %4860 = vmatpush2.bf16.msra.mxu0 0
        %4861 = vmatprep.subr.bf16.mxu0 0
        %4862 = vmatpush2.bf16.msra.mxu0 0
        %4863 = vmatprep.subr.bf16.mxu0 0
        %4864 = vmatpush2.bf16.msra.mxu0 0
        %4865 = vmatprep.subr.bf16.mxu0 0
        %4866 = vmatpush2.bf16.msra.mxu0 0
        %4867 = vmatprep.mubr.bf16.mxu0 0
        %4868 = vmatmul.mubr.bf16.gmra.mxu0 %v4469
        %v4869 = vpop.f32.mrf.mxu0
        %v4870 = vadd.f32 0.0, %v4869
        %v4871 = vpop.f32.mrf.mxu0
        %v4872 = vpop.f32.mrf.mxu0
        %v4873 = vpop.f32.mrf.mxu0
        %4874 = vdwg.mxu0
        %v4875 = vadd.f32 %v4834, %v4870
        %v4876 = vld [vmem:[%s2824] sm:$0xf]
        %v4877 = vpack.c.bf16 %v4876, %v4876
        %4878 = vmatprep.subr.bf16.mxu0 0
        %4879 = vmatpush1.bf16.msra.mxu0 %v3529
        %4880 = vmatprep.subr.bf16.mxu0 0
        %4881 = vmatpush1.bf16.msra.mxu0 %v3528
        %4882 = vmatprep.subr.bf16.mxu0 0
        %4883 = vmatpush1.bf16.msra.mxu0 %v3527
        %4884 = vmatprep.subr.bf16.mxu0 0
        %4885 = vmatpush1.bf16.msra.mxu0 %v3526
        %4886 = vmatprep.subr.bf16.mxu0 0
        %4887 = vmatpush1.bf16.msra.mxu0 %v3525
        %4888 = vmatprep.subr.bf16.mxu0 0
        %4889 = vmatpush1.bf16.msra.mxu0 %v3524
        %4890 = vmatprep.subr.bf16.mxu0 0
        %4891 = vmatpush1.bf16.msra.mxu0 %v3523
        %4892 = vmatprep.subr.bf16.mxu0 0
        %4893 = vmatpush1.bf16.msra.mxu0 %v3522
        %4894 = vmatprep.subr.bf16.mxu0 0
        %4895 = vmatpush2.bf16.msra.mxu0 0
        %4896 = vmatprep.subr.bf16.mxu0 0
        %4897 = vmatpush2.bf16.msra.mxu0 0
        %4898 = vmatprep.subr.bf16.mxu0 0
        %4899 = vmatpush2.bf16.msra.mxu0 0
        %4900 = vmatprep.subr.bf16.mxu0 0
        %4901 = vmatpush2.bf16.msra.mxu0 0
        %4902 = vmatprep.subr.bf16.mxu0 0
        %4903 = vmatpush2.bf16.msra.mxu0 0
        %4904 = vmatprep.subr.bf16.mxu0 0
        %4905 = vmatpush2.bf16.msra.mxu0 0
        %4906 = vmatprep.subr.bf16.mxu0 0
        %4907 = vmatpush2.bf16.msra.mxu0 0
        %4908 = vmatprep.subr.bf16.mxu0 0
        %4909 = vmatpush2.bf16.msra.mxu0 0
        %4910 = vmatprep.mubr.bf16.mxu0 0
        %4911 = vmatmul.mubr.bf16.gmra.mxu0 %v4877
        %v4912 = vpop.f32.mrf.mxu0
        %v4913 = vadd.f32 0.0, %v4912
        %v4914 = vpop.f32.mrf.mxu0
        %v4915 = vpop.f32.mrf.mxu0
        %v4916 = vpop.f32.mrf.mxu0
        %4917 = vdwg.mxu0
        %v4918 = vadd.f32 %v4875, %v4913
        %v4919 = vld [vmem:[%s2824 + $0x1] sm:$0xf]
        %v4920 = vpack.c.bf16 %v4919, %v4919
        %4921 = vmatprep.subr.bf16.mxu0 0
        %4922 = vmatpush1.bf16.msra.mxu0 %v3637
        %4923 = vmatprep.subr.bf16.mxu0 0
        %4924 = vmatpush1.bf16.msra.mxu0 %v3636
        %4925 = vmatprep.subr.bf16.mxu0 0
        %4926 = vmatpush1.bf16.msra.mxu0 %v3635
        %4927 = vmatprep.subr.bf16.mxu0 0
        %4928 = vmatpush1.bf16.msra.mxu0 %v3634
        %4929 = vmatprep.subr.bf16.mxu0 0
        %4930 = vmatpush1.bf16.msra.mxu0 %v3633
        %4931 = vmatprep.subr.bf16.mxu0 0
        %4932 = vmatpush1.bf16.msra.mxu0 %v3632
        %4933 = vmatprep.subr.bf16.mxu0 0
        %4934 = vmatpush1.bf16.msra.mxu0 %v3631
        %4935 = vmatprep.subr.bf16.mxu0 0
        %4936 = vmatpush1.bf16.msra.mxu0 %v3630
        %4937 = vmatprep.subr.bf16.mxu0 0
        %4938 = vmatpush2.bf16.msra.mxu0 0
        %4939 = vmatprep.subr.bf16.mxu0 0
        %4940 = vmatpush2.bf16.msra.mxu0 0
        %4941 = vmatprep.subr.bf16.mxu0 0
        %4942 = vmatpush2.bf16.msra.mxu0 0
        %4943 = vmatprep.subr.bf16.mxu0 0
        %4944 = vmatpush2.bf16.msra.mxu0 0
        %4945 = vmatprep.subr.bf16.mxu0 0
        %4946 = vmatpush2.bf16.msra.mxu0 0
        %4947 = vmatprep.subr.bf16.mxu0 0
        %4948 = vmatpush2.bf16.msra.mxu0 0
        %4949 = vmatprep.subr.bf16.mxu0 0
        %4950 = vmatpush2.bf16.msra.mxu0 0
        %4951 = vmatprep.subr.bf16.mxu0 0
        %4952 = vmatpush2.bf16.msra.mxu0 0
        %4953 = vmatprep.mubr.bf16.mxu0 0
        %4954 = vmatmul.mubr.bf16.gmra.mxu0 %v4920
        %v4955 = vpop.f32.mrf.mxu0
        %v4956 = vadd.f32 0.0, %v4955
        %v4957 = vpop.f32.mrf.mxu0
        %v4958 = vpop.f32.mrf.mxu0
        %v4959 = vpop.f32.mrf.mxu0
        %4960 = vdwg.mxu0
        %v4961 = vadd.f32 %v4918, %v4956
        %v4962 = vld [vmem:[%s2824 + $0x2] sm:$0xf]
        %v4963 = vpack.c.bf16 %v4962, %v4962
        %4964 = vmatprep.subr.bf16.mxu0 0
        %4965 = vmatpush1.bf16.msra.mxu0 %v3745
        %4966 = vmatprep.subr.bf16.mxu0 0
        %4967 = vmatpush1.bf16.msra.mxu0 %v3744
        %4968 = vmatprep.subr.bf16.mxu0 0
        %4969 = vmatpush1.bf16.msra.mxu0 %v3743
        %4970 = vmatprep.subr.bf16.mxu0 0
        %4971 = vmatpush1.bf16.msra.mxu0 %v3742
        %4972 = vmatprep.subr.bf16.mxu0 0
        %4973 = vmatpush1.bf16.msra.mxu0 %v3741
        %4974 = vmatprep.subr.bf16.mxu0 0
        %4975 = vmatpush1.bf16.msra.mxu0 %v3740
        %4976 = vmatprep.subr.bf16.mxu0 0
        %4977 = vmatpush1.bf16.msra.mxu0 %v3739
        %4978 = vmatprep.subr.bf16.mxu0 0
        %4979 = vmatpush1.bf16.msra.mxu0 %v3738
        %4980 = vmatprep.subr.bf16.mxu0 0
        %4981 = vmatpush2.bf16.msra.mxu0 0
        %4982 = vmatprep.subr.bf16.mxu0 0
        %4983 = vmatpush2.bf16.msra.mxu0 0
        %4984 = vmatprep.subr.bf16.mxu0 0
        %4985 = vmatpush2.bf16.msra.mxu0 0
        %4986 = vmatprep.subr.bf16.mxu0 0
        %4987 = vmatpush2.bf16.msra.mxu0 0
        %4988 = vmatprep.subr.bf16.mxu0 0
        %4989 = vmatpush2.bf16.msra.mxu0 0
        %4990 = vmatprep.subr.bf16.mxu0 0
        %4991 = vmatpush2.bf16.msra.mxu0 0
        %4992 = vmatprep.subr.bf16.mxu0 0
        %4993 = vmatpush2.bf16.msra.mxu0 0
        %4994 = vmatprep.subr.bf16.mxu0 0
        %4995 = vmatpush2.bf16.msra.mxu0 0
        %4996 = vmatprep.mubr.bf16.mxu0 0
        %4997 = vmatmul.mubr.bf16.gmra.mxu0 %v4963
        %v4998 = vpop.f32.mrf.mxu0
        %v4999 = vadd.f32 0.0, %v4998
        %v5000 = vpop.f32.mrf.mxu0
        %v5001 = vpop.f32.mrf.mxu0
        %v5002 = vpop.f32.mrf.mxu0
        %5003 = vdwg.mxu0
        %v5004 = vadd.f32 %v4961, %v4999
        %v5005 = vadd.f32 %v5004, %v3800
        %v5006 = vmax.f32 %v5005, 0.0
        %v5007 = vpack.c.bf16 %v5006, %v5006
        %5008 = vmatprep.subr.bf16.mxu0 %v3984
        %5009 = vmatpush1.bf16.msra.mxu0 %v3983
        %5010 = vmatprep.subr.bf16.mxu0 %v3980
        %5011 = vmatpush1.bf16.msra.mxu0 %v3979
        %5012 = vmatprep.subr.bf16.mxu0 %v3976
        %5013 = vmatpush1.bf16.msra.mxu0 %v3975
        %5014 = vmatprep.subr.bf16.mxu0 %v3972
        %5015 = vmatpush1.bf16.msra.mxu0 %v3971
        %5016 = vmatprep.subr.bf16.mxu0 %v3968
        %5017 = vmatpush1.bf16.msra.mxu0 %v3967
        %5018 = vmatprep.subr.bf16.mxu0 %v3964
        %5019 = vmatpush1.bf16.msra.mxu0 %v3963
        %5020 = vmatprep.subr.bf16.mxu0 %v3960
        %5021 = vmatpush1.bf16.msra.mxu0 %v3959
        %5022 = vmatprep.subr.bf16.mxu0 %v3956
        %5023 = vmatpush1.bf16.msra.mxu0 %v3955
        %5024 = vmatprep.subr.bf16.mxu0 0
        %5025 = vmatpush2.bf16.msra.mxu0 0
        %5026 = vmatprep.subr.bf16.mxu0 0
        %5027 = vmatpush2.bf16.msra.mxu0 0
        %5028 = vmatprep.subr.bf16.mxu0 0
        %5029 = vmatpush2.bf16.msra.mxu0 0
        %5030 = vmatprep.subr.bf16.mxu0 0
        %5031 = vmatpush2.bf16.msra.mxu0 0
        %5032 = vmatprep.subr.bf16.mxu0 0
        %5033 = vmatpush2.bf16.msra.mxu0 0
        %5034 = vmatprep.subr.bf16.mxu0 0
        %5035 = vmatpush2.bf16.msra.mxu0 0
        %5036 = vmatprep.subr.bf16.mxu0 0
        %5037 = vmatpush2.bf16.msra.mxu0 0
        %5038 = vmatprep.subr.bf16.mxu0 0
        %5039 = vmatpush2.bf16.msra.mxu0 0
        %5040 = vmatprep.mubr.bf16.mxu0 0
        %5041 = vmatmul.mubr.bf16.gmra.mxu0 %v5007
        %v5042 = vpop.f32.mrf.mxu0
        %v5043 = vadd.f32 %v3842, %v5042
        %v5044 = vpop.f32.mrf.mxu0
        %v5045 = vadd.f32 %v3846, %v5044
        %v5046 = vpop.f32.mrf.mxu0
        %v5047 = vpop.f32.mrf.mxu0
        %5048 = vdwg.mxu0
        %5049 = vmatprep.subr.bf16.mxu0 %v3986
        %5050 = vmatpush1.bf16.msra.mxu0 %v3985
        %5051 = vmatprep.subr.bf16.mxu0 %v3982
        %5052 = vmatpush1.bf16.msra.mxu0 %v3981
        %5053 = vmatprep.subr.bf16.mxu0 %v3978
        %5054 = vmatpush1.bf16.msra.mxu0 %v3977
        %5055 = vmatprep.subr.bf16.mxu0 %v3974
        %5056 = vmatpush1.bf16.msra.mxu0 %v3973
        %5057 = vmatprep.subr.bf16.mxu0 %v3970
        %5058 = vmatpush1.bf16.msra.mxu0 %v3969
        %5059 = vmatprep.subr.bf16.mxu0 %v3966
        %5060 = vmatpush1.bf16.msra.mxu0 %v3965
        %5061 = vmatprep.subr.bf16.mxu0 %v3962
        %5062 = vmatpush1.bf16.msra.mxu0 %v3961
        %5063 = vmatprep.subr.bf16.mxu0 %v3958
        %5064 = vmatpush1.bf16.msra.mxu0 %v3957
        %5065 = vmatprep.subr.bf16.mxu0 0
        %5066 = vmatpush2.bf16.msra.mxu0 0
        %5067 = vmatprep.subr.bf16.mxu0 0
        %5068 = vmatpush2.bf16.msra.mxu0 0
        %5069 = vmatprep.subr.bf16.mxu0 0
        %5070 = vmatpush2.bf16.msra.mxu0 0
        %5071 = vmatprep.subr.bf16.mxu0 0
        %5072 = vmatpush2.bf16.msra.mxu0 0
        %5073 = vmatprep.subr.bf16.mxu0 0
        %5074 = vmatpush2.bf16.msra.mxu0 0
        %5075 = vmatprep.subr.bf16.mxu0 0
        %5076 = vmatpush2.bf16.msra.mxu0 0
        %5077 = vmatprep.subr.bf16.mxu0 0
        %5078 = vmatpush2.bf16.msra.mxu0 0
        %5079 = vmatprep.subr.bf16.mxu0 0
        %5080 = vmatpush2.bf16.msra.mxu0 0
        %5081 = vmatprep.mubr.bf16.mxu0 0
        %5082 = vmatmul.mubr.bf16.gmra.mxu0 %v5007
        %v5083 = vpop.f32.mrf.mxu0
        %v5084 = vadd.f32 %v3850, %v5083
        %v5085 = vpop.f32.mrf.mxu0
        %v5086 = vadd.f32 %v3854, %v5085
        %v5087 = vpop.f32.mrf.mxu0
        %v5088 = vpop.f32.mrf.mxu0
        %5089 = vdwg.mxu0
        %v5090 = vmax.f32 %v5043, 0.0
        %v5091 = vmax.f32 %v5045, 0.0
        %v5092 = vmax.f32 %v5084, 0.0
        %v5093 = vmax.f32 %v5086, 0.0
        %v5094 = vsel %vm4105, %v5090, 0.0
        %v5095 = vrot.slane %v5094, 4
        %v5096 = vadd.f32 %v5094, %v5095
        %v5097 = vrot.slane %v5096, 2
        %v5098 = vadd.f32 %v5096, %v5097
        %v5099 = vrot.slane %v5098, 1
        %v5100 = vadd.f32 %v5098, %v5099
        %v5101 = vsel %vm4105, %v5091, 0.0
        %v5102 = vrot.slane %v5101, 4
        %v5103 = vadd.f32 %v5101, %v5102
        %v5104 = vrot.slane %v5103, 2
        %v5105 = vadd.f32 %v5103, %v5104
        %v5106 = vrot.slane %v5105, 1
        %v5107 = vadd.f32 %v5105, %v5106
        %v5108 = vsel %vm4105, %v5092, 0.0
        %v5109 = vrot.slane %v5108, 4
        %v5110 = vadd.f32 %v5108, %v5109
        %v5111 = vrot.slane %v5110, 2
        %v5112 = vadd.f32 %v5110, %v5111
        %v5113 = vrot.slane %v5112, 1
        %v5114 = vadd.f32 %v5112, %v5113
        %v5115 = vsel %vm4105, %v5093, 0.0
        %v5116 = vrot.slane %v5115, 4
        %v5117 = vadd.f32 %v5115, %v5116
        %v5118 = vrot.slane %v5117, 2
        %v5119 = vadd.f32 %v5117, %v5118
        %v5120 = vrot.slane %v5119, 1
        %v5121 = vadd.f32 %v5119, %v5120
        %v5122 = vadd.f32 %v4628, %v5100
        %v5123 = vadd.f32 %v4629, %v5107
        %v5124 = vadd.f32 %v4630, %v5114
        %v5125 = vadd.f32 %v4631, %v5121
        %5126 = vmatprep.subr.bf16.mxu0 0
        %5127 = vmatpush1.bf16.msra.mxu0 %v2902
        %5128 = vmatprep.subr.bf16.mxu0 0
        %5129 = vmatpush1.bf16.msra.mxu0 %v2901
        %5130 = vmatprep.subr.bf16.mxu0 0
        %5131 = vmatpush1.bf16.msra.mxu0 %v2900
        %5132 = vmatprep.subr.bf16.mxu0 0
        %5133 = vmatpush1.bf16.msra.mxu0 %v2899
        %5134 = vmatprep.subr.bf16.mxu0 0
        %5135 = vmatpush1.bf16.msra.mxu0 %v2898
        %5136 = vmatprep.subr.bf16.mxu0 0
        %5137 = vmatpush1.bf16.msra.mxu0 %v2897
        %5138 = vmatprep.subr.bf16.mxu0 0
        %5139 = vmatpush1.bf16.msra.mxu0 %v2896
        %5140 = vmatprep.subr.bf16.mxu0 0
        %5141 = vmatpush1.bf16.msra.mxu0 %v2895
        %5142 = vmatprep.subr.bf16.mxu0 0
        %5143 = vmatpush2.bf16.msra.mxu0 0
        %5144 = vmatprep.subr.bf16.mxu0 0
        %5145 = vmatpush2.bf16.msra.mxu0 0
        %5146 = vmatprep.subr.bf16.mxu0 0
        %5147 = vmatpush2.bf16.msra.mxu0 0
        %5148 = vmatprep.subr.bf16.mxu0 0
        %5149 = vmatpush2.bf16.msra.mxu0 0
        %5150 = vmatprep.subr.bf16.mxu0 0
        %5151 = vmatpush2.bf16.msra.mxu0 0
        %5152 = vmatprep.subr.bf16.mxu0 0
        %5153 = vmatpush2.bf16.msra.mxu0 0
        %5154 = vmatprep.subr.bf16.mxu0 0
        %5155 = vmatpush2.bf16.msra.mxu0 0
        %5156 = vmatprep.subr.bf16.mxu0 0
        %5157 = vmatpush2.bf16.msra.mxu0 0
        %5158 = vmatprep.mubr.bf16.mxu0 0
        %5159 = vmatmul.mubr.bf16.gmra.mxu0 %v4426
        %v5160 = vpop.f32.mrf.mxu0
        %v5161 = vadd.f32 0.0, %v5160
        %v5162 = vpop.f32.mrf.mxu0
        %v5163 = vpop.f32.mrf.mxu0
        %v5164 = vpop.f32.mrf.mxu0
        %5165 = vdwg.mxu0
        %5166 = vmatprep.subr.bf16.mxu0 0
        %5167 = vmatpush1.bf16.msra.mxu0 %v2990
        %5168 = vmatprep.subr.bf16.mxu0 0
        %5169 = vmatpush1.bf16.msra.mxu0 %v2989
        %5170 = vmatprep.subr.bf16.mxu0 0
        %5171 = vmatpush1.bf16.msra.mxu0 %v2988
        %5172 = vmatprep.subr.bf16.mxu0 0
        %5173 = vmatpush1.bf16.msra.mxu0 %v2987
        %5174 = vmatprep.subr.bf16.mxu0 0
        %5175 = vmatpush1.bf16.msra.mxu0 %v2986
        %5176 = vmatprep.subr.bf16.mxu0 0
        %5177 = vmatpush1.bf16.msra.mxu0 %v2985
        %5178 = vmatprep.subr.bf16.mxu0 0
        %5179 = vmatpush1.bf16.msra.mxu0 %v2984
        %5180 = vmatprep.subr.bf16.mxu0 0
        %5181 = vmatpush1.bf16.msra.mxu0 %v2983
        %5182 = vmatprep.subr.bf16.mxu0 0
        %5183 = vmatpush2.bf16.msra.mxu0 0
        %5184 = vmatprep.subr.bf16.mxu0 0
        %5185 = vmatpush2.bf16.msra.mxu0 0
        %5186 = vmatprep.subr.bf16.mxu0 0
        %5187 = vmatpush2.bf16.msra.mxu0 0
        %5188 = vmatprep.subr.bf16.mxu0 0
        %5189 = vmatpush2.bf16.msra.mxu0 0
        %5190 = vmatprep.subr.bf16.mxu0 0
        %5191 = vmatpush2.bf16.msra.mxu0 0
        %5192 = vmatprep.subr.bf16.mxu0 0
        %5193 = vmatpush2.bf16.msra.mxu0 0
        %5194 = vmatprep.subr.bf16.mxu0 0
        %5195 = vmatpush2.bf16.msra.mxu0 0
        %5196 = vmatprep.subr.bf16.mxu0 0
        %5197 = vmatpush2.bf16.msra.mxu0 0
        %5198 = vmatprep.mubr.bf16.mxu0 0
        %5199 = vmatmul.mubr.bf16.gmra.mxu0 %v4383
        %v5200 = vpop.f32.mrf.mxu0
        %v5201 = vadd.f32 %v5161, %v5200
        %v5202 = vpop.f32.mrf.mxu0
        %v5203 = vpop.f32.mrf.mxu0
        %v5204 = vpop.f32.mrf.mxu0
        %5205 = vdwg.mxu0
        %5206 = vmatprep.subr.bf16.mxu0 0
        %5207 = vmatpush1.bf16.msra.mxu0 %v3097
        %5208 = vmatprep.subr.bf16.mxu0 0
        %5209 = vmatpush1.bf16.msra.mxu0 %v3096
        %5210 = vmatprep.subr.bf16.mxu0 0
        %5211 = vmatpush1.bf16.msra.mxu0 %v3095
        %5212 = vmatprep.subr.bf16.mxu0 0
        %5213 = vmatpush1.bf16.msra.mxu0 %v3094
        %5214 = vmatprep.subr.bf16.mxu0 0
        %5215 = vmatpush1.bf16.msra.mxu0 %v3093
        %5216 = vmatprep.subr.bf16.mxu0 0
        %5217 = vmatpush1.bf16.msra.mxu0 %v3092
        %5218 = vmatprep.subr.bf16.mxu0 0
        %5219 = vmatpush1.bf16.msra.mxu0 %v3091
        %5220 = vmatprep.subr.bf16.mxu0 0
        %5221 = vmatpush1.bf16.msra.mxu0 %v3090
        %5222 = vmatprep.subr.bf16.mxu0 0
        %5223 = vmatpush2.bf16.msra.mxu0 0
        %5224 = vmatprep.subr.bf16.mxu0 0
        %5225 = vmatpush2.bf16.msra.mxu0 0
        %5226 = vmatprep.subr.bf16.mxu0 0
        %5227 = vmatpush2.bf16.msra.mxu0 0
        %5228 = vmatprep.subr.bf16.mxu0 0
        %5229 = vmatpush2.bf16.msra.mxu0 0
        %5230 = vmatprep.subr.bf16.mxu0 0
        %5231 = vmatpush2.bf16.msra.mxu0 0
        %5232 = vmatprep.subr.bf16.mxu0 0
        %5233 = vmatpush2.bf16.msra.mxu0 0
        %5234 = vmatprep.subr.bf16.mxu0 0
        %5235 = vmatpush2.bf16.msra.mxu0 0
        %5236 = vmatprep.subr.bf16.mxu0 0
        %5237 = vmatpush2.bf16.msra.mxu0 0
        %5238 = vmatprep.mubr.bf16.mxu0 0
        %5239 = vmatmul.mubr.bf16.gmra.mxu0 %v4469
        %v5240 = vpop.f32.mrf.mxu0
        %v5241 = vadd.f32 0.0, %v5240
        %v5242 = vpop.f32.mrf.mxu0
        %v5243 = vpop.f32.mrf.mxu0
        %v5244 = vpop.f32.mrf.mxu0
        %5245 = vdwg.mxu0
        %v5246 = vadd.f32 %v5201, %v5241
        %5247 = vmatprep.subr.bf16.mxu0 0
        %5248 = vmatpush1.bf16.msra.mxu0 %v3205
        %5249 = vmatprep.subr.bf16.mxu0 0
        %5250 = vmatpush1.bf16.msra.mxu0 %v3204
        %5251 = vmatprep.subr.bf16.mxu0 0
        %5252 = vmatpush1.bf16.msra.mxu0 %v3203
        %5253 = vmatprep.subr.bf16.mxu0 0
        %5254 = vmatpush1.bf16.msra.mxu0 %v3202
        %5255 = vmatprep.subr.bf16.mxu0 0
        %5256 = vmatpush1.bf16.msra.mxu0 %v3201
        %5257 = vmatprep.subr.bf16.mxu0 0
        %5258 = vmatpush1.bf16.msra.mxu0 %v3200
        %5259 = vmatprep.subr.bf16.mxu0 0
        %5260 = vmatpush1.bf16.msra.mxu0 %v3199
        %5261 = vmatprep.subr.bf16.mxu0 0
        %5262 = vmatpush1.bf16.msra.mxu0 %v3198
        %5263 = vmatprep.subr.bf16.mxu0 0
        %5264 = vmatpush2.bf16.msra.mxu0 0
        %5265 = vmatprep.subr.bf16.mxu0 0
        %5266 = vmatpush2.bf16.msra.mxu0 0
        %5267 = vmatprep.subr.bf16.mxu0 0
        %5268 = vmatpush2.bf16.msra.mxu0 0
        %5269 = vmatprep.subr.bf16.mxu0 0
        %5270 = vmatpush2.bf16.msra.mxu0 0
        %5271 = vmatprep.subr.bf16.mxu0 0
        %5272 = vmatpush2.bf16.msra.mxu0 0
        %5273 = vmatprep.subr.bf16.mxu0 0
        %5274 = vmatpush2.bf16.msra.mxu0 0
        %5275 = vmatprep.subr.bf16.mxu0 0
        %5276 = vmatpush2.bf16.msra.mxu0 0
        %5277 = vmatprep.subr.bf16.mxu0 0
        %5278 = vmatpush2.bf16.msra.mxu0 0
        %5279 = vmatprep.mubr.bf16.mxu0 0
        %5280 = vmatmul.mubr.bf16.gmra.mxu0 %v4877
        %v5281 = vpop.f32.mrf.mxu0
        %v5282 = vadd.f32 0.0, %v5281
        %v5283 = vpop.f32.mrf.mxu0
        %v5284 = vpop.f32.mrf.mxu0
        %v5285 = vpop.f32.mrf.mxu0
        %5286 = vdwg.mxu0
        %v5287 = vadd.f32 %v5246, %v5282
        %5288 = vmatprep.subr.bf16.mxu0 0
        %5289 = vmatpush1.bf16.msra.mxu0 %v3313
        %5290 = vmatprep.subr.bf16.mxu0 0
        %5291 = vmatpush1.bf16.msra.mxu0 %v3312
        %5292 = vmatprep.subr.bf16.mxu0 0
        %5293 = vmatpush1.bf16.msra.mxu0 %v3311
        %5294 = vmatprep.subr.bf16.mxu0 0
        %5295 = vmatpush1.bf16.msra.mxu0 %v3310
        %5296 = vmatprep.subr.bf16.mxu0 0
        %5297 = vmatpush1.bf16.msra.mxu0 %v3309
        %5298 = vmatprep.subr.bf16.mxu0 0
        %5299 = vmatpush1.bf16.msra.mxu0 %v3308
        %5300 = vmatprep.subr.bf16.mxu0 0
        %5301 = vmatpush1.bf16.msra.mxu0 %v3307
        %5302 = vmatprep.subr.bf16.mxu0 0
        %5303 = vmatpush1.bf16.msra.mxu0 %v3306
        %5304 = vmatprep.subr.bf16.mxu0 0
        %5305 = vmatpush2.bf16.msra.mxu0 0
        %5306 = vmatprep.subr.bf16.mxu0 0
        %5307 = vmatpush2.bf16.msra.mxu0 0
        %5308 = vmatprep.subr.bf16.mxu0 0
        %5309 = vmatpush2.bf16.msra.mxu0 0
        %5310 = vmatprep.subr.bf16.mxu0 0
        %5311 = vmatpush2.bf16.msra.mxu0 0
        %5312 = vmatprep.subr.bf16.mxu0 0
        %5313 = vmatpush2.bf16.msra.mxu0 0
        %5314 = vmatprep.subr.bf16.mxu0 0
        %5315 = vmatpush2.bf16.msra.mxu0 0
        %5316 = vmatprep.subr.bf16.mxu0 0
        %5317 = vmatpush2.bf16.msra.mxu0 0
        %5318 = vmatprep.subr.bf16.mxu0 0
        %5319 = vmatpush2.bf16.msra.mxu0 0
        %5320 = vmatprep.mubr.bf16.mxu0 0
        %5321 = vmatmul.mubr.bf16.gmra.mxu0 %v4920
        %v5322 = vpop.f32.mrf.mxu0
        %v5323 = vadd.f32 0.0, %v5322
        %v5324 = vpop.f32.mrf.mxu0
        %v5325 = vpop.f32.mrf.mxu0
        %v5326 = vpop.f32.mrf.mxu0
        %5327 = vdwg.mxu0
        %v5328 = vadd.f32 %v5287, %v5323
        %5329 = vmatprep.subr.bf16.mxu0 0
        %5330 = vmatpush1.bf16.msra.mxu0 %v3421
        %5331 = vmatprep.subr.bf16.mxu0 0
        %5332 = vmatpush1.bf16.msra.mxu0 %v3420
        %5333 = vmatprep.subr.bf16.mxu0 0
        %5334 = vmatpush1.bf16.msra.mxu0 %v3419
        %5335 = vmatprep.subr.bf16.mxu0 0
        %5336 = vmatpush1.bf16.msra.mxu0 %v3418
        %5337 = vmatprep.subr.bf16.mxu0 0
        %5338 = vmatpush1.bf16.msra.mxu0 %v3417
        %5339 = vmatprep.subr.bf16.mxu0 0
        %5340 = vmatpush1.bf16.msra.mxu0 %v3416
        %5341 = vmatprep.subr.bf16.mxu0 0
        %5342 = vmatpush1.bf16.msra.mxu0 %v3415
        %5343 = vmatprep.subr.bf16.mxu0 0
        %5344 = vmatpush1.bf16.msra.mxu0 %v3414
        %5345 = vmatprep.subr.bf16.mxu0 0
        %5346 = vmatpush2.bf16.msra.mxu0 0
        %5347 = vmatprep.subr.bf16.mxu0 0
        %5348 = vmatpush2.bf16.msra.mxu0 0
        %5349 = vmatprep.subr.bf16.mxu0 0
        %5350 = vmatpush2.bf16.msra.mxu0 0
        %5351 = vmatprep.subr.bf16.mxu0 0
        %5352 = vmatpush2.bf16.msra.mxu0 0
        %5353 = vmatprep.subr.bf16.mxu0 0
        %5354 = vmatpush2.bf16.msra.mxu0 0
        %5355 = vmatprep.subr.bf16.mxu0 0
        %5356 = vmatpush2.bf16.msra.mxu0 0
        %5357 = vmatprep.subr.bf16.mxu0 0
        %5358 = vmatpush2.bf16.msra.mxu0 0
        %5359 = vmatprep.subr.bf16.mxu0 0
        %5360 = vmatpush2.bf16.msra.mxu0 0
        %5361 = vmatprep.mubr.bf16.mxu0 0
        %5362 = vmatmul.mubr.bf16.gmra.mxu0 %v4963
        %v5363 = vpop.f32.mrf.mxu0
        %v5364 = vadd.f32 0.0, %v5363
        %v5365 = vpop.f32.mrf.mxu0
        %v5366 = vpop.f32.mrf.mxu0
        %v5367 = vpop.f32.mrf.mxu0
        %5368 = vdwg.mxu0
        %v5369 = vadd.f32 %v5328, %v5364
        %v5370 = vld [vmem:[%s2804] sm:$0xf]
        %v5371 = vpack.c.bf16 %v5370, %v5370
        %5372 = vmatprep.subr.bf16.mxu0 0
        %5373 = vmatpush1.bf16.msra.mxu0 %v3529
        %5374 = vmatprep.subr.bf16.mxu0 0
        %5375 = vmatpush1.bf16.msra.mxu0 %v3528
        %5376 = vmatprep.subr.bf16.mxu0 0
        %5377 = vmatpush1.bf16.msra.mxu0 %v3527
        %5378 = vmatprep.subr.bf16.mxu0 0
        %5379 = vmatpush1.bf16.msra.mxu0 %v3526
        %5380 = vmatprep.subr.bf16.mxu0 0
        %5381 = vmatpush1.bf16.msra.mxu0 %v3525
        %5382 = vmatprep.subr.bf16.mxu0 0
        %5383 = vmatpush1.bf16.msra.mxu0 %v3524
        %5384 = vmatprep.subr.bf16.mxu0 0
        %5385 = vmatpush1.bf16.msra.mxu0 %v3523
        %5386 = vmatprep.subr.bf16.mxu0 0
        %5387 = vmatpush1.bf16.msra.mxu0 %v3522
        %5388 = vmatprep.subr.bf16.mxu0 0
        %5389 = vmatpush2.bf16.msra.mxu0 0
        %5390 = vmatprep.subr.bf16.mxu0 0
        %5391 = vmatpush2.bf16.msra.mxu0 0
        %5392 = vmatprep.subr.bf16.mxu0 0
        %5393 = vmatpush2.bf16.msra.mxu0 0
        %5394 = vmatprep.subr.bf16.mxu0 0
        %5395 = vmatpush2.bf16.msra.mxu0 0
        %5396 = vmatprep.subr.bf16.mxu0 0
        %5397 = vmatpush2.bf16.msra.mxu0 0
        %5398 = vmatprep.subr.bf16.mxu0 0
        %5399 = vmatpush2.bf16.msra.mxu0 0
        %5400 = vmatprep.subr.bf16.mxu0 0
        %5401 = vmatpush2.bf16.msra.mxu0 0
        %5402 = vmatprep.subr.bf16.mxu0 0
        %5403 = vmatpush2.bf16.msra.mxu0 0
        %5404 = vmatprep.mubr.bf16.mxu0 0
        %5405 = vmatmul.mubr.bf16.gmra.mxu0 %v5371
        %v5406 = vpop.f32.mrf.mxu0
        %v5407 = vadd.f32 0.0, %v5406
        %v5408 = vpop.f32.mrf.mxu0
        %v5409 = vpop.f32.mrf.mxu0
        %v5410 = vpop.f32.mrf.mxu0
        %5411 = vdwg.mxu0
        %v5412 = vadd.f32 %v5369, %v5407
        %v5413 = vld [vmem:[%s2804 + $0x1] sm:$0xf]
        %v5414 = vpack.c.bf16 %v5413, %v5413
        %5415 = vmatprep.subr.bf16.mxu0 0
        %5416 = vmatpush1.bf16.msra.mxu0 %v3637
        %5417 = vmatprep.subr.bf16.mxu0 0
        %5418 = vmatpush1.bf16.msra.mxu0 %v3636
        %5419 = vmatprep.subr.bf16.mxu0 0
        %5420 = vmatpush1.bf16.msra.mxu0 %v3635
        %5421 = vmatprep.subr.bf16.mxu0 0
        %5422 = vmatpush1.bf16.msra.mxu0 %v3634
        %5423 = vmatprep.subr.bf16.mxu0 0
        %5424 = vmatpush1.bf16.msra.mxu0 %v3633
        %5425 = vmatprep.subr.bf16.mxu0 0
        %5426 = vmatpush1.bf16.msra.mxu0 %v3632
        %5427 = vmatprep.subr.bf16.mxu0 0
        %5428 = vmatpush1.bf16.msra.mxu0 %v3631
        %5429 = vmatprep.subr.bf16.mxu0 0
        %5430 = vmatpush1.bf16.msra.mxu0 %v3630
        %5431 = vmatprep.subr.bf16.mxu0 0
        %5432 = vmatpush2.bf16.msra.mxu0 0
        %5433 = vmatprep.subr.bf16.mxu0 0
        %5434 = vmatpush2.bf16.msra.mxu0 0
        %5435 = vmatprep.subr.bf16.mxu0 0
        %5436 = vmatpush2.bf16.msra.mxu0 0
        %5437 = vmatprep.subr.bf16.mxu0 0
        %5438 = vmatpush2.bf16.msra.mxu0 0
        %5439 = vmatprep.subr.bf16.mxu0 0
        %5440 = vmatpush2.bf16.msra.mxu0 0
        %5441 = vmatprep.subr.bf16.mxu0 0
        %5442 = vmatpush2.bf16.msra.mxu0 0
        %5443 = vmatprep.subr.bf16.mxu0 0
        %5444 = vmatpush2.bf16.msra.mxu0 0
        %5445 = vmatprep.subr.bf16.mxu0 0
        %5446 = vmatpush2.bf16.msra.mxu0 0
        %5447 = vmatprep.mubr.bf16.mxu0 0
        %5448 = vmatmul.mubr.bf16.gmra.mxu0 %v5414
        %v5449 = vpop.f32.mrf.mxu0
        %v5450 = vadd.f32 0.0, %v5449
        %v5451 = vpop.f32.mrf.mxu0
        %v5452 = vpop.f32.mrf.mxu0
        %v5453 = vpop.f32.mrf.mxu0
        %5454 = vdwg.mxu0
        %v5455 = vadd.f32 %v5412, %v5450
        %v5456 = vld [vmem:[%s2804 + $0x2] sm:$0xf]
        %v5457 = vpack.c.bf16 %v5456, %v5456
        %5458 = vmatprep.subr.bf16.mxu0 0
        %5459 = vmatpush1.bf16.msra.mxu0 %v3745
        %5460 = vmatprep.subr.bf16.mxu0 0
        %5461 = vmatpush1.bf16.msra.mxu0 %v3744
        %5462 = vmatprep.subr.bf16.mxu0 0
        %5463 = vmatpush1.bf16.msra.mxu0 %v3743
        %5464 = vmatprep.subr.bf16.mxu0 0
        %5465 = vmatpush1.bf16.msra.mxu0 %v3742
        %5466 = vmatprep.subr.bf16.mxu0 0
        %5467 = vmatpush1.bf16.msra.mxu0 %v3741
        %5468 = vmatprep.subr.bf16.mxu0 0
        %5469 = vmatpush1.bf16.msra.mxu0 %v3740
        %5470 = vmatprep.subr.bf16.mxu0 0
        %5471 = vmatpush1.bf16.msra.mxu0 %v3739
        %5472 = vmatprep.subr.bf16.mxu0 0
        %5473 = vmatpush1.bf16.msra.mxu0 %v3738
        %5474 = vmatprep.subr.bf16.mxu0 0
        %5475 = vmatpush2.bf16.msra.mxu0 0
        %5476 = vmatprep.subr.bf16.mxu0 0
        %5477 = vmatpush2.bf16.msra.mxu0 0
        %5478 = vmatprep.subr.bf16.mxu0 0
        %5479 = vmatpush2.bf16.msra.mxu0 0
        %5480 = vmatprep.subr.bf16.mxu0 0
        %5481 = vmatpush2.bf16.msra.mxu0 0
        %5482 = vmatprep.subr.bf16.mxu0 0
        %5483 = vmatpush2.bf16.msra.mxu0 0
        %5484 = vmatprep.subr.bf16.mxu0 0
        %5485 = vmatpush2.bf16.msra.mxu0 0
        %5486 = vmatprep.subr.bf16.mxu0 0
        %5487 = vmatpush2.bf16.msra.mxu0 0
        %5488 = vmatprep.subr.bf16.mxu0 0
        %5489 = vmatpush2.bf16.msra.mxu0 0
        %5490 = vmatprep.mubr.bf16.mxu0 0
        %5491 = vmatmul.mubr.bf16.gmra.mxu0 %v5457
        %v5492 = vpop.f32.mrf.mxu0
        %v5493 = vadd.f32 0.0, %v5492
        %v5494 = vpop.f32.mrf.mxu0
        %v5495 = vpop.f32.mrf.mxu0
        %v5496 = vpop.f32.mrf.mxu0
        %5497 = vdwg.mxu0
        %v5498 = vadd.f32 %v5455, %v5493
        %v5499 = vadd.f32 %v5498, %v3800
        %v5500 = vmax.f32 %v5499, 0.0
        %v5501 = vpack.c.bf16 %v5500, %v5500
        %5502 = vmatprep.subr.bf16.mxu0 %v3984
        %5503 = vmatpush1.bf16.msra.mxu0 %v3983
        %5504 = vmatprep.subr.bf16.mxu0 %v3980
        %5505 = vmatpush1.bf16.msra.mxu0 %v3979
        %5506 = vmatprep.subr.bf16.mxu0 %v3976
        %5507 = vmatpush1.bf16.msra.mxu0 %v3975
        %5508 = vmatprep.subr.bf16.mxu0 %v3972
        %5509 = vmatpush1.bf16.msra.mxu0 %v3971
        %5510 = vmatprep.subr.bf16.mxu0 %v3968
        %5511 = vmatpush1.bf16.msra.mxu0 %v3967
        %5512 = vmatprep.subr.bf16.mxu0 %v3964
        %5513 = vmatpush1.bf16.msra.mxu0 %v3963
        %5514 = vmatprep.subr.bf16.mxu0 %v3960
        %5515 = vmatpush1.bf16.msra.mxu0 %v3959
        %5516 = vmatprep.subr.bf16.mxu0 %v3956
        %5517 = vmatpush1.bf16.msra.mxu0 %v3955
        %5518 = vmatprep.subr.bf16.mxu0 0
        %5519 = vmatpush2.bf16.msra.mxu0 0
        %5520 = vmatprep.subr.bf16.mxu0 0
        %5521 = vmatpush2.bf16.msra.mxu0 0
        %5522 = vmatprep.subr.bf16.mxu0 0
        %5523 = vmatpush2.bf16.msra.mxu0 0
        %5524 = vmatprep.subr.bf16.mxu0 0
        %5525 = vmatpush2.bf16.msra.mxu0 0
        %5526 = vmatprep.subr.bf16.mxu0 0
        %5527 = vmatpush2.bf16.msra.mxu0 0
        %5528 = vmatprep.subr.bf16.mxu0 0
        %5529 = vmatpush2.bf16.msra.mxu0 0
        %5530 = vmatprep.subr.bf16.mxu0 0
        %5531 = vmatpush2.bf16.msra.mxu0 0
        %5532 = vmatprep.subr.bf16.mxu0 0
        %5533 = vmatpush2.bf16.msra.mxu0 0
        %5534 = vmatprep.mubr.bf16.mxu0 0
        %5535 = vmatmul.mubr.bf16.gmra.mxu0 %v5501
        %v5536 = vpop.f32.mrf.mxu0
        %v5537 = vadd.f32 %v3842, %v5536
        %v5538 = vpop.f32.mrf.mxu0
        %v5539 = vadd.f32 %v3846, %v5538
        %v5540 = vpop.f32.mrf.mxu0
        %v5541 = vpop.f32.mrf.mxu0
        %5542 = vdwg.mxu0
        %5543 = vmatprep.subr.bf16.mxu0 %v3986
        %5544 = vmatpush1.bf16.msra.mxu0 %v3985
        %5545 = vmatprep.subr.bf16.mxu0 %v3982
        %5546 = vmatpush1.bf16.msra.mxu0 %v3981
        %5547 = vmatprep.subr.bf16.mxu0 %v3978
        %5548 = vmatpush1.bf16.msra.mxu0 %v3977
        %5549 = vmatprep.subr.bf16.mxu0 %v3974
        %5550 = vmatpush1.bf16.msra.mxu0 %v3973
        %5551 = vmatprep.subr.bf16.mxu0 %v3970
        %5552 = vmatpush1.bf16.msra.mxu0 %v3969
        %5553 = vmatprep.subr.bf16.mxu0 %v3966
        %5554 = vmatpush1.bf16.msra.mxu0 %v3965
        %5555 = vmatprep.subr.bf16.mxu0 %v3962
        %5556 = vmatpush1.bf16.msra.mxu0 %v3961
        %5557 = vmatprep.subr.bf16.mxu0 %v3958
        %5558 = vmatpush1.bf16.msra.mxu0 %v3957
        %5559 = vmatprep.subr.bf16.mxu0 0
        %5560 = vmatpush2.bf16.msra.mxu0 0
        %5561 = vmatprep.subr.bf16.mxu0 0
        %5562 = vmatpush2.bf16.msra.mxu0 0
        %5563 = vmatprep.subr.bf16.mxu0 0
        %5564 = vmatpush2.bf16.msra.mxu0 0
        %5565 = vmatprep.subr.bf16.mxu0 0
        %5566 = vmatpush2.bf16.msra.mxu0 0
        %5567 = vmatprep.subr.bf16.mxu0 0
        %5568 = vmatpush2.bf16.msra.mxu0 0
        %5569 = vmatprep.subr.bf16.mxu0 0
        %5570 = vmatpush2.bf16.msra.mxu0 0
        %5571 = vmatprep.subr.bf16.mxu0 0
        %5572 = vmatpush2.bf16.msra.mxu0 0
        %5573 = vmatprep.subr.bf16.mxu0 0
        %5574 = vmatpush2.bf16.msra.mxu0 0
        %5575 = vmatprep.mubr.bf16.mxu0 0
        %5576 = vmatmul.mubr.bf16.gmra.mxu0 %v5501
        %v5577 = vpop.f32.mrf.mxu0
        %v5578 = vadd.f32 %v3850, %v5577
        %v5579 = vpop.f32.mrf.mxu0
        %v5580 = vadd.f32 %v3854, %v5579
        %v5581 = vpop.f32.mrf.mxu0
        %v5582 = vpop.f32.mrf.mxu0
        %5583 = vdwg.mxu0
        %v5584 = vmax.f32 %v5537, 0.0
        %v5585 = vmax.f32 %v5539, 0.0
        %v5586 = vmax.f32 %v5578, 0.0
        %v5587 = vmax.f32 %v5580, 0.0
        %v5588 = vsel %vm4105, %v5584, 0.0
        %v5589 = vrot.slane %v5588, 4
        %v5590 = vadd.f32 %v5588, %v5589
        %v5591 = vrot.slane %v5590, 2
        %v5592 = vadd.f32 %v5590, %v5591
        %v5593 = vrot.slane %v5592, 1
        %v5594 = vadd.f32 %v5592, %v5593
        %v5595 = vsel %vm4105, %v5585, 0.0
        %v5596 = vrot.slane %v5595, 4
        %v5597 = vadd.f32 %v5595, %v5596
        %v5598 = vrot.slane %v5597, 2
        %v5599 = vadd.f32 %v5597, %v5598
        %v5600 = vrot.slane %v5599, 1
        %v5601 = vadd.f32 %v5599, %v5600
        %v5602 = vsel %vm4105, %v5586, 0.0
        %v5603 = vrot.slane %v5602, 4
        %v5604 = vadd.f32 %v5602, %v5603
        %v5605 = vrot.slane %v5604, 2
        %v5606 = vadd.f32 %v5604, %v5605
        %v5607 = vrot.slane %v5606, 1
        %v5608 = vadd.f32 %v5606, %v5607
        %v5609 = vsel %vm4105, %v5587, 0.0
        %v5610 = vrot.slane %v5609, 4
        %v5611 = vadd.f32 %v5609, %v5610
        %v5612 = vrot.slane %v5611, 2
        %v5613 = vadd.f32 %v5611, %v5612
        %v5614 = vrot.slane %v5613, 1
        %v5615 = vadd.f32 %v5613, %v5614
        %v5616 = vadd.f32 %v5122, %v5594
        %v5617 = vadd.f32 %v5123, %v5601
        %v5618 = vadd.f32 %v5124, %v5608
        %v5619 = vadd.f32 %v5125, %v5615
        %v5620 = vmul.f32 %v5616, 0.0625
        %v5621 = vmul.f32 %v5617, 0.0625
        %v5622 = vmul.f32 %v5618, 0.0625
        %v5623 = vmul.f32 %v5619, 0.0625
        %v5624 = vld [vmem:[%s13] sm:$0xff]
        %v5625 = vld [vmem:[%s13 + $0x8] sm:$0xff]
        %v5626 = vld [vmem:[%s13 + $0x10] sm:$0xff]
        %v5627 = vld [vmem:[%s13 + $0x18] sm:$0xff]
        %v5628 = vld [vmem:[%s13 + $0x20] sm:$0xff]
        %v5629 = vld [vmem:[%s13 + $0x28] sm:$0xff]
        %v5630 = vld [vmem:[%s13 + $0x30] sm:$0xff]
        %v5631 = vld [vmem:[%s13 + $0x38] sm:$0xff]
        %v5632 = vld [vmem:[%s13 + $0x40] sm:$0xff]
        %v5633 = vld [vmem:[%s13 + $0x48] sm:$0xff]
        %v5634 = vld [vmem:[%s13 + $0x50] sm:$0xff]
        %v5635 = vld [vmem:[%s13 + $0x58] sm:$0xff]
        %v5636 = vld [vmem:[%s13 + $0x60] sm:$0xff]
        %v5637 = vld [vmem:[%s13 + $0x68] sm:$0xff]
        %v5638 = vld [vmem:[%s13 + $0x70] sm:$0xff]
        %v5639 = vld [vmem:[%s13 + $0x78] sm:$0xff]
        %v5640 = vld [vmem:[%s13 + $0x80] sm:$0xff]
        %v5641 = vld [vmem:[%s13 + $0x88] sm:$0xff]
        %v5642 = vld [vmem:[%s13 + $0x90] sm:$0xff]
        %v5643 = vld [vmem:[%s13 + $0x98] sm:$0xff]
        %v5644 = vld [vmem:[%s13 + $0xa0] sm:$0xff]
        %v5645 = vld [vmem:[%s13 + $0xa8] sm:$0xff]
        %v5646 = vld [vmem:[%s13 + $0xb0] sm:$0xff]
        %v5647 = vld [vmem:[%s13 + $0xb8] sm:$0xff]
        %v5648 = vld [vmem:[%s13 + $0xc0] sm:$0xff]
        %v5649 = vld [vmem:[%s13 + $0xc8] sm:$0xff]
        %v5650 = vld [vmem:[%s13 + $0xd0] sm:$0xff]
        %v5651 = vld [vmem:[%s13 + $0xd8] sm:$0xff]
        %v5652 = vld [vmem:[%s13 + $0xe0] sm:$0xff]
        %v5653 = vld [vmem:[%s13 + $0xe8] sm:$0xff]
        %v5654 = vld [vmem:[%s13 + $0xf0] sm:$0xff]
        %v5655 = vld [vmem:[%s13 + $0xf8] sm:$0xff]
        %v5656 = vld [vmem:[%s13 + $0x100] sm:$0xff]
        %v5657 = vld [vmem:[%s13 + $0x108] sm:$0xff]
        %v5658 = vld [vmem:[%s13 + $0x110] sm:$0xff]
        %v5659 = vld [vmem:[%s13 + $0x118] sm:$0xff]
        %v5660 = vld [vmem:[%s13 + $0x120] sm:$0xff]
        %v5661 = vld [vmem:[%s13 + $0x128] sm:$0xff]
        %v5662 = vld [vmem:[%s13 + $0x130] sm:$0xff]
        %v5663 = vld [vmem:[%s13 + $0x138] sm:$0xff]
        %v5664 = vld [vmem:[%s13 + $0x140] sm:$0xff]
        %v5665 = vld [vmem:[%s13 + $0x148] sm:$0xff]
        %v5666 = vld [vmem:[%s13 + $0x150] sm:$0xff]
        %v5667 = vld [vmem:[%s13 + $0x158] sm:$0xff]
        %v5668 = vld [vmem:[%s13 + $0x160] sm:$0xff]
        %v5669 = vld [vmem:[%s13 + $0x168] sm:$0xff]
        %v5670 = vld [vmem:[%s13 + $0x170] sm:$0xff]
        %v5671 = vld [vmem:[%s13 + $0x178] sm:$0xff]
        %v5672 = vld [vmem:[%s13 + $0x180] sm:$0xff]
        %v5673 = vld [vmem:[%s13 + $0x188] sm:$0xff]
        %v5674 = vld [vmem:[%s13 + $0x190] sm:$0xff]
        %v5675 = vld [vmem:[%s13 + $0x198] sm:$0xff]
        %v5676 = vld [vmem:[%s13 + $0x1a0] sm:$0xff]
        %v5677 = vld [vmem:[%s13 + $0x1a8] sm:$0xff]
        %v5678 = vld [vmem:[%s13 + $0x1b0] sm:$0xff]
        %v5679 = vld [vmem:[%s13 + $0x1b8] sm:$0xff]
        %v5680 = vld [vmem:[%s13 + $0x1c0] sm:$0xff]
        %v5681 = vld [vmem:[%s13 + $0x1c8] sm:$0xff]
        %v5682 = vld [vmem:[%s13 + $0x1d0] sm:$0xff]
        %v5683 = vld [vmem:[%s13 + $0x1d8] sm:$0xff]
        %v5684 = vld [vmem:[%s13 + $0x1e0] sm:$0xff]
        %v5685 = vld [vmem:[%s13 + $0x1e8] sm:$0xff]
        %v5686 = vld [vmem:[%s13 + $0x1f0] sm:$0xff]
        %v5687 = vld [vmem:[%s13 + $0x1f8] sm:$0xff]
        %v5688 = vld [vmem:[%s14] sm:$0x1]
        %5689 = vmatprep.subr.mxu0 0.0
        %5690 = vmatpush1.msra.mxu0 %v5639
        %5691 = vmatprep.subr.mxu0 0.0
        %5692 = vmatpush1.msra.mxu0 %v5638
        %5693 = vmatprep.subr.mxu0 0.0
        %5694 = vmatpush1.msra.mxu0 %v5637
        %5695 = vmatprep.subr.mxu0 0.0
        %5696 = vmatpush1.msra.mxu0 %v5636
        %5697 = vmatprep.subr.mxu0 0.0
        %5698 = vmatpush1.msra.mxu0 %v5635
        %5699 = vmatprep.subr.mxu0 0.0
        %5700 = vmatpush1.msra.mxu0 %v5634
        %5701 = vmatprep.subr.mxu0 0.0
        %5702 = vmatpush1.msra.mxu0 %v5633
        %5703 = vmatprep.subr.mxu0 0.0
        %5704 = vmatpush1.msra.mxu0 %v5632
        %5705 = vmatprep.subr.mxu0 0.0
        %5706 = vmatpush1.msra.mxu0 %v5631
        %5707 = vmatprep.subr.mxu0 0.0
        %5708 = vmatpush1.msra.mxu0 %v5630
        %5709 = vmatprep.subr.mxu0 0.0
        %5710 = vmatpush1.msra.mxu0 %v5629
        %5711 = vmatprep.subr.mxu0 0.0
        %5712 = vmatpush1.msra.mxu0 %v5628
        %5713 = vmatprep.subr.mxu0 0.0
        %5714 = vmatpush1.msra.mxu0 %v5627
        %5715 = vmatprep.subr.mxu0 0.0
        %5716 = vmatpush1.msra.mxu0 %v5626
        %5717 = vmatprep.subr.mxu0 0.0
        %5718 = vmatpush1.msra.mxu0 %v5625
        %5719 = vmatprep.subr.mxu0 0.0
        %5720 = vmatpush1.msra.mxu0 %v5624
        %5721 = vmatprep.subr.mxu0 0.0
        %5722 = vmatpush2.msra.mxu0 %v5655
        %5723 = vmatprep.subr.mxu0 0.0
        %5724 = vmatpush2.msra.mxu0 %v5654
        %5725 = vmatprep.subr.mxu0 0.0
        %5726 = vmatpush2.msra.mxu0 %v5653
        %5727 = vmatprep.subr.mxu0 0.0
        %5728 = vmatpush2.msra.mxu0 %v5652
        %5729 = vmatprep.subr.mxu0 0.0
        %5730 = vmatpush2.msra.mxu0 %v5651
        %5731 = vmatprep.subr.mxu0 0.0
        %5732 = vmatpush2.msra.mxu0 %v5650
        %5733 = vmatprep.subr.mxu0 0.0
        %5734 = vmatpush2.msra.mxu0 %v5649
        %5735 = vmatprep.subr.mxu0 0.0
        %5736 = vmatpush2.msra.mxu0 %v5648
        %5737 = vmatprep.subr.mxu0 0.0
        %5738 = vmatpush2.msra.mxu0 %v5647
        %5739 = vmatprep.subr.mxu0 0.0
        %5740 = vmatpush2.msra.mxu0 %v5646
        %5741 = vmatprep.subr.mxu0 0.0
        %5742 = vmatpush2.msra.mxu0 %v5645
        %5743 = vmatprep.subr.mxu0 0.0
        %5744 = vmatpush2.msra.mxu0 %v5644
        %5745 = vmatprep.subr.mxu0 0.0
        %5746 = vmatpush2.msra.mxu0 %v5643
        %5747 = vmatprep.subr.mxu0 0.0
        %5748 = vmatpush2.msra.mxu0 %v5642
        %5749 = vmatprep.subr.mxu0 0.0
        %5750 = vmatpush2.msra.mxu0 %v5641
        %5751 = vmatprep.subr.mxu0 0.0
        %5752 = vmatpush2.msra.mxu0 %v5640
        %5753 = vmatprep.mubr.f32.mxu0 %v5621
        %5754 = vmatmul.mubr.f32.gmra.mxu0 %v5620
        %v5755 = vpop.f32.mrf.mxu0
        %v5756 = vadd.f32 %v5688, %v5755
        %v5757 = vpop.f32.mrf.mxu0
        %5758 = vdwg.mxu0
        %5759 = vmatprep.subr.mxu0 0.0
        %5760 = vmatpush1.msra.mxu0 %v5671
        %5761 = vmatprep.subr.mxu0 0.0
        %5762 = vmatpush1.msra.mxu0 %v5670
        %5763 = vmatprep.subr.mxu0 0.0
        %5764 = vmatpush1.msra.mxu0 %v5669
        %5765 = vmatprep.subr.mxu0 0.0
        %5766 = vmatpush1.msra.mxu0 %v5668
        %5767 = vmatprep.subr.mxu0 0.0
        %5768 = vmatpush1.msra.mxu0 %v5667
        %5769 = vmatprep.subr.mxu0 0.0
        %5770 = vmatpush1.msra.mxu0 %v5666
        %5771 = vmatprep.subr.mxu0 0.0
        %5772 = vmatpush1.msra.mxu0 %v5665
        %5773 = vmatprep.subr.mxu0 0.0
        %5774 = vmatpush1.msra.mxu0 %v5664
        %5775 = vmatprep.subr.mxu0 0.0
        %5776 = vmatpush1.msra.mxu0 %v5663
        %5777 = vmatprep.subr.mxu0 0.0
        %5778 = vmatpush1.msra.mxu0 %v5662
        %5779 = vmatprep.subr.mxu0 0.0
        %5780 = vmatpush1.msra.mxu0 %v5661
        %5781 = vmatprep.subr.mxu0 0.0
        %5782 = vmatpush1.msra.mxu0 %v5660
        %5783 = vmatprep.subr.mxu0 0.0
        %5784 = vmatpush1.msra.mxu0 %v5659
        %5785 = vmatprep.subr.mxu0 0.0
        %5786 = vmatpush1.msra.mxu0 %v5658
        %5787 = vmatprep.subr.mxu0 0.0
        %5788 = vmatpush1.msra.mxu0 %v5657
        %5789 = vmatprep.subr.mxu0 0.0
        %5790 = vmatpush1.msra.mxu0 %v5656
        %5791 = vmatprep.subr.mxu0 0.0
        %5792 = vmatpush2.msra.mxu0 %v5687
        %5793 = vmatprep.subr.mxu0 0.0
        %5794 = vmatpush2.msra.mxu0 %v5686
        %5795 = vmatprep.subr.mxu0 0.0
        %5796 = vmatpush2.msra.mxu0 %v5685
        %5797 = vmatprep.subr.mxu0 0.0
        %5798 = vmatpush2.msra.mxu0 %v5684
        %5799 = vmatprep.subr.mxu0 0.0
        %5800 = vmatpush2.msra.mxu0 %v5683
        %5801 = vmatprep.subr.mxu0 0.0
        %5802 = vmatpush2.msra.mxu0 %v5682
        %5803 = vmatprep.subr.mxu0 0.0
        %5804 = vmatpush2.msra.mxu0 %v5681
        %5805 = vmatprep.subr.mxu0 0.0
        %5806 = vmatpush2.msra.mxu0 %v5680
        %5807 = vmatprep.subr.mxu0 0.0
        %5808 = vmatpush2.msra.mxu0 %v5679
        %5809 = vmatprep.subr.mxu0 0.0
        %5810 = vmatpush2.msra.mxu0 %v5678
        %5811 = vmatprep.subr.mxu0 0.0
        %5812 = vmatpush2.msra.mxu0 %v5677
        %5813 = vmatprep.subr.mxu0 0.0
        %5814 = vmatpush2.msra.mxu0 %v5676
        %5815 = vmatprep.subr.mxu0 0.0
        %5816 = vmatpush2.msra.mxu0 %v5675
        %5817 = vmatprep.subr.mxu0 0.0
        %5818 = vmatpush2.msra.mxu0 %v5674
        %5819 = vmatprep.subr.mxu0 0.0
        %5820 = vmatpush2.msra.mxu0 %v5673
        %5821 = vmatprep.subr.mxu0 0.0
        %5822 = vmatpush2.msra.mxu0 %v5672
        %5823 = vmatprep.mubr.f32.mxu0 %v5623
        %5824 = vmatmul.mubr.f32.gmra.mxu0 %v5622
        %v5825 = vpop.f32.mrf.mxu0
        %v5826 = vadd.f32 %v5756, %v5825
        %v5827 = vpop.f32.mrf.mxu0
        %5828 = vdwg.mxu0
        %vm5829 = vcmask 811008
        %5830 = vst.msk [vmem:[%s486] sm:$0x1] %vm5829, %v5826
        %s5831 = sand.u32 %s357, 1
        %s5832 = scalar_lea.sflag [#allocation7], %s5831
        %s5833 = sand.u32 %s357, 1
        %s5834 = scalar_lea.vmem [#allocation6], %s5833
        // Predicated region
        $region81: #{simplenet_forward.3} parent=79 // pred_check
          %p5835 = pneg %p367
        $region82: #{simplenet_forward.3} parent=79 // pred_check_branch
          %5837 = sbr.rel (%p5835) target = $region84
        $region83: #{simplenet_forward.3} parent=79 // pred_region
          %s5839 = ssub.s32 16, 16
          %5840 = vsyncadd %s5832, %s5839
          %s5841 = smul.addr %s29, 16
          %s5842 = scalar_lea.hbm %s15, %s5841
          %s5844 = sshll.u32 %s5834, 4
          %s5845 = int_to_ptr.vmem [resolvable:$true] %s5844
          %5847 = dma.vmem_to_hbm [thread:$0]  %s5845, 16, %s5842, %s5832
        $region84: #{simplenet_forward.3} parent=79 // pred_fallthru
          _
      $region80: #{simplenet_forward.3} parent=5 // pred_fallthru
        _
      %p5848 = scmp.le.s32.totalorder 2, %s24
      // Predicated region
      $region85: #{simplenet_forward.3} parent=5 // pred_check
        %p5849 = pneg %p5848
      $region86: #{simplenet_forward.3} parent=5 // pred_check_branch
        %5851 = sbr.rel (%p5849) target = $region88
      $region87: #{simplenet_forward.3} parent=5 // pred_region
        %s5852 = ssub.s32 %s24, 2
        // Predicated region
        $region89: #{simplenet_forward.3} parent=87 // pred_check
          %p5853 = pneg %p373
        $region90: #{simplenet_forward.3} parent=87 // pred_check_branch
          %5855 = sbr.rel (%p5853) target = $region92
        $region91: #{simplenet_forward.3} parent=87 // pred_region
          %s5856 = sand.u32 %s358, 1
          %s5857 = scalar_lea.sflag [#allocation7], %s5856
          %s5858 = sand.u32 %s358, 1
          %s5859 = scalar_lea.vmem [#allocation6], %s5858
          %5860 = dma.done %s5857, 16
        $region92: #{simplenet_forward.3} parent=87 // pred_fallthru
          _
      $region88: #{simplenet_forward.3} parent=5 // pred_fallthru
        _
    $region6: #{simplenet_forward.3} parent=1 // loop_footer
      %s28 = sadd.s32 1, %s24
    $region7: #{simplenet_forward.3} parent=1 // loop_footer_branch
      %23 = sbr.rel target = $region3
    $region8: #{simplenet_forward.3} parent=1 // loop_exit
      _
    %5861 = vsyncpa [#allocation7], 1
    %s5862 = scalar_lea.sflag [#allocation7], 1
    %5863 = vsyncpa %s5862, 1

</llo_original>
